<compile_context>
chip_gen: v7x
topology: tpu7x:2x2x1
jax: 0.10.0
libtpu: 0.0.40
codegen_flags: <defaults>
</compile_context>

<pallas_src>
import numpy as np
import jax
import jax.numpy as jnp
from jax import lax
from jax.experimental import pallas as pl
from jax.experimental.pallas import tpu as pltpu

# ----------------------------------------------------------------------------
# Flat "slot" geometry shared by all in-kernel buffers.
#   flat column = HEAD + n*SLOT + row*WS + col      (row, col < 16; n < NB)
# ----------------------------------------------------------------------------
NB = 8                      # batch of the 2-D layers (= Cout of deconv1 = D-2)
HS = 16                     # slot height  (>= 14 rows of the padded deconv3 input)
WS = 16                     # slot width   (>= 14 cols of any padded tensor)
SLOT = HS * WS              # 256
BODY = NB * SLOT            # 2048 lane-dense columns
HEAD = 80                   # zero head: negative tap shifts stay in bounds; chosen so
                            # the stage-A store offset (HEAD + 3*WS = 128) is lane-aligned
TAIL = 176                  # zero tail: positive tap shifts stay in bounds
LTOT = HEAD + BODY + TAIL   # 2304  (= 18 lane tiles)
CTAIL = 128                 # tail of the merged deconv3 phase buffer (stage-C shifts <= 33)

NTAP3 = 15                  # deconv3 taps: kh in 0..4, j = floor(kw/2) in 0..2


# ----------------------------------------------------------------------------
# The fused kernel.
# ----------------------------------------------------------------------------
def _fused_model_kernel(xa_ref, wa_ref, betaf_ref, w3k_ref, mask3_ref, bias3_ref,
                        w4k_ref, b4_ref, out_ref,
                        v2p_ref, wstk_ref, v3p_ref, cstk_ref):
    f32 = jnp.float32

    # v2p zeros double as the deconv3 zero padding (inside and around each slot).
    v2p_ref[...] = jnp.zeros(v2p_ref.shape, f32)
    # v3p body is fully overwritten below; only its tail needs zeroing.
    v3p_ref[:, BODY:] = jnp.zeros((v3p_ref.shape[0], v3p_ref.shape[1] - BODY), f32)

    # ---- stage A: deconv1 (1x1x1, pad 1) + deconv2 (1x1, pad 1), ONE matmul -------
    # a_out[n*16 + c2, h*16 + (w+1)] = v2[n, c2, h, w]   (rows n*16+14/15 are zero)
    a_out = jnp.dot(wa_ref[...], xa_ref[...],
                    preferred_element_type=f32) + betaf_ref[...]        # (128, 128)
    for n in range(NB):
        start = HEAD + n * SLOT + 3 * WS          # = 128 + 256*n  (lane aligned)
        v2p_ref[:, start:start + 128] = a_out[n * 16:(n + 1) * 16, :]

    # ---- stage B: deconv3 = ConvTranspose2d(14, 8, 5, stride=(1,2), pad=(1,2)) ----
    # K-stacking: stage the 15 shifted (16, BODY) windows of v2p, then one matmul.
    # Rows 0..7 of the result are the even output columns, rows 8..15 the odd ones.
    for t in range(NTAP3):
        kh, j = divmod(t, 3)
        shift = HEAD + (3 - kh) * WS + (1 - j)
        wstk_ref[t * 16:(t + 1) * 16, :] = v2p_ref[:, shift:shift + BODY]
    acc3 = jnp.dot(w3k_ref[...], wstk_ref[...],
                   preferred_element_type=f32)                          # (16, BODY)
    # Masked FMA re-creates the zero padding stage C relies on (bias is pre-masked).
    v3p_ref[:, :BODY] = acc3 * mask3_ref[...] + bias3_ref[...]

    # ---- stage C: deconv4 = Conv2d(8, 3, 3, stride=(1,2), pad=(1,2)) --------------
    # Per kh: kw=0 -> even rows, kw=1 -> odd rows (same shift), kw=2 -> even rows +1.
    for kh in range(3):
        base = kh * WS
        cstk_ref[kh * 24:kh * 24 + 16, :] = v3p_ref[:, base:base + BODY]
        cstk_ref[kh * 24 + 16:kh * 24 + 24, :] = v3p_ref[0:8, base + 1:base + 1 + BODY]
    out_ref[...] = jnp.dot(w4k_ref[...], cstk_ref[...],
                           preferred_element_type=f32) + b4_ref[...]


# ----------------------------------------------------------------------------
# One-time weight prepacking (hoisted out of the forward pass).
# ----------------------------------------------------------------------------
def prepack_params(params):
    w1 = np.asarray(params["w1"])[:, :, 0, 0, 0]      # (3, 8)   [ci, n]
    b1 = np.asarray(params["b1"])                      # (8,)
    w2 = np.asarray(params["w2"])[:, :, 0, 0]          # (8, 14)  [d, c2]
    b2 = np.asarray(params["b2"])                      # (14,)
    w3 = np.asarray(params["w3"])                      # (14, 8, 5, 5) [c2, co, kh, kw]
    b3 = np.asarray(params["b3"])                      # (8,)
    w4 = np.asarray(params["w4"])                      # (3, 8, 3, 3)  [co, c3, kh, kw]
    b4 = np.asarray(params["b4"])                      # (3,)

    # --- stage A: fused deconv1+deconv2 weight (128, 24) and bias (128, 128) -------
    # wa[n*16 + c2, ci*8 + d] = W1[ci, n] * W2[d, c2]; rows n*16+{14,15} are zero.
    wa = np.zeros((NB * 16, 24), np.float32)
    beta = b1[:, None] * w2.sum(axis=0)[None, :] + b2[None, :]          # (8, 14)
    betaf = np.zeros((NB * 16, 128), np.float32)
    colmask = np.zeros((128,), np.float32)                 # data at slot cols 1..12
    for h in range(8):
        colmask[h * WS + 1: h * WS + 13] = 1.0
    for n in range(NB):
        for c2 in range(14):
            wa[n * 16 + c2, :] = np.outer(w1[:, n], w2[:, c2]).reshape(24)
            betaf[n * 16 + c2, :] = beta[n, c2] * colmask

    # --- stage B: K-stacked deconv3 weight (16, 240); tap t = kh*3 + j -------------
    w3k = np.zeros((16, NTAP3 * 16), np.float32)
    for kh in range(5):
        for j in range(3):
            t = kh * 3 + j
            w3k[0:8, t * 16: t * 16 + 14] = w3[:, :, kh, 2 * j].T            # even cols
            if 2 * j + 1 < 5:
                w3k[8:16, t * 16: t * 16 + 14] = w3[:, :, kh, 2 * j + 1].T   # odd cols

    # --- merged even/odd validity mask and pre-masked bias (16, BODY) --------------
    mask3 = np.zeros((16, BODY), np.float32)
    for n in range(NB):
        for r in range(1, 11):                   # valid output rows (ho3 + 1)
            base = n * SLOT + r * WS
            mask3[0:8,  base + 1: base + 13] = 1.0    # even phase: 12 valid columns
            mask3[8:16, base + 1: base + 12] = 1.0    # odd phase:  11 valid columns
    bias3 = np.concatenate([b3, b3]).astype(np.float32)[:, None] * mask3

    # --- stage C: K-stacked deconv4 weight (3, 72) ----------------------------------
    w4k = np.zeros((3, 72), np.float32)
    for kh in range(3):
        for kw in range(3):
            w4k[:, kh * 24 + kw * 8: kh * 24 + kw * 8 + 8] = w4[:, :, kh, kw]

    b4b = np.broadcast_to(b4.astype(np.float32)[:, None], (3, BODY)).copy()

    return dict(
        wa=jnp.asarray(wa), betaf=jnp.asarray(betaf),
        w3k=jnp.asarray(w3k), mask3=jnp.asarray(mask3), bias3=jnp.asarray(bias3),
        w4k=jnp.asarray(w4k), b4b=jnp.asarray(b4b),
    )


def model_forward_pallas(x1, packed):
    # deconv1 (k=1, pad=1) and deconv2 (k=1, pad=1) only crop; the crop is pre-laid
    # into the 16-wide slot-row layout (data at cols 1..12) so stage A needs no
    # in-kernel re-striding.
    xa = x1[:, 1:9, 2:10, 2:14].astype(jnp.float32)            # (3, 8, 8, 12)
    xa = jnp.pad(xa, ((0, 0), (0, 0), (0, 0), (1, 3)))          # (3, 8, 8, 16)
    xa24 = xa.reshape(24, 128)                                  # rows = ci*8 + d

    vspec = pl.BlockSpec(memory_space=pltpu.MemorySpace.VMEM)

    out_flat = pl.pallas_call(
        _fused_model_kernel,
        out_shape=jax.ShapeDtypeStruct((3, BODY), jnp.float32),
        in_specs=[vspec] * 8,
        out_specs=vspec,
        scratch_shapes=[
            pltpu.VMEM((16, LTOT), jnp.float32),          # padded deconv3 input (v2)
            pltpu.VMEM((NTAP3 * 16, BODY), jnp.float32),  # stage-B K-stacked windows
            pltpu.VMEM((16, BODY + CTAIL), jnp.float32),  # merged deconv3 phase buffer
            pltpu.VMEM((72, BODY), jnp.float32),          # stage-C K-stacked windows
        ],
    )(xa24, packed["wa"], packed["betaf"], packed["w3k"], packed["mask3"],
      packed["bias3"], packed["w4k"], packed["b4b"])

    # Lane-dense (3, 2048) -> (3, N, 16, 16) -> crop valid (10, 13) -> NCHW.
    # (The crop/transpose could be deferred to the consumer; kept here so the wrapper
    # returns the module-shaped result.)
    v4 = out_flat.reshape(3, NB, HS, WS)[:, :, :10, :13]
    # TODO(synk): deconv5 (ConvTranspose1d) cannot run on a 4-D tensor in PyTorch;
    # the reproducible module output is v4.
    return jnp.transpose(v4, (1, 0, 2, 3))                      # (8, 3, 10, 13)


# ----------------------------------------------------------------------------
# Plain-JAX reference of the same chain (for the correctness cross-check).
# ----------------------------------------------------------------------------
def _conv2d_valid_ref(x_nhwc, w_hwio, b):
    N, Hp, Wp, Cin = x_nhwc.shape
    KH, KW, _, Cout = w_hwio.shape
    Ho, Wo = Hp - KH + 1, Wp - KW + 1
    acc = jnp.zeros((N, Ho, Wo, Cout), jnp.float32)
    for kh in range(KH):
        for kw in range(KW):
            patch = x_nhwc[:, kh:kh + Ho, kw:kw + Wo, :]
            acc = acc + jnp.einsum("nhwc,co->nhwo", patch, w_hwio[kh, kw],
                                   precision=lax.Precision.HIGHEST)
    return acc + b.reshape(1, 1, 1, Cout)


def _dilate(x, axis, s):
    if s == 1:
        return x
    L = x.shape[axis]
    shape = list(x.shape)
    shape[axis] = (L - 1) * s + 1
    out = jnp.zeros(shape, x.dtype)
    idx = [slice(None)] * x.ndim
    idx[axis] = slice(None, None, s)
    return out.at[tuple(idx)].set(x)


def _pad_or_crop(x, axis, p):
    if p == 0:
        return x
    if p > 0:
        pads = [(0, 0)] * x.ndim
        pads[axis] = (p, p)
        return jnp.pad(x, pads)
    idx = [slice(None)] * x.ndim
    idx[axis] = slice(-p, x.shape[axis] + p)
    return x[tuple(idx)]


def _conv_transpose2d_ref(x, weight, bias, stride, padding):
    sh, sw = stride
    ph, pw = padding
    Cin, Cout, KH, KW = weight.shape
    xn = jnp.transpose(x, (0, 2, 3, 1))
    xn = _dilate(xn, 1, sh)
    xn = _dilate(xn, 2, sw)
    xn = _pad_or_crop(xn, 1, KH - 1 - ph)
    xn = _pad_or_crop(xn, 2, KW - 1 - pw)
    w_hwio = jnp.transpose(weight[:, :, ::-1, ::-1], (2, 3, 0, 1))
    y = _conv2d_valid_ref(xn, w_hwio, bias)
    return jnp.transpose(y, (0, 3, 1, 2))


def _conv2d_ref(x, weight, bias, stride, padding):
    sh, sw = stride
    ph, pw = padding
    xn = jnp.transpose(x, (0, 2, 3, 1))
    xn = _pad_or_crop(xn, 1, ph)
    xn = _pad_or_crop(xn, 2, pw)
    w_hwio = jnp.transpose(weight, (2, 3, 1, 0))
    y = _conv2d_valid_ref(xn, w_hwio, bias)[:, ::sh, ::sw, :]
    return jnp.transpose(y, (0, 3, 1, 2))


def _conv_transpose3d_k1_ref(x_cdhw, weight, bias, padding):
    Cin, Cout = weight.shape[:2]
    p = padding
    _, D, H, W = x_cdhw.shape
    xc = x_cdhw[:, p:D - p, p:H - p, p:W - p]
    x_nhwc = jnp.transpose(xc, (1, 2, 3, 0))
    w_hwio = weight[:, :, 0, 0, 0].reshape(1, 1, Cin, Cout)
    y = _conv2d_valid_ref(x_nhwc, w_hwio, bias)
    return jnp.transpose(y, (3, 0, 1, 2))


def model_forward_ref(x1, params):
    v1 = _conv_transpose3d_k1_ref(x1, params["w1"], params["b1"], 1)
    v2 = _conv_transpose2d_ref(v1, params["w2"], params["b2"], (1, 1), (1, 1))
    v3 = _conv_transpose2d_ref(v2, params["w3"], params["b3"], (1, 2), (1, 2))
    v4 = _conv2d_ref(v3, params["w4"], params["b4"], (1, 2), (1, 2))
    return v4


def init_params(key):
    ks = jax.random.split(key, 8)
    s = 0.1
    return {
        "w1": s * jax.random.normal(ks[0], (3, 8, 1, 1, 1), jnp.float32),   # ConvTranspose3d
        "b1": s * jax.random.normal(ks[1], (8,), jnp.float32),
        "w2": s * jax.random.normal(ks[2], (8, 14, 1, 1), jnp.float32),     # ConvTranspose2d
        "b2": s * jax.random.normal(ks[3], (14,), jnp.float32),
        "w3": s * jax.random.normal(ks[4], (14, 8, 5, 5), jnp.float32),     # ConvTranspose2d
        "b3": s * jax.random.normal(ks[5], (8,), jnp.float32),
        "w4": s * jax.random.normal(ks[6], (3, 8, 3, 3), jnp.float32),      # Conv2d
        "b4": s * jax.random.normal(ks[7], (3,), jnp.float32),
    }


if __name__ == "__main__":
    key = jax.random.PRNGKey(0)
    kp, kx = jax.random.split(key)
    params = init_params(kp)
    packed = prepack_params(params)

    # Unbatched (Cin=3, D=10, H=12, W=16): the only shape family for which the
    # PyTorch forward chain is rank/channel consistent through deconv4.
    x1 = jax.random.normal(kx, (3, 10, 12, 16), jnp.float32)

    fwd = jax.jit(lambda x: model_forward_pallas(x, packed))
    out = jax.block_until_ready(fwd(x1))

    ref = jax.block_until_ready(jax.jit(lambda x: model_forward_ref(x, params))(x1))

    assert out.shape == (8, 3, 10, 13), out.shape
    max_err = float(jnp.max(jnp.abs(out - ref)))
    # All-f32 path; tolerance still catches any tap/mask/geometry regression.
    assert max_err < 2e-3, max_err

    print("KERNEL_OK")
</pallas_src>

<mosaic_0001>
module attributes {stable_mosaic.version = 11 : i64} {
  func.func @_fused_model_kernel(%arg0: memref<24x128xf32, #tpu.memory_space<vmem>>, %arg1: memref<128x24xf32, #tpu.memory_space<vmem>>, %arg2: memref<128x128xf32, #tpu.memory_space<vmem>>, %arg3: memref<16x240xf32, #tpu.memory_space<vmem>>, %arg4: memref<16x2048xf32, #tpu.memory_space<vmem>>, %arg5: memref<16x2048xf32, #tpu.memory_space<vmem>>, %arg6: memref<3x72xf32, #tpu.memory_space<vmem>>, %arg7: memref<3x2048xf32, #tpu.memory_space<vmem>>, %arg8: memref<3x2048xf32, #tpu.memory_space<vmem>>, %arg9: memref<16x2304xf32, #tpu.memory_space<vmem>>, %arg10: memref<240x2048xf32, #tpu.memory_space<vmem>>, %arg11: memref<16x2176xf32, #tpu.memory_space<vmem>>, %arg12: memref<72x2048xf32, #tpu.memory_space<vmem>>) attributes {dimension_semantics = [], scalar_prefetch = 0 : i64, scratch_operands = 4 : i64, tpu.core_type = #tpu.core_type<tc>} {
    %cst = arith.constant 0.000000e+00 : f32
    %0 = vector.broadcast %cst : f32 to vector<16x2304xf32>
    %c0 = arith.constant 0 : index
    %c0_0 = arith.constant 0 : index
    %1 = vector.load %arg9[%c0, %c0_0] : memref<16x2304xf32, #tpu.memory_space<vmem>>, vector<16x2304xf32>
    tpu.vector_store %arg9[%c0, %c0_0], %0 {strides = array<i32>} : memref<16x2304xf32, #tpu.memory_space<vmem>>, vector<16x2304xf32>,
    %cst_1 = arith.constant 0.000000e+00 : f32
    %2 = vector.broadcast %cst_1 : f32 to vector<16x128xf32>
    %c0_2 = arith.constant 0 : index
    %c2048 = arith.constant 2048 : index
    %3 = vector.load %arg11[%c0_2, %c2048] : memref<16x2176xf32, #tpu.memory_space<vmem>>, vector<16x128xf32>
    tpu.vector_store %arg11[%c0_2, %c2048], %2 {strides = array<i32>} : memref<16x2176xf32, #tpu.memory_space<vmem>>, vector<16x128xf32>,
    %c0_3 = arith.constant 0 : index
    %c0_4 = arith.constant 0 : index
    %4 = vector.load %arg1[%c0_3, %c0_4] : memref<128x24xf32, #tpu.memory_space<vmem>>, vector<128x24xf32>
    %c0_5 = arith.constant 0 : index
    %c0_6 = arith.constant 0 : index
    %5 = vector.load %arg0[%c0_5, %c0_6] : memref<24x128xf32, #tpu.memory_space<vmem>>, vector<24x128xf32>
    %cst_7 = arith.constant dense<0.000000e+00> : vector<128x128xf32>
    %6 = tpu.matmul %4, %5, %cst_7 {dimension_numbers = #tpu.dot_dimension_numbers<[1], [0], [0], [1], [0, 0, 1, 1], [], []>} : vector<128x24xf32>, vector<24x128xf32>, vector<128x128xf32> -> vector<128x128xf32>
    %c0_8 = arith.constant 0 : index
    %c0_9 = arith.constant 0 : index
    %7 = vector.load %arg2[%c0_8, %c0_9] : memref<128x128xf32, #tpu.memory_space<vmem>>, vector<128x128xf32>
    %8 = arith.addf %6, %7 : vector<128x128xf32>
    %9 = vector.extract_strided_slice %8 {offsets = [0, 0], sizes = [16, 128], strides = [1, 1]} : vector<128x128xf32> to vector<16x128xf32>
    %c0_10 = arith.constant 0 : index
    %c128 = arith.constant 128 : index
    %10 = vector.load %arg9[%c0_10, %c128] : memref<16x2304xf32, #tpu.memory_space<vmem>>, vector<16x128xf32>
    tpu.vector_store %arg9[%c0_10, %c128], %9 {strides = array<i32>} : memref<16x2304xf32, #tpu.memory_space<vmem>>, vector<16x128xf32>,
    %11 = vector.extract_strided_slice %8 {offsets = [16, 0], sizes = [16, 128], strides = [1, 1]} : vector<128x128xf32> to vector<16x128xf32>
    %c0_11 = arith.constant 0 : index
    %c384 = arith.constant 384 : index
    %12 = vector.load %arg9[%c0_11, %c384] : memref<16x2304xf32, #tpu.memory_space<vmem>>, vector<16x128xf32>
    tpu.vector_store %arg9[%c0_11, %c384], %11 {strides = array<i32>} : memref<16x2304xf32, #tpu.memory_space<vmem>>, vector<16x128xf32>,
    %13 = vector.extract_strided_slice %8 {offsets = [32, 0], sizes = [16, 128], strides = [1, 1]} : vector<128x128xf32> to vector<16x128xf32>
    %c0_12 = arith.constant 0 : index
    %c640 = arith.constant 640 : index
    %14 = vector.load %arg9[%c0_12, %c640] : memref<16x2304xf32, #tpu.memory_space<vmem>>, vector<16x128xf32>
    tpu.vector_store %arg9[%c0_12, %c640], %13 {strides = array<i32>} : memref<16x2304xf32, #tpu.memory_space<vmem>>, vector<16x128xf32>,
    %15 = vector.extract_strided_slice %8 {offsets = [48, 0], sizes = [16, 128], strides = [1, 1]} : vector<128x128xf32> to vector<16x128xf32>
    %c0_13 = arith.constant 0 : index
    %c896 = arith.constant 896 : index
    %16 = vector.load %arg9[%c0_13, %c896] : memref<16x2304xf32, #tpu.memory_space<vmem>>, vector<16x128xf32>
    tpu.vector_store %arg9[%c0_13, %c896], %15 {strides = array<i32>} : memref<16x2304xf32, #tpu.memory_space<vmem>>, vector<16x128xf32>,
    %17 = vector.extract_strided_slice %8 {offsets = [64, 0], sizes = [16, 128], strides = [1, 1]} : vector<128x128xf32> to vector<16x128xf32>
    %c0_14 = arith.constant 0 : index
    %c1152 = arith.constant 1152 : index
    %18 = vector.load %arg9[%c0_14, %c1152] : memref<16x2304xf32, #tpu.memory_space<vmem>>, vector<16x128xf32>
    tpu.vector_store %arg9[%c0_14, %c1152], %17 {strides = array<i32>} : memref<16x2304xf32, #tpu.memory_space<vmem>>, vector<16x128xf32>,
    %19 = vector.extract_strided_slice %8 {offsets = [80, 0], sizes = [16, 128], strides = [1, 1]} : vector<128x128xf32> to vector<16x128xf32>
    %c0_15 = arith.constant 0 : index
    %c1408 = arith.constant 1408 : index
    %20 = vector.load %arg9[%c0_15, %c1408] : memref<16x2304xf32, #tpu.memory_space<vmem>>, vector<16x128xf32>
    tpu.vector_store %arg9[%c0_15, %c1408], %19 {strides = array<i32>} : memref<16x2304xf32, #tpu.memory_space<vmem>>, vector<16x128xf32>,
    %21 = vector.extract_strided_slice %8 {offsets = [96, 0], sizes = [16, 128], strides = [1, 1]} : vector<128x128xf32> to vector<16x128xf32>
    %c0_16 = arith.constant 0 : index
    %c1664 = arith.constant 1664 : index
    %22 = vector.load %arg9[%c0_16, %c1664] : memref<16x2304xf32, #tpu.memory_space<vmem>>, vector<16x128xf32>
    tpu.vector_store %arg9[%c0_16, %c1664], %21 {strides = array<i32>} : memref<16x2304xf32, #tpu.memory_space<vmem>>, vector<16x128xf32>,
    %23 = vector.extract_strided_slice %8 {offsets = [112, 0], sizes = [16, 128], strides = [1, 1]} : vector<128x128xf32> to vector<16x128xf32>
    %c0_17 = arith.constant 0 : index
    %c1920 = arith.constant 1920 : index
    %24 = vector.load %arg9[%c0_17, %c1920] : memref<16x2304xf32, #tpu.memory_space<vmem>>, vector<16x128xf32>
    tpu.vector_store %arg9[%c0_17, %c1920], %23 {strides = array<i32>} : memref<16x2304xf32, #tpu.memory_space<vmem>>, vector<16x128xf32>,
    %c0_18 = arith.constant 0 : index
    %c129 = arith.constant 129 : index
    %25 = vector.load %arg9[%c0_18, %c129] : memref<16x2304xf32, #tpu.memory_space<vmem>>, vector<16x2048xf32>
    %c0_19 = arith.constant 0 : index
    %c0_20 = arith.constant 0 : index
    %26 = vector.load %arg10[%c0_19, %c0_20] : memref<240x2048xf32, #tpu.memory_space<vmem>>, vector<16x2048xf32>
    tpu.vector_store %arg10[%c0_19, %c0_20], %25 {strides = array<i32>} : memref<240x2048xf32, #tpu.memory_space<vmem>>, vector<16x2048xf32>,
    %c0_21 = arith.constant 0 : index
    %c128_22 = arith.constant 128 : index
    %27 = vector.load %arg9[%c0_21, %c128_22] : memref<16x2304xf32, #tpu.memory_space<vmem>>, vector<16x2048xf32>
    %c16 = arith.constant 16 : index
    %c0_23 = arith.constant 0 : index
    %28 = vector.load %arg10[%c16, %c0_23] : memref<240x2048xf32, #tpu.memory_space<vmem>>, vector<16x2048xf32>
    tpu.vector_store %arg10[%c16, %c0_23], %27 {strides = array<i32>} : memref<240x2048xf32, #tpu.memory_space<vmem>>, vector<16x2048xf32>,
    %c0_24 = arith.constant 0 : index
    %c127 = arith.constant 127 : index
    %29 = vector.load %arg9[%c0_24, %c127] : memref<16x2304xf32, #tpu.memory_space<vmem>>, vector<16x2048xf32>
    %c32 = arith.constant 32 : index
    %c0_25 = arith.constant 0 : index
    %30 = vector.load %arg10[%c32, %c0_25] : memref<240x2048xf32, #tpu.memory_space<vmem>>, vector<16x2048xf32>
    tpu.vector_store %arg10[%c32, %c0_25], %29 {strides = array<i32>} : memref<240x2048xf32, #tpu.memory_space<vmem>>, vector<16x2048xf32>,
    %c0_26 = arith.constant 0 : index
    %c113 = arith.constant 113 : index
    %31 = vector.load %arg9[%c0_26, %c113] : memref<16x2304xf32, #tpu.memory_space<vmem>>, vector<16x2048xf32>
    %c48 = arith.constant 48 : index
    %c0_27 = arith.constant 0 : index
    %32 = vector.load %arg10[%c48, %c0_27] : memref<240x2048xf32, #tpu.memory_space<vmem>>, vector<16x2048xf32>
    tpu.vector_store %arg10[%c48, %c0_27], %31 {strides = array<i32>} : memref<240x2048xf32, #tpu.memory_space<vmem>>, vector<16x2048xf32>,
    %c0_28 = arith.constant 0 : index
    %c112 = arith.constant 112 : index
    %33 = vector.load %arg9[%c0_28, %c112] : memref<16x2304xf32, #tpu.memory_space<vmem>>, vector<16x2048xf32>
    %c64 = arith.constant 64 : index
    %c0_29 = arith.constant 0 : index
    %34 = vector.load %arg10[%c64, %c0_29] : memref<240x2048xf32, #tpu.memory_space<vmem>>, vector<16x2048xf32>
    tpu.vector_store %arg10[%c64, %c0_29], %33 {strides = array<i32>} : memref<240x2048xf32, #tpu.memory_space<vmem>>, vector<16x2048xf32>,
    %c0_30 = arith.constant 0 : index
    %c111 = arith.constant 111 : index
    %35 = vector.load %arg9[%c0_30, %c111] : memref<16x2304xf32, #tpu.memory_space<vmem>>, vector<16x2048xf32>
    %c80 = arith.constant 80 : index
    %c0_31 = arith.constant 0 : index
    %36 = vector.load %arg10[%c80, %c0_31] : memref<240x2048xf32, #tpu.memory_space<vmem>>, vector<16x2048xf32>
    tpu.vector_store %arg10[%c80, %c0_31], %35 {strides = array<i32>} : memref<240x2048xf32, #tpu.memory_space<vmem>>, vector<16x2048xf32>,
    %c0_32 = arith.constant 0 : index
    %c97 = arith.constant 97 : index
    %37 = vector.load %arg9[%c0_32, %c97] : memref<16x2304xf32, #tpu.memory_space<vmem>>, vector<16x2048xf32>
    %c96 = arith.constant 96 : index
    %c0_33 = arith.constant 0 : index
    %38 = vector.load %arg10[%c96, %c0_33] : memref<240x2048xf32, #tpu.memory_space<vmem>>, vector<16x2048xf32>
    tpu.vector_store %arg10[%c96, %c0_33], %37 {strides = array<i32>} : memref<240x2048xf32, #tpu.memory_space<vmem>>, vector<16x2048xf32>,
    %c0_34 = arith.constant 0 : index
    %c96_35 = arith.constant 96 : index
    %39 = vector.load %arg9[%c0_34, %c96_35] : memref<16x2304xf32, #tpu.memory_space<vmem>>, vector<16x2048xf32>
    %c112_36 = arith.constant 112 : index
    %c0_37 = arith.constant 0 : index
    %40 = vector.load %arg10[%c112_36, %c0_37] : memref<240x2048xf32, #tpu.memory_space<vmem>>, vector<16x2048xf32>
    tpu.vector_store %arg10[%c112_36, %c0_37], %39 {strides = array<i32>} : memref<240x2048xf32, #tpu.memory_space<vmem>>, vector<16x2048xf32>,
    %c0_38 = arith.constant 0 : index
    %c95 = arith.constant 95 : index
    %41 = vector.load %arg9[%c0_38, %c95] : memref<16x2304xf32, #tpu.memory_space<vmem>>, vector<16x2048xf32>
    %c128_39 = arith.constant 128 : index
    %c0_40 = arith.constant 0 : index
    %42 = vector.load %arg10[%c128_39, %c0_40] : memref<240x2048xf32, #tpu.memory_space<vmem>>, vector<16x2048xf32>
    tpu.vector_store %arg10[%c128_39, %c0_40], %41 {strides = array<i32>} : memref<240x2048xf32, #tpu.memory_space<vmem>>, vector<16x2048xf32>,
    %c0_41 = arith.constant 0 : index
    %c81 = arith.constant 81 : index
    %43 = vector.load %arg9[%c0_41, %c81] : memref<16x2304xf32, #tpu.memory_space<vmem>>, vector<16x2048xf32>
    %c144 = arith.constant 144 : index
    %c0_42 = arith.constant 0 : index
    %44 = vector.load %arg10[%c144, %c0_42] : memref<240x2048xf32, #tpu.memory_space<vmem>>, vector<16x2048xf32>
    tpu.vector_store %arg10[%c144, %c0_42], %43 {strides = array<i32>} : memref<240x2048xf32, #tpu.memory_space<vmem>>, vector<16x2048xf32>,
    %c0_43 = arith.constant 0 : index
    %c80_44 = arith.constant 80 : index
    %45 = vector.load %arg9[%c0_43, %c80_44] : memref<16x2304xf32, #tpu.memory_space<vmem>>, vector<16x2048xf32>
    %c160 = arith.constant 160 : index
    %c0_45 = arith.constant 0 : index
    %46 = vector.load %arg10[%c160, %c0_45] : memref<240x2048xf32, #tpu.memory_space<vmem>>, vector<16x2048xf32>
    tpu.vector_store %arg10[%c160, %c0_45], %45 {strides = array<i32>} : memref<240x2048xf32, #tpu.memory_space<vmem>>, vector<16x2048xf32>,
    %c0_46 = arith.constant 0 : index
    %c79 = arith.constant 79 : index
    %47 = vector.load %arg9[%c0_46, %c79] : memref<16x2304xf32, #tpu.memory_space<vmem>>, vector<16x2048xf32>
    %c176 = arith.constant 176 : index
    %c0_47 = arith.constant 0 : index
    %48 = vector.load %arg10[%c176, %c0_47] : memref<240x2048xf32, #tpu.memory_space<vmem>>, vector<16x2048xf32>
    tpu.vector_store %arg10[%c176, %c0_47], %47 {strides = array<i32>} : memref<240x2048xf32, #tpu.memory_space<vmem>>, vector<16x2048xf32>,
    %c0_48 = arith.constant 0 : index
    %c65 = arith.constant 65 : index
    %49 = vector.load %arg9[%c0_48, %c65] : memref<16x2304xf32, #tpu.memory_space<vmem>>, vector<16x2048xf32>
    %c192 = arith.constant 192 : index
    %c0_49 = arith.constant 0 : index
    %50 = vector.load %arg10[%c192, %c0_49] : memref<240x2048xf32, #tpu.memory_space<vmem>>, vector<16x2048xf32>
    tpu.vector_store %arg10[%c192, %c0_49], %49 {strides = array<i32>} : memref<240x2048xf32, #tpu.memory_space<vmem>>, vector<16x2048xf32>,
    %c0_50 = arith.constant 0 : index
    %c64_51 = arith.constant 64 : index
    %51 = vector.load %arg9[%c0_50, %c64_51] : memref<16x2304xf32, #tpu.memory_space<vmem>>, vector<16x2048xf32>
    %c208 = arith.constant 208 : index
    %c0_52 = arith.constant 0 : index
    %52 = vector.load %arg10[%c208, %c0_52] : memref<240x2048xf32, #tpu.memory_space<vmem>>, vector<16x2048xf32>
    tpu.vector_store %arg10[%c208, %c0_52], %51 {strides = array<i32>} : memref<240x2048xf32, #tpu.memory_space<vmem>>, vector<16x2048xf32>,
    %c0_53 = arith.constant 0 : index
    %c63 = arith.constant 63 : index
    %53 = vector.load %arg9[%c0_53, %c63] : memref<16x2304xf32, #tpu.memory_space<vmem>>, vector<16x2048xf32>
    %c224 = arith.constant 224 : index
    %c0_54 = arith.constant 0 : index
    %54 = vector.load %arg10[%c224, %c0_54] : memref<240x2048xf32, #tpu.memory_space<vmem>>, vector<16x2048xf32>
    tpu.vector_store %arg10[%c224, %c0_54], %53 {strides = array<i32>} : memref<240x2048xf32, #tpu.memory_space<vmem>>, vector<16x2048xf32>,
    %c0_55 = arith.constant 0 : index
    %c0_56 = arith.constant 0 : index
    %55 = vector.load %arg3[%c0_55, %c0_56] : memref<16x240xf32, #tpu.memory_space<vmem>>, vector<16x240xf32>
    %c0_57 = arith.constant 0 : index
    %c0_58 = arith.constant 0 : index
    %56 = vector.load %arg10[%c0_57, %c0_58] : memref<240x2048xf32, #tpu.memory_space<vmem>>, vector<240x2048xf32>
    %cst_59 = arith.constant dense<0.000000e+00> : vector<16x2048xf32>
    %57 = tpu.matmul %55, %56, %cst_59 {dimension_numbers = #tpu.dot_dimension_numbers<[1], [0], [0], [1], [0, 0, 1, 1], [], []>} : vector<16x240xf32>, vector<240x2048xf32>, vector<16x2048xf32> -> vector<16x2048xf32>
    %c0_60 = arith.constant 0 : index
    %c0_61 = arith.constant 0 : index
    %58 = vector.load %arg4[%c0_60, %c0_61] : memref<16x2048xf32, #tpu.memory_space<vmem>>, vector<16x2048xf32>
    %59 = arith.mulf %57, %58 : vector<16x2048xf32>
    %c0_62 = arith.constant 0 : index
    %c0_63 = arith.constant 0 : index
    %60 = vector.load %arg5[%c0_62, %c0_63] : memref<16x2048xf32, #tpu.memory_space<vmem>>, vector<16x2048xf32>
    %61 = arith.addf %59, %60 : vector<16x2048xf32>
    %c0_64 = arith.constant 0 : index
    %c0_65 = arith.constant 0 : index
    %62 = vector.load %arg11[%c0_64, %c0_65] : memref<16x2176xf32, #tpu.memory_space<vmem>>, vector<16x2048xf32>
    tpu.vector_store %arg11[%c0_64, %c0_65], %61 {strides = array<i32>} : memref<16x2176xf32, #tpu.memory_space<vmem>>, vector<16x2048xf32>,
    %c0_66 = arith.constant 0 : index
    %c0_67 = arith.constant 0 : index
    %63 = vector.load %arg11[%c0_66, %c0_67] : memref<16x2176xf32, #tpu.memory_space<vmem>>, vector<16x2048xf32>
    %c0_68 = arith.constant 0 : index
    %c0_69 = arith.constant 0 : index
    %64 = vector.load %arg12[%c0_68, %c0_69] : memref<72x2048xf32, #tpu.memory_space<vmem>>, vector<16x2048xf32>
    tpu.vector_store %arg12[%c0_68, %c0_69], %63 {strides = array<i32>} : memref<72x2048xf32, #tpu.memory_space<vmem>>, vector<16x2048xf32>,
    %c0_70 = arith.constant 0 : index
    %c1 = arith.constant 1 : index
    %65 = vector.load %arg11[%c0_70, %c1] : memref<16x2176xf32, #tpu.memory_space<vmem>>, vector<8x2048xf32>
    %c16_71 = arith.constant 16 : index
    %c0_72 = arith.constant 0 : index
    %66 = vector.load %arg12[%c16_71, %c0_72] : memref<72x2048xf32, #tpu.memory_space<vmem>>, vector<8x2048xf32>
    tpu.vector_store %arg12[%c16_71, %c0_72], %65 {strides = array<i32>} : memref<72x2048xf32, #tpu.memory_space<vmem>>, vector<8x2048xf32>,
    %c0_73 = arith.constant 0 : index
    %c16_74 = arith.constant 16 : index
    %67 = vector.load %arg11[%c0_73, %c16_74] : memref<16x2176xf32, #tpu.memory_space<vmem>>, vector<16x2048xf32>
    %c24 = arith.constant 24 : index
    %c0_75 = arith.constant 0 : index
    %68 = vector.load %arg12[%c24, %c0_75] : memref<72x2048xf32, #tpu.memory_space<vmem>>, vector<16x2048xf32>
    tpu.vector_store %arg12[%c24, %c0_75], %67 {strides = array<i32>} : memref<72x2048xf32, #tpu.memory_space<vmem>>, vector<16x2048xf32>,
    %c0_76 = arith.constant 0 : index
    %c17 = arith.constant 17 : index
    %69 = vector.load %arg11[%c0_76, %c17] : memref<16x2176xf32, #tpu.memory_space<vmem>>, vector<8x2048xf32>
    %c40 = arith.constant 40 : index
    %c0_77 = arith.constant 0 : index
    %70 = vector.load %arg12[%c40, %c0_77] : memref<72x2048xf32, #tpu.memory_space<vmem>>, vector<8x2048xf32>
    tpu.vector_store %arg12[%c40, %c0_77], %69 {strides = array<i32>} : memref<72x2048xf32, #tpu.memory_space<vmem>>, vector<8x2048xf32>,
    %c0_78 = arith.constant 0 : index
    %c32_79 = arith.constant 32 : index
    %71 = vector.load %arg11[%c0_78, %c32_79] : memref<16x2176xf32, #tpu.memory_space<vmem>>, vector<16x2048xf32>
    %c48_80 = arith.constant 48 : index
    %c0_81 = arith.constant 0 : index
    %72 = vector.load %arg12[%c48_80, %c0_81] : memref<72x2048xf32, #tpu.memory_space<vmem>>, vector<16x2048xf32>
    tpu.vector_store %arg12[%c48_80, %c0_81], %71 {strides = array<i32>} : memref<72x2048xf32, #tpu.memory_space<vmem>>, vector<16x2048xf32>,
    %c0_82 = arith.constant 0 : index
    %c33 = arith.constant 33 : index
    %73 = vector.load %arg11[%c0_82, %c33] : memref<16x2176xf32, #tpu.memory_space<vmem>>, vector<8x2048xf32>
    %c64_83 = arith.constant 64 : index
    %c0_84 = arith.constant 0 : index
    %74 = vector.load %arg12[%c64_83, %c0_84] : memref<72x2048xf32, #tpu.memory_space<vmem>>, vector<8x2048xf32>
    tpu.vector_store %arg12[%c64_83, %c0_84], %73 {strides = array<i32>} : memref<72x2048xf32, #tpu.memory_space<vmem>>, vector<8x2048xf32>,
    %c0_85 = arith.constant 0 : index
    %c0_86 = arith.constant 0 : index
    %75 = vector.load %arg6[%c0_85, %c0_86] : memref<3x72xf32, #tpu.memory_space<vmem>>, vector<3x72xf32>
    %c0_87 = arith.constant 0 : index
    %c0_88 = arith.constant 0 : index
    %76 = vector.load %arg12[%c0_87, %c0_88] : memref<72x2048xf32, #tpu.memory_space<vmem>>, vector<72x2048xf32>
    %cst_89 = arith.constant dense<0.000000e+00> : vector<3x2048xf32>
    %77 = tpu.matmul %75, %76, %cst_89 {dimension_numbers = #tpu.dot_dimension_numbers<[1], [0], [0], [1], [0, 0, 1, 1], [], []>} : vector<3x72xf32>, vector<72x2048xf32>, vector<3x2048xf32> -> vector<3x2048xf32>
    %c0_90 = arith.constant 0 : index
    %c0_91 = arith.constant 0 : index
    %78 = vector.load %arg7[%c0_90, %c0_91] : memref<3x2048xf32, #tpu.memory_space<vmem>>, vector<3x2048xf32>
    %79 = arith.addf %77, %78 : vector<3x2048xf32>
    %c0_92 = arith.constant 0 : index
    %c0_93 = arith.constant 0 : index
    %80 = vector.load %arg8[%c0_92, %c0_93] : memref<3x2048xf32, #tpu.memory_space<vmem>>, vector<3x2048xf32>
    tpu.vector_store %arg8[%c0_92, %c0_93], %79 {strides = array<i32>} : memref<3x2048xf32, #tpu.memory_space<vmem>>, vector<3x2048xf32>,
    return
  }
}

</mosaic_0001>

<llo_original>
// kernel: _lambda_.1
$region0: #{_lambda_.1}
  #allocation0 [shape = 'u32[]', space=smem, size = 0x4, offset = 0x4, fixed_abs, tag = 'smem constant byte address 0x4 - core index']
  #allocation1 [shape = 'u32[144,128]{1,0:T(1,128)}', space=vmem, size = 0x12000, scoped, tag = 'internal scratch']
  #allocation2 [shape = 'f32[16,2304]{1,0:T(8,128)}', space=vmem, size = 0x24000, scoped, tag = 'scratch operand']
  #allocation3 [shape = 'f32[240,2048]{1,0:T(8,128)}', space=vmem, size = 0x1e0000, scoped, tag = 'scratch operand']
  #allocation4 [shape = 'f32[16,2176]{1,0:T(8,128)}', space=vmem, size = 0x22000, scoped, tag = 'scratch operand']
  #allocation5 [shape = 'f32[72,2048]{1,0:T(8,128)}', space=vmem, size = 0x90000, scoped, tag = 'scratch operand']
  %s0 = inlined_call_operand.vmem [shape: f32[24,128], index: 0, kind: input, shape index: {}]
  %s1 = inlined_call_operand.vmem [shape: f32[128,24], index: 1, kind: input, shape index: {}]
  %s2 = inlined_call_operand.vmem [shape: f32[128,128], index: 2, kind: input, shape index: {}]
  %s3 = inlined_call_operand.vmem [shape: f32[16,240], index: 3, kind: input, shape index: {}]
  %s4 = inlined_call_operand.vmem [shape: f32[16,2048], index: 4, kind: input, shape index: {}]
  %s5 = inlined_call_operand.vmem [shape: f32[16,2048], index: 5, kind: input, shape index: {}]
  %s6 = inlined_call_operand.vmem [shape: f32[3,72], index: 6, kind: input, shape index: {}]
  %s7 = inlined_call_operand.vmem [shape: f32[3,2048], index: 7, kind: input, shape index: {}]
  %s8 = inlined_call_operand.vmem [shape: f32[3,2048], index: 8, kind: output, shape index: {}]
  %s9 = sld [smem:[#allocation0]]
  $region42: #{_lambda_.1} parent=0
    _
  %s11 = ssub.s32 1, %s9
  %s12 = scalar_select 0, %s11, %s9
  // Predicated region
  $region2: #{_lambda_.1} parent=0 // pred_check
    _
  $region3: #{_lambda_.1} parent=0 // pred_check_branch
    %14 = sbr.rel (0) target = $region5
  $region4: #{_lambda_.1} parent=0 // pred_region
    _
  $region5: #{_lambda_.1} parent=0 // pred_fallthru
    _
  // Predicated region
  $region6: #{_lambda_.1} parent=0 // pred_check
    _
  $region7: #{_lambda_.1} parent=0 // pred_check_branch
    %16 = sbr.rel (0) target = $region9
  $region8: #{_lambda_.1} parent=0 // pred_region
    _
  $region9: #{_lambda_.1} parent=0 // pred_fallthru
    _
  // Predicated region
  $region10: #{_lambda_.1} parent=0 // pred_check
    _
  $region11: #{_lambda_.1} parent=0 // pred_check_branch
    %18 = sbr.rel (0) target = $region13
  $region12: #{_lambda_.1} parent=0 // pred_region
    _
  $region13: #{_lambda_.1} parent=0 // pred_fallthru
    _
  // Predicated region
  $region14: #{_lambda_.1} parent=0 // pred_check
    _
  $region15: #{_lambda_.1} parent=0 // pred_check_branch
    %20 = sbr.rel (0) target = $region17
  $region16: #{_lambda_.1} parent=0 // pred_region
    _
  $region17: #{_lambda_.1} parent=0 // pred_fallthru
    _
  // Predicated region
  $region18: #{_lambda_.1} parent=0 // pred_check
    _
  $region19: #{_lambda_.1} parent=0 // pred_check_branch
    %22 = sbr.rel (0) target = $region21
  $region20: #{_lambda_.1} parent=0 // pred_region
    _
  $region21: #{_lambda_.1} parent=0 // pred_fallthru
    _
  // Predicated region
  $region22: #{_lambda_.1} parent=0 // pred_check
    _
  $region23: #{_lambda_.1} parent=0 // pred_check_branch
    %24 = sbr.rel (0) target = $region25
  $region24: #{_lambda_.1} parent=0 // pred_region
    _
  $region25: #{_lambda_.1} parent=0 // pred_fallthru
    _
  // Predicated region
  $region26: #{_lambda_.1} parent=0 // pred_check
    _
  $region27: #{_lambda_.1} parent=0 // pred_check_branch
    %26 = sbr.rel (0) target = $region29
  $region28: #{_lambda_.1} parent=0 // pred_region
    _
  $region29: #{_lambda_.1} parent=0 // pred_fallthru
    _
  // Predicated region
  $region30: #{_lambda_.1} parent=0 // pred_check
    _
  $region31: #{_lambda_.1} parent=0 // pred_check_branch
    %28 = sbr.rel (0) target = $region33
  $region32: #{_lambda_.1} parent=0 // pred_region
    _
  $region33: #{_lambda_.1} parent=0 // pred_fallthru
    _
  %29 = vst [vmem:[#allocation2] sm:$0xff] 0.0
  %30 = vst [vmem:[#allocation2 + $0x8] sm:$0xff] 0.0
  %31 = vst [vmem:[#allocation2 + $0x10] sm:$0xff] 0.0
  %32 = vst [vmem:[#allocation2 + $0x18] sm:$0xff] 0.0
  %33 = vst [vmem:[#allocation2 + $0x20] sm:$0xff] 0.0
  %34 = vst [vmem:[#allocation2 + $0x28] sm:$0xff] 0.0
  %35 = vst [vmem:[#allocation2 + $0x30] sm:$0xff] 0.0
  %36 = vst [vmem:[#allocation2 + $0x38] sm:$0xff] 0.0
  %37 = vst [vmem:[#allocation2 + $0x40] sm:$0xff] 0.0
  %38 = vst [vmem:[#allocation2 + $0x48] sm:$0xff] 0.0
  %39 = vst [vmem:[#allocation2 + $0x50] sm:$0xff] 0.0
  %40 = vst [vmem:[#allocation2 + $0x58] sm:$0xff] 0.0
  %41 = vst [vmem:[#allocation2 + $0x60] sm:$0xff] 0.0
  %42 = vst [vmem:[#allocation2 + $0x68] sm:$0xff] 0.0
  %43 = vst [vmem:[#allocation2 + $0x70] sm:$0xff] 0.0
  %44 = vst [vmem:[#allocation2 + $0x78] sm:$0xff] 0.0
  %45 = vst [vmem:[#allocation2 + $0x80] sm:$0xff] 0.0
  %46 = vst [vmem:[#allocation2 + $0x88] sm:$0xff] 0.0
  %47 = vst [vmem:[#allocation2 + $0x90] sm:$0xff] 0.0
  %48 = vst [vmem:[#allocation2 + $0x98] sm:$0xff] 0.0
  %49 = vst [vmem:[#allocation2 + $0xa0] sm:$0xff] 0.0
  %50 = vst [vmem:[#allocation2 + $0xa8] sm:$0xff] 0.0
  %51 = vst [vmem:[#allocation2 + $0xb0] sm:$0xff] 0.0
  %52 = vst [vmem:[#allocation2 + $0xb8] sm:$0xff] 0.0
  %53 = vst [vmem:[#allocation2 + $0xc0] sm:$0xff] 0.0
  %54 = vst [vmem:[#allocation2 + $0xc8] sm:$0xff] 0.0
  %55 = vst [vmem:[#allocation2 + $0xd0] sm:$0xff] 0.0
  %56 = vst [vmem:[#allocation2 + $0xd8] sm:$0xff] 0.0
  %57 = vst [vmem:[#allocation2 + $0xe0] sm:$0xff] 0.0
  %58 = vst [vmem:[#allocation2 + $0xe8] sm:$0xff] 0.0
  %59 = vst [vmem:[#allocation2 + $0xf0] sm:$0xff] 0.0
  %60 = vst [vmem:[#allocation2 + $0xf8] sm:$0xff] 0.0
  %61 = vst [vmem:[#allocation2 + $0x100] sm:$0xff] 0.0
  %62 = vst [vmem:[#allocation2 + $0x108] sm:$0xff] 0.0
  %63 = vst [vmem:[#allocation2 + $0x110] sm:$0xff] 0.0
  %64 = vst [vmem:[#allocation2 + $0x118] sm:$0xff] 0.0
  %65 = vst [vmem:[#allocation4 + $0x80] sm:$0xff] 0.0
  %66 = vst [vmem:[#allocation4 + $0x108] sm:$0xff] 0.0
  %v67 = vld [vmem:[%s1] sm:$0xff]
  %v68 = vld [vmem:[%s1 + $0x8] sm:$0xff]
  %v69 = vld [vmem:[%s1 + $0x10] sm:$0xff]
  %v70 = vld [vmem:[%s1 + $0x18] sm:$0xff]
  %v71 = vld [vmem:[%s1 + $0x20] sm:$0xff]
  %v72 = vld [vmem:[%s1 + $0x28] sm:$0xff]
  %v73 = vld [vmem:[%s1 + $0x30] sm:$0xff]
  %v74 = vld [vmem:[%s1 + $0x38] sm:$0xff]
  %v75 = vld [vmem:[%s1 + $0x40] sm:$0xff]
  %v76 = vld [vmem:[%s1 + $0x48] sm:$0xff]
  %v77 = vld [vmem:[%s1 + $0x50] sm:$0xff]
  %v78 = vld [vmem:[%s1 + $0x58] sm:$0xff]
  %v79 = vld [vmem:[%s1 + $0x60] sm:$0xff]
  %v80 = vld [vmem:[%s1 + $0x68] sm:$0xff]
  %v81 = vld [vmem:[%s1 + $0x70] sm:$0xff]
  %v82 = vld [vmem:[%s1 + $0x78] sm:$0xff]
  %v83 = vld [vmem:[%s0] sm:$0xff]
  %v84 = vld [vmem:[%s0 + $0x8] sm:$0xff]
  %v85 = vld [vmem:[%s0 + $0x10] sm:$0xff]
  %v86 = vld [vmem:[%s2] sm:$0xff]
  %v87 = vld [vmem:[%s2 + $0x8] sm:$0xff]
  %v88 = vld [vmem:[%s2 + $0x10] sm:$0xff]
  %v89 = vld [vmem:[%s2 + $0x18] sm:$0xff]
  %v90 = vld [vmem:[%s2 + $0x20] sm:$0xff]
  %v91 = vld [vmem:[%s2 + $0x28] sm:$0xff]
  %v92 = vld [vmem:[%s2 + $0x30] sm:$0xff]
  %v93 = vld [vmem:[%s2 + $0x38] sm:$0xff]
  %v94 = vld [vmem:[%s2 + $0x40] sm:$0xff]
  %v95 = vld [vmem:[%s2 + $0x48] sm:$0xff]
  %v96 = vld [vmem:[%s2 + $0x50] sm:$0xff]
  %v97 = vld [vmem:[%s2 + $0x58] sm:$0xff]
  %v98 = vld [vmem:[%s2 + $0x60] sm:$0xff]
  %v99 = vld [vmem:[%s2 + $0x68] sm:$0xff]
  %v100 = vld [vmem:[%s2 + $0x70] sm:$0xff]
  %v101 = vld [vmem:[%s2 + $0x78] sm:$0xff]
  %vm102 = vcmask 195584
  %v104 = vsel %vm102, %v67, 0
  %v107 = vsel %vm102, %v68, 0
  %v110 = vsel %vm102, %v69, 0
  %v113 = vsel %vm102, %v70, 0
  %v116 = vsel %vm102, %v71, 0
  %v119 = vsel %vm102, %v72, 0
  %v122 = vsel %vm102, %v73, 0
  %v125 = vsel %vm102, %v74, 0
  %v128 = vsel %vm102, %v75, 0
  %v131 = vsel %vm102, %v76, 0
  %v134 = vsel %vm102, %v77, 0
  %v137 = vsel %vm102, %v78, 0
  %v140 = vsel %vm102, %v79, 0
  %v143 = vsel %vm102, %v80, 0
  %v146 = vsel %vm102, %v81, 0
  %v149 = vsel %vm102, %v82, 0
  %151 = vmatprep.subr.mxu0 0.0
  %152 = vmatpush1.msra.mxu0 %v83
  %153 = vmatprep.subr.mxu0 0.0
  %154 = vmatpush1.msra.mxu0 %v84
  %155 = vmatprep.subr.mxu0 0.0
  %156 = vmatpush1.msra.mxu0 %v85
  %157 = vmatprep.subr.mxu0 0.0
  %158 = vmatpush1.msra.mxu0 0.0
  %159 = vmatprep.subr.mxu0 0.0
  %160 = vmatpush1.msra.mxu0 0.0
  %161 = vmatprep.subr.mxu0 0.0
  %162 = vmatpush1.msra.mxu0 0.0
  %163 = vmatprep.subr.mxu0 0.0
  %164 = vmatpush1.msra.mxu0 0.0
  %165 = vmatprep.subr.mxu0 0.0
  %166 = vmatpush1.msra.mxu0 0.0
  %167 = vmatprep.subr.mxu0 0.0
  %168 = vmatpush1.msra.mxu0 0.0
  %169 = vmatprep.subr.mxu0 0.0
  %170 = vmatpush1.msra.mxu0 0.0
  %171 = vmatprep.subr.mxu0 0.0
  %172 = vmatpush1.msra.mxu0 0.0
  %173 = vmatprep.subr.mxu0 0.0
  %174 = vmatpush1.msra.mxu0 0.0
  %175 = vmatprep.subr.mxu0 0.0
  %176 = vmatpush1.msra.mxu0 0.0
  %177 = vmatprep.subr.mxu0 0.0
  %178 = vmatpush1.msra.mxu0 0.0
  %179 = vmatprep.subr.mxu0 0.0
  %180 = vmatpush1.msra.mxu0 0.0
  %181 = vmatprep.subr.mxu0 0.0
  %182 = vmatpush1.msra.mxu0 0.0
  %183 = vmatprep.subr.mxu0 0.0
  %184 = vmatpush1.msra.mxu0 0.0
  %185 = vmatprep.subr.mxu0 0.0
  %186 = vmatpush1.msra.mxu0 0.0
  %187 = vmatprep.subr.mxu0 0.0
  %188 = vmatpush1.msra.mxu0 0.0
  %189 = vmatprep.subr.mxu0 0.0
  %190 = vmatpush1.msra.mxu0 0.0
  %191 = vmatprep.subr.mxu0 0.0
  %192 = vmatpush1.msra.mxu0 0.0
  %193 = vmatprep.subr.mxu0 0.0
  %194 = vmatpush1.msra.mxu0 0.0
  %195 = vmatprep.subr.mxu0 0.0
  %196 = vmatpush1.msra.mxu0 0.0
  %197 = vmatprep.subr.mxu0 0.0
  %198 = vmatpush1.msra.mxu0 0.0
  %199 = vmatprep.subr.mxu0 0.0
  %200 = vmatpush1.msra.mxu0 0.0
  %201 = vmatprep.subr.mxu0 0.0
  %202 = vmatpush1.msra.mxu0 0.0
  %203 = vmatprep.subr.mxu0 0.0
  %204 = vmatpush1.msra.mxu0 0.0
  %205 = vmatprep.subr.mxu0 0.0
  %206 = vmatpush1.msra.mxu0 0.0
  %207 = vmatprep.subr.mxu0 0.0
  %208 = vmatpush1.msra.mxu0 0.0
  %209 = vmatprep.subr.mxu0 0.0
  %210 = vmatpush1.msra.mxu0 0.0
  %211 = vmatprep.subr.mxu0 0.0
  %212 = vmatpush1.msra.mxu0 0.0
  %213 = vmatprep.subr.mxu0 0.0
  %214 = vmatpush1.msra.mxu0 0.0
  %215 = vmatprep.mubr.f32.mxu0 0.0
  %216 = vmatmul.mubr.f32.gmra.mrb[0].mxu0 %v104
  %v217 = vpop.f32.mrb[0].mxu0
  %v218 = vadd.f32 %v86, %v217
  %v219 = vpop.f32.mrb[0].mxu0
  %220 = vmatprep.mubr.f32.mxu0 0.0
  %221 = vmatmul.mubr.f32.gmra.mrb[0].mxu0 %v107
  %v222 = vpop.f32.mrb[0].mxu0
  %v223 = vadd.f32 %v87, %v222
  %v224 = vpop.f32.mrb[0].mxu0
  %225 = vmatprep.mubr.f32.mxu0 0.0
  %226 = vmatmul.mubr.f32.gmra.mrb[0].mxu0 %v110
  %v227 = vpop.f32.mrb[0].mxu0
  %v228 = vadd.f32 %v88, %v227
  %v229 = vpop.f32.mrb[0].mxu0
  %230 = vmatprep.mubr.f32.mxu0 0.0
  %231 = vmatmul.mubr.f32.gmra.mrb[0].mxu0 %v113
  %v232 = vpop.f32.mrb[0].mxu0
  %v233 = vadd.f32 %v89, %v232
  %v234 = vpop.f32.mrb[0].mxu0
  %235 = vmatprep.mubr.f32.mxu0 0.0
  %236 = vmatmul.mubr.f32.gmra.mrb[0].mxu0 %v116
  %v237 = vpop.f32.mrb[0].mxu0
  %v238 = vadd.f32 %v90, %v237
  %v239 = vpop.f32.mrb[0].mxu0
  %240 = vmatprep.mubr.f32.mxu0 0.0
  %241 = vmatmul.mubr.f32.gmra.mrb[0].mxu0 %v119
  %v242 = vpop.f32.mrb[0].mxu0
  %v243 = vadd.f32 %v91, %v242
  %v244 = vpop.f32.mrb[0].mxu0
  %245 = vmatprep.mubr.f32.mxu0 0.0
  %246 = vmatmul.mubr.f32.gmra.mrb[0].mxu0 %v122
  %v247 = vpop.f32.mrb[0].mxu0
  %v248 = vadd.f32 %v92, %v247
  %v249 = vpop.f32.mrb[0].mxu0
  %250 = vmatprep.mubr.f32.mxu0 0.0
  %251 = vmatmul.mubr.f32.gmra.mrb[0].mxu0 %v125
  %v252 = vpop.f32.mrb[0].mxu0
  %v253 = vadd.f32 %v93, %v252
  %v254 = vpop.f32.mrb[0].mxu0
  %255 = vmatprep.mubr.f32.mxu0 0.0
  %256 = vmatmul.mubr.f32.gmra.mrb[0].mxu0 %v128
  %v257 = vpop.f32.mrb[0].mxu0
  %v258 = vadd.f32 %v94, %v257
  %v259 = vpop.f32.mrb[0].mxu0
  %260 = vmatprep.mubr.f32.mxu0 0.0
  %261 = vmatmul.mubr.f32.gmra.mrb[0].mxu0 %v131
  %v262 = vpop.f32.mrb[0].mxu0
  %v263 = vadd.f32 %v95, %v262
  %v264 = vpop.f32.mrb[0].mxu0
  %265 = vmatprep.mubr.f32.mxu0 0.0
  %266 = vmatmul.mubr.f32.gmra.mrb[0].mxu0 %v134
  %v267 = vpop.f32.mrb[0].mxu0
  %v268 = vadd.f32 %v96, %v267
  %v269 = vpop.f32.mrb[0].mxu0
  %270 = vmatprep.mubr.f32.mxu0 0.0
  %271 = vmatmul.mubr.f32.gmra.mrb[0].mxu0 %v137
  %v272 = vpop.f32.mrb[0].mxu0
  %v273 = vadd.f32 %v97, %v272
  %v274 = vpop.f32.mrb[0].mxu0
  %275 = vmatprep.mubr.f32.mxu0 0.0
  %276 = vmatmul.mubr.f32.gmra.mrb[0].mxu0 %v140
  %v277 = vpop.f32.mrb[0].mxu0
  %v278 = vadd.f32 %v98, %v277
  %v279 = vpop.f32.mrb[0].mxu0
  %280 = vmatprep.mubr.f32.mxu0 0.0
  %281 = vmatmul.mubr.f32.gmra.mrb[0].mxu0 %v143
  %v282 = vpop.f32.mrb[0].mxu0
  %v283 = vadd.f32 %v99, %v282
  %v284 = vpop.f32.mrb[0].mxu0
  %285 = vmatprep.mubr.f32.mxu0 0.0
  %286 = vmatmul.mubr.f32.gmra.mrb[0].mxu0 %v146
  %v287 = vpop.f32.mrb[0].mxu0
  %v288 = vadd.f32 %v100, %v287
  %v289 = vpop.f32.mrb[0].mxu0
  %290 = vmatprep.mubr.f32.mxu0 0.0
  %291 = vmatmul.mubr.f32.gmra.mrb[0].mxu0 %v149
  %v292 = vpop.f32.mrb[0].mxu0
  %v293 = vadd.f32 %v101, %v292
  %v294 = vpop.f32.mrb[0].mxu0
  %295 = vdwg.mxu0
  %296 = vst [vmem:[#allocation2 + $0x8] sm:$0xff] %v218
  %297 = vst [vmem:[#allocation2 + $0x98] sm:$0xff] %v223
  %298 = vst [vmem:[#allocation2 + $0x18] sm:$0xff] %v228
  %299 = vst [vmem:[#allocation2 + $0xa8] sm:$0xff] %v233
  %300 = vst [vmem:[#allocation2 + $0x28] sm:$0xff] %v238
  %301 = vst [vmem:[#allocation2 + $0xb8] sm:$0xff] %v243
  %302 = vst [vmem:[#allocation2 + $0x38] sm:$0xff] %v248
  %303 = vst [vmem:[#allocation2 + $0xc8] sm:$0xff] %v253
  %304 = vst [vmem:[#allocation2 + $0x48] sm:$0xff] %v258
  %305 = vst [vmem:[#allocation2 + $0xd8] sm:$0xff] %v263
  %306 = vst [vmem:[#allocation2 + $0x58] sm:$0xff] %v268
  %307 = vst [vmem:[#allocation2 + $0xe8] sm:$0xff] %v273
  %308 = vst [vmem:[#allocation2 + $0x68] sm:$0xff] %v278
  %309 = vst [vmem:[#allocation2 + $0xf8] sm:$0xff] %v283
  %310 = vst [vmem:[#allocation2 + $0x78] sm:$0xff] %v288
  %311 = vst [vmem:[#allocation2 + $0x108] sm:$0xff] %v293
  %v312 = vld [vmem:[#allocation2 + $0x8] sm:$0xff]
  %v313 = vld [vmem:[#allocation2 + $0x10] sm:$0xff]
  %v314 = vld [vmem:[#allocation2 + $0x18] sm:$0xff]
  %v315 = vld [vmem:[#allocation2 + $0x20] sm:$0xff]
  %v316 = vld [vmem:[#allocation2 + $0x28] sm:$0xff]
  %v317 = vld [vmem:[#allocation2 + $0x30] sm:$0xff]
  %v318 = vld [vmem:[#allocation2 + $0x38] sm:$0xff]
  %v319 = vld [vmem:[#allocation2 + $0x40] sm:$0xff]
  %v320 = vld [vmem:[#allocation2 + $0x48] sm:$0xff]
  %v321 = vld [vmem:[#allocation2 + $0x50] sm:$0xff]
  %v322 = vld [vmem:[#allocation2 + $0x58] sm:$0xff]
  %v323 = vld [vmem:[#allocation2 + $0x60] sm:$0xff]
  %v324 = vld [vmem:[#allocation2 + $0x68] sm:$0xff]
  %v325 = vld [vmem:[#allocation2 + $0x70] sm:$0xff]
  %v326 = vld [vmem:[#allocation2 + $0x78] sm:$0xff]
  %v327 = vld [vmem:[#allocation2 + $0x80] sm:$0xff]
  %v328 = vld [vmem:[#allocation2 + $0x88] sm:$0xff]
  %v329 = vld [vmem:[#allocation2 + $0x98] sm:$0xff]
  %v330 = vld [vmem:[#allocation2 + $0xa0] sm:$0xff]
  %v331 = vld [vmem:[#allocation2 + $0xa8] sm:$0xff]
  %v332 = vld [vmem:[#allocation2 + $0xb0] sm:$0xff]
  %v333 = vld [vmem:[#allocation2 + $0xb8] sm:$0xff]
  %v334 = vld [vmem:[#allocation2 + $0xc0] sm:$0xff]
  %v335 = vld [vmem:[#allocation2 + $0xc8] sm:$0xff]
  %v336 = vld [vmem:[#allocation2 + $0xd0] sm:$0xff]
  %v337 = vld [vmem:[#allocation2 + $0xd8] sm:$0xff]
  %v338 = vld [vmem:[#allocation2 + $0xe0] sm:$0xff]
  %v339 = vld [vmem:[#allocation2 + $0xe8] sm:$0xff]
  %v340 = vld [vmem:[#allocation2 + $0xf0] sm:$0xff]
  %v341 = vld [vmem:[#allocation2 + $0xf8] sm:$0xff]
  %v342 = vld [vmem:[#allocation2 + $0x100] sm:$0xff]
  %v343 = vld [vmem:[#allocation2 + $0x108] sm:$0xff]
  %v344 = vld [vmem:[#allocation2 + $0x110] sm:$0xff]
  %v345 = vld [vmem:[#allocation2 + $0x118] sm:$0xff]
  %380 = vrot.lane.b32.xlu0 %v312, 127
  %v381 = vpop.permute.xlu0 %380
  %382 = vrot.lane.b32.xlu0 %v313, 127
  %v383 = vpop.permute.xlu0 %382
  %384 = vrot.lane.b32.xlu0 %v314, 127
  %v385 = vpop.permute.xlu0 %384
  %386 = vrot.lane.b32.xlu0 %v315, 127
  %v387 = vpop.permute.xlu0 %386
  %388 = vrot.lane.b32.xlu0 %v316, 127
  %v389 = vpop.permute.xlu0 %388
  %390 = vrot.lane.b32.xlu0 %v317, 127
  %v391 = vpop.permute.xlu0 %390
  %392 = vrot.lane.b32.xlu0 %v318, 127
  %v393 = vpop.permute.xlu0 %392
  %394 = vrot.lane.b32.xlu0 %v319, 127
  %v395 = vpop.permute.xlu0 %394
  %396 = vrot.lane.b32.xlu0 %v320, 127
  %v397 = vpop.permute.xlu0 %396
  %398 = vrot.lane.b32.xlu0 %v321, 127
  %v399 = vpop.permute.xlu0 %398
  %400 = vrot.lane.b32.xlu0 %v322, 127
  %v401 = vpop.permute.xlu0 %400
  %402 = vrot.lane.b32.xlu0 %v323, 127
  %v403 = vpop.permute.xlu0 %402
  %404 = vrot.lane.b32.xlu0 %v324, 127
  %v405 = vpop.permute.xlu0 %404
  %406 = vrot.lane.b32.xlu0 %v325, 127
  %v407 = vpop.permute.xlu0 %406
  %408 = vrot.lane.b32.xlu0 %v326, 127
  %v409 = vpop.permute.xlu0 %408
  %410 = vrot.lane.b32.xlu0 %v327, 127
  %v411 = vpop.permute.xlu0 %410
  %412 = vrot.lane.b32.xlu0 %v328, 127
  %v413 = vpop.permute.xlu0 %412
  %414 = vrot.lane.b32.xlu0 %v329, 127
  %v415 = vpop.permute.xlu0 %414
  %416 = vrot.lane.b32.xlu0 %v330, 127
  %v417 = vpop.permute.xlu0 %416
  %418 = vrot.lane.b32.xlu0 %v331, 127
  %v419 = vpop.permute.xlu0 %418
  %420 = vrot.lane.b32.xlu0 %v332, 127
  %v421 = vpop.permute.xlu0 %420
  %422 = vrot.lane.b32.xlu0 %v333, 127
  %v423 = vpop.permute.xlu0 %422
  %424 = vrot.lane.b32.xlu0 %v334, 127
  %v425 = vpop.permute.xlu0 %424
  %426 = vrot.lane.b32.xlu0 %v335, 127
  %v427 = vpop.permute.xlu0 %426
  %428 = vrot.lane.b32.xlu0 %v336, 127
  %v429 = vpop.permute.xlu0 %428
  %430 = vrot.lane.b32.xlu0 %v337, 127
  %v431 = vpop.permute.xlu0 %430
  %432 = vrot.lane.b32.xlu0 %v338, 127
  %v433 = vpop.permute.xlu0 %432
  %434 = vrot.lane.b32.xlu0 %v339, 127
  %v435 = vpop.permute.xlu0 %434
  %436 = vrot.lane.b32.xlu0 %v340, 127
  %v437 = vpop.permute.xlu0 %436
  %438 = vrot.lane.b32.xlu0 %v341, 127
  %v439 = vpop.permute.xlu0 %438
  %440 = vrot.lane.b32.xlu0 %v342, 127
  %v441 = vpop.permute.xlu0 %440
  %442 = vrot.lane.b32.xlu0 %v343, 127
  %v443 = vpop.permute.xlu0 %442
  %444 = vrot.lane.b32.xlu0 %v344, 127
  %v445 = vpop.permute.xlu0 %444
  %446 = vrot.lane.b32.xlu0 %v345, 127
  %v447 = vpop.permute.xlu0 %446
  %vm448 = vcmask 1039360
  %v449 = vsel %vm448, %v381, %v383
  %v450 = vsel %vm448, %v383, %v385
  %v451 = vsel %vm448, %v385, %v387
  %v452 = vsel %vm448, %v387, %v389
  %v453 = vsel %vm448, %v389, %v391
  %v454 = vsel %vm448, %v391, %v393
  %v455 = vsel %vm448, %v393, %v395
  %v456 = vsel %vm448, %v395, %v397
  %v457 = vsel %vm448, %v397, %v399
  %v458 = vsel %vm448, %v399, %v401
  %v459 = vsel %vm448, %v401, %v403
  %v460 = vsel %vm448, %v403, %v405
  %v461 = vsel %vm448, %v405, %v407
  %v462 = vsel %vm448, %v407, %v409
  %v463 = vsel %vm448, %v409, %v411
  %v464 = vsel %vm448, %v411, %v413
  %v465 = vsel %vm448, %v415, %v417
  %v466 = vsel %vm448, %v417, %v419
  %v467 = vsel %vm448, %v419, %v421
  %v468 = vsel %vm448, %v421, %v423
  %v469 = vsel %vm448, %v423, %v425
  %v470 = vsel %vm448, %v425, %v427
  %v471 = vsel %vm448, %v427, %v429
  %v472 = vsel %vm448, %v429, %v431
  %v473 = vsel %vm448, %v431, %v433
  %v474 = vsel %vm448, %v433, %v435
  %v475 = vsel %vm448, %v435, %v437
  %v476 = vsel %vm448, %v437, %v439
  %v477 = vsel %vm448, %v439, %v441
  %v478 = vsel %vm448, %v441, %v443
  %v479 = vsel %vm448, %v443, %v445
  %v480 = vsel %vm448, %v445, %v447
  %513 = vst [vmem:[#allocation3] sm:$0xff] %v449
  %514 = vst [vmem:[#allocation3 + $0x8] sm:$0xff] %v450
  %515 = vst [vmem:[#allocation3 + $0x10] sm:$0xff] %v451
  %516 = vst [vmem:[#allocation3 + $0x18] sm:$0xff] %v452
  %517 = vst [vmem:[#allocation3 + $0x20] sm:$0xff] %v453
  %518 = vst [vmem:[#allocation3 + $0x28] sm:$0xff] %v454
  %519 = vst [vmem:[#allocation3 + $0x30] sm:$0xff] %v455
  %520 = vst [vmem:[#allocation3 + $0x38] sm:$0xff] %v456
  %521 = vst [vmem:[#allocation3 + $0x40] sm:$0xff] %v457
  %522 = vst [vmem:[#allocation3 + $0x48] sm:$0xff] %v458
  %523 = vst [vmem:[#allocation3 + $0x50] sm:$0xff] %v459
  %524 = vst [vmem:[#allocation3 + $0x58] sm:$0xff] %v460
  %525 = vst [vmem:[#allocation3 + $0x60] sm:$0xff] %v461
  %526 = vst [vmem:[#allocation3 + $0x68] sm:$0xff] %v462
  %527 = vst [vmem:[#allocation3 + $0x70] sm:$0xff] %v463
  %528 = vst [vmem:[#allocation3 + $0x78] sm:$0xff] %v464
  %529 = vst [vmem:[#allocation3 + $0x80] sm:$0xff] %v465
  %530 = vst [vmem:[#allocation3 + $0x88] sm:$0xff] %v466
  %531 = vst [vmem:[#allocation3 + $0x90] sm:$0xff] %v467
  %532 = vst [vmem:[#allocation3 + $0x98] sm:$0xff] %v468
  %533 = vst [vmem:[#allocation3 + $0xa0] sm:$0xff] %v469
  %534 = vst [vmem:[#allocation3 + $0xa8] sm:$0xff] %v470
  %535 = vst [vmem:[#allocation3 + $0xb0] sm:$0xff] %v471
  %536 = vst [vmem:[#allocation3 + $0xb8] sm:$0xff] %v472
  %537 = vst [vmem:[#allocation3 + $0xc0] sm:$0xff] %v473
  %538 = vst [vmem:[#allocation3 + $0xc8] sm:$0xff] %v474
  %539 = vst [vmem:[#allocation3 + $0xd0] sm:$0xff] %v475
  %540 = vst [vmem:[#allocation3 + $0xd8] sm:$0xff] %v476
  %541 = vst [vmem:[#allocation3 + $0xe0] sm:$0xff] %v477
  %542 = vst [vmem:[#allocation3 + $0xe8] sm:$0xff] %v478
  %543 = vst [vmem:[#allocation3 + $0xf0] sm:$0xff] %v479
  %544 = vst [vmem:[#allocation3 + $0xf8] sm:$0xff] %v480
  %v545 = vld [vmem:[#allocation2 + $0x8] sm:$0xff]
  %v546 = vld [vmem:[#allocation2 + $0x10] sm:$0xff]
  %v547 = vld [vmem:[#allocation2 + $0x18] sm:$0xff]
  %v548 = vld [vmem:[#allocation2 + $0x20] sm:$0xff]
  %v549 = vld [vmem:[#allocation2 + $0x28] sm:$0xff]
  %v550 = vld [vmem:[#allocation2 + $0x30] sm:$0xff]
  %v551 = vld [vmem:[#allocation2 + $0x38] sm:$0xff]
  %v552 = vld [vmem:[#allocation2 + $0x40] sm:$0xff]
  %v553 = vld [vmem:[#allocation2 + $0x48] sm:$0xff]
  %v554 = vld [vmem:[#allocation2 + $0x50] sm:$0xff]
  %v555 = vld [vmem:[#allocation2 + $0x58] sm:$0xff]
  %v556 = vld [vmem:[#allocation2 + $0x60] sm:$0xff]
  %v557 = vld [vmem:[#allocation2 + $0x68] sm:$0xff]
  %v558 = vld [vmem:[#allocation2 + $0x70] sm:$0xff]
  %v559 = vld [vmem:[#allocation2 + $0x78] sm:$0xff]
  %v560 = vld [vmem:[#allocation2 + $0x80] sm:$0xff]
  %v561 = vld [vmem:[#allocation2 + $0x98] sm:$0xff]
  %v562 = vld [vmem:[#allocation2 + $0xa0] sm:$0xff]
  %v563 = vld [vmem:[#allocation2 + $0xa8] sm:$0xff]
  %v564 = vld [vmem:[#allocation2 + $0xb0] sm:$0xff]
  %v565 = vld [vmem:[#allocation2 + $0xb8] sm:$0xff]
  %v566 = vld [vmem:[#allocation2 + $0xc0] sm:$0xff]
  %v567 = vld [vmem:[#allocation2 + $0xc8] sm:$0xff]
  %v568 = vld [vmem:[#allocation2 + $0xd0] sm:$0xff]
  %v569 = vld [vmem:[#allocation2 + $0xd8] sm:$0xff]
  %v570 = vld [vmem:[#allocation2 + $0xe0] sm:$0xff]
  %v571 = vld [vmem:[#allocation2 + $0xe8] sm:$0xff]
  %v572 = vld [vmem:[#allocation2 + $0xf0] sm:$0xff]
  %v573 = vld [vmem:[#allocation2 + $0xf8] sm:$0xff]
  %v574 = vld [vmem:[#allocation2 + $0x100] sm:$0xff]
  %v575 = vld [vmem:[#allocation2 + $0x108] sm:$0xff]
  %v576 = vld [vmem:[#allocation2 + $0x110] sm:$0xff]
  %577 = vst [vmem:[#allocation3 + $0x100] sm:$0xff] %v545
  %578 = vst [vmem:[#allocation3 + $0x108] sm:$0xff] %v546
  %579 = vst [vmem:[#allocation3 + $0x110] sm:$0xff] %v547
  %580 = vst [vmem:[#allocation3 + $0x118] sm:$0xff] %v548
  %581 = vst [vmem:[#allocation3 + $0x120] sm:$0xff] %v549
  %582 = vst [vmem:[#allocation3 + $0x128] sm:$0xff] %v550
  %583 = vst [vmem:[#allocation3 + $0x130] sm:$0xff] %v551
  %584 = vst [vmem:[#allocation3 + $0x138] sm:$0xff] %v552
  %585 = vst [vmem:[#allocation3 + $0x140] sm:$0xff] %v553
  %586 = vst [vmem:[#allocation3 + $0x148] sm:$0xff] %v554
  %587 = vst [vmem:[#allocation3 + $0x150] sm:$0xff] %v555
  %588 = vst [vmem:[#allocation3 + $0x158] sm:$0xff] %v556
  %589 = vst [vmem:[#allocation3 + $0x160] sm:$0xff] %v557
  %590 = vst [vmem:[#allocation3 + $0x168] sm:$0xff] %v558
  %591 = vst [vmem:[#allocation3 + $0x170] sm:$0xff] %v559
  %592 = vst [vmem:[#allocation3 + $0x178] sm:$0xff] %v560
  %593 = vst [vmem:[#allocation3 + $0x180] sm:$0xff] %v561
  %594 = vst [vmem:[#allocation3 + $0x188] sm:$0xff] %v562
  %595 = vst [vmem:[#allocation3 + $0x190] sm:$0xff] %v563
  %596 = vst [vmem:[#allocation3 + $0x198] sm:$0xff] %v564
  %597 = vst [vmem:[#allocation3 + $0x1a0] sm:$0xff] %v565
  %598 = vst [vmem:[#allocation3 + $0x1a8] sm:$0xff] %v566
  %599 = vst [vmem:[#allocation3 + $0x1b0] sm:$0xff] %v567
  %600 = vst [vmem:[#allocation3 + $0x1b8] sm:$0xff] %v568
  %601 = vst [vmem:[#allocation3 + $0x1c0] sm:$0xff] %v569
  %602 = vst [vmem:[#allocation3 + $0x1c8] sm:$0xff] %v570
  %603 = vst [vmem:[#allocation3 + $0x1d0] sm:$0xff] %v571
  %604 = vst [vmem:[#allocation3 + $0x1d8] sm:$0xff] %v572
  %605 = vst [vmem:[#allocation3 + $0x1e0] sm:$0xff] %v573
  %606 = vst [vmem:[#allocation3 + $0x1e8] sm:$0xff] %v574
  %607 = vst [vmem:[#allocation3 + $0x1f0] sm:$0xff] %v575
  %608 = vst [vmem:[#allocation3 + $0x1f8] sm:$0xff] %v576
  %v609 = vld [vmem:[#allocation2] sm:$0xff]
  %v610 = vld [vmem:[#allocation2 + $0x8] sm:$0xff]
  %v611 = vld [vmem:[#allocation2 + $0x10] sm:$0xff]
  %v612 = vld [vmem:[#allocation2 + $0x18] sm:$0xff]
  %v613 = vld [vmem:[#allocation2 + $0x20] sm:$0xff]
  %v614 = vld [vmem:[#allocation2 + $0x28] sm:$0xff]
  %v615 = vld [vmem:[#allocation2 + $0x30] sm:$0xff]
  %v616 = vld [vmem:[#allocation2 + $0x38] sm:$0xff]
  %v617 = vld [vmem:[#allocation2 + $0x40] sm:$0xff]
  %v618 = vld [vmem:[#allocation2 + $0x48] sm:$0xff]
  %v619 = vld [vmem:[#allocation2 + $0x50] sm:$0xff]
  %v620 = vld [vmem:[#allocation2 + $0x58] sm:$0xff]
  %v621 = vld [vmem:[#allocation2 + $0x60] sm:$0xff]
  %v622 = vld [vmem:[#allocation2 + $0x68] sm:$0xff]
  %v623 = vld [vmem:[#allocation2 + $0x70] sm:$0xff]
  %v624 = vld [vmem:[#allocation2 + $0x78] sm:$0xff]
  %v625 = vld [vmem:[#allocation2 + $0x80] sm:$0xff]
  %v626 = vld [vmem:[#allocation2 + $0x90] sm:$0xff]
  %v627 = vld [vmem:[#allocation2 + $0x98] sm:$0xff]
  %v628 = vld [vmem:[#allocation2 + $0xa0] sm:$0xff]
  %v629 = vld [vmem:[#allocation2 + $0xa8] sm:$0xff]
  %v630 = vld [vmem:[#allocation2 + $0xb0] sm:$0xff]
  %v631 = vld [vmem:[#allocation2 + $0xb8] sm:$0xff]
  %v632 = vld [vmem:[#allocation2 + $0xc0] sm:$0xff]
  %v633 = vld [vmem:[#allocation2 + $0xc8] sm:$0xff]
  %v634 = vld [vmem:[#allocation2 + $0xd0] sm:$0xff]
  %v635 = vld [vmem:[#allocation2 + $0xd8] sm:$0xff]
  %v636 = vld [vmem:[#allocation2 + $0xe0] sm:$0xff]
  %v637 = vld [vmem:[#allocation2 + $0xe8] sm:$0xff]
  %v638 = vld [vmem:[#allocation2 + $0xf0] sm:$0xff]
  %v639 = vld [vmem:[#allocation2 + $0xf8] sm:$0xff]
  %v640 = vld [vmem:[#allocation2 + $0x100] sm:$0xff]
  %v641 = vld [vmem:[#allocation2 + $0x108] sm:$0xff]
  %v642 = vld [vmem:[#allocation2 + $0x110] sm:$0xff]
  %677 = vrot.lane.b32.xlu0 %v609, 1
  %v678 = vpop.permute.xlu0 %677
  %679 = vrot.lane.b32.xlu0 %v610, 1
  %v680 = vpop.permute.xlu0 %679
  %681 = vrot.lane.b32.xlu0 %v611, 1
  %v682 = vpop.permute.xlu0 %681
  %683 = vrot.lane.b32.xlu0 %v612, 1
  %v684 = vpop.permute.xlu0 %683
  %685 = vrot.lane.b32.xlu0 %v613, 1
  %v686 = vpop.permute.xlu0 %685
  %687 = vrot.lane.b32.xlu0 %v614, 1
  %v688 = vpop.permute.xlu0 %687
  %689 = vrot.lane.b32.xlu0 %v615, 1
  %v690 = vpop.permute.xlu0 %689
  %691 = vrot.lane.b32.xlu0 %v616, 1
  %v692 = vpop.permute.xlu0 %691
  %693 = vrot.lane.b32.xlu0 %v617, 1
  %v694 = vpop.permute.xlu0 %693
  %695 = vrot.lane.b32.xlu0 %v618, 1
  %v696 = vpop.permute.xlu0 %695
  %697 = vrot.lane.b32.xlu0 %v619, 1
  %v698 = vpop.permute.xlu0 %697
  %699 = vrot.lane.b32.xlu0 %v620, 1
  %v700 = vpop.permute.xlu0 %699
  %701 = vrot.lane.b32.xlu0 %v621, 1
  %v702 = vpop.permute.xlu0 %701
  %703 = vrot.lane.b32.xlu0 %v622, 1
  %v704 = vpop.permute.xlu0 %703
  %705 = vrot.lane.b32.xlu0 %v623, 1
  %v706 = vpop.permute.xlu0 %705
  %707 = vrot.lane.b32.xlu0 %v624, 1
  %v708 = vpop.permute.xlu0 %707
  %709 = vrot.lane.b32.xlu0 %v625, 1
  %v710 = vpop.permute.xlu0 %709
  %711 = vrot.lane.b32.xlu0 %v626, 1
  %v712 = vpop.permute.xlu0 %711
  %713 = vrot.lane.b32.xlu0 %v627, 1
  %v714 = vpop.permute.xlu0 %713
  %715 = vrot.lane.b32.xlu0 %v628, 1
  %v716 = vpop.permute.xlu0 %715
  %717 = vrot.lane.b32.xlu0 %v629, 1
  %v718 = vpop.permute.xlu0 %717
  %719 = vrot.lane.b32.xlu0 %v630, 1
  %v720 = vpop.permute.xlu0 %719
  %721 = vrot.lane.b32.xlu0 %v631, 1
  %v722 = vpop.permute.xlu0 %721
  %723 = vrot.lane.b32.xlu0 %v632, 1
  %v724 = vpop.permute.xlu0 %723
  %725 = vrot.lane.b32.xlu0 %v633, 1
  %v726 = vpop.permute.xlu0 %725
  %727 = vrot.lane.b32.xlu0 %v634, 1
  %v728 = vpop.permute.xlu0 %727
  %729 = vrot.lane.b32.xlu0 %v635, 1
  %v730 = vpop.permute.xlu0 %729
  %731 = vrot.lane.b32.xlu0 %v636, 1
  %v732 = vpop.permute.xlu0 %731
  %733 = vrot.lane.b32.xlu0 %v637, 1
  %v734 = vpop.permute.xlu0 %733
  %735 = vrot.lane.b32.xlu0 %v638, 1
  %v736 = vpop.permute.xlu0 %735
  %737 = vrot.lane.b32.xlu0 %v639, 1
  %v738 = vpop.permute.xlu0 %737
  %739 = vrot.lane.b32.xlu0 %v640, 1
  %v740 = vpop.permute.xlu0 %739
  %741 = vrot.lane.b32.xlu0 %v641, 1
  %v742 = vpop.permute.xlu0 %741
  %743 = vrot.lane.b32.xlu0 %v642, 1
  %v744 = vpop.permute.xlu0 %743
  %vm745 = vcmask 7168
  %v746 = vsel %vm745, %v678, %v680
  %v747 = vsel %vm745, %v680, %v682
  %v748 = vsel %vm745, %v682, %v684
  %v749 = vsel %vm745, %v684, %v686
  %v750 = vsel %vm745, %v686, %v688
  %v751 = vsel %vm745, %v688, %v690
  %v752 = vsel %vm745, %v690, %v692
  %v753 = vsel %vm745, %v692, %v694
  %v754 = vsel %vm745, %v694, %v696
  %v755 = vsel %vm745, %v696, %v698
  %v756 = vsel %vm745, %v698, %v700
  %v757 = vsel %vm745, %v700, %v702
  %v758 = vsel %vm745, %v702, %v704
  %v759 = vsel %vm745, %v704, %v706
  %v760 = vsel %vm745, %v706, %v708
  %v761 = vsel %vm745, %v708, %v710
  %v762 = vsel %vm745, %v712, %v714
  %v763 = vsel %vm745, %v714, %v716
  %v764 = vsel %vm745, %v716, %v718
  %v765 = vsel %vm745, %v718, %v720
  %v766 = vsel %vm745, %v720, %v722
  %v767 = vsel %vm745, %v722, %v724
  %v768 = vsel %vm745, %v724, %v726
  %v769 = vsel %vm745, %v726, %v728
  %v770 = vsel %vm745, %v728, %v730
  %v771 = vsel %vm745, %v730, %v732
  %v772 = vsel %vm745, %v732, %v734
  %v773 = vsel %vm745, %v734, %v736
  %v774 = vsel %vm745, %v736, %v738
  %v775 = vsel %vm745, %v738, %v740
  %v776 = vsel %vm745, %v740, %v742
  %v777 = vsel %vm745, %v742, %v744
  %810 = vst [vmem:[#allocation3 + $0x200] sm:$0xff] %v746
  %811 = vst [vmem:[#allocation3 + $0x208] sm:$0xff] %v747
  %812 = vst [vmem:[#allocation3 + $0x210] sm:$0xff] %v748
  %813 = vst [vmem:[#allocation3 + $0x218] sm:$0xff] %v749
  %814 = vst [vmem:[#allocation3 + $0x220] sm:$0xff] %v750
  %815 = vst [vmem:[#allocation3 + $0x228] sm:$0xff] %v751
  %816 = vst [vmem:[#allocation3 + $0x230] sm:$0xff] %v752
  %817 = vst [vmem:[#allocation3 + $0x238] sm:$0xff] %v753
  %818 = vst [vmem:[#allocation3 + $0x240] sm:$0xff] %v754
  %819 = vst [vmem:[#allocation3 + $0x248] sm:$0xff] %v755
  %820 = vst [vmem:[#allocation3 + $0x250] sm:$0xff] %v756
  %821 = vst [vmem:[#allocation3 + $0x258] sm:$0xff] %v757
  %822 = vst [vmem:[#allocation3 + $0x260] sm:$0xff] %v758
  %823 = vst [vmem:[#allocation3 + $0x268] sm:$0xff] %v759
  %824 = vst [vmem:[#allocation3 + $0x270] sm:$0xff] %v760
  %825 = vst [vmem:[#allocation3 + $0x278] sm:$0xff] %v761
  %826 = vst [vmem:[#allocation3 + $0x280] sm:$0xff] %v762
  %827 = vst [vmem:[#allocation3 + $0x288] sm:$0xff] %v763
  %828 = vst [vmem:[#allocation3 + $0x290] sm:$0xff] %v764
  %829 = vst [vmem:[#allocation3 + $0x298] sm:$0xff] %v765
  %830 = vst [vmem:[#allocation3 + $0x2a0] sm:$0xff] %v766
  %831 = vst [vmem:[#allocation3 + $0x2a8] sm:$0xff] %v767
  %832 = vst [vmem:[#allocation3 + $0x2b0] sm:$0xff] %v768
  %833 = vst [vmem:[#allocation3 + $0x2b8] sm:$0xff] %v769
  %834 = vst [vmem:[#allocation3 + $0x2c0] sm:$0xff] %v770
  %835 = vst [vmem:[#allocation3 + $0x2c8] sm:$0xff] %v771
  %836 = vst [vmem:[#allocation3 + $0x2d0] sm:$0xff] %v772
  %837 = vst [vmem:[#allocation3 + $0x2d8] sm:$0xff] %v773
  %838 = vst [vmem:[#allocation3 + $0x2e0] sm:$0xff] %v774
  %839 = vst [vmem:[#allocation3 + $0x2e8] sm:$0xff] %v775
  %840 = vst [vmem:[#allocation3 + $0x2f0] sm:$0xff] %v776
  %841 = vst [vmem:[#allocation3 + $0x2f8] sm:$0xff] %v777
  %v842 = vld [vmem:[#allocation2] sm:$0xff]
  %v843 = vld [vmem:[#allocation2 + $0x8] sm:$0xff]
  %v844 = vld [vmem:[#allocation2 + $0x10] sm:$0xff]
  %v845 = vld [vmem:[#allocation2 + $0x18] sm:$0xff]
  %v846 = vld [vmem:[#allocation2 + $0x20] sm:$0xff]
  %v847 = vld [vmem:[#allocation2 + $0x28] sm:$0xff]
  %v848 = vld [vmem:[#allocation2 + $0x30] sm:$0xff]
  %v849 = vld [vmem:[#allocation2 + $0x38] sm:$0xff]
  %v850 = vld [vmem:[#allocation2 + $0x40] sm:$0xff]
  %v851 = vld [vmem:[#allocation2 + $0x48] sm:$0xff]
  %v852 = vld [vmem:[#allocation2 + $0x50] sm:$0xff]
  %v853 = vld [vmem:[#allocation2 + $0x58] sm:$0xff]
  %v854 = vld [vmem:[#allocation2 + $0x60] sm:$0xff]
  %v855 = vld [vmem:[#allocation2 + $0x68] sm:$0xff]
  %v856 = vld [vmem:[#allocation2 + $0x70] sm:$0xff]
  %v857 = vld [vmem:[#allocation2 + $0x78] sm:$0xff]
  %v858 = vld [vmem:[#allocation2 + $0x80] sm:$0xff]
  %v859 = vld [vmem:[#allocation2 + $0x90] sm:$0xff]
  %v860 = vld [vmem:[#allocation2 + $0x98] sm:$0xff]
  %v861 = vld [vmem:[#allocation2 + $0xa0] sm:$0xff]
  %v862 = vld [vmem:[#allocation2 + $0xa8] sm:$0xff]
  %v863 = vld [vmem:[#allocation2 + $0xb0] sm:$0xff]
  %v864 = vld [vmem:[#allocation2 + $0xb8] sm:$0xff]
  %v865 = vld [vmem:[#allocation2 + $0xc0] sm:$0xff]
  %v866 = vld [vmem:[#allocation2 + $0xc8] sm:$0xff]
  %v867 = vld [vmem:[#allocation2 + $0xd0] sm:$0xff]
  %v868 = vld [vmem:[#allocation2 + $0xd8] sm:$0xff]
  %v869 = vld [vmem:[#allocation2 + $0xe0] sm:$0xff]
  %v870 = vld [vmem:[#allocation2 + $0xe8] sm:$0xff]
  %v871 = vld [vmem:[#allocation2 + $0xf0] sm:$0xff]
  %v872 = vld [vmem:[#allocation2 + $0xf8] sm:$0xff]
  %v873 = vld [vmem:[#allocation2 + $0x100] sm:$0xff]
  %v874 = vld [vmem:[#allocation2 + $0x108] sm:$0xff]
  %v875 = vld [vmem:[#allocation2 + $0x110] sm:$0xff]
  %910 = vrot.lane.b32.xlu0 %v842, 15
  %v911 = vpop.permute.xlu0 %910
  %912 = vrot.lane.b32.xlu0 %v843, 15
  %v913 = vpop.permute.xlu0 %912
  %914 = vrot.lane.b32.xlu0 %v844, 15
  %v915 = vpop.permute.xlu0 %914
  %916 = vrot.lane.b32.xlu0 %v845, 15
  %v917 = vpop.permute.xlu0 %916
  %918 = vrot.lane.b32.xlu0 %v846, 15
  %v919 = vpop.permute.xlu0 %918
  %920 = vrot.lane.b32.xlu0 %v847, 15
  %v921 = vpop.permute.xlu0 %920
  %922 = vrot.lane.b32.xlu0 %v848, 15
  %v923 = vpop.permute.xlu0 %922
  %924 = vrot.lane.b32.xlu0 %v849, 15
  %v925 = vpop.permute.xlu0 %924
  %926 = vrot.lane.b32.xlu0 %v850, 15
  %v927 = vpop.permute.xlu0 %926
  %928 = vrot.lane.b32.xlu0 %v851, 15
  %v929 = vpop.permute.xlu0 %928
  %930 = vrot.lane.b32.xlu0 %v852, 15
  %v931 = vpop.permute.xlu0 %930
  %932 = vrot.lane.b32.xlu0 %v853, 15
  %v933 = vpop.permute.xlu0 %932
  %934 = vrot.lane.b32.xlu0 %v854, 15
  %v935 = vpop.permute.xlu0 %934
  %936 = vrot.lane.b32.xlu0 %v855, 15
  %v937 = vpop.permute.xlu0 %936
  %938 = vrot.lane.b32.xlu0 %v856, 15
  %v939 = vpop.permute.xlu0 %938
  %940 = vrot.lane.b32.xlu0 %v857, 15
  %v941 = vpop.permute.xlu0 %940
  %942 = vrot.lane.b32.xlu0 %v858, 15
  %v943 = vpop.permute.xlu0 %942
  %944 = vrot.lane.b32.xlu0 %v859, 15
  %v945 = vpop.permute.xlu0 %944
  %946 = vrot.lane.b32.xlu0 %v860, 15
  %v947 = vpop.permute.xlu0 %946
  %948 = vrot.lane.b32.xlu0 %v861, 15
  %v949 = vpop.permute.xlu0 %948
  %950 = vrot.lane.b32.xlu0 %v862, 15
  %v951 = vpop.permute.xlu0 %950
  %952 = vrot.lane.b32.xlu0 %v863, 15
  %v953 = vpop.permute.xlu0 %952
  %954 = vrot.lane.b32.xlu0 %v864, 15
  %v955 = vpop.permute.xlu0 %954
  %956 = vrot.lane.b32.xlu0 %v865, 15
  %v957 = vpop.permute.xlu0 %956
  %958 = vrot.lane.b32.xlu0 %v866, 15
  %v959 = vpop.permute.xlu0 %958
  %960 = vrot.lane.b32.xlu0 %v867, 15
  %v961 = vpop.permute.xlu0 %960
  %962 = vrot.lane.b32.xlu0 %v868, 15
  %v963 = vpop.permute.xlu0 %962
  %964 = vrot.lane.b32.xlu0 %v869, 15
  %v965 = vpop.permute.xlu0 %964
  %966 = vrot.lane.b32.xlu0 %v870, 15
  %v967 = vpop.permute.xlu0 %966
  %968 = vrot.lane.b32.xlu0 %v871, 15
  %v969 = vpop.permute.xlu0 %968
  %970 = vrot.lane.b32.xlu0 %v872, 15
  %v971 = vpop.permute.xlu0 %970
  %972 = vrot.lane.b32.xlu0 %v873, 15
  %v973 = vpop.permute.xlu0 %972
  %974 = vrot.lane.b32.xlu0 %v874, 15
  %v975 = vpop.permute.xlu0 %974
  %976 = vrot.lane.b32.xlu0 %v875, 15
  %v977 = vpop.permute.xlu0 %976
  %vm978 = vcmask 121856
  %v979 = vsel %vm978, %v911, %v913
  %v980 = vsel %vm978, %v913, %v915
  %v981 = vsel %vm978, %v915, %v917
  %v982 = vsel %vm978, %v917, %v919
  %v983 = vsel %vm978, %v919, %v921
  %v984 = vsel %vm978, %v921, %v923
  %v985 = vsel %vm978, %v923, %v925
  %v986 = vsel %vm978, %v925, %v927
  %v987 = vsel %vm978, %v927, %v929
  %v988 = vsel %vm978, %v929, %v931
  %v989 = vsel %vm978, %v931, %v933
  %v990 = vsel %vm978, %v933, %v935
  %v991 = vsel %vm978, %v935, %v937
  %v992 = vsel %vm978, %v937, %v939
  %v993 = vsel %vm978, %v939, %v941
  %v994 = vsel %vm978, %v941, %v943
  %v995 = vsel %vm978, %v945, %v947
  %v996 = vsel %vm978, %v947, %v949
  %v997 = vsel %vm978, %v949, %v951
  %v998 = vsel %vm978, %v951, %v953
  %v999 = vsel %vm978, %v953, %v955
  %v1000 = vsel %vm978, %v955, %v957
  %v1001 = vsel %vm978, %v957, %v959
  %v1002 = vsel %vm978, %v959, %v961
  %v1003 = vsel %vm978, %v961, %v963
  %v1004 = vsel %vm978, %v963, %v965
  %v1005 = vsel %vm978, %v965, %v967
  %v1006 = vsel %vm978, %v967, %v969
  %v1007 = vsel %vm978, %v969, %v971
  %v1008 = vsel %vm978, %v971, %v973
  %v1009 = vsel %vm978, %v973, %v975
  %v1010 = vsel %vm978, %v975, %v977
  %1043 = vst [vmem:[#allocation3 + $0x300] sm:$0xff] %v979
  %1044 = vst [vmem:[#allocation3 + $0x308] sm:$0xff] %v980
  %1045 = vst [vmem:[#allocation3 + $0x310] sm:$0xff] %v981
  %1046 = vst [vmem:[#allocation3 + $0x318] sm:$0xff] %v982
  %1047 = vst [vmem:[#allocation3 + $0x320] sm:$0xff] %v983
  %1048 = vst [vmem:[#allocation3 + $0x328] sm:$0xff] %v984
  %1049 = vst [vmem:[#allocation3 + $0x330] sm:$0xff] %v985
  %1050 = vst [vmem:[#allocation3 + $0x338] sm:$0xff] %v986
  %1051 = vst [vmem:[#allocation3 + $0x340] sm:$0xff] %v987
  %1052 = vst [vmem:[#allocation3 + $0x348] sm:$0xff] %v988
  %1053 = vst [vmem:[#allocation3 + $0x350] sm:$0xff] %v989
  %1054 = vst [vmem:[#allocation3 + $0x358] sm:$0xff] %v990
  %1055 = vst [vmem:[#allocation3 + $0x360] sm:$0xff] %v991
  %1056 = vst [vmem:[#allocation3 + $0x368] sm:$0xff] %v992
  %1057 = vst [vmem:[#allocation3 + $0x370] sm:$0xff] %v993
  %1058 = vst [vmem:[#allocation3 + $0x378] sm:$0xff] %v994
  %1059 = vst [vmem:[#allocation3 + $0x380] sm:$0xff] %v995
  %1060 = vst [vmem:[#allocation3 + $0x388] sm:$0xff] %v996
  %1061 = vst [vmem:[#allocation3 + $0x390] sm:$0xff] %v997
  %1062 = vst [vmem:[#allocation3 + $0x398] sm:$0xff] %v998
  %1063 = vst [vmem:[#allocation3 + $0x3a0] sm:$0xff] %v999
  %1064 = vst [vmem:[#allocation3 + $0x3a8] sm:$0xff] %v1000
  %1065 = vst [vmem:[#allocation3 + $0x3b0] sm:$0xff] %v1001
  %1066 = vst [vmem:[#allocation3 + $0x3b8] sm:$0xff] %v1002
  %1067 = vst [vmem:[#allocation3 + $0x3c0] sm:$0xff] %v1003
  %1068 = vst [vmem:[#allocation3 + $0x3c8] sm:$0xff] %v1004
  %1069 = vst [vmem:[#allocation3 + $0x3d0] sm:$0xff] %v1005
  %1070 = vst [vmem:[#allocation3 + $0x3d8] sm:$0xff] %v1006
  %1071 = vst [vmem:[#allocation3 + $0x3e0] sm:$0xff] %v1007
  %1072 = vst [vmem:[#allocation3 + $0x3e8] sm:$0xff] %v1008
  %1073 = vst [vmem:[#allocation3 + $0x3f0] sm:$0xff] %v1009
  %1074 = vst [vmem:[#allocation3 + $0x3f8] sm:$0xff] %v1010
  %v1075 = vld [vmem:[#allocation2] sm:$0xff]
  %v1076 = vld [vmem:[#allocation2 + $0x8] sm:$0xff]
  %v1077 = vld [vmem:[#allocation2 + $0x10] sm:$0xff]
  %v1078 = vld [vmem:[#allocation2 + $0x18] sm:$0xff]
  %v1079 = vld [vmem:[#allocation2 + $0x20] sm:$0xff]
  %v1080 = vld [vmem:[#allocation2 + $0x28] sm:$0xff]
  %v1081 = vld [vmem:[#allocation2 + $0x30] sm:$0xff]
  %v1082 = vld [vmem:[#allocation2 + $0x38] sm:$0xff]
  %v1083 = vld [vmem:[#allocation2 + $0x40] sm:$0xff]
  %v1084 = vld [vmem:[#allocation2 + $0x48] sm:$0xff]
  %v1085 = vld [vmem:[#allocation2 + $0x50] sm:$0xff]
  %v1086 = vld [vmem:[#allocation2 + $0x58] sm:$0xff]
  %v1087 = vld [vmem:[#allocation2 + $0x60] sm:$0xff]
  %v1088 = vld [vmem:[#allocation2 + $0x68] sm:$0xff]
  %v1089 = vld [vmem:[#allocation2 + $0x70] sm:$0xff]
  %v1090 = vld [vmem:[#allocation2 + $0x78] sm:$0xff]
  %v1091 = vld [vmem:[#allocation2 + $0x80] sm:$0xff]
  %v1092 = vld [vmem:[#allocation2 + $0x90] sm:$0xff]
  %v1093 = vld [vmem:[#allocation2 + $0x98] sm:$0xff]
  %v1094 = vld [vmem:[#allocation2 + $0xa0] sm:$0xff]
  %v1095 = vld [vmem:[#allocation2 + $0xa8] sm:$0xff]
  %v1096 = vld [vmem:[#allocation2 + $0xb0] sm:$0xff]
  %v1097 = vld [vmem:[#allocation2 + $0xb8] sm:$0xff]
  %v1098 = vld [vmem:[#allocation2 + $0xc0] sm:$0xff]
  %v1099 = vld [vmem:[#allocation2 + $0xc8] sm:$0xff]
  %v1100 = vld [vmem:[#allocation2 + $0xd0] sm:$0xff]
  %v1101 = vld [vmem:[#allocation2 + $0xd8] sm:$0xff]
  %v1102 = vld [vmem:[#allocation2 + $0xe0] sm:$0xff]
  %v1103 = vld [vmem:[#allocation2 + $0xe8] sm:$0xff]
  %v1104 = vld [vmem:[#allocation2 + $0xf0] sm:$0xff]
  %v1105 = vld [vmem:[#allocation2 + $0xf8] sm:$0xff]
  %v1106 = vld [vmem:[#allocation2 + $0x100] sm:$0xff]
  %v1107 = vld [vmem:[#allocation2 + $0x108] sm:$0xff]
  %v1108 = vld [vmem:[#allocation2 + $0x110] sm:$0xff]
  %1143 = vrot.lane.b32.xlu0 %v1075, 16
  %v1144 = vpop.permute.xlu0 %1143
  %1145 = vrot.lane.b32.xlu0 %v1076, 16
  %v1146 = vpop.permute.xlu0 %1145
  %1147 = vrot.lane.b32.xlu0 %v1077, 16
  %v1148 = vpop.permute.xlu0 %1147
  %1149 = vrot.lane.b32.xlu0 %v1078, 16
  %v1150 = vpop.permute.xlu0 %1149
  %1151 = vrot.lane.b32.xlu0 %v1079, 16
  %v1152 = vpop.permute.xlu0 %1151
  %1153 = vrot.lane.b32.xlu0 %v1080, 16
  %v1154 = vpop.permute.xlu0 %1153
  %1155 = vrot.lane.b32.xlu0 %v1081, 16
  %v1156 = vpop.permute.xlu0 %1155
  %1157 = vrot.lane.b32.xlu0 %v1082, 16
  %v1158 = vpop.permute.xlu0 %1157
  %1159 = vrot.lane.b32.xlu0 %v1083, 16
  %v1160 = vpop.permute.xlu0 %1159
  %1161 = vrot.lane.b32.xlu0 %v1084, 16
  %v1162 = vpop.permute.xlu0 %1161
  %1163 = vrot.lane.b32.xlu0 %v1085, 16
  %v1164 = vpop.permute.xlu0 %1163
  %1165 = vrot.lane.b32.xlu0 %v1086, 16
  %v1166 = vpop.permute.xlu0 %1165
  %1167 = vrot.lane.b32.xlu0 %v1087, 16
  %v1168 = vpop.permute.xlu0 %1167
  %1169 = vrot.lane.b32.xlu0 %v1088, 16
  %v1170 = vpop.permute.xlu0 %1169
  %1171 = vrot.lane.b32.xlu0 %v1089, 16
  %v1172 = vpop.permute.xlu0 %1171
  %1173 = vrot.lane.b32.xlu0 %v1090, 16
  %v1174 = vpop.permute.xlu0 %1173
  %1175 = vrot.lane.b32.xlu0 %v1091, 16
  %v1176 = vpop.permute.xlu0 %1175
  %1177 = vrot.lane.b32.xlu0 %v1092, 16
  %v1178 = vpop.permute.xlu0 %1177
  %1179 = vrot.lane.b32.xlu0 %v1093, 16
  %v1180 = vpop.permute.xlu0 %1179
  %1181 = vrot.lane.b32.xlu0 %v1094, 16
  %v1182 = vpop.permute.xlu0 %1181
  %1183 = vrot.lane.b32.xlu0 %v1095, 16
  %v1184 = vpop.permute.xlu0 %1183
  %1185 = vrot.lane.b32.xlu0 %v1096, 16
  %v1186 = vpop.permute.xlu0 %1185
  %1187 = vrot.lane.b32.xlu0 %v1097, 16
  %v1188 = vpop.permute.xlu0 %1187
  %1189 = vrot.lane.b32.xlu0 %v1098, 16
  %v1190 = vpop.permute.xlu0 %1189
  %1191 = vrot.lane.b32.xlu0 %v1099, 16
  %v1192 = vpop.permute.xlu0 %1191
  %1193 = vrot.lane.b32.xlu0 %v1100, 16
  %v1194 = vpop.permute.xlu0 %1193
  %1195 = vrot.lane.b32.xlu0 %v1101, 16
  %v1196 = vpop.permute.xlu0 %1195
  %1197 = vrot.lane.b32.xlu0 %v1102, 16
  %v1198 = vpop.permute.xlu0 %1197
  %1199 = vrot.lane.b32.xlu0 %v1103, 16
  %v1200 = vpop.permute.xlu0 %1199
  %1201 = vrot.lane.b32.xlu0 %v1104, 16
  %v1202 = vpop.permute.xlu0 %1201
  %1203 = vrot.lane.b32.xlu0 %v1105, 16
  %v1204 = vpop.permute.xlu0 %1203
  %1205 = vrot.lane.b32.xlu0 %v1106, 16
  %v1206 = vpop.permute.xlu0 %1205
  %1207 = vrot.lane.b32.xlu0 %v1107, 16
  %v1208 = vpop.permute.xlu0 %1207
  %1209 = vrot.lane.b32.xlu0 %v1108, 16
  %v1210 = vpop.permute.xlu0 %1209
  %vm1211 = vcmask 130048
  %v1212 = vsel %vm1211, %v1144, %v1146
  %v1213 = vsel %vm1211, %v1146, %v1148
  %v1214 = vsel %vm1211, %v1148, %v1150
  %v1215 = vsel %vm1211, %v1150, %v1152
  %v1216 = vsel %vm1211, %v1152, %v1154
  %v1217 = vsel %vm1211, %v1154, %v1156
  %v1218 = vsel %vm1211, %v1156, %v1158
  %v1219 = vsel %vm1211, %v1158, %v1160
  %v1220 = vsel %vm1211, %v1160, %v1162
  %v1221 = vsel %vm1211, %v1162, %v1164
  %v1222 = vsel %vm1211, %v1164, %v1166
  %v1223 = vsel %vm1211, %v1166, %v1168
  %v1224 = vsel %vm1211, %v1168, %v1170
  %v1225 = vsel %vm1211, %v1170, %v1172
  %v1226 = vsel %vm1211, %v1172, %v1174
  %v1227 = vsel %vm1211, %v1174, %v1176
  %v1228 = vsel %vm1211, %v1178, %v1180
  %v1229 = vsel %vm1211, %v1180, %v1182
  %v1230 = vsel %vm1211, %v1182, %v1184
  %v1231 = vsel %vm1211, %v1184, %v1186
  %v1232 = vsel %vm1211, %v1186, %v1188
  %v1233 = vsel %vm1211, %v1188, %v1190
  %v1234 = vsel %vm1211, %v1190, %v1192
  %v1235 = vsel %vm1211, %v1192, %v1194
  %v1236 = vsel %vm1211, %v1194, %v1196
  %v1237 = vsel %vm1211, %v1196, %v1198
  %v1238 = vsel %vm1211, %v1198, %v1200
  %v1239 = vsel %vm1211, %v1200, %v1202
  %v1240 = vsel %vm1211, %v1202, %v1204
  %v1241 = vsel %vm1211, %v1204, %v1206
  %v1242 = vsel %vm1211, %v1206, %v1208
  %v1243 = vsel %vm1211, %v1208, %v1210
  %1276 = vst [vmem:[#allocation3 + $0x400] sm:$0xff] %v1212
  %1277 = vst [vmem:[#allocation3 + $0x408] sm:$0xff] %v1213
  %1278 = vst [vmem:[#allocation3 + $0x410] sm:$0xff] %v1214
  %1279 = vst [vmem:[#allocation3 + $0x418] sm:$0xff] %v1215
  %1280 = vst [vmem:[#allocation3 + $0x420] sm:$0xff] %v1216
  %1281 = vst [vmem:[#allocation3 + $0x428] sm:$0xff] %v1217
  %1282 = vst [vmem:[#allocation3 + $0x430] sm:$0xff] %v1218
  %1283 = vst [vmem:[#allocation3 + $0x438] sm:$0xff] %v1219
  %1284 = vst [vmem:[#allocation3 + $0x440] sm:$0xff] %v1220
  %1285 = vst [vmem:[#allocation3 + $0x448] sm:$0xff] %v1221
  %1286 = vst [vmem:[#allocation3 + $0x450] sm:$0xff] %v1222
  %1287 = vst [vmem:[#allocation3 + $0x458] sm:$0xff] %v1223
  %1288 = vst [vmem:[#allocation3 + $0x460] sm:$0xff] %v1224
  %1289 = vst [vmem:[#allocation3 + $0x468] sm:$0xff] %v1225
  %1290 = vst [vmem:[#allocation3 + $0x470] sm:$0xff] %v1226
  %1291 = vst [vmem:[#allocation3 + $0x478] sm:$0xff] %v1227
  %1292 = vst [vmem:[#allocation3 + $0x480] sm:$0xff] %v1228
  %1293 = vst [vmem:[#allocation3 + $0x488] sm:$0xff] %v1229
  %1294 = vst [vmem:[#allocation3 + $0x490] sm:$0xff] %v1230
  %1295 = vst [vmem:[#allocation3 + $0x498] sm:$0xff] %v1231
  %1296 = vst [vmem:[#allocation3 + $0x4a0] sm:$0xff] %v1232
  %1297 = vst [vmem:[#allocation3 + $0x4a8] sm:$0xff] %v1233
  %1298 = vst [vmem:[#allocation3 + $0x4b0] sm:$0xff] %v1234
  %1299 = vst [vmem:[#allocation3 + $0x4b8] sm:$0xff] %v1235
  %1300 = vst [vmem:[#allocation3 + $0x4c0] sm:$0xff] %v1236
  %1301 = vst [vmem:[#allocation3 + $0x4c8] sm:$0xff] %v1237
  %1302 = vst [vmem:[#allocation3 + $0x4d0] sm:$0xff] %v1238
  %1303 = vst [vmem:[#allocation3 + $0x4d8] sm:$0xff] %v1239
  %1304 = vst [vmem:[#allocation3 + $0x4e0] sm:$0xff] %v1240
  %1305 = vst [vmem:[#allocation3 + $0x4e8] sm:$0xff] %v1241
  %1306 = vst [vmem:[#allocation3 + $0x4f0] sm:$0xff] %v1242
  %1307 = vst [vmem:[#allocation3 + $0x4f8] sm:$0xff] %v1243
  %v1308 = vld [vmem:[#allocation2] sm:$0xff]
  %v1309 = vld [vmem:[#allocation2 + $0x8] sm:$0xff]
  %v1310 = vld [vmem:[#allocation2 + $0x10] sm:$0xff]
  %v1311 = vld [vmem:[#allocation2 + $0x18] sm:$0xff]
  %v1312 = vld [vmem:[#allocation2 + $0x20] sm:$0xff]
  %v1313 = vld [vmem:[#allocation2 + $0x28] sm:$0xff]
  %v1314 = vld [vmem:[#allocation2 + $0x30] sm:$0xff]
  %v1315 = vld [vmem:[#allocation2 + $0x38] sm:$0xff]
  %v1316 = vld [vmem:[#allocation2 + $0x40] sm:$0xff]
  %v1317 = vld [vmem:[#allocation2 + $0x48] sm:$0xff]
  %v1318 = vld [vmem:[#allocation2 + $0x50] sm:$0xff]
  %v1319 = vld [vmem:[#allocation2 + $0x58] sm:$0xff]
  %v1320 = vld [vmem:[#allocation2 + $0x60] sm:$0xff]
  %v1321 = vld [vmem:[#allocation2 + $0x68] sm:$0xff]
  %v1322 = vld [vmem:[#allocation2 + $0x70] sm:$0xff]
  %v1323 = vld [vmem:[#allocation2 + $0x78] sm:$0xff]
  %v1324 = vld [vmem:[#allocation2 + $0x80] sm:$0xff]
  %v1325 = vld [vmem:[#allocation2 + $0x90] sm:$0xff]
  %v1326 = vld [vmem:[#allocation2 + $0x98] sm:$0xff]
  %v1327 = vld [vmem:[#allocation2 + $0xa0] sm:$0xff]
  %v1328 = vld [vmem:[#allocation2 + $0xa8] sm:$0xff]
  %v1329 = vld [vmem:[#allocation2 + $0xb0] sm:$0xff]
  %v1330 = vld [vmem:[#allocation2 + $0xb8] sm:$0xff]
  %v1331 = vld [vmem:[#allocation2 + $0xc0] sm:$0xff]
  %v1332 = vld [vmem:[#allocation2 + $0xc8] sm:$0xff]
  %v1333 = vld [vmem:[#allocation2 + $0xd0] sm:$0xff]
  %v1334 = vld [vmem:[#allocation2 + $0xd8] sm:$0xff]
  %v1335 = vld [vmem:[#allocation2 + $0xe0] sm:$0xff]
  %v1336 = vld [vmem:[#allocation2 + $0xe8] sm:$0xff]
  %v1337 = vld [vmem:[#allocation2 + $0xf0] sm:$0xff]
  %v1338 = vld [vmem:[#allocation2 + $0xf8] sm:$0xff]
  %v1339 = vld [vmem:[#allocation2 + $0x100] sm:$0xff]
  %v1340 = vld [vmem:[#allocation2 + $0x108] sm:$0xff]
  %v1341 = vld [vmem:[#allocation2 + $0x110] sm:$0xff]
  %1376 = vrot.lane.b32.xlu0 %v1308, 17
  %v1377 = vpop.permute.xlu0 %1376
  %1378 = vrot.lane.b32.xlu0 %v1309, 17
  %v1379 = vpop.permute.xlu0 %1378
  %1380 = vrot.lane.b32.xlu0 %v1310, 17
  %v1381 = vpop.permute.xlu0 %1380
  %1382 = vrot.lane.b32.xlu0 %v1311, 17
  %v1383 = vpop.permute.xlu0 %1382
  %1384 = vrot.lane.b32.xlu0 %v1312, 17
  %v1385 = vpop.permute.xlu0 %1384
  %1386 = vrot.lane.b32.xlu0 %v1313, 17
  %v1387 = vpop.permute.xlu0 %1386
  %1388 = vrot.lane.b32.xlu0 %v1314, 17
  %v1389 = vpop.permute.xlu0 %1388
  %1390 = vrot.lane.b32.xlu0 %v1315, 17
  %v1391 = vpop.permute.xlu0 %1390
  %1392 = vrot.lane.b32.xlu0 %v1316, 17
  %v1393 = vpop.permute.xlu0 %1392
  %1394 = vrot.lane.b32.xlu0 %v1317, 17
  %v1395 = vpop.permute.xlu0 %1394
  %1396 = vrot.lane.b32.xlu0 %v1318, 17
  %v1397 = vpop.permute.xlu0 %1396
  %1398 = vrot.lane.b32.xlu0 %v1319, 17
  %v1399 = vpop.permute.xlu0 %1398
  %1400 = vrot.lane.b32.xlu0 %v1320, 17
  %v1401 = vpop.permute.xlu0 %1400
  %1402 = vrot.lane.b32.xlu0 %v1321, 17
  %v1403 = vpop.permute.xlu0 %1402
  %1404 = vrot.lane.b32.xlu0 %v1322, 17
  %v1405 = vpop.permute.xlu0 %1404
  %1406 = vrot.lane.b32.xlu0 %v1323, 17
  %v1407 = vpop.permute.xlu0 %1406
  %1408 = vrot.lane.b32.xlu0 %v1324, 17
  %v1409 = vpop.permute.xlu0 %1408
  %1410 = vrot.lane.b32.xlu0 %v1325, 17
  %v1411 = vpop.permute.xlu0 %1410
  %1412 = vrot.lane.b32.xlu0 %v1326, 17
  %v1413 = vpop.permute.xlu0 %1412
  %1414 = vrot.lane.b32.xlu0 %v1327, 17
  %v1415 = vpop.permute.xlu0 %1414
  %1416 = vrot.lane.b32.xlu0 %v1328, 17
  %v1417 = vpop.permute.xlu0 %1416
  %1418 = vrot.lane.b32.xlu0 %v1329, 17
  %v1419 = vpop.permute.xlu0 %1418
  %1420 = vrot.lane.b32.xlu0 %v1330, 17
  %v1421 = vpop.permute.xlu0 %1420
  %1422 = vrot.lane.b32.xlu0 %v1331, 17
  %v1423 = vpop.permute.xlu0 %1422
  %1424 = vrot.lane.b32.xlu0 %v1332, 17
  %v1425 = vpop.permute.xlu0 %1424
  %1426 = vrot.lane.b32.xlu0 %v1333, 17
  %v1427 = vpop.permute.xlu0 %1426
  %1428 = vrot.lane.b32.xlu0 %v1334, 17
  %v1429 = vpop.permute.xlu0 %1428
  %1430 = vrot.lane.b32.xlu0 %v1335, 17
  %v1431 = vpop.permute.xlu0 %1430
  %1432 = vrot.lane.b32.xlu0 %v1336, 17
  %v1433 = vpop.permute.xlu0 %1432
  %1434 = vrot.lane.b32.xlu0 %v1337, 17
  %v1435 = vpop.permute.xlu0 %1434
  %1436 = vrot.lane.b32.xlu0 %v1338, 17
  %v1437 = vpop.permute.xlu0 %1436
  %1438 = vrot.lane.b32.xlu0 %v1339, 17
  %v1439 = vpop.permute.xlu0 %1438
  %1440 = vrot.lane.b32.xlu0 %v1340, 17
  %v1441 = vpop.permute.xlu0 %1440
  %1442 = vrot.lane.b32.xlu0 %v1341, 17
  %v1443 = vpop.permute.xlu0 %1442
  %vm1444 = vcmask 138240
  %v1445 = vsel %vm1444, %v1377, %v1379
  %v1446 = vsel %vm1444, %v1379, %v1381
  %v1447 = vsel %vm1444, %v1381, %v1383
  %v1448 = vsel %vm1444, %v1383, %v1385
  %v1449 = vsel %vm1444, %v1385, %v1387
  %v1450 = vsel %vm1444, %v1387, %v1389
  %v1451 = vsel %vm1444, %v1389, %v1391
  %v1452 = vsel %vm1444, %v1391, %v1393
  %v1453 = vsel %vm1444, %v1393, %v1395
  %v1454 = vsel %vm1444, %v1395, %v1397
  %v1455 = vsel %vm1444, %v1397, %v1399
  %v1456 = vsel %vm1444, %v1399, %v1401
  %v1457 = vsel %vm1444, %v1401, %v1403
  %v1458 = vsel %vm1444, %v1403, %v1405
  %v1459 = vsel %vm1444, %v1405, %v1407
  %v1460 = vsel %vm1444, %v1407, %v1409
  %v1461 = vsel %vm1444, %v1411, %v1413
  %v1462 = vsel %vm1444, %v1413, %v1415
  %v1463 = vsel %vm1444, %v1415, %v1417
  %v1464 = vsel %vm1444, %v1417, %v1419
  %v1465 = vsel %vm1444, %v1419, %v1421
  %v1466 = vsel %vm1444, %v1421, %v1423
  %v1467 = vsel %vm1444, %v1423, %v1425
  %v1468 = vsel %vm1444, %v1425, %v1427
  %v1469 = vsel %vm1444, %v1427, %v1429
  %v1470 = vsel %vm1444, %v1429, %v1431
  %v1471 = vsel %vm1444, %v1431, %v1433
  %v1472 = vsel %vm1444, %v1433, %v1435
  %v1473 = vsel %vm1444, %v1435, %v1437
  %v1474 = vsel %vm1444, %v1437, %v1439
  %v1475 = vsel %vm1444, %v1439, %v1441
  %v1476 = vsel %vm1444, %v1441, %v1443
  %1509 = vst [vmem:[#allocation3 + $0x500] sm:$0xff] %v1445
  %1510 = vst [vmem:[#allocation3 + $0x508] sm:$0xff] %v1446
  %1511 = vst [vmem:[#allocation3 + $0x510] sm:$0xff] %v1447
  %1512 = vst [vmem:[#allocation3 + $0x518] sm:$0xff] %v1448
  %1513 = vst [vmem:[#allocation3 + $0x520] sm:$0xff] %v1449
  %1514 = vst [vmem:[#allocation3 + $0x528] sm:$0xff] %v1450
  %1515 = vst [vmem:[#allocation3 + $0x530] sm:$0xff] %v1451
  %1516 = vst [vmem:[#allocation3 + $0x538] sm:$0xff] %v1452
  %1517 = vst [vmem:[#allocation3 + $0x540] sm:$0xff] %v1453
  %1518 = vst [vmem:[#allocation3 + $0x548] sm:$0xff] %v1454
  %1519 = vst [vmem:[#allocation3 + $0x550] sm:$0xff] %v1455
  %1520 = vst [vmem:[#allocation3 + $0x558] sm:$0xff] %v1456
  %1521 = vst [vmem:[#allocation3 + $0x560] sm:$0xff] %v1457
  %1522 = vst [vmem:[#allocation3 + $0x568] sm:$0xff] %v1458
  %1523 = vst [vmem:[#allocation3 + $0x570] sm:$0xff] %v1459
  %1524 = vst [vmem:[#allocation3 + $0x578] sm:$0xff] %v1460
  %1525 = vst [vmem:[#allocation3 + $0x580] sm:$0xff] %v1461
  %1526 = vst [vmem:[#allocation3 + $0x588] sm:$0xff] %v1462
  %1527 = vst [vmem:[#allocation3 + $0x590] sm:$0xff] %v1463
  %1528 = vst [vmem:[#allocation3 + $0x598] sm:$0xff] %v1464
  %1529 = vst [vmem:[#allocation3 + $0x5a0] sm:$0xff] %v1465
  %1530 = vst [vmem:[#allocation3 + $0x5a8] sm:$0xff] %v1466
  %1531 = vst [vmem:[#allocation3 + $0x5b0] sm:$0xff] %v1467
  %1532 = vst [vmem:[#allocation3 + $0x5b8] sm:$0xff] %v1468
  %1533 = vst [vmem:[#allocation3 + $0x5c0] sm:$0xff] %v1469
  %1534 = vst [vmem:[#allocation3 + $0x5c8] sm:$0xff] %v1470
  %1535 = vst [vmem:[#allocation3 + $0x5d0] sm:$0xff] %v1471
  %1536 = vst [vmem:[#allocation3 + $0x5d8] sm:$0xff] %v1472
  %1537 = vst [vmem:[#allocation3 + $0x5e0] sm:$0xff] %v1473
  %1538 = vst [vmem:[#allocation3 + $0x5e8] sm:$0xff] %v1474
  %1539 = vst [vmem:[#allocation3 + $0x5f0] sm:$0xff] %v1475
  %1540 = vst [vmem:[#allocation3 + $0x5f8] sm:$0xff] %v1476
  %v1541 = vld [vmem:[#allocation2] sm:$0xff]
  %v1542 = vld [vmem:[#allocation2 + $0x8] sm:$0xff]
  %v1543 = vld [vmem:[#allocation2 + $0x10] sm:$0xff]
  %v1544 = vld [vmem:[#allocation2 + $0x18] sm:$0xff]
  %v1545 = vld [vmem:[#allocation2 + $0x20] sm:$0xff]
  %v1546 = vld [vmem:[#allocation2 + $0x28] sm:$0xff]
  %v1547 = vld [vmem:[#allocation2 + $0x30] sm:$0xff]
  %v1548 = vld [vmem:[#allocation2 + $0x38] sm:$0xff]
  %v1549 = vld [vmem:[#allocation2 + $0x40] sm:$0xff]
  %v1550 = vld [vmem:[#allocation2 + $0x48] sm:$0xff]
  %v1551 = vld [vmem:[#allocation2 + $0x50] sm:$0xff]
  %v1552 = vld [vmem:[#allocation2 + $0x58] sm:$0xff]
  %v1553 = vld [vmem:[#allocation2 + $0x60] sm:$0xff]
  %v1554 = vld [vmem:[#allocation2 + $0x68] sm:$0xff]
  %v1555 = vld [vmem:[#allocation2 + $0x70] sm:$0xff]
  %v1556 = vld [vmem:[#allocation2 + $0x78] sm:$0xff]
  %v1557 = vld [vmem:[#allocation2 + $0x80] sm:$0xff]
  %v1558 = vld [vmem:[#allocation2 + $0x90] sm:$0xff]
  %v1559 = vld [vmem:[#allocation2 + $0x98] sm:$0xff]
  %v1560 = vld [vmem:[#allocation2 + $0xa0] sm:$0xff]
  %v1561 = vld [vmem:[#allocation2 + $0xa8] sm:$0xff]
  %v1562 = vld [vmem:[#allocation2 + $0xb0] sm:$0xff]
  %v1563 = vld [vmem:[#allocation2 + $0xb8] sm:$0xff]
  %v1564 = vld [vmem:[#allocation2 + $0xc0] sm:$0xff]
  %v1565 = vld [vmem:[#allocation2 + $0xc8] sm:$0xff]
  %v1566 = vld [vmem:[#allocation2 + $0xd0] sm:$0xff]
  %v1567 = vld [vmem:[#allocation2 + $0xd8] sm:$0xff]
  %v1568 = vld [vmem:[#allocation2 + $0xe0] sm:$0xff]
  %v1569 = vld [vmem:[#allocation2 + $0xe8] sm:$0xff]
  %v1570 = vld [vmem:[#allocation2 + $0xf0] sm:$0xff]
  %v1571 = vld [vmem:[#allocation2 + $0xf8] sm:$0xff]
  %v1572 = vld [vmem:[#allocation2 + $0x100] sm:$0xff]
  %v1573 = vld [vmem:[#allocation2 + $0x108] sm:$0xff]
  %v1574 = vld [vmem:[#allocation2 + $0x110] sm:$0xff]
  %1609 = vrot.lane.b32.xlu0 %v1541, 31
  %v1610 = vpop.permute.xlu0 %1609
  %1611 = vrot.lane.b32.xlu0 %v1542, 31
  %v1612 = vpop.permute.xlu0 %1611
  %1613 = vrot.lane.b32.xlu0 %v1543, 31
  %v1614 = vpop.permute.xlu0 %1613
  %1615 = vrot.lane.b32.xlu0 %v1544, 31
  %v1616 = vpop.permute.xlu0 %1615
  %1617 = vrot.lane.b32.xlu0 %v1545, 31
  %v1618 = vpop.permute.xlu0 %1617
  %1619 = vrot.lane.b32.xlu0 %v1546, 31
  %v1620 = vpop.permute.xlu0 %1619
  %1621 = vrot.lane.b32.xlu0 %v1547, 31
  %v1622 = vpop.permute.xlu0 %1621
  %1623 = vrot.lane.b32.xlu0 %v1548, 31
  %v1624 = vpop.permute.xlu0 %1623
  %1625 = vrot.lane.b32.xlu0 %v1549, 31
  %v1626 = vpop.permute.xlu0 %1625
  %1627 = vrot.lane.b32.xlu0 %v1550, 31
  %v1628 = vpop.permute.xlu0 %1627
  %1629 = vrot.lane.b32.xlu0 %v1551, 31
  %v1630 = vpop.permute.xlu0 %1629
  %1631 = vrot.lane.b32.xlu0 %v1552, 31
  %v1632 = vpop.permute.xlu0 %1631
  %1633 = vrot.lane.b32.xlu0 %v1553, 31
  %v1634 = vpop.permute.xlu0 %1633
  %1635 = vrot.lane.b32.xlu0 %v1554, 31
  %v1636 = vpop.permute.xlu0 %1635
  %1637 = vrot.lane.b32.xlu0 %v1555, 31
  %v1638 = vpop.permute.xlu0 %1637
  %1639 = vrot.lane.b32.xlu0 %v1556, 31
  %v1640 = vpop.permute.xlu0 %1639
  %1641 = vrot.lane.b32.xlu0 %v1557, 31
  %v1642 = vpop.permute.xlu0 %1641
  %1643 = vrot.lane.b32.xlu0 %v1558, 31
  %v1644 = vpop.permute.xlu0 %1643
  %1645 = vrot.lane.b32.xlu0 %v1559, 31
  %v1646 = vpop.permute.xlu0 %1645
  %1647 = vrot.lane.b32.xlu0 %v1560, 31
  %v1648 = vpop.permute.xlu0 %1647
  %1649 = vrot.lane.b32.xlu0 %v1561, 31
  %v1650 = vpop.permute.xlu0 %1649
  %1651 = vrot.lane.b32.xlu0 %v1562, 31
  %v1652 = vpop.permute.xlu0 %1651
  %1653 = vrot.lane.b32.xlu0 %v1563, 31
  %v1654 = vpop.permute.xlu0 %1653
  %1655 = vrot.lane.b32.xlu0 %v1564, 31
  %v1656 = vpop.permute.xlu0 %1655
  %1657 = vrot.lane.b32.xlu0 %v1565, 31
  %v1658 = vpop.permute.xlu0 %1657
  %1659 = vrot.lane.b32.xlu0 %v1566, 31
  %v1660 = vpop.permute.xlu0 %1659
  %1661 = vrot.lane.b32.xlu0 %v1567, 31
  %v1662 = vpop.permute.xlu0 %1661
  %1663 = vrot.lane.b32.xlu0 %v1568, 31
  %v1664 = vpop.permute.xlu0 %1663
  %1665 = vrot.lane.b32.xlu0 %v1569, 31
  %v1666 = vpop.permute.xlu0 %1665
  %1667 = vrot.lane.b32.xlu0 %v1570, 31
  %v1668 = vpop.permute.xlu0 %1667
  %1669 = vrot.lane.b32.xlu0 %v1571, 31
  %v1670 = vpop.permute.xlu0 %1669
  %1671 = vrot.lane.b32.xlu0 %v1572, 31
  %v1672 = vpop.permute.xlu0 %1671
  %1673 = vrot.lane.b32.xlu0 %v1573, 31
  %v1674 = vpop.permute.xlu0 %1673
  %1675 = vrot.lane.b32.xlu0 %v1574, 31
  %v1676 = vpop.permute.xlu0 %1675
  %vm1677 = vcmask 252928
  %v1678 = vsel %vm1677, %v1610, %v1612
  %v1679 = vsel %vm1677, %v1612, %v1614
  %v1680 = vsel %vm1677, %v1614, %v1616
  %v1681 = vsel %vm1677, %v1616, %v1618
  %v1682 = vsel %vm1677, %v1618, %v1620
  %v1683 = vsel %vm1677, %v1620, %v1622
  %v1684 = vsel %vm1677, %v1622, %v1624
  %v1685 = vsel %vm1677, %v1624, %v1626
  %v1686 = vsel %vm1677, %v1626, %v1628
  %v1687 = vsel %vm1677, %v1628, %v1630
  %v1688 = vsel %vm1677, %v1630, %v1632
  %v1689 = vsel %vm1677, %v1632, %v1634
  %v1690 = vsel %vm1677, %v1634, %v1636
  %v1691 = vsel %vm1677, %v1636, %v1638
  %v1692 = vsel %vm1677, %v1638, %v1640
  %v1693 = vsel %vm1677, %v1640, %v1642
  %v1694 = vsel %vm1677, %v1644, %v1646
  %v1695 = vsel %vm1677, %v1646, %v1648
  %v1696 = vsel %vm1677, %v1648, %v1650
  %v1697 = vsel %vm1677, %v1650, %v1652
  %v1698 = vsel %vm1677, %v1652, %v1654
  %v1699 = vsel %vm1677, %v1654, %v1656
  %v1700 = vsel %vm1677, %v1656, %v1658
  %v1701 = vsel %vm1677, %v1658, %v1660
  %v1702 = vsel %vm1677, %v1660, %v1662
  %v1703 = vsel %vm1677, %v1662, %v1664
  %v1704 = vsel %vm1677, %v1664, %v1666
  %v1705 = vsel %vm1677, %v1666, %v1668
  %v1706 = vsel %vm1677, %v1668, %v1670
  %v1707 = vsel %vm1677, %v1670, %v1672
  %v1708 = vsel %vm1677, %v1672, %v1674
  %v1709 = vsel %vm1677, %v1674, %v1676
  %1742 = vst [vmem:[#allocation3 + $0x600] sm:$0xff] %v1678
  %1743 = vst [vmem:[#allocation3 + $0x608] sm:$0xff] %v1679
  %1744 = vst [vmem:[#allocation3 + $0x610] sm:$0xff] %v1680
  %1745 = vst [vmem:[#allocation3 + $0x618] sm:$0xff] %v1681
  %1746 = vst [vmem:[#allocation3 + $0x620] sm:$0xff] %v1682
  %1747 = vst [vmem:[#allocation3 + $0x628] sm:$0xff] %v1683
  %1748 = vst [vmem:[#allocation3 + $0x630] sm:$0xff] %v1684
  %1749 = vst [vmem:[#allocation3 + $0x638] sm:$0xff] %v1685
  %1750 = vst [vmem:[#allocation3 + $0x640] sm:$0xff] %v1686
  %1751 = vst [vmem:[#allocation3 + $0x648] sm:$0xff] %v1687
  %1752 = vst [vmem:[#allocation3 + $0x650] sm:$0xff] %v1688
  %1753 = vst [vmem:[#allocation3 + $0x658] sm:$0xff] %v1689
  %1754 = vst [vmem:[#allocation3 + $0x660] sm:$0xff] %v1690
  %1755 = vst [vmem:[#allocation3 + $0x668] sm:$0xff] %v1691
  %1756 = vst [vmem:[#allocation3 + $0x670] sm:$0xff] %v1692
  %1757 = vst [vmem:[#allocation3 + $0x678] sm:$0xff] %v1693
  %1758 = vst [vmem:[#allocation3 + $0x680] sm:$0xff] %v1694
  %1759 = vst [vmem:[#allocation3 + $0x688] sm:$0xff] %v1695
  %1760 = vst [vmem:[#allocation3 + $0x690] sm:$0xff] %v1696
  %1761 = vst [vmem:[#allocation3 + $0x698] sm:$0xff] %v1697
  %1762 = vst [vmem:[#allocation3 + $0x6a0] sm:$0xff] %v1698
  %1763 = vst [vmem:[#allocation3 + $0x6a8] sm:$0xff] %v1699
  %1764 = vst [vmem:[#allocation3 + $0x6b0] sm:$0xff] %v1700
  %1765 = vst [vmem:[#allocation3 + $0x6b8] sm:$0xff] %v1701
  %1766 = vst [vmem:[#allocation3 + $0x6c0] sm:$0xff] %v1702
  %1767 = vst [vmem:[#allocation3 + $0x6c8] sm:$0xff] %v1703
  %1768 = vst [vmem:[#allocation3 + $0x6d0] sm:$0xff] %v1704
  %1769 = vst [vmem:[#allocation3 + $0x6d8] sm:$0xff] %v1705
  %1770 = vst [vmem:[#allocation3 + $0x6e0] sm:$0xff] %v1706
  %1771 = vst [vmem:[#allocation3 + $0x6e8] sm:$0xff] %v1707
  %1772 = vst [vmem:[#allocation3 + $0x6f0] sm:$0xff] %v1708
  %1773 = vst [vmem:[#allocation3 + $0x6f8] sm:$0xff] %v1709
  %v1774 = vld [vmem:[#allocation2] sm:$0xff]
  %v1775 = vld [vmem:[#allocation2 + $0x8] sm:$0xff]
  %v1776 = vld [vmem:[#allocation2 + $0x10] sm:$0xff]
  %v1777 = vld [vmem:[#allocation2 + $0x18] sm:$0xff]
  %v1778 = vld [vmem:[#allocation2 + $0x20] sm:$0xff]
  %v1779 = vld [vmem:[#allocation2 + $0x28] sm:$0xff]
  %v1780 = vld [vmem:[#allocation2 + $0x30] sm:$0xff]
  %v1781 = vld [vmem:[#allocation2 + $0x38] sm:$0xff]
  %v1782 = vld [vmem:[#allocation2 + $0x40] sm:$0xff]
  %v1783 = vld [vmem:[#allocation2 + $0x48] sm:$0xff]
  %v1784 = vld [vmem:[#allocation2 + $0x50] sm:$0xff]
  %v1785 = vld [vmem:[#allocation2 + $0x58] sm:$0xff]
  %v1786 = vld [vmem:[#allocation2 + $0x60] sm:$0xff]
  %v1787 = vld [vmem:[#allocation2 + $0x68] sm:$0xff]
  %v1788 = vld [vmem:[#allocation2 + $0x70] sm:$0xff]
  %v1789 = vld [vmem:[#allocation2 + $0x78] sm:$0xff]
  %v1790 = vld [vmem:[#allocation2 + $0x80] sm:$0xff]
  %v1791 = vld [vmem:[#allocation2 + $0x90] sm:$0xff]
  %v1792 = vld [vmem:[#allocation2 + $0x98] sm:$0xff]
  %v1793 = vld [vmem:[#allocation2 + $0xa0] sm:$0xff]
  %v1794 = vld [vmem:[#allocation2 + $0xa8] sm:$0xff]
  %v1795 = vld [vmem:[#allocation2 + $0xb0] sm:$0xff]
  %v1796 = vld [vmem:[#allocation2 + $0xb8] sm:$0xff]
  %v1797 = vld [vmem:[#allocation2 + $0xc0] sm:$0xff]
  %v1798 = vld [vmem:[#allocation2 + $0xc8] sm:$0xff]
  %v1799 = vld [vmem:[#allocation2 + $0xd0] sm:$0xff]
  %v1800 = vld [vmem:[#allocation2 + $0xd8] sm:$0xff]
  %v1801 = vld [vmem:[#allocation2 + $0xe0] sm:$0xff]
  %v1802 = vld [vmem:[#allocation2 + $0xe8] sm:$0xff]
  %v1803 = vld [vmem:[#allocation2 + $0xf0] sm:$0xff]
  %v1804 = vld [vmem:[#allocation2 + $0xf8] sm:$0xff]
  %v1805 = vld [vmem:[#allocation2 + $0x100] sm:$0xff]
  %v1806 = vld [vmem:[#allocation2 + $0x108] sm:$0xff]
  %v1807 = vld [vmem:[#allocation2 + $0x110] sm:$0xff]
  %1842 = vrot.lane.b32.xlu0 %v1774, 32
  %v1843 = vpop.permute.xlu0 %1842
  %1844 = vrot.lane.b32.xlu0 %v1775, 32
  %v1845 = vpop.permute.xlu0 %1844
  %1846 = vrot.lane.b32.xlu0 %v1776, 32
  %v1847 = vpop.permute.xlu0 %1846
  %1848 = vrot.lane.b32.xlu0 %v1777, 32
  %v1849 = vpop.permute.xlu0 %1848
  %1850 = vrot.lane.b32.xlu0 %v1778, 32
  %v1851 = vpop.permute.xlu0 %1850
  %1852 = vrot.lane.b32.xlu0 %v1779, 32
  %v1853 = vpop.permute.xlu0 %1852
  %1854 = vrot.lane.b32.xlu0 %v1780, 32
  %v1855 = vpop.permute.xlu0 %1854
  %1856 = vrot.lane.b32.xlu0 %v1781, 32
  %v1857 = vpop.permute.xlu0 %1856
  %1858 = vrot.lane.b32.xlu0 %v1782, 32
  %v1859 = vpop.permute.xlu0 %1858
  %1860 = vrot.lane.b32.xlu0 %v1783, 32
  %v1861 = vpop.permute.xlu0 %1860
  %1862 = vrot.lane.b32.xlu0 %v1784, 32
  %v1863 = vpop.permute.xlu0 %1862
  %1864 = vrot.lane.b32.xlu0 %v1785, 32
  %v1865 = vpop.permute.xlu0 %1864
  %1866 = vrot.lane.b32.xlu0 %v1786, 32
  %v1867 = vpop.permute.xlu0 %1866
  %1868 = vrot.lane.b32.xlu0 %v1787, 32
  %v1869 = vpop.permute.xlu0 %1868
  %1870 = vrot.lane.b32.xlu0 %v1788, 32
  %v1871 = vpop.permute.xlu0 %1870
  %1872 = vrot.lane.b32.xlu0 %v1789, 32
  %v1873 = vpop.permute.xlu0 %1872
  %1874 = vrot.lane.b32.xlu0 %v1790, 32
  %v1875 = vpop.permute.xlu0 %1874
  %1876 = vrot.lane.b32.xlu0 %v1791, 32
  %v1877 = vpop.permute.xlu0 %1876
  %1878 = vrot.lane.b32.xlu0 %v1792, 32
  %v1879 = vpop.permute.xlu0 %1878
  %1880 = vrot.lane.b32.xlu0 %v1793, 32
  %v1881 = vpop.permute.xlu0 %1880
  %1882 = vrot.lane.b32.xlu0 %v1794, 32
  %v1883 = vpop.permute.xlu0 %1882
  %1884 = vrot.lane.b32.xlu0 %v1795, 32
  %v1885 = vpop.permute.xlu0 %1884
  %1886 = vrot.lane.b32.xlu0 %v1796, 32
  %v1887 = vpop.permute.xlu0 %1886
  %1888 = vrot.lane.b32.xlu0 %v1797, 32
  %v1889 = vpop.permute.xlu0 %1888
  %1890 = vrot.lane.b32.xlu0 %v1798, 32
  %v1891 = vpop.permute.xlu0 %1890
  %1892 = vrot.lane.b32.xlu0 %v1799, 32
  %v1893 = vpop.permute.xlu0 %1892
  %1894 = vrot.lane.b32.xlu0 %v1800, 32
  %v1895 = vpop.permute.xlu0 %1894
  %1896 = vrot.lane.b32.xlu0 %v1801, 32
  %v1897 = vpop.permute.xlu0 %1896
  %1898 = vrot.lane.b32.xlu0 %v1802, 32
  %v1899 = vpop.permute.xlu0 %1898
  %1900 = vrot.lane.b32.xlu0 %v1803, 32
  %v1901 = vpop.permute.xlu0 %1900
  %1902 = vrot.lane.b32.xlu0 %v1804, 32
  %v1903 = vpop.permute.xlu0 %1902
  %1904 = vrot.lane.b32.xlu0 %v1805, 32
  %v1905 = vpop.permute.xlu0 %1904
  %1906 = vrot.lane.b32.xlu0 %v1806, 32
  %v1907 = vpop.permute.xlu0 %1906
  %1908 = vrot.lane.b32.xlu0 %v1807, 32
  %v1909 = vpop.permute.xlu0 %1908
  %vm1910 = vcmask 261120
  %v1911 = vsel %vm1910, %v1843, %v1845
  %v1912 = vsel %vm1910, %v1845, %v1847
  %v1913 = vsel %vm1910, %v1847, %v1849
  %v1914 = vsel %vm1910, %v1849, %v1851
  %v1915 = vsel %vm1910, %v1851, %v1853
  %v1916 = vsel %vm1910, %v1853, %v1855
  %v1917 = vsel %vm1910, %v1855, %v1857
  %v1918 = vsel %vm1910, %v1857, %v1859
  %v1919 = vsel %vm1910, %v1859, %v1861
  %v1920 = vsel %vm1910, %v1861, %v1863
  %v1921 = vsel %vm1910, %v1863, %v1865
  %v1922 = vsel %vm1910, %v1865, %v1867
  %v1923 = vsel %vm1910, %v1867, %v1869
  %v1924 = vsel %vm1910, %v1869, %v1871
  %v1925 = vsel %vm1910, %v1871, %v1873
  %v1926 = vsel %vm1910, %v1873, %v1875
  %v1927 = vsel %vm1910, %v1877, %v1879
  %v1928 = vsel %vm1910, %v1879, %v1881
  %v1929 = vsel %vm1910, %v1881, %v1883
  %v1930 = vsel %vm1910, %v1883, %v1885
  %v1931 = vsel %vm1910, %v1885, %v1887
  %v1932 = vsel %vm1910, %v1887, %v1889
  %v1933 = vsel %vm1910, %v1889, %v1891
  %v1934 = vsel %vm1910, %v1891, %v1893
  %v1935 = vsel %vm1910, %v1893, %v1895
  %v1936 = vsel %vm1910, %v1895, %v1897
  %v1937 = vsel %vm1910, %v1897, %v1899
  %v1938 = vsel %vm1910, %v1899, %v1901
  %v1939 = vsel %vm1910, %v1901, %v1903
  %v1940 = vsel %vm1910, %v1903, %v1905
  %v1941 = vsel %vm1910, %v1905, %v1907
  %v1942 = vsel %vm1910, %v1907, %v1909
  %1975 = vst [vmem:[#allocation3 + $0x700] sm:$0xff] %v1911
  %1976 = vst [vmem:[#allocation3 + $0x708] sm:$0xff] %v1912
  %1977 = vst [vmem:[#allocation3 + $0x710] sm:$0xff] %v1913
  %1978 = vst [vmem:[#allocation3 + $0x718] sm:$0xff] %v1914
  %1979 = vst [vmem:[#allocation3 + $0x720] sm:$0xff] %v1915
  %1980 = vst [vmem:[#allocation3 + $0x728] sm:$0xff] %v1916
  %1981 = vst [vmem:[#allocation3 + $0x730] sm:$0xff] %v1917
  %1982 = vst [vmem:[#allocation3 + $0x738] sm:$0xff] %v1918
  %1983 = vst [vmem:[#allocation3 + $0x740] sm:$0xff] %v1919
  %1984 = vst [vmem:[#allocation3 + $0x748] sm:$0xff] %v1920
  %1985 = vst [vmem:[#allocation3 + $0x750] sm:$0xff] %v1921
  %1986 = vst [vmem:[#allocation3 + $0x758] sm:$0xff] %v1922
  %1987 = vst [vmem:[#allocation3 + $0x760] sm:$0xff] %v1923
  %1988 = vst [vmem:[#allocation3 + $0x768] sm:$0xff] %v1924
  %1989 = vst [vmem:[#allocation3 + $0x770] sm:$0xff] %v1925
  %1990 = vst [vmem:[#allocation3 + $0x778] sm:$0xff] %v1926
  %1991 = vst [vmem:[#allocation3 + $0x780] sm:$0xff] %v1927
  %1992 = vst [vmem:[#allocation3 + $0x788] sm:$0xff] %v1928
  %1993 = vst [vmem:[#allocation3 + $0x790] sm:$0xff] %v1929
  %1994 = vst [vmem:[#allocation3 + $0x798] sm:$0xff] %v1930
  %1995 = vst [vmem:[#allocation3 + $0x7a0] sm:$0xff] %v1931
  %1996 = vst [vmem:[#allocation3 + $0x7a8] sm:$0xff] %v1932
  %1997 = vst [vmem:[#allocation3 + $0x7b0] sm:$0xff] %v1933
  %1998 = vst [vmem:[#allocation3 + $0x7b8] sm:$0xff] %v1934
  %1999 = vst [vmem:[#allocation3 + $0x7c0] sm:$0xff] %v1935
  %2000 = vst [vmem:[#allocation3 + $0x7c8] sm:$0xff] %v1936
  %2001 = vst [vmem:[#allocation3 + $0x7d0] sm:$0xff] %v1937
  %2002 = vst [vmem:[#allocation3 + $0x7d8] sm:$0xff] %v1938
  %2003 = vst [vmem:[#allocation3 + $0x7e0] sm:$0xff] %v1939
  %2004 = vst [vmem:[#allocation3 + $0x7e8] sm:$0xff] %v1940
  %2005 = vst [vmem:[#allocation3 + $0x7f0] sm:$0xff] %v1941
  %2006 = vst [vmem:[#allocation3 + $0x7f8] sm:$0xff] %v1942
  %v2007 = vld [vmem:[#allocation2] sm:$0xff]
  %v2008 = vld [vmem:[#allocation2 + $0x8] sm:$0xff]
  %v2009 = vld [vmem:[#allocation2 + $0x10] sm:$0xff]
  %v2010 = vld [vmem:[#allocation2 + $0x18] sm:$0xff]
  %v2011 = vld [vmem:[#allocation2 + $0x20] sm:$0xff]
  %v2012 = vld [vmem:[#allocation2 + $0x28] sm:$0xff]
  %v2013 = vld [vmem:[#allocation2 + $0x30] sm:$0xff]
  %v2014 = vld [vmem:[#allocation2 + $0x38] sm:$0xff]
  %v2015 = vld [vmem:[#allocation2 + $0x40] sm:$0xff]
  %v2016 = vld [vmem:[#allocation2 + $0x48] sm:$0xff]
  %v2017 = vld [vmem:[#allocation2 + $0x50] sm:$0xff]
  %v2018 = vld [vmem:[#allocation2 + $0x58] sm:$0xff]
  %v2019 = vld [vmem:[#allocation2 + $0x60] sm:$0xff]
  %v2020 = vld [vmem:[#allocation2 + $0x68] sm:$0xff]
  %v2021 = vld [vmem:[#allocation2 + $0x70] sm:$0xff]
  %v2022 = vld [vmem:[#allocation2 + $0x78] sm:$0xff]
  %v2023 = vld [vmem:[#allocation2 + $0x80] sm:$0xff]
  %v2024 = vld [vmem:[#allocation2 + $0x90] sm:$0xff]
  %v2025 = vld [vmem:[#allocation2 + $0x98] sm:$0xff]
  %v2026 = vld [vmem:[#allocation2 + $0xa0] sm:$0xff]
  %v2027 = vld [vmem:[#allocation2 + $0xa8] sm:$0xff]
  %v2028 = vld [vmem:[#allocation2 + $0xb0] sm:$0xff]
  %v2029 = vld [vmem:[#allocation2 + $0xb8] sm:$0xff]
  %v2030 = vld [vmem:[#allocation2 + $0xc0] sm:$0xff]
  %v2031 = vld [vmem:[#allocation2 + $0xc8] sm:$0xff]
  %v2032 = vld [vmem:[#allocation2 + $0xd0] sm:$0xff]
  %v2033 = vld [vmem:[#allocation2 + $0xd8] sm:$0xff]
  %v2034 = vld [vmem:[#allocation2 + $0xe0] sm:$0xff]
  %v2035 = vld [vmem:[#allocation2 + $0xe8] sm:$0xff]
  %v2036 = vld [vmem:[#allocation2 + $0xf0] sm:$0xff]
  %v2037 = vld [vmem:[#allocation2 + $0xf8] sm:$0xff]
  %v2038 = vld [vmem:[#allocation2 + $0x100] sm:$0xff]
  %v2039 = vld [vmem:[#allocation2 + $0x108] sm:$0xff]
  %v2040 = vld [vmem:[#allocation2 + $0x110] sm:$0xff]
  %2075 = vrot.lane.b32.xlu0 %v2007, 33
  %v2076 = vpop.permute.xlu0 %2075
  %2077 = vrot.lane.b32.xlu0 %v2008, 33
  %v2078 = vpop.permute.xlu0 %2077
  %2079 = vrot.lane.b32.xlu0 %v2009, 33
  %v2080 = vpop.permute.xlu0 %2079
  %2081 = vrot.lane.b32.xlu0 %v2010, 33
  %v2082 = vpop.permute.xlu0 %2081
  %2083 = vrot.lane.b32.xlu0 %v2011, 33
  %v2084 = vpop.permute.xlu0 %2083
  %2085 = vrot.lane.b32.xlu0 %v2012, 33
  %v2086 = vpop.permute.xlu0 %2085
  %2087 = vrot.lane.b32.xlu0 %v2013, 33
  %v2088 = vpop.permute.xlu0 %2087
  %2089 = vrot.lane.b32.xlu0 %v2014, 33
  %v2090 = vpop.permute.xlu0 %2089
  %2091 = vrot.lane.b32.xlu0 %v2015, 33
  %v2092 = vpop.permute.xlu0 %2091
  %2093 = vrot.lane.b32.xlu0 %v2016, 33
  %v2094 = vpop.permute.xlu0 %2093
  %2095 = vrot.lane.b32.xlu0 %v2017, 33
  %v2096 = vpop.permute.xlu0 %2095
  %2097 = vrot.lane.b32.xlu0 %v2018, 33
  %v2098 = vpop.permute.xlu0 %2097
  %2099 = vrot.lane.b32.xlu0 %v2019, 33
  %v2100 = vpop.permute.xlu0 %2099
  %2101 = vrot.lane.b32.xlu0 %v2020, 33
  %v2102 = vpop.permute.xlu0 %2101
  %2103 = vrot.lane.b32.xlu0 %v2021, 33
  %v2104 = vpop.permute.xlu0 %2103
  %2105 = vrot.lane.b32.xlu0 %v2022, 33
  %v2106 = vpop.permute.xlu0 %2105
  %2107 = vrot.lane.b32.xlu0 %v2023, 33
  %v2108 = vpop.permute.xlu0 %2107
  %2109 = vrot.lane.b32.xlu0 %v2024, 33
  %v2110 = vpop.permute.xlu0 %2109
  %2111 = vrot.lane.b32.xlu0 %v2025, 33
  %v2112 = vpop.permute.xlu0 %2111
  %2113 = vrot.lane.b32.xlu0 %v2026, 33
  %v2114 = vpop.permute.xlu0 %2113
  %2115 = vrot.lane.b32.xlu0 %v2027, 33
  %v2116 = vpop.permute.xlu0 %2115
  %2117 = vrot.lane.b32.xlu0 %v2028, 33
  %v2118 = vpop.permute.xlu0 %2117
  %2119 = vrot.lane.b32.xlu0 %v2029, 33
  %v2120 = vpop.permute.xlu0 %2119
  %2121 = vrot.lane.b32.xlu0 %v2030, 33
  %v2122 = vpop.permute.xlu0 %2121
  %2123 = vrot.lane.b32.xlu0 %v2031, 33
  %v2124 = vpop.permute.xlu0 %2123
  %2125 = vrot.lane.b32.xlu0 %v2032, 33
  %v2126 = vpop.permute.xlu0 %2125
  %2127 = vrot.lane.b32.xlu0 %v2033, 33
  %v2128 = vpop.permute.xlu0 %2127
  %2129 = vrot.lane.b32.xlu0 %v2034, 33
  %v2130 = vpop.permute.xlu0 %2129
  %2131 = vrot.lane.b32.xlu0 %v2035, 33
  %v2132 = vpop.permute.xlu0 %2131
  %2133 = vrot.lane.b32.xlu0 %v2036, 33
  %v2134 = vpop.permute.xlu0 %2133
  %2135 = vrot.lane.b32.xlu0 %v2037, 33
  %v2136 = vpop.permute.xlu0 %2135
  %2137 = vrot.lane.b32.xlu0 %v2038, 33
  %v2138 = vpop.permute.xlu0 %2137
  %2139 = vrot.lane.b32.xlu0 %v2039, 33
  %v2140 = vpop.permute.xlu0 %2139
  %2141 = vrot.lane.b32.xlu0 %v2040, 33
  %v2142 = vpop.permute.xlu0 %2141
  %vm2143 = vcmask 269312
  %v2144 = vsel %vm2143, %v2076, %v2078
  %v2145 = vsel %vm2143, %v2078, %v2080
  %v2146 = vsel %vm2143, %v2080, %v2082
  %v2147 = vsel %vm2143, %v2082, %v2084
  %v2148 = vsel %vm2143, %v2084, %v2086
  %v2149 = vsel %vm2143, %v2086, %v2088
  %v2150 = vsel %vm2143, %v2088, %v2090
  %v2151 = vsel %vm2143, %v2090, %v2092
  %v2152 = vsel %vm2143, %v2092, %v2094
  %v2153 = vsel %vm2143, %v2094, %v2096
  %v2154 = vsel %vm2143, %v2096, %v2098
  %v2155 = vsel %vm2143, %v2098, %v2100
  %v2156 = vsel %vm2143, %v2100, %v2102
  %v2157 = vsel %vm2143, %v2102, %v2104
  %v2158 = vsel %vm2143, %v2104, %v2106
  %v2159 = vsel %vm2143, %v2106, %v2108
  %v2160 = vsel %vm2143, %v2110, %v2112
  %v2161 = vsel %vm2143, %v2112, %v2114
  %v2162 = vsel %vm2143, %v2114, %v2116
  %v2163 = vsel %vm2143, %v2116, %v2118
  %v2164 = vsel %vm2143, %v2118, %v2120
  %v2165 = vsel %vm2143, %v2120, %v2122
  %v2166 = vsel %vm2143, %v2122, %v2124
  %v2167 = vsel %vm2143, %v2124, %v2126
  %v2168 = vsel %vm2143, %v2126, %v2128
  %v2169 = vsel %vm2143, %v2128, %v2130
  %v2170 = vsel %vm2143, %v2130, %v2132
  %v2171 = vsel %vm2143, %v2132, %v2134
  %v2172 = vsel %vm2143, %v2134, %v2136
  %v2173 = vsel %vm2143, %v2136, %v2138
  %v2174 = vsel %vm2143, %v2138, %v2140
  %v2175 = vsel %vm2143, %v2140, %v2142
  %2208 = vst [vmem:[#allocation3 + $0x800] sm:$0xff] %v2144
  %2209 = vst [vmem:[#allocation3 + $0x808] sm:$0xff] %v2145
  %2210 = vst [vmem:[#allocation3 + $0x810] sm:$0xff] %v2146
  %2211 = vst [vmem:[#allocation3 + $0x818] sm:$0xff] %v2147
  %2212 = vst [vmem:[#allocation3 + $0x820] sm:$0xff] %v2148
  %2213 = vst [vmem:[#allocation3 + $0x828] sm:$0xff] %v2149
  %2214 = vst [vmem:[#allocation3 + $0x830] sm:$0xff] %v2150
  %2215 = vst [vmem:[#allocation3 + $0x838] sm:$0xff] %v2151
  %2216 = vst [vmem:[#allocation3 + $0x840] sm:$0xff] %v2152
  %2217 = vst [vmem:[#allocation3 + $0x848] sm:$0xff] %v2153
  %2218 = vst [vmem:[#allocation3 + $0x850] sm:$0xff] %v2154
  %2219 = vst [vmem:[#allocation3 + $0x858] sm:$0xff] %v2155
  %2220 = vst [vmem:[#allocation3 + $0x860] sm:$0xff] %v2156
  %2221 = vst [vmem:[#allocation3 + $0x868] sm:$0xff] %v2157
  %2222 = vst [vmem:[#allocation3 + $0x870] sm:$0xff] %v2158
  %2223 = vst [vmem:[#allocation3 + $0x878] sm:$0xff] %v2159
  %2224 = vst [vmem:[#allocation3 + $0x880] sm:$0xff] %v2160
  %2225 = vst [vmem:[#allocation3 + $0x888] sm:$0xff] %v2161
  %2226 = vst [vmem:[#allocation3 + $0x890] sm:$0xff] %v2162
  %2227 = vst [vmem:[#allocation3 + $0x898] sm:$0xff] %v2163
  %2228 = vst [vmem:[#allocation3 + $0x8a0] sm:$0xff] %v2164
  %2229 = vst [vmem:[#allocation3 + $0x8a8] sm:$0xff] %v2165
  %2230 = vst [vmem:[#allocation3 + $0x8b0] sm:$0xff] %v2166
  %2231 = vst [vmem:[#allocation3 + $0x8b8] sm:$0xff] %v2167
  %2232 = vst [vmem:[#allocation3 + $0x8c0] sm:$0xff] %v2168
  %2233 = vst [vmem:[#allocation3 + $0x8c8] sm:$0xff] %v2169
  %2234 = vst [vmem:[#allocation3 + $0x8d0] sm:$0xff] %v2170
  %2235 = vst [vmem:[#allocation3 + $0x8d8] sm:$0xff] %v2171
  %2236 = vst [vmem:[#allocation3 + $0x8e0] sm:$0xff] %v2172
  %2237 = vst [vmem:[#allocation3 + $0x8e8] sm:$0xff] %v2173
  %2238 = vst [vmem:[#allocation3 + $0x8f0] sm:$0xff] %v2174
  %2239 = vst [vmem:[#allocation3 + $0x8f8] sm:$0xff] %v2175
  %v2240 = vld [vmem:[#allocation2] sm:$0xff]
  %v2241 = vld [vmem:[#allocation2 + $0x8] sm:$0xff]
  %v2242 = vld [vmem:[#allocation2 + $0x10] sm:$0xff]
  %v2243 = vld [vmem:[#allocation2 + $0x18] sm:$0xff]
  %v2244 = vld [vmem:[#allocation2 + $0x20] sm:$0xff]
  %v2245 = vld [vmem:[#allocation2 + $0x28] sm:$0xff]
  %v2246 = vld [vmem:[#allocation2 + $0x30] sm:$0xff]
  %v2247 = vld [vmem:[#allocation2 + $0x38] sm:$0xff]
  %v2248 = vld [vmem:[#allocation2 + $0x40] sm:$0xff]
  %v2249 = vld [vmem:[#allocation2 + $0x48] sm:$0xff]
  %v2250 = vld [vmem:[#allocation2 + $0x50] sm:$0xff]
  %v2251 = vld [vmem:[#allocation2 + $0x58] sm:$0xff]
  %v2252 = vld [vmem:[#allocation2 + $0x60] sm:$0xff]
  %v2253 = vld [vmem:[#allocation2 + $0x68] sm:$0xff]
  %v2254 = vld [vmem:[#allocation2 + $0x70] sm:$0xff]
  %v2255 = vld [vmem:[#allocation2 + $0x78] sm:$0xff]
  %v2256 = vld [vmem:[#allocation2 + $0x80] sm:$0xff]
  %v2257 = vld [vmem:[#allocation2 + $0x90] sm:$0xff]
  %v2258 = vld [vmem:[#allocation2 + $0x98] sm:$0xff]
  %v2259 = vld [vmem:[#allocation2 + $0xa0] sm:$0xff]
  %v2260 = vld [vmem:[#allocation2 + $0xa8] sm:$0xff]
  %v2261 = vld [vmem:[#allocation2 + $0xb0] sm:$0xff]
  %v2262 = vld [vmem:[#allocation2 + $0xb8] sm:$0xff]
  %v2263 = vld [vmem:[#allocation2 + $0xc0] sm:$0xff]
  %v2264 = vld [vmem:[#allocation2 + $0xc8] sm:$0xff]
  %v2265 = vld [vmem:[#allocation2 + $0xd0] sm:$0xff]
  %v2266 = vld [vmem:[#allocation2 + $0xd8] sm:$0xff]
  %v2267 = vld [vmem:[#allocation2 + $0xe0] sm:$0xff]
  %v2268 = vld [vmem:[#allocation2 + $0xe8] sm:$0xff]
  %v2269 = vld [vmem:[#allocation2 + $0xf0] sm:$0xff]
  %v2270 = vld [vmem:[#allocation2 + $0xf8] sm:$0xff]
  %v2271 = vld [vmem:[#allocation2 + $0x100] sm:$0xff]
  %v2272 = vld [vmem:[#allocation2 + $0x108] sm:$0xff]
  %v2273 = vld [vmem:[#allocation2 + $0x110] sm:$0xff]
  %2308 = vrot.lane.b32.xlu0 %v2240, 47
  %v2309 = vpop.permute.xlu0 %2308
  %2310 = vrot.lane.b32.xlu0 %v2241, 47
  %v2311 = vpop.permute.xlu0 %2310
  %2312 = vrot.lane.b32.xlu0 %v2242, 47
  %v2313 = vpop.permute.xlu0 %2312
  %2314 = vrot.lane.b32.xlu0 %v2243, 47
  %v2315 = vpop.permute.xlu0 %2314
  %2316 = vrot.lane.b32.xlu0 %v2244, 47
  %v2317 = vpop.permute.xlu0 %2316
  %2318 = vrot.lane.b32.xlu0 %v2245, 47
  %v2319 = vpop.permute.xlu0 %2318
  %2320 = vrot.lane.b32.xlu0 %v2246, 47
  %v2321 = vpop.permute.xlu0 %2320
  %2322 = vrot.lane.b32.xlu0 %v2247, 47
  %v2323 = vpop.permute.xlu0 %2322
  %2324 = vrot.lane.b32.xlu0 %v2248, 47
  %v2325 = vpop.permute.xlu0 %2324
  %2326 = vrot.lane.b32.xlu0 %v2249, 47
  %v2327 = vpop.permute.xlu0 %2326
  %2328 = vrot.lane.b32.xlu0 %v2250, 47
  %v2329 = vpop.permute.xlu0 %2328
  %2330 = vrot.lane.b32.xlu0 %v2251, 47
  %v2331 = vpop.permute.xlu0 %2330
  %2332 = vrot.lane.b32.xlu0 %v2252, 47
  %v2333 = vpop.permute.xlu0 %2332
  %2334 = vrot.lane.b32.xlu0 %v2253, 47
  %v2335 = vpop.permute.xlu0 %2334
  %2336 = vrot.lane.b32.xlu0 %v2254, 47
  %v2337 = vpop.permute.xlu0 %2336
  %2338 = vrot.lane.b32.xlu0 %v2255, 47
  %v2339 = vpop.permute.xlu0 %2338
  %2340 = vrot.lane.b32.xlu0 %v2256, 47
  %v2341 = vpop.permute.xlu0 %2340
  %2342 = vrot.lane.b32.xlu0 %v2257, 47
  %v2343 = vpop.permute.xlu0 %2342
  %2344 = vrot.lane.b32.xlu0 %v2258, 47
  %v2345 = vpop.permute.xlu0 %2344
  %2346 = vrot.lane.b32.xlu0 %v2259, 47
  %v2347 = vpop.permute.xlu0 %2346
  %2348 = vrot.lane.b32.xlu0 %v2260, 47
  %v2349 = vpop.permute.xlu0 %2348
  %2350 = vrot.lane.b32.xlu0 %v2261, 47
  %v2351 = vpop.permute.xlu0 %2350
  %2352 = vrot.lane.b32.xlu0 %v2262, 47
  %v2353 = vpop.permute.xlu0 %2352
  %2354 = vrot.lane.b32.xlu0 %v2263, 47
  %v2355 = vpop.permute.xlu0 %2354
  %2356 = vrot.lane.b32.xlu0 %v2264, 47
  %v2357 = vpop.permute.xlu0 %2356
  %2358 = vrot.lane.b32.xlu0 %v2265, 47
  %v2359 = vpop.permute.xlu0 %2358
  %2360 = vrot.lane.b32.xlu0 %v2266, 47
  %v2361 = vpop.permute.xlu0 %2360
  %2362 = vrot.lane.b32.xlu0 %v2267, 47
  %v2363 = vpop.permute.xlu0 %2362
  %2364 = vrot.lane.b32.xlu0 %v2268, 47
  %v2365 = vpop.permute.xlu0 %2364
  %2366 = vrot.lane.b32.xlu0 %v2269, 47
  %v2367 = vpop.permute.xlu0 %2366
  %2368 = vrot.lane.b32.xlu0 %v2270, 47
  %v2369 = vpop.permute.xlu0 %2368
  %2370 = vrot.lane.b32.xlu0 %v2271, 47
  %v2371 = vpop.permute.xlu0 %2370
  %2372 = vrot.lane.b32.xlu0 %v2272, 47
  %v2373 = vpop.permute.xlu0 %2372
  %2374 = vrot.lane.b32.xlu0 %v2273, 47
  %v2375 = vpop.permute.xlu0 %2374
  %vm2376 = vcmask 384000
  %v2377 = vsel %vm2376, %v2309, %v2311
  %v2378 = vsel %vm2376, %v2311, %v2313
  %v2379 = vsel %vm2376, %v2313, %v2315
  %v2380 = vsel %vm2376, %v2315, %v2317
  %v2381 = vsel %vm2376, %v2317, %v2319
  %v2382 = vsel %vm2376, %v2319, %v2321
  %v2383 = vsel %vm2376, %v2321, %v2323
  %v2384 = vsel %vm2376, %v2323, %v2325
  %v2385 = vsel %vm2376, %v2325, %v2327
  %v2386 = vsel %vm2376, %v2327, %v2329
  %v2387 = vsel %vm2376, %v2329, %v2331
  %v2388 = vsel %vm2376, %v2331, %v2333
  %v2389 = vsel %vm2376, %v2333, %v2335
  %v2390 = vsel %vm2376, %v2335, %v2337
  %v2391 = vsel %vm2376, %v2337, %v2339
  %v2392 = vsel %vm2376, %v2339, %v2341
  %v2393 = vsel %vm2376, %v2343, %v2345
  %v2394 = vsel %vm2376, %v2345, %v2347
  %v2395 = vsel %vm2376, %v2347, %v2349
  %v2396 = vsel %vm2376, %v2349, %v2351
  %v2397 = vsel %vm2376, %v2351, %v2353
  %v2398 = vsel %vm2376, %v2353, %v2355
  %v2399 = vsel %vm2376, %v2355, %v2357
  %v2400 = vsel %vm2376, %v2357, %v2359
  %v2401 = vsel %vm2376, %v2359, %v2361
  %v2402 = vsel %vm2376, %v2361, %v2363
  %v2403 = vsel %vm2376, %v2363, %v2365
  %v2404 = vsel %vm2376, %v2365, %v2367
  %v2405 = vsel %vm2376, %v2367, %v2369
  %v2406 = vsel %vm2376, %v2369, %v2371
  %v2407 = vsel %vm2376, %v2371, %v2373
  %v2408 = vsel %vm2376, %v2373, %v2375
  %2441 = vst [vmem:[#allocation3 + $0x900] sm:$0xff] %v2377
  %2442 = vst [vmem:[#allocation3 + $0x908] sm:$0xff] %v2378
  %2443 = vst [vmem:[#allocation3 + $0x910] sm:$0xff] %v2379
  %2444 = vst [vmem:[#allocation3 + $0x918] sm:$0xff] %v2380
  %2445 = vst [vmem:[#allocation3 + $0x920] sm:$0xff] %v2381
  %2446 = vst [vmem:[#allocation3 + $0x928] sm:$0xff] %v2382
  %2447 = vst [vmem:[#allocation3 + $0x930] sm:$0xff] %v2383
  %2448 = vst [vmem:[#allocation3 + $0x938] sm:$0xff] %v2384
  %2449 = vst [vmem:[#allocation3 + $0x940] sm:$0xff] %v2385
  %2450 = vst [vmem:[#allocation3 + $0x948] sm:$0xff] %v2386
  %2451 = vst [vmem:[#allocation3 + $0x950] sm:$0xff] %v2387
  %2452 = vst [vmem:[#allocation3 + $0x958] sm:$0xff] %v2388
  %2453 = vst [vmem:[#allocation3 + $0x960] sm:$0xff] %v2389
  %2454 = vst [vmem:[#allocation3 + $0x968] sm:$0xff] %v2390
  %2455 = vst [vmem:[#allocation3 + $0x970] sm:$0xff] %v2391
  %2456 = vst [vmem:[#allocation3 + $0x978] sm:$0xff] %v2392
  %2457 = vst [vmem:[#allocation3 + $0x980] sm:$0xff] %v2393
  %2458 = vst [vmem:[#allocation3 + $0x988] sm:$0xff] %v2394
  %2459 = vst [vmem:[#allocation3 + $0x990] sm:$0xff] %v2395
  %2460 = vst [vmem:[#allocation3 + $0x998] sm:$0xff] %v2396
  %2461 = vst [vmem:[#allocation3 + $0x9a0] sm:$0xff] %v2397
  %2462 = vst [vmem:[#allocation3 + $0x9a8] sm:$0xff] %v2398
  %2463 = vst [vmem:[#allocation3 + $0x9b0] sm:$0xff] %v2399
  %2464 = vst [vmem:[#allocation3 + $0x9b8] sm:$0xff] %v2400
  %2465 = vst [vmem:[#allocation3 + $0x9c0] sm:$0xff] %v2401
  %2466 = vst [vmem:[#allocation3 + $0x9c8] sm:$0xff] %v2402
  %2467 = vst [vmem:[#allocation3 + $0x9d0] sm:$0xff] %v2403
  %2468 = vst [vmem:[#allocation3 + $0x9d8] sm:$0xff] %v2404
  %2469 = vst [vmem:[#allocation3 + $0x9e0] sm:$0xff] %v2405
  %2470 = vst [vmem:[#allocation3 + $0x9e8] sm:$0xff] %v2406
  %2471 = vst [vmem:[#allocation3 + $0x9f0] sm:$0xff] %v2407
  %2472 = vst [vmem:[#allocation3 + $0x9f8] sm:$0xff] %v2408
  %v2473 = vld [vmem:[#allocation2] sm:$0xff]
  %v2474 = vld [vmem:[#allocation2 + $0x8] sm:$0xff]
  %v2475 = vld [vmem:[#allocation2 + $0x10] sm:$0xff]
  %v2476 = vld [vmem:[#allocation2 + $0x18] sm:$0xff]
  %v2477 = vld [vmem:[#allocation2 + $0x20] sm:$0xff]
  %v2478 = vld [vmem:[#allocation2 + $0x28] sm:$0xff]
  %v2479 = vld [vmem:[#allocation2 + $0x30] sm:$0xff]
  %v2480 = vld [vmem:[#allocation2 + $0x38] sm:$0xff]
  %v2481 = vld [vmem:[#allocation2 + $0x40] sm:$0xff]
  %v2482 = vld [vmem:[#allocation2 + $0x48] sm:$0xff]
  %v2483 = vld [vmem:[#allocation2 + $0x50] sm:$0xff]
  %v2484 = vld [vmem:[#allocation2 + $0x58] sm:$0xff]
  %v2485 = vld [vmem:[#allocation2 + $0x60] sm:$0xff]
  %v2486 = vld [vmem:[#allocation2 + $0x68] sm:$0xff]
  %v2487 = vld [vmem:[#allocation2 + $0x70] sm:$0xff]
  %v2488 = vld [vmem:[#allocation2 + $0x78] sm:$0xff]
  %v2489 = vld [vmem:[#allocation2 + $0x80] sm:$0xff]
  %v2490 = vld [vmem:[#allocation2 + $0x90] sm:$0xff]
  %v2491 = vld [vmem:[#allocation2 + $0x98] sm:$0xff]
  %v2492 = vld [vmem:[#allocation2 + $0xa0] sm:$0xff]
  %v2493 = vld [vmem:[#allocation2 + $0xa8] sm:$0xff]
  %v2494 = vld [vmem:[#allocation2 + $0xb0] sm:$0xff]
  %v2495 = vld [vmem:[#allocation2 + $0xb8] sm:$0xff]
  %v2496 = vld [vmem:[#allocation2 + $0xc0] sm:$0xff]
  %v2497 = vld [vmem:[#allocation2 + $0xc8] sm:$0xff]
  %v2498 = vld [vmem:[#allocation2 + $0xd0] sm:$0xff]
  %v2499 = vld [vmem:[#allocation2 + $0xd8] sm:$0xff]
  %v2500 = vld [vmem:[#allocation2 + $0xe0] sm:$0xff]
  %v2501 = vld [vmem:[#allocation2 + $0xe8] sm:$0xff]
  %v2502 = vld [vmem:[#allocation2 + $0xf0] sm:$0xff]
  %v2503 = vld [vmem:[#allocation2 + $0xf8] sm:$0xff]
  %v2504 = vld [vmem:[#allocation2 + $0x100] sm:$0xff]
  %v2505 = vld [vmem:[#allocation2 + $0x108] sm:$0xff]
  %v2506 = vld [vmem:[#allocation2 + $0x110] sm:$0xff]
  %2541 = vrot.lane.b32.xlu0 %v2473, 48
  %v2542 = vpop.permute.xlu0 %2541
  %2543 = vrot.lane.b32.xlu0 %v2474, 48
  %v2544 = vpop.permute.xlu0 %2543
  %2545 = vrot.lane.b32.xlu0 %v2475, 48
  %v2546 = vpop.permute.xlu0 %2545
  %2547 = vrot.lane.b32.xlu0 %v2476, 48
  %v2548 = vpop.permute.xlu0 %2547
  %2549 = vrot.lane.b32.xlu0 %v2477, 48
  %v2550 = vpop.permute.xlu0 %2549
  %2551 = vrot.lane.b32.xlu0 %v2478, 48
  %v2552 = vpop.permute.xlu0 %2551
  %2553 = vrot.lane.b32.xlu0 %v2479, 48
  %v2554 = vpop.permute.xlu0 %2553
  %2555 = vrot.lane.b32.xlu0 %v2480, 48
  %v2556 = vpop.permute.xlu0 %2555
  %2557 = vrot.lane.b32.xlu0 %v2481, 48
  %v2558 = vpop.permute.xlu0 %2557
  %2559 = vrot.lane.b32.xlu0 %v2482, 48
  %v2560 = vpop.permute.xlu0 %2559
  %2561 = vrot.lane.b32.xlu0 %v2483, 48
  %v2562 = vpop.permute.xlu0 %2561
  %2563 = vrot.lane.b32.xlu0 %v2484, 48
  %v2564 = vpop.permute.xlu0 %2563
  %2565 = vrot.lane.b32.xlu0 %v2485, 48
  %v2566 = vpop.permute.xlu0 %2565
  %2567 = vrot.lane.b32.xlu0 %v2486, 48
  %v2568 = vpop.permute.xlu0 %2567
  %2569 = vrot.lane.b32.xlu0 %v2487, 48
  %v2570 = vpop.permute.xlu0 %2569
  %2571 = vrot.lane.b32.xlu0 %v2488, 48
  %v2572 = vpop.permute.xlu0 %2571
  %2573 = vrot.lane.b32.xlu0 %v2489, 48
  %v2574 = vpop.permute.xlu0 %2573
  %2575 = vrot.lane.b32.xlu0 %v2490, 48
  %v2576 = vpop.permute.xlu0 %2575
  %2577 = vrot.lane.b32.xlu0 %v2491, 48
  %v2578 = vpop.permute.xlu0 %2577
  %2579 = vrot.lane.b32.xlu0 %v2492, 48
  %v2580 = vpop.permute.xlu0 %2579
  %2581 = vrot.lane.b32.xlu0 %v2493, 48
  %v2582 = vpop.permute.xlu0 %2581
  %2583 = vrot.lane.b32.xlu0 %v2494, 48
  %v2584 = vpop.permute.xlu0 %2583
  %2585 = vrot.lane.b32.xlu0 %v2495, 48
  %v2586 = vpop.permute.xlu0 %2585
  %2587 = vrot.lane.b32.xlu0 %v2496, 48
  %v2588 = vpop.permute.xlu0 %2587
  %2589 = vrot.lane.b32.xlu0 %v2497, 48
  %v2590 = vpop.permute.xlu0 %2589
  %2591 = vrot.lane.b32.xlu0 %v2498, 48
  %v2592 = vpop.permute.xlu0 %2591
  %2593 = vrot.lane.b32.xlu0 %v2499, 48
  %v2594 = vpop.permute.xlu0 %2593
  %2595 = vrot.lane.b32.xlu0 %v2500, 48
  %v2596 = vpop.permute.xlu0 %2595
  %2597 = vrot.lane.b32.xlu0 %v2501, 48
  %v2598 = vpop.permute.xlu0 %2597
  %2599 = vrot.lane.b32.xlu0 %v2502, 48
  %v2600 = vpop.permute.xlu0 %2599
  %2601 = vrot.lane.b32.xlu0 %v2503, 48
  %v2602 = vpop.permute.xlu0 %2601
  %2603 = vrot.lane.b32.xlu0 %v2504, 48
  %v2604 = vpop.permute.xlu0 %2603
  %2605 = vrot.lane.b32.xlu0 %v2505, 48
  %v2606 = vpop.permute.xlu0 %2605
  %2607 = vrot.lane.b32.xlu0 %v2506, 48
  %v2608 = vpop.permute.xlu0 %2607
  %vm2609 = vcmask 392192
  %v2610 = vsel %vm2609, %v2542, %v2544
  %v2611 = vsel %vm2609, %v2544, %v2546
  %v2612 = vsel %vm2609, %v2546, %v2548
  %v2613 = vsel %vm2609, %v2548, %v2550
  %v2614 = vsel %vm2609, %v2550, %v2552
  %v2615 = vsel %vm2609, %v2552, %v2554
  %v2616 = vsel %vm2609, %v2554, %v2556
  %v2617 = vsel %vm2609, %v2556, %v2558
  %v2618 = vsel %vm2609, %v2558, %v2560
  %v2619 = vsel %vm2609, %v2560, %v2562
  %v2620 = vsel %vm2609, %v2562, %v2564
  %v2621 = vsel %vm2609, %v2564, %v2566
  %v2622 = vsel %vm2609, %v2566, %v2568
  %v2623 = vsel %vm2609, %v2568, %v2570
  %v2624 = vsel %vm2609, %v2570, %v2572
  %v2625 = vsel %vm2609, %v2572, %v2574
  %v2626 = vsel %vm2609, %v2576, %v2578
  %v2627 = vsel %vm2609, %v2578, %v2580
  %v2628 = vsel %vm2609, %v2580, %v2582
  %v2629 = vsel %vm2609, %v2582, %v2584
  %v2630 = vsel %vm2609, %v2584, %v2586
  %v2631 = vsel %vm2609, %v2586, %v2588
  %v2632 = vsel %vm2609, %v2588, %v2590
  %v2633 = vsel %vm2609, %v2590, %v2592
  %v2634 = vsel %vm2609, %v2592, %v2594
  %v2635 = vsel %vm2609, %v2594, %v2596
  %v2636 = vsel %vm2609, %v2596, %v2598
  %v2637 = vsel %vm2609, %v2598, %v2600
  %v2638 = vsel %vm2609, %v2600, %v2602
  %v2639 = vsel %vm2609, %v2602, %v2604
  %v2640 = vsel %vm2609, %v2604, %v2606
  %v2641 = vsel %vm2609, %v2606, %v2608
  %2674 = vst [vmem:[#allocation3 + $0xa00] sm:$0xff] %v2610
  %2675 = vst [vmem:[#allocation3 + $0xa08] sm:$0xff] %v2611
  %2676 = vst [vmem:[#allocation3 + $0xa10] sm:$0xff] %v2612
  %2677 = vst [vmem:[#allocation3 + $0xa18] sm:$0xff] %v2613
  %2678 = vst [vmem:[#allocation3 + $0xa20] sm:$0xff] %v2614
  %2679 = vst [vmem:[#allocation3 + $0xa28] sm:$0xff] %v2615
  %2680 = vst [vmem:[#allocation3 + $0xa30] sm:$0xff] %v2616
  %2681 = vst [vmem:[#allocation3 + $0xa38] sm:$0xff] %v2617
  %2682 = vst [vmem:[#allocation3 + $0xa40] sm:$0xff] %v2618
  %2683 = vst [vmem:[#allocation3 + $0xa48] sm:$0xff] %v2619
  %2684 = vst [vmem:[#allocation3 + $0xa50] sm:$0xff] %v2620
  %2685 = vst [vmem:[#allocation3 + $0xa58] sm:$0xff] %v2621
  %2686 = vst [vmem:[#allocation3 + $0xa60] sm:$0xff] %v2622
  %2687 = vst [vmem:[#allocation3 + $0xa68] sm:$0xff] %v2623
  %2688 = vst [vmem:[#allocation3 + $0xa70] sm:$0xff] %v2624
  %2689 = vst [vmem:[#allocation3 + $0xa78] sm:$0xff] %v2625
  %2690 = vst [vmem:[#allocation3 + $0xa80] sm:$0xff] %v2626
  %2691 = vst [vmem:[#allocation3 + $0xa88] sm:$0xff] %v2627
  %2692 = vst [vmem:[#allocation3 + $0xa90] sm:$0xff] %v2628
  %2693 = vst [vmem:[#allocation3 + $0xa98] sm:$0xff] %v2629
  %2694 = vst [vmem:[#allocation3 + $0xaa0] sm:$0xff] %v2630
  %2695 = vst [vmem:[#allocation3 + $0xaa8] sm:$0xff] %v2631
  %2696 = vst [vmem:[#allocation3 + $0xab0] sm:$0xff] %v2632
  %2697 = vst [vmem:[#allocation3 + $0xab8] sm:$0xff] %v2633
  %2698 = vst [vmem:[#allocation3 + $0xac0] sm:$0xff] %v2634
  %2699 = vst [vmem:[#allocation3 + $0xac8] sm:$0xff] %v2635
  %2700 = vst [vmem:[#allocation3 + $0xad0] sm:$0xff] %v2636
  %2701 = vst [vmem:[#allocation3 + $0xad8] sm:$0xff] %v2637
  %2702 = vst [vmem:[#allocation3 + $0xae0] sm:$0xff] %v2638
  %2703 = vst [vmem:[#allocation3 + $0xae8] sm:$0xff] %v2639
  %2704 = vst [vmem:[#allocation3 + $0xaf0] sm:$0xff] %v2640
  %2705 = vst [vmem:[#allocation3 + $0xaf8] sm:$0xff] %v2641
  %v2706 = vld [vmem:[#allocation2] sm:$0xff]
  %v2707 = vld [vmem:[#allocation2 + $0x8] sm:$0xff]
  %v2708 = vld [vmem:[#allocation2 + $0x10] sm:$0xff]
  %v2709 = vld [vmem:[#allocation2 + $0x18] sm:$0xff]
  %v2710 = vld [vmem:[#allocation2 + $0x20] sm:$0xff]
  %v2711 = vld [vmem:[#allocation2 + $0x28] sm:$0xff]
  %v2712 = vld [vmem:[#allocation2 + $0x30] sm:$0xff]
  %v2713 = vld [vmem:[#allocation2 + $0x38] sm:$0xff]
  %v2714 = vld [vmem:[#allocation2 + $0x40] sm:$0xff]
  %v2715 = vld [vmem:[#allocation2 + $0x48] sm:$0xff]
  %v2716 = vld [vmem:[#allocation2 + $0x50] sm:$0xff]
  %v2717 = vld [vmem:[#allocation2 + $0x58] sm:$0xff]
  %v2718 = vld [vmem:[#allocation2 + $0x60] sm:$0xff]
  %v2719 = vld [vmem:[#allocation2 + $0x68] sm:$0xff]
  %v2720 = vld [vmem:[#allocation2 + $0x70] sm:$0xff]
  %v2721 = vld [vmem:[#allocation2 + $0x78] sm:$0xff]
  %v2722 = vld [vmem:[#allocation2 + $0x80] sm:$0xff]
  %v2723 = vld [vmem:[#allocation2 + $0x90] sm:$0xff]
  %v2724 = vld [vmem:[#allocation2 + $0x98] sm:$0xff]
  %v2725 = vld [vmem:[#allocation2 + $0xa0] sm:$0xff]
  %v2726 = vld [vmem:[#allocation2 + $0xa8] sm:$0xff]
  %v2727 = vld [vmem:[#allocation2 + $0xb0] sm:$0xff]
  %v2728 = vld [vmem:[#allocation2 + $0xb8] sm:$0xff]
  %v2729 = vld [vmem:[#allocation2 + $0xc0] sm:$0xff]
  %v2730 = vld [vmem:[#allocation2 + $0xc8] sm:$0xff]
  %v2731 = vld [vmem:[#allocation2 + $0xd0] sm:$0xff]
  %v2732 = vld [vmem:[#allocation2 + $0xd8] sm:$0xff]
  %v2733 = vld [vmem:[#allocation2 + $0xe0] sm:$0xff]
  %v2734 = vld [vmem:[#allocation2 + $0xe8] sm:$0xff]
  %v2735 = vld [vmem:[#allocation2 + $0xf0] sm:$0xff]
  %v2736 = vld [vmem:[#allocation2 + $0xf8] sm:$0xff]
  %v2737 = vld [vmem:[#allocation2 + $0x100] sm:$0xff]
  %v2738 = vld [vmem:[#allocation2 + $0x108] sm:$0xff]
  %v2739 = vld [vmem:[#allocation2 + $0x110] sm:$0xff]
  %2774 = vrot.lane.b32.xlu0 %v2706, 49
  %v2775 = vpop.permute.xlu0 %2774
  %2776 = vrot.lane.b32.xlu0 %v2707, 49
  %v2777 = vpop.permute.xlu0 %2776
  %2778 = vrot.lane.b32.xlu0 %v2708, 49
  %v2779 = vpop.permute.xlu0 %2778
  %2780 = vrot.lane.b32.xlu0 %v2709, 49
  %v2781 = vpop.permute.xlu0 %2780
  %2782 = vrot.lane.b32.xlu0 %v2710, 49
  %v2783 = vpop.permute.xlu0 %2782
  %2784 = vrot.lane.b32.xlu0 %v2711, 49
  %v2785 = vpop.permute.xlu0 %2784
  %2786 = vrot.lane.b32.xlu0 %v2712, 49
  %v2787 = vpop.permute.xlu0 %2786
  %2788 = vrot.lane.b32.xlu0 %v2713, 49
  %v2789 = vpop.permute.xlu0 %2788
  %2790 = vrot.lane.b32.xlu0 %v2714, 49
  %v2791 = vpop.permute.xlu0 %2790
  %2792 = vrot.lane.b32.xlu0 %v2715, 49
  %v2793 = vpop.permute.xlu0 %2792
  %2794 = vrot.lane.b32.xlu0 %v2716, 49
  %v2795 = vpop.permute.xlu0 %2794
  %2796 = vrot.lane.b32.xlu0 %v2717, 49
  %v2797 = vpop.permute.xlu0 %2796
  %2798 = vrot.lane.b32.xlu0 %v2718, 49
  %v2799 = vpop.permute.xlu0 %2798
  %2800 = vrot.lane.b32.xlu0 %v2719, 49
  %v2801 = vpop.permute.xlu0 %2800
  %2802 = vrot.lane.b32.xlu0 %v2720, 49
  %v2803 = vpop.permute.xlu0 %2802
  %2804 = vrot.lane.b32.xlu0 %v2721, 49
  %v2805 = vpop.permute.xlu0 %2804
  %2806 = vrot.lane.b32.xlu0 %v2722, 49
  %v2807 = vpop.permute.xlu0 %2806
  %2808 = vrot.lane.b32.xlu0 %v2723, 49
  %v2809 = vpop.permute.xlu0 %2808
  %2810 = vrot.lane.b32.xlu0 %v2724, 49
  %v2811 = vpop.permute.xlu0 %2810
  %2812 = vrot.lane.b32.xlu0 %v2725, 49
  %v2813 = vpop.permute.xlu0 %2812
  %2814 = vrot.lane.b32.xlu0 %v2726, 49
  %v2815 = vpop.permute.xlu0 %2814
  %2816 = vrot.lane.b32.xlu0 %v2727, 49
  %v2817 = vpop.permute.xlu0 %2816
  %2818 = vrot.lane.b32.xlu0 %v2728, 49
  %v2819 = vpop.permute.xlu0 %2818
  %2820 = vrot.lane.b32.xlu0 %v2729, 49
  %v2821 = vpop.permute.xlu0 %2820
  %2822 = vrot.lane.b32.xlu0 %v2730, 49
  %v2823 = vpop.permute.xlu0 %2822
  %2824 = vrot.lane.b32.xlu0 %v2731, 49
  %v2825 = vpop.permute.xlu0 %2824
  %2826 = vrot.lane.b32.xlu0 %v2732, 49
  %v2827 = vpop.permute.xlu0 %2826
  %2828 = vrot.lane.b32.xlu0 %v2733, 49
  %v2829 = vpop.permute.xlu0 %2828
  %2830 = vrot.lane.b32.xlu0 %v2734, 49
  %v2831 = vpop.permute.xlu0 %2830
  %2832 = vrot.lane.b32.xlu0 %v2735, 49
  %v2833 = vpop.permute.xlu0 %2832
  %2834 = vrot.lane.b32.xlu0 %v2736, 49
  %v2835 = vpop.permute.xlu0 %2834
  %2836 = vrot.lane.b32.xlu0 %v2737, 49
  %v2837 = vpop.permute.xlu0 %2836
  %2838 = vrot.lane.b32.xlu0 %v2738, 49
  %v2839 = vpop.permute.xlu0 %2838
  %2840 = vrot.lane.b32.xlu0 %v2739, 49
  %v2841 = vpop.permute.xlu0 %2840
  %vm2842 = vcmask 400384
  %v2843 = vsel %vm2842, %v2775, %v2777
  %v2844 = vsel %vm2842, %v2777, %v2779
  %v2845 = vsel %vm2842, %v2779, %v2781
  %v2846 = vsel %vm2842, %v2781, %v2783
  %v2847 = vsel %vm2842, %v2783, %v2785
  %v2848 = vsel %vm2842, %v2785, %v2787
  %v2849 = vsel %vm2842, %v2787, %v2789
  %v2850 = vsel %vm2842, %v2789, %v2791
  %v2851 = vsel %vm2842, %v2791, %v2793
  %v2852 = vsel %vm2842, %v2793, %v2795
  %v2853 = vsel %vm2842, %v2795, %v2797
  %v2854 = vsel %vm2842, %v2797, %v2799
  %v2855 = vsel %vm2842, %v2799, %v2801
  %v2856 = vsel %vm2842, %v2801, %v2803
  %v2857 = vsel %vm2842, %v2803, %v2805
  %v2858 = vsel %vm2842, %v2805, %v2807
  %v2859 = vsel %vm2842, %v2809, %v2811
  %v2860 = vsel %vm2842, %v2811, %v2813
  %v2861 = vsel %vm2842, %v2813, %v2815
  %v2862 = vsel %vm2842, %v2815, %v2817
  %v2863 = vsel %vm2842, %v2817, %v2819
  %v2864 = vsel %vm2842, %v2819, %v2821
  %v2865 = vsel %vm2842, %v2821, %v2823
  %v2866 = vsel %vm2842, %v2823, %v2825
  %v2867 = vsel %vm2842, %v2825, %v2827
  %v2868 = vsel %vm2842, %v2827, %v2829
  %v2869 = vsel %vm2842, %v2829, %v2831
  %v2870 = vsel %vm2842, %v2831, %v2833
  %v2871 = vsel %vm2842, %v2833, %v2835
  %v2872 = vsel %vm2842, %v2835, %v2837
  %v2873 = vsel %vm2842, %v2837, %v2839
  %v2874 = vsel %vm2842, %v2839, %v2841
  %2907 = vst [vmem:[#allocation3 + $0xb00] sm:$0xff] %v2843
  %2908 = vst [vmem:[#allocation3 + $0xb08] sm:$0xff] %v2844
  %2909 = vst [vmem:[#allocation3 + $0xb10] sm:$0xff] %v2845
  %2910 = vst [vmem:[#allocation3 + $0xb18] sm:$0xff] %v2846
  %2911 = vst [vmem:[#allocation3 + $0xb20] sm:$0xff] %v2847
  %2912 = vst [vmem:[#allocation3 + $0xb28] sm:$0xff] %v2848
  %2913 = vst [vmem:[#allocation3 + $0xb30] sm:$0xff] %v2849
  %2914 = vst [vmem:[#allocation3 + $0xb38] sm:$0xff] %v2850
  %2915 = vst [vmem:[#allocation3 + $0xb40] sm:$0xff] %v2851
  %2916 = vst [vmem:[#allocation3 + $0xb48] sm:$0xff] %v2852
  %2917 = vst [vmem:[#allocation3 + $0xb50] sm:$0xff] %v2853
  %2918 = vst [vmem:[#allocation3 + $0xb58] sm:$0xff] %v2854
  %2919 = vst [vmem:[#allocation3 + $0xb60] sm:$0xff] %v2855
  %2920 = vst [vmem:[#allocation3 + $0xb68] sm:$0xff] %v2856
  %2921 = vst [vmem:[#allocation3 + $0xb70] sm:$0xff] %v2857
  %2922 = vst [vmem:[#allocation3 + $0xb78] sm:$0xff] %v2858
  %2923 = vst [vmem:[#allocation3 + $0xb80] sm:$0xff] %v2859
  %2924 = vst [vmem:[#allocation3 + $0xb88] sm:$0xff] %v2860
  %2925 = vst [vmem:[#allocation3 + $0xb90] sm:$0xff] %v2861
  %2926 = vst [vmem:[#allocation3 + $0xb98] sm:$0xff] %v2862
  %2927 = vst [vmem:[#allocation3 + $0xba0] sm:$0xff] %v2863
  %2928 = vst [vmem:[#allocation3 + $0xba8] sm:$0xff] %v2864
  %2929 = vst [vmem:[#allocation3 + $0xbb0] sm:$0xff] %v2865
  %2930 = vst [vmem:[#allocation3 + $0xbb8] sm:$0xff] %v2866
  %2931 = vst [vmem:[#allocation3 + $0xbc0] sm:$0xff] %v2867
  %2932 = vst [vmem:[#allocation3 + $0xbc8] sm:$0xff] %v2868
  %2933 = vst [vmem:[#allocation3 + $0xbd0] sm:$0xff] %v2869
  %2934 = vst [vmem:[#allocation3 + $0xbd8] sm:$0xff] %v2870
  %2935 = vst [vmem:[#allocation3 + $0xbe0] sm:$0xff] %v2871
  %2936 = vst [vmem:[#allocation3 + $0xbe8] sm:$0xff] %v2872
  %2937 = vst [vmem:[#allocation3 + $0xbf0] sm:$0xff] %v2873
  %2938 = vst [vmem:[#allocation3 + $0xbf8] sm:$0xff] %v2874
  %v2939 = vld [vmem:[#allocation2] sm:$0xff]
  %v2940 = vld [vmem:[#allocation2 + $0x8] sm:$0xff]
  %v2941 = vld [vmem:[#allocation2 + $0x10] sm:$0xff]
  %v2942 = vld [vmem:[#allocation2 + $0x18] sm:$0xff]
  %v2943 = vld [vmem:[#allocation2 + $0x20] sm:$0xff]
  %v2944 = vld [vmem:[#allocation2 + $0x28] sm:$0xff]
  %v2945 = vld [vmem:[#allocation2 + $0x30] sm:$0xff]
  %v2946 = vld [vmem:[#allocation2 + $0x38] sm:$0xff]
  %v2947 = vld [vmem:[#allocation2 + $0x40] sm:$0xff]
  %v2948 = vld [vmem:[#allocation2 + $0x48] sm:$0xff]
  %v2949 = vld [vmem:[#allocation2 + $0x50] sm:$0xff]
  %v2950 = vld [vmem:[#allocation2 + $0x58] sm:$0xff]
  %v2951 = vld [vmem:[#allocation2 + $0x60] sm:$0xff]
  %v2952 = vld [vmem:[#allocation2 + $0x68] sm:$0xff]
  %v2953 = vld [vmem:[#allocation2 + $0x70] sm:$0xff]
  %v2954 = vld [vmem:[#allocation2 + $0x78] sm:$0xff]
  %v2955 = vld [vmem:[#allocation2 + $0x80] sm:$0xff]
  %v2956 = vld [vmem:[#allocation2 + $0x90] sm:$0xff]
  %v2957 = vld [vmem:[#allocation2 + $0x98] sm:$0xff]
  %v2958 = vld [vmem:[#allocation2 + $0xa0] sm:$0xff]
  %v2959 = vld [vmem:[#allocation2 + $0xa8] sm:$0xff]
  %v2960 = vld [vmem:[#allocation2 + $0xb0] sm:$0xff]
  %v2961 = vld [vmem:[#allocation2 + $0xb8] sm:$0xff]
  %v2962 = vld [vmem:[#allocation2 + $0xc0] sm:$0xff]
  %v2963 = vld [vmem:[#allocation2 + $0xc8] sm:$0xff]
  %v2964 = vld [vmem:[#allocation2 + $0xd0] sm:$0xff]
  %v2965 = vld [vmem:[#allocation2 + $0xd8] sm:$0xff]
  %v2966 = vld [vmem:[#allocation2 + $0xe0] sm:$0xff]
  %v2967 = vld [vmem:[#allocation2 + $0xe8] sm:$0xff]
  %v2968 = vld [vmem:[#allocation2 + $0xf0] sm:$0xff]
  %v2969 = vld [vmem:[#allocation2 + $0xf8] sm:$0xff]
  %v2970 = vld [vmem:[#allocation2 + $0x100] sm:$0xff]
  %v2971 = vld [vmem:[#allocation2 + $0x108] sm:$0xff]
  %v2972 = vld [vmem:[#allocation2 + $0x110] sm:$0xff]
  %3007 = vrot.lane.b32.xlu0 %v2939, 63
  %v3008 = vpop.permute.xlu0 %3007
  %3009 = vrot.lane.b32.xlu0 %v2940, 63
  %v3010 = vpop.permute.xlu0 %3009
  %3011 = vrot.lane.b32.xlu0 %v2941, 63
  %v3012 = vpop.permute.xlu0 %3011
  %3013 = vrot.lane.b32.xlu0 %v2942, 63
  %v3014 = vpop.permute.xlu0 %3013
  %3015 = vrot.lane.b32.xlu0 %v2943, 63
  %v3016 = vpop.permute.xlu0 %3015
  %3017 = vrot.lane.b32.xlu0 %v2944, 63
  %v3018 = vpop.permute.xlu0 %3017
  %3019 = vrot.lane.b32.xlu0 %v2945, 63
  %v3020 = vpop.permute.xlu0 %3019
  %3021 = vrot.lane.b32.xlu0 %v2946, 63
  %v3022 = vpop.permute.xlu0 %3021
  %3023 = vrot.lane.b32.xlu0 %v2947, 63
  %v3024 = vpop.permute.xlu0 %3023
  %3025 = vrot.lane.b32.xlu0 %v2948, 63
  %v3026 = vpop.permute.xlu0 %3025
  %3027 = vrot.lane.b32.xlu0 %v2949, 63
  %v3028 = vpop.permute.xlu0 %3027
  %3029 = vrot.lane.b32.xlu0 %v2950, 63
  %v3030 = vpop.permute.xlu0 %3029
  %3031 = vrot.lane.b32.xlu0 %v2951, 63
  %v3032 = vpop.permute.xlu0 %3031
  %3033 = vrot.lane.b32.xlu0 %v2952, 63
  %v3034 = vpop.permute.xlu0 %3033
  %3035 = vrot.lane.b32.xlu0 %v2953, 63
  %v3036 = vpop.permute.xlu0 %3035
  %3037 = vrot.lane.b32.xlu0 %v2954, 63
  %v3038 = vpop.permute.xlu0 %3037
  %3039 = vrot.lane.b32.xlu0 %v2955, 63
  %v3040 = vpop.permute.xlu0 %3039
  %3041 = vrot.lane.b32.xlu0 %v2956, 63
  %v3042 = vpop.permute.xlu0 %3041
  %3043 = vrot.lane.b32.xlu0 %v2957, 63
  %v3044 = vpop.permute.xlu0 %3043
  %3045 = vrot.lane.b32.xlu0 %v2958, 63
  %v3046 = vpop.permute.xlu0 %3045
  %3047 = vrot.lane.b32.xlu0 %v2959, 63
  %v3048 = vpop.permute.xlu0 %3047
  %3049 = vrot.lane.b32.xlu0 %v2960, 63
  %v3050 = vpop.permute.xlu0 %3049
  %3051 = vrot.lane.b32.xlu0 %v2961, 63
  %v3052 = vpop.permute.xlu0 %3051
  %3053 = vrot.lane.b32.xlu0 %v2962, 63
  %v3054 = vpop.permute.xlu0 %3053
  %3055 = vrot.lane.b32.xlu0 %v2963, 63
  %v3056 = vpop.permute.xlu0 %3055
  %3057 = vrot.lane.b32.xlu0 %v2964, 63
  %v3058 = vpop.permute.xlu0 %3057
  %3059 = vrot.lane.b32.xlu0 %v2965, 63
  %v3060 = vpop.permute.xlu0 %3059
  %3061 = vrot.lane.b32.xlu0 %v2966, 63
  %v3062 = vpop.permute.xlu0 %3061
  %3063 = vrot.lane.b32.xlu0 %v2967, 63
  %v3064 = vpop.permute.xlu0 %3063
  %3065 = vrot.lane.b32.xlu0 %v2968, 63
  %v3066 = vpop.permute.xlu0 %3065
  %3067 = vrot.lane.b32.xlu0 %v2969, 63
  %v3068 = vpop.permute.xlu0 %3067
  %3069 = vrot.lane.b32.xlu0 %v2970, 63
  %v3070 = vpop.permute.xlu0 %3069
  %3071 = vrot.lane.b32.xlu0 %v2971, 63
  %v3072 = vpop.permute.xlu0 %3071
  %3073 = vrot.lane.b32.xlu0 %v2972, 63
  %v3074 = vpop.permute.xlu0 %3073
  %vm3075 = vcmask 515072
  %v3076 = vsel %vm3075, %v3008, %v3010
  %v3077 = vsel %vm3075, %v3010, %v3012
  %v3078 = vsel %vm3075, %v3012, %v3014
  %v3079 = vsel %vm3075, %v3014, %v3016
  %v3080 = vsel %vm3075, %v3016, %v3018
  %v3081 = vsel %vm3075, %v3018, %v3020
  %v3082 = vsel %vm3075, %v3020, %v3022
  %v3083 = vsel %vm3075, %v3022, %v3024
  %v3084 = vsel %vm3075, %v3024, %v3026
  %v3085 = vsel %vm3075, %v3026, %v3028
  %v3086 = vsel %vm3075, %v3028, %v3030
  %v3087 = vsel %vm3075, %v3030, %v3032
  %v3088 = vsel %vm3075, %v3032, %v3034
  %v3089 = vsel %vm3075, %v3034, %v3036
  %v3090 = vsel %vm3075, %v3036, %v3038
  %v3091 = vsel %vm3075, %v3038, %v3040
  %v3092 = vsel %vm3075, %v3042, %v3044
  %v3093 = vsel %vm3075, %v3044, %v3046
  %v3094 = vsel %vm3075, %v3046, %v3048
  %v3095 = vsel %vm3075, %v3048, %v3050
  %v3096 = vsel %vm3075, %v3050, %v3052
  %v3097 = vsel %vm3075, %v3052, %v3054
  %v3098 = vsel %vm3075, %v3054, %v3056
  %v3099 = vsel %vm3075, %v3056, %v3058
  %v3100 = vsel %vm3075, %v3058, %v3060
  %v3101 = vsel %vm3075, %v3060, %v3062
  %v3102 = vsel %vm3075, %v3062, %v3064
  %v3103 = vsel %vm3075, %v3064, %v3066
  %v3104 = vsel %vm3075, %v3066, %v3068
  %v3105 = vsel %vm3075, %v3068, %v3070
  %v3106 = vsel %vm3075, %v3070, %v3072
  %v3107 = vsel %vm3075, %v3072, %v3074
  %3140 = vst [vmem:[#allocation3 + $0xc00] sm:$0xff] %v3076
  %3141 = vst [vmem:[#allocation3 + $0xc08] sm:$0xff] %v3077
  %3142 = vst [vmem:[#allocation3 + $0xc10] sm:$0xff] %v3078
  %3143 = vst [vmem:[#allocation3 + $0xc18] sm:$0xff] %v3079
  %3144 = vst [vmem:[#allocation3 + $0xc20] sm:$0xff] %v3080
  %3145 = vst [vmem:[#allocation3 + $0xc28] sm:$0xff] %v3081
  %3146 = vst [vmem:[#allocation3 + $0xc30] sm:$0xff] %v3082
  %3147 = vst [vmem:[#allocation3 + $0xc38] sm:$0xff] %v3083
  %3148 = vst [vmem:[#allocation3 + $0xc40] sm:$0xff] %v3084
  %3149 = vst [vmem:[#allocation3 + $0xc48] sm:$0xff] %v3085
  %3150 = vst [vmem:[#allocation3 + $0xc50] sm:$0xff] %v3086
  %3151 = vst [vmem:[#allocation3 + $0xc58] sm:$0xff] %v3087
  %3152 = vst [vmem:[#allocation3 + $0xc60] sm:$0xff] %v3088
  %3153 = vst [vmem:[#allocation3 + $0xc68] sm:$0xff] %v3089
  %3154 = vst [vmem:[#allocation3 + $0xc70] sm:$0xff] %v3090
  %3155 = vst [vmem:[#allocation3 + $0xc78] sm:$0xff] %v3091
  %3156 = vst [vmem:[#allocation3 + $0xc80] sm:$0xff] %v3092
  %3157 = vst [vmem:[#allocation3 + $0xc88] sm:$0xff] %v3093
  %3158 = vst [vmem:[#allocation3 + $0xc90] sm:$0xff] %v3094
  %3159 = vst [vmem:[#allocation3 + $0xc98] sm:$0xff] %v3095
  %3160 = vst [vmem:[#allocation3 + $0xca0] sm:$0xff] %v3096
  %3161 = vst [vmem:[#allocation3 + $0xca8] sm:$0xff] %v3097
  %3162 = vst [vmem:[#allocation3 + $0xcb0] sm:$0xff] %v3098
  %3163 = vst [vmem:[#allocation3 + $0xcb8] sm:$0xff] %v3099
  %3164 = vst [vmem:[#allocation3 + $0xcc0] sm:$0xff] %v3100
  %3165 = vst [vmem:[#allocation3 + $0xcc8] sm:$0xff] %v3101
  %3166 = vst [vmem:[#allocation3 + $0xcd0] sm:$0xff] %v3102
  %3167 = vst [vmem:[#allocation3 + $0xcd8] sm:$0xff] %v3103
  %3168 = vst [vmem:[#allocation3 + $0xce0] sm:$0xff] %v3104
  %3169 = vst [vmem:[#allocation3 + $0xce8] sm:$0xff] %v3105
  %3170 = vst [vmem:[#allocation3 + $0xcf0] sm:$0xff] %v3106
  %3171 = vst [vmem:[#allocation3 + $0xcf8] sm:$0xff] %v3107
  %v3172 = vld [vmem:[#allocation2] sm:$0xff]
  %v3173 = vld [vmem:[#allocation2 + $0x8] sm:$0xff]
  %v3174 = vld [vmem:[#allocation2 + $0x10] sm:$0xff]
  %v3175 = vld [vmem:[#allocation2 + $0x18] sm:$0xff]
  %v3176 = vld [vmem:[#allocation2 + $0x20] sm:$0xff]
  %v3177 = vld [vmem:[#allocation2 + $0x28] sm:$0xff]
  %v3178 = vld [vmem:[#allocation2 + $0x30] sm:$0xff]
  %v3179 = vld [vmem:[#allocation2 + $0x38] sm:$0xff]
  %v3180 = vld [vmem:[#allocation2 + $0x40] sm:$0xff]
  %v3181 = vld [vmem:[#allocation2 + $0x48] sm:$0xff]
  %v3182 = vld [vmem:[#allocation2 + $0x50] sm:$0xff]
  %v3183 = vld [vmem:[#allocation2 + $0x58] sm:$0xff]
  %v3184 = vld [vmem:[#allocation2 + $0x60] sm:$0xff]
  %v3185 = vld [vmem:[#allocation2 + $0x68] sm:$0xff]
  %v3186 = vld [vmem:[#allocation2 + $0x70] sm:$0xff]
  %v3187 = vld [vmem:[#allocation2 + $0x78] sm:$0xff]
  %v3188 = vld [vmem:[#allocation2 + $0x80] sm:$0xff]
  %v3189 = vld [vmem:[#allocation2 + $0x90] sm:$0xff]
  %v3190 = vld [vmem:[#allocation2 + $0x98] sm:$0xff]
  %v3191 = vld [vmem:[#allocation2 + $0xa0] sm:$0xff]
  %v3192 = vld [vmem:[#allocation2 + $0xa8] sm:$0xff]
  %v3193 = vld [vmem:[#allocation2 + $0xb0] sm:$0xff]
  %v3194 = vld [vmem:[#allocation2 + $0xb8] sm:$0xff]
  %v3195 = vld [vmem:[#allocation2 + $0xc0] sm:$0xff]
  %v3196 = vld [vmem:[#allocation2 + $0xc8] sm:$0xff]
  %v3197 = vld [vmem:[#allocation2 + $0xd0] sm:$0xff]
  %v3198 = vld [vmem:[#allocation2 + $0xd8] sm:$0xff]
  %v3199 = vld [vmem:[#allocation2 + $0xe0] sm:$0xff]
  %v3200 = vld [vmem:[#allocation2 + $0xe8] sm:$0xff]
  %v3201 = vld [vmem:[#allocation2 + $0xf0] sm:$0xff]
  %v3202 = vld [vmem:[#allocation2 + $0xf8] sm:$0xff]
  %v3203 = vld [vmem:[#allocation2 + $0x100] sm:$0xff]
  %v3204 = vld [vmem:[#allocation2 + $0x108] sm:$0xff]
  %v3205 = vld [vmem:[#allocation2 + $0x110] sm:$0xff]
  %3240 = vrot.lane.b32.xlu0 %v3172, 64
  %v3241 = vpop.permute.xlu0 %3240
  %3242 = vrot.lane.b32.xlu0 %v3173, 64
  %v3243 = vpop.permute.xlu0 %3242
  %3244 = vrot.lane.b32.xlu0 %v3174, 64
  %v3245 = vpop.permute.xlu0 %3244
  %3246 = vrot.lane.b32.xlu0 %v3175, 64
  %v3247 = vpop.permute.xlu0 %3246
  %3248 = vrot.lane.b32.xlu0 %v3176, 64
  %v3249 = vpop.permute.xlu0 %3248
  %3250 = vrot.lane.b32.xlu0 %v3177, 64
  %v3251 = vpop.permute.xlu0 %3250
  %3252 = vrot.lane.b32.xlu0 %v3178, 64
  %v3253 = vpop.permute.xlu0 %3252
  %3254 = vrot.lane.b32.xlu0 %v3179, 64
  %v3255 = vpop.permute.xlu0 %3254
  %3256 = vrot.lane.b32.xlu0 %v3180, 64
  %v3257 = vpop.permute.xlu0 %3256
  %3258 = vrot.lane.b32.xlu0 %v3181, 64
  %v3259 = vpop.permute.xlu0 %3258
  %3260 = vrot.lane.b32.xlu0 %v3182, 64
  %v3261 = vpop.permute.xlu0 %3260
  %3262 = vrot.lane.b32.xlu0 %v3183, 64
  %v3263 = vpop.permute.xlu0 %3262
  %3264 = vrot.lane.b32.xlu0 %v3184, 64
  %v3265 = vpop.permute.xlu0 %3264
  %3266 = vrot.lane.b32.xlu0 %v3185, 64
  %v3267 = vpop.permute.xlu0 %3266
  %3268 = vrot.lane.b32.xlu0 %v3186, 64
  %v3269 = vpop.permute.xlu0 %3268
  %3270 = vrot.lane.b32.xlu0 %v3187, 64
  %v3271 = vpop.permute.xlu0 %3270
  %3272 = vrot.lane.b32.xlu0 %v3188, 64
  %v3273 = vpop.permute.xlu0 %3272
  %3274 = vrot.lane.b32.xlu0 %v3189, 64
  %v3275 = vpop.permute.xlu0 %3274
  %3276 = vrot.lane.b32.xlu0 %v3190, 64
  %v3277 = vpop.permute.xlu0 %3276
  %3278 = vrot.lane.b32.xlu0 %v3191, 64
  %v3279 = vpop.permute.xlu0 %3278
  %3280 = vrot.lane.b32.xlu0 %v3192, 64
  %v3281 = vpop.permute.xlu0 %3280
  %3282 = vrot.lane.b32.xlu0 %v3193, 64
  %v3283 = vpop.permute.xlu0 %3282
  %3284 = vrot.lane.b32.xlu0 %v3194, 64
  %v3285 = vpop.permute.xlu0 %3284
  %3286 = vrot.lane.b32.xlu0 %v3195, 64
  %v3287 = vpop.permute.xlu0 %3286
  %3288 = vrot.lane.b32.xlu0 %v3196, 64
  %v3289 = vpop.permute.xlu0 %3288
  %3290 = vrot.lane.b32.xlu0 %v3197, 64
  %v3291 = vpop.permute.xlu0 %3290
  %3292 = vrot.lane.b32.xlu0 %v3198, 64
  %v3293 = vpop.permute.xlu0 %3292
  %3294 = vrot.lane.b32.xlu0 %v3199, 64
  %v3295 = vpop.permute.xlu0 %3294
  %3296 = vrot.lane.b32.xlu0 %v3200, 64
  %v3297 = vpop.permute.xlu0 %3296
  %3298 = vrot.lane.b32.xlu0 %v3201, 64
  %v3299 = vpop.permute.xlu0 %3298
  %3300 = vrot.lane.b32.xlu0 %v3202, 64
  %v3301 = vpop.permute.xlu0 %3300
  %3302 = vrot.lane.b32.xlu0 %v3203, 64
  %v3303 = vpop.permute.xlu0 %3302
  %3304 = vrot.lane.b32.xlu0 %v3204, 64
  %v3305 = vpop.permute.xlu0 %3304
  %3306 = vrot.lane.b32.xlu0 %v3205, 64
  %v3307 = vpop.permute.xlu0 %3306
  %vm3308 = vcmask 523264
  %v3309 = vsel %vm3308, %v3241, %v3243
  %v3310 = vsel %vm3308, %v3243, %v3245
  %v3311 = vsel %vm3308, %v3245, %v3247
  %v3312 = vsel %vm3308, %v3247, %v3249
  %v3313 = vsel %vm3308, %v3249, %v3251
  %v3314 = vsel %vm3308, %v3251, %v3253
  %v3315 = vsel %vm3308, %v3253, %v3255
  %v3316 = vsel %vm3308, %v3255, %v3257
  %v3317 = vsel %vm3308, %v3257, %v3259
  %v3318 = vsel %vm3308, %v3259, %v3261
  %v3319 = vsel %vm3308, %v3261, %v3263
  %v3320 = vsel %vm3308, %v3263, %v3265
  %v3321 = vsel %vm3308, %v3265, %v3267
  %v3322 = vsel %vm3308, %v3267, %v3269
  %v3323 = vsel %vm3308, %v3269, %v3271
  %v3324 = vsel %vm3308, %v3271, %v3273
  %v3325 = vsel %vm3308, %v3275, %v3277
  %v3326 = vsel %vm3308, %v3277, %v3279
  %v3327 = vsel %vm3308, %v3279, %v3281
  %v3328 = vsel %vm3308, %v3281, %v3283
  %v3329 = vsel %vm3308, %v3283, %v3285
  %v3330 = vsel %vm3308, %v3285, %v3287
  %v3331 = vsel %vm3308, %v3287, %v3289
  %v3332 = vsel %vm3308, %v3289, %v3291
  %v3333 = vsel %vm3308, %v3291, %v3293
  %v3334 = vsel %vm3308, %v3293, %v3295
  %v3335 = vsel %vm3308, %v3295, %v3297
  %v3336 = vsel %vm3308, %v3297, %v3299
  %v3337 = vsel %vm3308, %v3299, %v3301
  %v3338 = vsel %vm3308, %v3301, %v3303
  %v3339 = vsel %vm3308, %v3303, %v3305
  %v3340 = vsel %vm3308, %v3305, %v3307
  %3373 = vst [vmem:[#allocation3 + $0xd00] sm:$0xff] %v3309
  %3374 = vst [vmem:[#allocation3 + $0xd08] sm:$0xff] %v3310
  %3375 = vst [vmem:[#allocation3 + $0xd10] sm:$0xff] %v3311
  %3376 = vst [vmem:[#allocation3 + $0xd18] sm:$0xff] %v3312
  %3377 = vst [vmem:[#allocation3 + $0xd20] sm:$0xff] %v3313
  %3378 = vst [vmem:[#allocation3 + $0xd28] sm:$0xff] %v3314
  %3379 = vst [vmem:[#allocation3 + $0xd30] sm:$0xff] %v3315
  %3380 = vst [vmem:[#allocation3 + $0xd38] sm:$0xff] %v3316
  %3381 = vst [vmem:[#allocation3 + $0xd40] sm:$0xff] %v3317
  %3382 = vst [vmem:[#allocation3 + $0xd48] sm:$0xff] %v3318
  %3383 = vst [vmem:[#allocation3 + $0xd50] sm:$0xff] %v3319
  %3384 = vst [vmem:[#allocation3 + $0xd58] sm:$0xff] %v3320
  %3385 = vst [vmem:[#allocation3 + $0xd60] sm:$0xff] %v3321
  %3386 = vst [vmem:[#allocation3 + $0xd68] sm:$0xff] %v3322
  %3387 = vst [vmem:[#allocation3 + $0xd70] sm:$0xff] %v3323
  %3388 = vst [vmem:[#allocation3 + $0xd78] sm:$0xff] %v3324
  %3389 = vst [vmem:[#allocation3 + $0xd80] sm:$0xff] %v3325
  %3390 = vst [vmem:[#allocation3 + $0xd88] sm:$0xff] %v3326
  %3391 = vst [vmem:[#allocation3 + $0xd90] sm:$0xff] %v3327
  %3392 = vst [vmem:[#allocation3 + $0xd98] sm:$0xff] %v3328
  %3393 = vst [vmem:[#allocation3 + $0xda0] sm:$0xff] %v3329
  %3394 = vst [vmem:[#allocation3 + $0xda8] sm:$0xff] %v3330
  %3395 = vst [vmem:[#allocation3 + $0xdb0] sm:$0xff] %v3331
  %3396 = vst [vmem:[#allocation3 + $0xdb8] sm:$0xff] %v3332
  %3397 = vst [vmem:[#allocation3 + $0xdc0] sm:$0xff] %v3333
  %3398 = vst [vmem:[#allocation3 + $0xdc8] sm:$0xff] %v3334
  %3399 = vst [vmem:[#allocation3 + $0xdd0] sm:$0xff] %v3335
  %3400 = vst [vmem:[#allocation3 + $0xdd8] sm:$0xff] %v3336
  %3401 = vst [vmem:[#allocation3 + $0xde0] sm:$0xff] %v3337
  %3402 = vst [vmem:[#allocation3 + $0xde8] sm:$0xff] %v3338
  %3403 = vst [vmem:[#allocation3 + $0xdf0] sm:$0xff] %v3339
  %3404 = vst [vmem:[#allocation3 + $0xdf8] sm:$0xff] %v3340
  %v3405 = vld [vmem:[#allocation2] sm:$0xff]
  %v3406 = vld [vmem:[#allocation2 + $0x8] sm:$0xff]
  %v3407 = vld [vmem:[#allocation2 + $0x10] sm:$0xff]
  %v3408 = vld [vmem:[#allocation2 + $0x18] sm:$0xff]
  %v3409 = vld [vmem:[#allocation2 + $0x20] sm:$0xff]
  %v3410 = vld [vmem:[#allocation2 + $0x28] sm:$0xff]
  %v3411 = vld [vmem:[#allocation2 + $0x30] sm:$0xff]
  %v3412 = vld [vmem:[#allocation2 + $0x38] sm:$0xff]
  %v3413 = vld [vmem:[#allocation2 + $0x40] sm:$0xff]
  %v3414 = vld [vmem:[#allocation2 + $0x48] sm:$0xff]
  %v3415 = vld [vmem:[#allocation2 + $0x50] sm:$0xff]
  %v3416 = vld [vmem:[#allocation2 + $0x58] sm:$0xff]
  %v3417 = vld [vmem:[#allocation2 + $0x60] sm:$0xff]
  %v3418 = vld [vmem:[#allocation2 + $0x68] sm:$0xff]
  %v3419 = vld [vmem:[#allocation2 + $0x70] sm:$0xff]
  %v3420 = vld [vmem:[#allocation2 + $0x78] sm:$0xff]
  %v3421 = vld [vmem:[#allocation2 + $0x80] sm:$0xff]
  %v3422 = vld [vmem:[#allocation2 + $0x90] sm:$0xff]
  %v3423 = vld [vmem:[#allocation2 + $0x98] sm:$0xff]
  %v3424 = vld [vmem:[#allocation2 + $0xa0] sm:$0xff]
  %v3425 = vld [vmem:[#allocation2 + $0xa8] sm:$0xff]
  %v3426 = vld [vmem:[#allocation2 + $0xb0] sm:$0xff]
  %v3427 = vld [vmem:[#allocation2 + $0xb8] sm:$0xff]
  %v3428 = vld [vmem:[#allocation2 + $0xc0] sm:$0xff]
  %v3429 = vld [vmem:[#allocation2 + $0xc8] sm:$0xff]
  %v3430 = vld [vmem:[#allocation2 + $0xd0] sm:$0xff]
  %v3431 = vld [vmem:[#allocation2 + $0xd8] sm:$0xff]
  %v3432 = vld [vmem:[#allocation2 + $0xe0] sm:$0xff]
  %v3433 = vld [vmem:[#allocation2 + $0xe8] sm:$0xff]
  %v3434 = vld [vmem:[#allocation2 + $0xf0] sm:$0xff]
  %v3435 = vld [vmem:[#allocation2 + $0xf8] sm:$0xff]
  %v3436 = vld [vmem:[#allocation2 + $0x100] sm:$0xff]
  %v3437 = vld [vmem:[#allocation2 + $0x108] sm:$0xff]
  %v3438 = vld [vmem:[#allocation2 + $0x110] sm:$0xff]
  %3473 = vrot.lane.b32.xlu0 %v3405, 65
  %v3474 = vpop.permute.xlu0 %3473
  %3475 = vrot.lane.b32.xlu0 %v3406, 65
  %v3476 = vpop.permute.xlu0 %3475
  %3477 = vrot.lane.b32.xlu0 %v3407, 65
  %v3478 = vpop.permute.xlu0 %3477
  %3479 = vrot.lane.b32.xlu0 %v3408, 65
  %v3480 = vpop.permute.xlu0 %3479
  %3481 = vrot.lane.b32.xlu0 %v3409, 65
  %v3482 = vpop.permute.xlu0 %3481
  %3483 = vrot.lane.b32.xlu0 %v3410, 65
  %v3484 = vpop.permute.xlu0 %3483
  %3485 = vrot.lane.b32.xlu0 %v3411, 65
  %v3486 = vpop.permute.xlu0 %3485
  %3487 = vrot.lane.b32.xlu0 %v3412, 65
  %v3488 = vpop.permute.xlu0 %3487
  %3489 = vrot.lane.b32.xlu0 %v3413, 65
  %v3490 = vpop.permute.xlu0 %3489
  %3491 = vrot.lane.b32.xlu0 %v3414, 65
  %v3492 = vpop.permute.xlu0 %3491
  %3493 = vrot.lane.b32.xlu0 %v3415, 65
  %v3494 = vpop.permute.xlu0 %3493
  %3495 = vrot.lane.b32.xlu0 %v3416, 65
  %v3496 = vpop.permute.xlu0 %3495
  %3497 = vrot.lane.b32.xlu0 %v3417, 65
  %v3498 = vpop.permute.xlu0 %3497
  %3499 = vrot.lane.b32.xlu0 %v3418, 65
  %v3500 = vpop.permute.xlu0 %3499
  %3501 = vrot.lane.b32.xlu0 %v3419, 65
  %v3502 = vpop.permute.xlu0 %3501
  %3503 = vrot.lane.b32.xlu0 %v3420, 65
  %v3504 = vpop.permute.xlu0 %3503
  %3505 = vrot.lane.b32.xlu0 %v3421, 65
  %v3506 = vpop.permute.xlu0 %3505
  %3507 = vrot.lane.b32.xlu0 %v3422, 65
  %v3508 = vpop.permute.xlu0 %3507
  %3509 = vrot.lane.b32.xlu0 %v3423, 65
  %v3510 = vpop.permute.xlu0 %3509
  %3511 = vrot.lane.b32.xlu0 %v3424, 65
  %v3512 = vpop.permute.xlu0 %3511
  %3513 = vrot.lane.b32.xlu0 %v3425, 65
  %v3514 = vpop.permute.xlu0 %3513
  %3515 = vrot.lane.b32.xlu0 %v3426, 65
  %v3516 = vpop.permute.xlu0 %3515
  %3517 = vrot.lane.b32.xlu0 %v3427, 65
  %v3518 = vpop.permute.xlu0 %3517
  %3519 = vrot.lane.b32.xlu0 %v3428, 65
  %v3520 = vpop.permute.xlu0 %3519
  %3521 = vrot.lane.b32.xlu0 %v3429, 65
  %v3522 = vpop.permute.xlu0 %3521
  %3523 = vrot.lane.b32.xlu0 %v3430, 65
  %v3524 = vpop.permute.xlu0 %3523
  %3525 = vrot.lane.b32.xlu0 %v3431, 65
  %v3526 = vpop.permute.xlu0 %3525
  %3527 = vrot.lane.b32.xlu0 %v3432, 65
  %v3528 = vpop.permute.xlu0 %3527
  %3529 = vrot.lane.b32.xlu0 %v3433, 65
  %v3530 = vpop.permute.xlu0 %3529
  %3531 = vrot.lane.b32.xlu0 %v3434, 65
  %v3532 = vpop.permute.xlu0 %3531
  %3533 = vrot.lane.b32.xlu0 %v3435, 65
  %v3534 = vpop.permute.xlu0 %3533
  %3535 = vrot.lane.b32.xlu0 %v3436, 65
  %v3536 = vpop.permute.xlu0 %3535
  %3537 = vrot.lane.b32.xlu0 %v3437, 65
  %v3538 = vpop.permute.xlu0 %3537
  %3539 = vrot.lane.b32.xlu0 %v3438, 65
  %v3540 = vpop.permute.xlu0 %3539
  %vm3541 = vcmask 531456
  %v3542 = vsel %vm3541, %v3474, %v3476
  %v3543 = vsel %vm3541, %v3476, %v3478
  %v3544 = vsel %vm3541, %v3478, %v3480
  %v3545 = vsel %vm3541, %v3480, %v3482
  %v3546 = vsel %vm3541, %v3482, %v3484
  %v3547 = vsel %vm3541, %v3484, %v3486
  %v3548 = vsel %vm3541, %v3486, %v3488
  %v3549 = vsel %vm3541, %v3488, %v3490
  %v3550 = vsel %vm3541, %v3490, %v3492
  %v3551 = vsel %vm3541, %v3492, %v3494
  %v3552 = vsel %vm3541, %v3494, %v3496
  %v3553 = vsel %vm3541, %v3496, %v3498
  %v3554 = vsel %vm3541, %v3498, %v3500
  %v3555 = vsel %vm3541, %v3500, %v3502
  %v3556 = vsel %vm3541, %v3502, %v3504
  %v3557 = vsel %vm3541, %v3504, %v3506
  %v3558 = vsel %vm3541, %v3508, %v3510
  %v3559 = vsel %vm3541, %v3510, %v3512
  %v3560 = vsel %vm3541, %v3512, %v3514
  %v3561 = vsel %vm3541, %v3514, %v3516
  %v3562 = vsel %vm3541, %v3516, %v3518
  %v3563 = vsel %vm3541, %v3518, %v3520
  %v3564 = vsel %vm3541, %v3520, %v3522
  %v3565 = vsel %vm3541, %v3522, %v3524
  %v3566 = vsel %vm3541, %v3524, %v3526
  %v3567 = vsel %vm3541, %v3526, %v3528
  %v3568 = vsel %vm3541, %v3528, %v3530
  %v3569 = vsel %vm3541, %v3530, %v3532
  %v3570 = vsel %vm3541, %v3532, %v3534
  %v3571 = vsel %vm3541, %v3534, %v3536
  %v3572 = vsel %vm3541, %v3536, %v3538
  %v3573 = vsel %vm3541, %v3538, %v3540
  %3606 = vst [vmem:[#allocation3 + $0xe00] sm:$0xff] %v3542
  %3607 = vst [vmem:[#allocation3 + $0xe08] sm:$0xff] %v3543
  %3608 = vst [vmem:[#allocation3 + $0xe10] sm:$0xff] %v3544
  %3609 = vst [vmem:[#allocation3 + $0xe18] sm:$0xff] %v3545
  %3610 = vst [vmem:[#allocation3 + $0xe20] sm:$0xff] %v3546
  %3611 = vst [vmem:[#allocation3 + $0xe28] sm:$0xff] %v3547
  %3612 = vst [vmem:[#allocation3 + $0xe30] sm:$0xff] %v3548
  %3613 = vst [vmem:[#allocation3 + $0xe38] sm:$0xff] %v3549
  %3614 = vst [vmem:[#allocation3 + $0xe40] sm:$0xff] %v3550
  %3615 = vst [vmem:[#allocation3 + $0xe48] sm:$0xff] %v3551
  %3616 = vst [vmem:[#allocation3 + $0xe50] sm:$0xff] %v3552
  %3617 = vst [vmem:[#allocation3 + $0xe58] sm:$0xff] %v3553
  %3618 = vst [vmem:[#allocation3 + $0xe60] sm:$0xff] %v3554
  %3619 = vst [vmem:[#allocation3 + $0xe68] sm:$0xff] %v3555
  %3620 = vst [vmem:[#allocation3 + $0xe70] sm:$0xff] %v3556
  %3621 = vst [vmem:[#allocation3 + $0xe78] sm:$0xff] %v3557
  %3622 = vst [vmem:[#allocation3 + $0xe80] sm:$0xff] %v3558
  %3623 = vst [vmem:[#allocation3 + $0xe88] sm:$0xff] %v3559
  %3624 = vst [vmem:[#allocation3 + $0xe90] sm:$0xff] %v3560
  %3625 = vst [vmem:[#allocation3 + $0xe98] sm:$0xff] %v3561
  %3626 = vst [vmem:[#allocation3 + $0xea0] sm:$0xff] %v3562
  %3627 = vst [vmem:[#allocation3 + $0xea8] sm:$0xff] %v3563
  %3628 = vst [vmem:[#allocation3 + $0xeb0] sm:$0xff] %v3564
  %3629 = vst [vmem:[#allocation3 + $0xeb8] sm:$0xff] %v3565
  %3630 = vst [vmem:[#allocation3 + $0xec0] sm:$0xff] %v3566
  %3631 = vst [vmem:[#allocation3 + $0xec8] sm:$0xff] %v3567
  %3632 = vst [vmem:[#allocation3 + $0xed0] sm:$0xff] %v3568
  %3633 = vst [vmem:[#allocation3 + $0xed8] sm:$0xff] %v3569
  %3634 = vst [vmem:[#allocation3 + $0xee0] sm:$0xff] %v3570
  %3635 = vst [vmem:[#allocation3 + $0xee8] sm:$0xff] %v3571
  %3636 = vst [vmem:[#allocation3 + $0xef0] sm:$0xff] %v3572
  %3637 = vst [vmem:[#allocation3 + $0xef8] sm:$0xff] %v3573
  %v3638 = vld [vmem:[%s3] sm:$0xff]
  %v3639 = vld [vmem:[%s3 + $0x8] sm:$0xff]
  %v3640 = vld [vmem:[%s3 + $0x10] sm:$0xff]
  %v3641 = vld [vmem:[%s3 + $0x18] sm:$0xff]
  %v3642 = vld [vmem:[#allocation3] sm:$0xff]
  %v3643 = vld [vmem:[#allocation3 + $0x8] sm:$0xff]
  %v3644 = vld [vmem:[#allocation3 + $0x10] sm:$0xff]
  %v3645 = vld [vmem:[#allocation3 + $0x18] sm:$0xff]
  %v3646 = vld [vmem:[#allocation3 + $0x20] sm:$0xff]
  %v3647 = vld [vmem:[#allocation3 + $0x28] sm:$0xff]
  %v3648 = vld [vmem:[#allocation3 + $0x30] sm:$0xff]
  %v3649 = vld [vmem:[#allocation3 + $0x38] sm:$0xff]
  %v3650 = vld [vmem:[#allocation3 + $0x40] sm:$0xff]
  %v3651 = vld [vmem:[#allocation3 + $0x48] sm:$0xff]
  %v3652 = vld [vmem:[#allocation3 + $0x50] sm:$0xff]
  %v3653 = vld [vmem:[#allocation3 + $0x58] sm:$0xff]
  %v3654 = vld [vmem:[#allocation3 + $0x60] sm:$0xff]
  %v3655 = vld [vmem:[#allocation3 + $0x68] sm:$0xff]
  %v3656 = vld [vmem:[#allocation3 + $0x70] sm:$0xff]
  %v3657 = vld [vmem:[#allocation3 + $0x78] sm:$0xff]
  %v3658 = vld [vmem:[#allocation3 + $0x80] sm:$0xff]
  %v3659 = vld [vmem:[#allocation3 + $0x88] sm:$0xff]
  %v3660 = vld [vmem:[#allocation3 + $0x90] sm:$0xff]
  %v3661 = vld [vmem:[#allocation3 + $0x98] sm:$0xff]
  %v3662 = vld [vmem:[#allocation3 + $0xa0] sm:$0xff]
  %v3663 = vld [vmem:[#allocation3 + $0xa8] sm:$0xff]
  %v3664 = vld [vmem:[#allocation3 + $0xb0] sm:$0xff]
  %v3665 = vld [vmem:[#allocation3 + $0xb8] sm:$0xff]
  %v3666 = vld [vmem:[#allocation3 + $0xc0] sm:$0xff]
  %v3667 = vld [vmem:[#allocation3 + $0xc8] sm:$0xff]
  %v3668 = vld [vmem:[#allocation3 + $0xd0] sm:$0xff]
  %v3669 = vld [vmem:[#allocation3 + $0xd8] sm:$0xff]
  %v3670 = vld [vmem:[#allocation3 + $0xe0] sm:$0xff]
  %v3671 = vld [vmem:[#allocation3 + $0xe8] sm:$0xff]
  %v3672 = vld [vmem:[#allocation3 + $0xf0] sm:$0xff]
  %v3673 = vld [vmem:[#allocation3 + $0xf8] sm:$0xff]
  %v3674 = vld [vmem:[#allocation3 + $0x100] sm:$0xff]
  %v3675 = vld [vmem:[#allocation3 + $0x108] sm:$0xff]
  %v3676 = vld [vmem:[#allocation3 + $0x110] sm:$0xff]
  %v3677 = vld [vmem:[#allocation3 + $0x118] sm:$0xff]
  %v3678 = vld [vmem:[#allocation3 + $0x120] sm:$0xff]
  %v3679 = vld [vmem:[#allocation3 + $0x128] sm:$0xff]
  %v3680 = vld [vmem:[#allocation3 + $0x130] sm:$0xff]
  %v3681 = vld [vmem:[#allocation3 + $0x138] sm:$0xff]
  %v3682 = vld [vmem:[#allocation3 + $0x140] sm:$0xff]
  %v3683 = vld [vmem:[#allocation3 + $0x148] sm:$0xff]
  %v3684 = vld [vmem:[#allocation3 + $0x150] sm:$0xff]
  %v3685 = vld [vmem:[#allocation3 + $0x158] sm:$0xff]
  %v3686 = vld [vmem:[#allocation3 + $0x160] sm:$0xff]
  %v3687 = vld [vmem:[#allocation3 + $0x168] sm:$0xff]
  %v3688 = vld [vmem:[#allocation3 + $0x170] sm:$0xff]
  %v3689 = vld [vmem:[#allocation3 + $0x178] sm:$0xff]
  %v3690 = vld [vmem:[#allocation3 + $0x180] sm:$0xff]
  %v3691 = vld [vmem:[#allocation3 + $0x188] sm:$0xff]
  %v3692 = vld [vmem:[#allocation3 + $0x190] sm:$0xff]
  %v3693 = vld [vmem:[#allocation3 + $0x198] sm:$0xff]
  %v3694 = vld [vmem:[#allocation3 + $0x1a0] sm:$0xff]
  %v3695 = vld [vmem:[#allocation3 + $0x1a8] sm:$0xff]
  %v3696 = vld [vmem:[#allocation3 + $0x1b0] sm:$0xff]
  %v3697 = vld [vmem:[#allocation3 + $0x1b8] sm:$0xff]
  %v3698 = vld [vmem:[#allocation3 + $0x1c0] sm:$0xff]
  %v3699 = vld [vmem:[#allocation3 + $0x1c8] sm:$0xff]
  %v3700 = vld [vmem:[#allocation3 + $0x1d0] sm:$0xff]
  %v3701 = vld [vmem:[#allocation3 + $0x1d8] sm:$0xff]
  %v3702 = vld [vmem:[#allocation3 + $0x1e0] sm:$0xff]
  %v3703 = vld [vmem:[#allocation3 + $0x1e8] sm:$0xff]
  %v3704 = vld [vmem:[#allocation3 + $0x1f0] sm:$0xff]
  %v3705 = vld [vmem:[#allocation3 + $0x1f8] sm:$0xff]
  %v3706 = vld [vmem:[#allocation3 + $0x200] sm:$0xff]
  %v3707 = vld [vmem:[#allocation3 + $0x208] sm:$0xff]
  %v3708 = vld [vmem:[#allocation3 + $0x210] sm:$0xff]
  %v3709 = vld [vmem:[#allocation3 + $0x218] sm:$0xff]
  %v3710 = vld [vmem:[#allocation3 + $0x220] sm:$0xff]
  %v3711 = vld [vmem:[#allocation3 + $0x228] sm:$0xff]
  %v3712 = vld [vmem:[#allocation3 + $0x230] sm:$0xff]
  %v3713 = vld [vmem:[#allocation3 + $0x238] sm:$0xff]
  %v3714 = vld [vmem:[#allocation3 + $0x240] sm:$0xff]
  %v3715 = vld [vmem:[#allocation3 + $0x248] sm:$0xff]
  %v3716 = vld [vmem:[#allocation3 + $0x250] sm:$0xff]
  %v3717 = vld [vmem:[#allocation3 + $0x258] sm:$0xff]
  %v3718 = vld [vmem:[#allocation3 + $0x260] sm:$0xff]
  %v3719 = vld [vmem:[#allocation3 + $0x268] sm:$0xff]
  %v3720 = vld [vmem:[#allocation3 + $0x270] sm:$0xff]
  %v3721 = vld [vmem:[#allocation3 + $0x278] sm:$0xff]
  %v3722 = vld [vmem:[#allocation3 + $0x280] sm:$0xff]
  %v3723 = vld [vmem:[#allocation3 + $0x288] sm:$0xff]
  %v3724 = vld [vmem:[#allocation3 + $0x290] sm:$0xff]
  %v3725 = vld [vmem:[#allocation3 + $0x298] sm:$0xff]
  %v3726 = vld [vmem:[#allocation3 + $0x2a0] sm:$0xff]
  %v3727 = vld [vmem:[#allocation3 + $0x2a8] sm:$0xff]
  %v3728 = vld [vmem:[#allocation3 + $0x2b0] sm:$0xff]
  %v3729 = vld [vmem:[#allocation3 + $0x2b8] sm:$0xff]
  %v3730 = vld [vmem:[#allocation3 + $0x2c0] sm:$0xff]
  %v3731 = vld [vmem:[#allocation3 + $0x2c8] sm:$0xff]
  %v3732 = vld [vmem:[#allocation3 + $0x2d0] sm:$0xff]
  %v3733 = vld [vmem:[#allocation3 + $0x2d8] sm:$0xff]
  %v3734 = vld [vmem:[#allocation3 + $0x2e0] sm:$0xff]
  %v3735 = vld [vmem:[#allocation3 + $0x2e8] sm:$0xff]
  %v3736 = vld [vmem:[#allocation3 + $0x2f0] sm:$0xff]
  %v3737 = vld [vmem:[#allocation3 + $0x2f8] sm:$0xff]
  %v3738 = vld [vmem:[#allocation3 + $0x300] sm:$0xff]
  %v3739 = vld [vmem:[#allocation3 + $0x308] sm:$0xff]
  %v3740 = vld [vmem:[#allocation3 + $0x310] sm:$0xff]
  %v3741 = vld [vmem:[#allocation3 + $0x318] sm:$0xff]
  %v3742 = vld [vmem:[#allocation3 + $0x320] sm:$0xff]
  %v3743 = vld [vmem:[#allocation3 + $0x328] sm:$0xff]
  %v3744 = vld [vmem:[#allocation3 + $0x330] sm:$0xff]
  %v3745 = vld [vmem:[#allocation3 + $0x338] sm:$0xff]
  %v3746 = vld [vmem:[#allocation3 + $0x340] sm:$0xff]
  %v3747 = vld [vmem:[#allocation3 + $0x348] sm:$0xff]
  %v3748 = vld [vmem:[#allocation3 + $0x350] sm:$0xff]
  %v3749 = vld [vmem:[#allocation3 + $0x358] sm:$0xff]
  %v3750 = vld [vmem:[#allocation3 + $0x360] sm:$0xff]
  %v3751 = vld [vmem:[#allocation3 + $0x368] sm:$0xff]
  %v3752 = vld [vmem:[#allocation3 + $0x370] sm:$0xff]
  %v3753 = vld [vmem:[#allocation3 + $0x378] sm:$0xff]
  %v3754 = vld [vmem:[#allocation3 + $0x380] sm:$0xff]
  %v3755 = vld [vmem:[#allocation3 + $0x388] sm:$0xff]
  %v3756 = vld [vmem:[#allocation3 + $0x390] sm:$0xff]
  %v3757 = vld [vmem:[#allocation3 + $0x398] sm:$0xff]
  %v3758 = vld [vmem:[#allocation3 + $0x3a0] sm:$0xff]
  %v3759 = vld [vmem:[#allocation3 + $0x3a8] sm:$0xff]
  %v3760 = vld [vmem:[#allocation3 + $0x3b0] sm:$0xff]
  %v3761 = vld [vmem:[#allocation3 + $0x3b8] sm:$0xff]
  %v3762 = vld [vmem:[#allocation3 + $0x3c0] sm:$0xff]
  %v3763 = vld [vmem:[#allocation3 + $0x3c8] sm:$0xff]
  %v3764 = vld [vmem:[#allocation3 + $0x3d0] sm:$0xff]
  %v3765 = vld [vmem:[#allocation3 + $0x3d8] sm:$0xff]
  %v3766 = vld [vmem:[#allocation3 + $0x3e0] sm:$0xff]
  %v3767 = vld [vmem:[#allocation3 + $0x3e8] sm:$0xff]
  %v3768 = vld [vmem:[#allocation3 + $0x3f0] sm:$0xff]
  %v3769 = vld [vmem:[#allocation3 + $0x3f8] sm:$0xff]
  %v3770 = vld [vmem:[#allocation3 + $0x400] sm:$0xff]
  %v3771 = vld [vmem:[#allocation3 + $0x408] sm:$0xff]
  %v3772 = vld [vmem:[#allocation3 + $0x410] sm:$0xff]
  %v3773 = vld [vmem:[#allocation3 + $0x418] sm:$0xff]
  %v3774 = vld [vmem:[#allocation3 + $0x420] sm:$0xff]
  %v3775 = vld [vmem:[#allocation3 + $0x428] sm:$0xff]
  %v3776 = vld [vmem:[#allocation3 + $0x430] sm:$0xff]
  %v3777 = vld [vmem:[#allocation3 + $0x438] sm:$0xff]
  %v3778 = vld [vmem:[#allocation3 + $0x440] sm:$0xff]
  %v3779 = vld [vmem:[#allocation3 + $0x448] sm:$0xff]
  %v3780 = vld [vmem:[#allocation3 + $0x450] sm:$0xff]
  %v3781 = vld [vmem:[#allocation3 + $0x458] sm:$0xff]
  %v3782 = vld [vmem:[#allocation3 + $0x460] sm:$0xff]
  %v3783 = vld [vmem:[#allocation3 + $0x468] sm:$0xff]
  %v3784 = vld [vmem:[#allocation3 + $0x470] sm:$0xff]
  %v3785 = vld [vmem:[#allocation3 + $0x478] sm:$0xff]
  %v3786 = vld [vmem:[#allocation3 + $0x480] sm:$0xff]
  %v3787 = vld [vmem:[#allocation3 + $0x488] sm:$0xff]
  %v3788 = vld [vmem:[#allocation3 + $0x490] sm:$0xff]
  %v3789 = vld [vmem:[#allocation3 + $0x498] sm:$0xff]
  %v3790 = vld [vmem:[#allocation3 + $0x4a0] sm:$0xff]
  %v3791 = vld [vmem:[#allocation3 + $0x4a8] sm:$0xff]
  %v3792 = vld [vmem:[#allocation3 + $0x4b0] sm:$0xff]
  %v3793 = vld [vmem:[#allocation3 + $0x4b8] sm:$0xff]
  %v3794 = vld [vmem:[#allocation3 + $0x4c0] sm:$0xff]
  %v3795 = vld [vmem:[#allocation3 + $0x4c8] sm:$0xff]
  %v3796 = vld [vmem:[#allocation3 + $0x4d0] sm:$0xff]
  %v3797 = vld [vmem:[#allocation3 + $0x4d8] sm:$0xff]
  %v3798 = vld [vmem:[#allocation3 + $0x4e0] sm:$0xff]
  %v3799 = vld [vmem:[#allocation3 + $0x4e8] sm:$0xff]
  %v3800 = vld [vmem:[#allocation3 + $0x4f0] sm:$0xff]
  %v3801 = vld [vmem:[#allocation3 + $0x4f8] sm:$0xff]
  %v3802 = vld [vmem:[#allocation3 + $0x500] sm:$0xff]
  %v3803 = vld [vmem:[#allocation3 + $0x508] sm:$0xff]
  %v3804 = vld [vmem:[#allocation3 + $0x510] sm:$0xff]
  %v3805 = vld [vmem:[#allocation3 + $0x518] sm:$0xff]
  %v3806 = vld [vmem:[#allocation3 + $0x520] sm:$0xff]
  %v3807 = vld [vmem:[#allocation3 + $0x528] sm:$0xff]
  %v3808 = vld [vmem:[#allocation3 + $0x530] sm:$0xff]
  %v3809 = vld [vmem:[#allocation3 + $0x538] sm:$0xff]
  %v3810 = vld [vmem:[#allocation3 + $0x540] sm:$0xff]
  %v3811 = vld [vmem:[#allocation3 + $0x548] sm:$0xff]
  %v3812 = vld [vmem:[#allocation3 + $0x550] sm:$0xff]
  %v3813 = vld [vmem:[#allocation3 + $0x558] sm:$0xff]
  %v3814 = vld [vmem:[#allocation3 + $0x560] sm:$0xff]
  %v3815 = vld [vmem:[#allocation3 + $0x568] sm:$0xff]
  %v3816 = vld [vmem:[#allocation3 + $0x570] sm:$0xff]
  %v3817 = vld [vmem:[#allocation3 + $0x578] sm:$0xff]
  %v3818 = vld [vmem:[#allocation3 + $0x580] sm:$0xff]
  %v3819 = vld [vmem:[#allocation3 + $0x588] sm:$0xff]
  %v3820 = vld [vmem:[#allocation3 + $0x590] sm:$0xff]
  %v3821 = vld [vmem:[#allocation3 + $0x598] sm:$0xff]
  %v3822 = vld [vmem:[#allocation3 + $0x5a0] sm:$0xff]
  %v3823 = vld [vmem:[#allocation3 + $0x5a8] sm:$0xff]
  %v3824 = vld [vmem:[#allocation3 + $0x5b0] sm:$0xff]
  %v3825 = vld [vmem:[#allocation3 + $0x5b8] sm:$0xff]
  %v3826 = vld [vmem:[#allocation3 + $0x5c0] sm:$0xff]
  %v3827 = vld [vmem:[#allocation3 + $0x5c8] sm:$0xff]
  %v3828 = vld [vmem:[#allocation3 + $0x5d0] sm:$0xff]
  %v3829 = vld [vmem:[#allocation3 + $0x5d8] sm:$0xff]
  %v3830 = vld [vmem:[#allocation3 + $0x5e0] sm:$0xff]
  %v3831 = vld [vmem:[#allocation3 + $0x5e8] sm:$0xff]
  %v3832 = vld [vmem:[#allocation3 + $0x5f0] sm:$0xff]
  %v3833 = vld [vmem:[#allocation3 + $0x5f8] sm:$0xff]
  %v3834 = vld [vmem:[#allocation3 + $0x600] sm:$0xff]
  %v3835 = vld [vmem:[#allocation3 + $0x608] sm:$0xff]
  %v3836 = vld [vmem:[#allocation3 + $0x610] sm:$0xff]
  %v3837 = vld [vmem:[#allocation3 + $0x618] sm:$0xff]
  %v3838 = vld [vmem:[#allocation3 + $0x620] sm:$0xff]
  %v3839 = vld [vmem:[#allocation3 + $0x628] sm:$0xff]
  %v3840 = vld [vmem:[#allocation3 + $0x630] sm:$0xff]
  %v3841 = vld [vmem:[#allocation3 + $0x638] sm:$0xff]
  %v3842 = vld [vmem:[#allocation3 + $0x640] sm:$0xff]
  %v3843 = vld [vmem:[#allocation3 + $0x648] sm:$0xff]
  %v3844 = vld [vmem:[#allocation3 + $0x650] sm:$0xff]
  %v3845 = vld [vmem:[#allocation3 + $0x658] sm:$0xff]
  %v3846 = vld [vmem:[#allocation3 + $0x660] sm:$0xff]
  %v3847 = vld [vmem:[#allocation3 + $0x668] sm:$0xff]
  %v3848 = vld [vmem:[#allocation3 + $0x670] sm:$0xff]
  %v3849 = vld [vmem:[#allocation3 + $0x678] sm:$0xff]
  %v3850 = vld [vmem:[#allocation3 + $0x680] sm:$0xff]
  %v3851 = vld [vmem:[#allocation3 + $0x688] sm:$0xff]
  %v3852 = vld [vmem:[#allocation3 + $0x690] sm:$0xff]
  %v3853 = vld [vmem:[#allocation3 + $0x698] sm:$0xff]
  %v3854 = vld [vmem:[#allocation3 + $0x6a0] sm:$0xff]
  %v3855 = vld [vmem:[#allocation3 + $0x6a8] sm:$0xff]
  %v3856 = vld [vmem:[#allocation3 + $0x6b0] sm:$0xff]
  %v3857 = vld [vmem:[#allocation3 + $0x6b8] sm:$0xff]
  %v3858 = vld [vmem:[#allocation3 + $0x6c0] sm:$0xff]
  %v3859 = vld [vmem:[#allocation3 + $0x6c8] sm:$0xff]
  %v3860 = vld [vmem:[#allocation3 + $0x6d0] sm:$0xff]
  %v3861 = vld [vmem:[#allocation3 + $0x6d8] sm:$0xff]
  %v3862 = vld [vmem:[#allocation3 + $0x6e0] sm:$0xff]
  %v3863 = vld [vmem:[#allocation3 + $0x6e8] sm:$0xff]
  %v3864 = vld [vmem:[#allocation3 + $0x6f0] sm:$0xff]
  %v3865 = vld [vmem:[#allocation3 + $0x6f8] sm:$0xff]
  %v3866 = vld [vmem:[#allocation3 + $0x700] sm:$0xff]
  %v3867 = vld [vmem:[#allocation3 + $0x708] sm:$0xff]
  %v3868 = vld [vmem:[#allocation3 + $0x710] sm:$0xff]
  %v3869 = vld [vmem:[#allocation3 + $0x718] sm:$0xff]
  %v3870 = vld [vmem:[#allocation3 + $0x720] sm:$0xff]
  %v3871 = vld [vmem:[#allocation3 + $0x728] sm:$0xff]
  %v3872 = vld [vmem:[#allocation3 + $0x730] sm:$0xff]
  %v3873 = vld [vmem:[#allocation3 + $0x738] sm:$0xff]
  %v3874 = vld [vmem:[#allocation3 + $0x740] sm:$0xff]
  %v3875 = vld [vmem:[#allocation3 + $0x748] sm:$0xff]
  %v3876 = vld [vmem:[#allocation3 + $0x750] sm:$0xff]
  %v3877 = vld [vmem:[#allocation3 + $0x758] sm:$0xff]
  %v3878 = vld [vmem:[#allocation3 + $0x760] sm:$0xff]
  %v3879 = vld [vmem:[#allocation3 + $0x768] sm:$0xff]
  %v3880 = vld [vmem:[#allocation3 + $0x770] sm:$0xff]
  %v3881 = vld [vmem:[#allocation3 + $0x778] sm:$0xff]
  %v3882 = vld [vmem:[#allocation3 + $0x780] sm:$0xff]
  %v3883 = vld [vmem:[#allocation3 + $0x788] sm:$0xff]
  %v3884 = vld [vmem:[#allocation3 + $0x790] sm:$0xff]
  %v3885 = vld [vmem:[#allocation3 + $0x798] sm:$0xff]
  %v3886 = vld [vmem:[#allocation3 + $0x7a0] sm:$0xff]
  %v3887 = vld [vmem:[#allocation3 + $0x7a8] sm:$0xff]
  %v3888 = vld [vmem:[#allocation3 + $0x7b0] sm:$0xff]
  %v3889 = vld [vmem:[#allocation3 + $0x7b8] sm:$0xff]
  %v3890 = vld [vmem:[#allocation3 + $0x7c0] sm:$0xff]
  %v3891 = vld [vmem:[#allocation3 + $0x7c8] sm:$0xff]
  %v3892 = vld [vmem:[#allocation3 + $0x7d0] sm:$0xff]
  %v3893 = vld [vmem:[#allocation3 + $0x7d8] sm:$0xff]
  %v3894 = vld [vmem:[#allocation3 + $0x7e0] sm:$0xff]
  %v3895 = vld [vmem:[#allocation3 + $0x7e8] sm:$0xff]
  %v3896 = vld [vmem:[#allocation3 + $0x7f0] sm:$0xff]
  %v3897 = vld [vmem:[#allocation3 + $0x7f8] sm:$0xff]
  %v3898 = vld [vmem:[#allocation3 + $0x800] sm:$0xff]
  %v3899 = vld [vmem:[#allocation3 + $0x808] sm:$0xff]
  %v3900 = vld [vmem:[#allocation3 + $0x810] sm:$0xff]
  %v3901 = vld [vmem:[#allocation3 + $0x818] sm:$0xff]
  %v3902 = vld [vmem:[#allocation3 + $0x820] sm:$0xff]
  %v3903 = vld [vmem:[#allocation3 + $0x828] sm:$0xff]
  %v3904 = vld [vmem:[#allocation3 + $0x830] sm:$0xff]
  %v3905 = vld [vmem:[#allocation3 + $0x838] sm:$0xff]
  %v3906 = vld [vmem:[#allocation3 + $0x840] sm:$0xff]
  %v3907 = vld [vmem:[#allocation3 + $0x848] sm:$0xff]
  %v3908 = vld [vmem:[#allocation3 + $0x850] sm:$0xff]
  %v3909 = vld [vmem:[#allocation3 + $0x858] sm:$0xff]
  %v3910 = vld [vmem:[#allocation3 + $0x860] sm:$0xff]
  %v3911 = vld [vmem:[#allocation3 + $0x868] sm:$0xff]
  %v3912 = vld [vmem:[#allocation3 + $0x870] sm:$0xff]
  %v3913 = vld [vmem:[#allocation3 + $0x878] sm:$0xff]
  %v3914 = vld [vmem:[#allocation3 + $0x880] sm:$0xff]
  %v3915 = vld [vmem:[#allocation3 + $0x888] sm:$0xff]
  %v3916 = vld [vmem:[#allocation3 + $0x890] sm:$0xff]
  %v3917 = vld [vmem:[#allocation3 + $0x898] sm:$0xff]
  %v3918 = vld [vmem:[#allocation3 + $0x8a0] sm:$0xff]
  %v3919 = vld [vmem:[#allocation3 + $0x8a8] sm:$0xff]
  %v3920 = vld [vmem:[#allocation3 + $0x8b0] sm:$0xff]
  %v3921 = vld [vmem:[#allocation3 + $0x8b8] sm:$0xff]
  %v3922 = vld [vmem:[#allocation3 + $0x8c0] sm:$0xff]
  %v3923 = vld [vmem:[#allocation3 + $0x8c8] sm:$0xff]
  %v3924 = vld [vmem:[#allocation3 + $0x8d0] sm:$0xff]
  %v3925 = vld [vmem:[#allocation3 + $0x8d8] sm:$0xff]
  %v3926 = vld [vmem:[#allocation3 + $0x8e0] sm:$0xff]
  %v3927 = vld [vmem:[#allocation3 + $0x8e8] sm:$0xff]
  %v3928 = vld [vmem:[#allocation3 + $0x8f0] sm:$0xff]
  %v3929 = vld [vmem:[#allocation3 + $0x8f8] sm:$0xff]
  %v3930 = vld [vmem:[#allocation3 + $0x900] sm:$0xff]
  %v3931 = vld [vmem:[#allocation3 + $0x908] sm:$0xff]
  %v3932 = vld [vmem:[#allocation3 + $0x910] sm:$0xff]
  %v3933 = vld [vmem:[#allocation3 + $0x918] sm:$0xff]
  %v3934 = vld [vmem:[#allocation3 + $0x920] sm:$0xff]
  %v3935 = vld [vmem:[#allocation3 + $0x928] sm:$0xff]
  %v3936 = vld [vmem:[#allocation3 + $0x930] sm:$0xff]
  %v3937 = vld [vmem:[#allocation3 + $0x938] sm:$0xff]
  %v3938 = vld [vmem:[#allocation3 + $0x940] sm:$0xff]
  %v3939 = vld [vmem:[#allocation3 + $0x948] sm:$0xff]
  %v3940 = vld [vmem:[#allocation3 + $0x950] sm:$0xff]
  %v3941 = vld [vmem:[#allocation3 + $0x958] sm:$0xff]
  %v3942 = vld [vmem:[#allocation3 + $0x960] sm:$0xff]
  %v3943 = vld [vmem:[#allocation3 + $0x968] sm:$0xff]
  %v3944 = vld [vmem:[#allocation3 + $0x970] sm:$0xff]
  %v3945 = vld [vmem:[#allocation3 + $0x978] sm:$0xff]
  %v3946 = vld [vmem:[#allocation3 + $0x980] sm:$0xff]
  %v3947 = vld [vmem:[#allocation3 + $0x988] sm:$0xff]
  %v3948 = vld [vmem:[#allocation3 + $0x990] sm:$0xff]
  %v3949 = vld [vmem:[#allocation3 + $0x998] sm:$0xff]
  %v3950 = vld [vmem:[#allocation3 + $0x9a0] sm:$0xff]
  %v3951 = vld [vmem:[#allocation3 + $0x9a8] sm:$0xff]
  %v3952 = vld [vmem:[#allocation3 + $0x9b0] sm:$0xff]
  %v3953 = vld [vmem:[#allocation3 + $0x9b8] sm:$0xff]
  %v3954 = vld [vmem:[#allocation3 + $0x9c0] sm:$0xff]
  %v3955 = vld [vmem:[#allocation3 + $0x9c8] sm:$0xff]
  %v3956 = vld [vmem:[#allocation3 + $0x9d0] sm:$0xff]
  %v3957 = vld [vmem:[#allocation3 + $0x9d8] sm:$0xff]
  %v3958 = vld [vmem:[#allocation3 + $0x9e0] sm:$0xff]
  %v3959 = vld [vmem:[#allocation3 + $0x9e8] sm:$0xff]
  %v3960 = vld [vmem:[#allocation3 + $0x9f0] sm:$0xff]
  %v3961 = vld [vmem:[#allocation3 + $0x9f8] sm:$0xff]
  %v3962 = vld [vmem:[#allocation3 + $0xa00] sm:$0xff]
  %v3963 = vld [vmem:[#allocation3 + $0xa08] sm:$0xff]
  %v3964 = vld [vmem:[#allocation3 + $0xa10] sm:$0xff]
  %v3965 = vld [vmem:[#allocation3 + $0xa18] sm:$0xff]
  %v3966 = vld [vmem:[#allocation3 + $0xa20] sm:$0xff]
  %v3967 = vld [vmem:[#allocation3 + $0xa28] sm:$0xff]
  %v3968 = vld [vmem:[#allocation3 + $0xa30] sm:$0xff]
  %v3969 = vld [vmem:[#allocation3 + $0xa38] sm:$0xff]
  %v3970 = vld [vmem:[#allocation3 + $0xa40] sm:$0xff]
  %v3971 = vld [vmem:[#allocation3 + $0xa48] sm:$0xff]
  %v3972 = vld [vmem:[#allocation3 + $0xa50] sm:$0xff]
  %v3973 = vld [vmem:[#allocation3 + $0xa58] sm:$0xff]
  %v3974 = vld [vmem:[#allocation3 + $0xa60] sm:$0xff]
  %v3975 = vld [vmem:[#allocation3 + $0xa68] sm:$0xff]
  %v3976 = vld [vmem:[#allocation3 + $0xa70] sm:$0xff]
  %v3977 = vld [vmem:[#allocation3 + $0xa78] sm:$0xff]
  %v3978 = vld [vmem:[#allocation3 + $0xa80] sm:$0xff]
  %v3979 = vld [vmem:[#allocation3 + $0xa88] sm:$0xff]
  %v3980 = vld [vmem:[#allocation3 + $0xa90] sm:$0xff]
  %v3981 = vld [vmem:[#allocation3 + $0xa98] sm:$0xff]
  %v3982 = vld [vmem:[#allocation3 + $0xaa0] sm:$0xff]
  %v3983 = vld [vmem:[#allocation3 + $0xaa8] sm:$0xff]
  %v3984 = vld [vmem:[#allocation3 + $0xab0] sm:$0xff]
  %v3985 = vld [vmem:[#allocation3 + $0xab8] sm:$0xff]
  %v3986 = vld [vmem:[#allocation3 + $0xac0] sm:$0xff]
  %v3987 = vld [vmem:[#allocation3 + $0xac8] sm:$0xff]
  %v3988 = vld [vmem:[#allocation3 + $0xad0] sm:$0xff]
  %v3989 = vld [vmem:[#allocation3 + $0xad8] sm:$0xff]
  %v3990 = vld [vmem:[#allocation3 + $0xae0] sm:$0xff]
  %v3991 = vld [vmem:[#allocation3 + $0xae8] sm:$0xff]
  %v3992 = vld [vmem:[#allocation3 + $0xaf0] sm:$0xff]
  %v3993 = vld [vmem:[#allocation3 + $0xaf8] sm:$0xff]
  %v3994 = vld [vmem:[#allocation3 + $0xb00] sm:$0xff]
  %v3995 = vld [vmem:[#allocation3 + $0xb08] sm:$0xff]
  %v3996 = vld [vmem:[#allocation3 + $0xb10] sm:$0xff]
  %v3997 = vld [vmem:[#allocation3 + $0xb18] sm:$0xff]
  %v3998 = vld [vmem:[#allocation3 + $0xb20] sm:$0xff]
  %v3999 = vld [vmem:[#allocation3 + $0xb28] sm:$0xff]
  %v4000 = vld [vmem:[#allocation3 + $0xb30] sm:$0xff]
  %v4001 = vld [vmem:[#allocation3 + $0xb38] sm:$0xff]
  %v4002 = vld [vmem:[#allocation3 + $0xb40] sm:$0xff]
  %v4003 = vld [vmem:[#allocation3 + $0xb48] sm:$0xff]
  %v4004 = vld [vmem:[#allocation3 + $0xb50] sm:$0xff]
  %v4005 = vld [vmem:[#allocation3 + $0xb58] sm:$0xff]
  %v4006 = vld [vmem:[#allocation3 + $0xb60] sm:$0xff]
  %v4007 = vld [vmem:[#allocation3 + $0xb68] sm:$0xff]
  %v4008 = vld [vmem:[#allocation3 + $0xb70] sm:$0xff]
  %v4009 = vld [vmem:[#allocation3 + $0xb78] sm:$0xff]
  %v4010 = vld [vmem:[#allocation3 + $0xb80] sm:$0xff]
  %v4011 = vld [vmem:[#allocation3 + $0xb88] sm:$0xff]
  %v4012 = vld [vmem:[#allocation3 + $0xb90] sm:$0xff]
  %v4013 = vld [vmem:[#allocation3 + $0xb98] sm:$0xff]
  %v4014 = vld [vmem:[#allocation3 + $0xba0] sm:$0xff]
  %v4015 = vld [vmem:[#allocation3 + $0xba8] sm:$0xff]
  %v4016 = vld [vmem:[#allocation3 + $0xbb0] sm:$0xff]
  %v4017 = vld [vmem:[#allocation3 + $0xbb8] sm:$0xff]
  %v4018 = vld [vmem:[#allocation3 + $0xbc0] sm:$0xff]
  %v4019 = vld [vmem:[#allocation3 + $0xbc8] sm:$0xff]
  %v4020 = vld [vmem:[#allocation3 + $0xbd0] sm:$0xff]
  %v4021 = vld [vmem:[#allocation3 + $0xbd8] sm:$0xff]
  %v4022 = vld [vmem:[#allocation3 + $0xbe0] sm:$0xff]
  %v4023 = vld [vmem:[#allocation3 + $0xbe8] sm:$0xff]
  %v4024 = vld [vmem:[#allocation3 + $0xbf0] sm:$0xff]
  %v4025 = vld [vmem:[#allocation3 + $0xbf8] sm:$0xff]
  %v4026 = vld [vmem:[#allocation3 + $0xc00] sm:$0xff]
  %v4027 = vld [vmem:[#allocation3 + $0xc08] sm:$0xff]
  %v4028 = vld [vmem:[#allocation3 + $0xc10] sm:$0xff]
  %v4029 = vld [vmem:[#allocation3 + $0xc18] sm:$0xff]
  %v4030 = vld [vmem:[#allocation3 + $0xc20] sm:$0xff]
  %v4031 = vld [vmem:[#allocation3 + $0xc28] sm:$0xff]
  %v4032 = vld [vmem:[#allocation3 + $0xc30] sm:$0xff]
  %v4033 = vld [vmem:[#allocation3 + $0xc38] sm:$0xff]
  %v4034 = vld [vmem:[#allocation3 + $0xc40] sm:$0xff]
  %v4035 = vld [vmem:[#allocation3 + $0xc48] sm:$0xff]
  %v4036 = vld [vmem:[#allocation3 + $0xc50] sm:$0xff]
  %v4037 = vld [vmem:[#allocation3 + $0xc58] sm:$0xff]
  %v4038 = vld [vmem:[#allocation3 + $0xc60] sm:$0xff]
  %v4039 = vld [vmem:[#allocation3 + $0xc68] sm:$0xff]
  %v4040 = vld [vmem:[#allocation3 + $0xc70] sm:$0xff]
  %v4041 = vld [vmem:[#allocation3 + $0xc78] sm:$0xff]
  %v4042 = vld [vmem:[#allocation3 + $0xc80] sm:$0xff]
  %v4043 = vld [vmem:[#allocation3 + $0xc88] sm:$0xff]
  %v4044 = vld [vmem:[#allocation3 + $0xc90] sm:$0xff]
  %v4045 = vld [vmem:[#allocation3 + $0xc98] sm:$0xff]
  %v4046 = vld [vmem:[#allocation3 + $0xca0] sm:$0xff]
  %v4047 = vld [vmem:[#allocation3 + $0xca8] sm:$0xff]
  %v4048 = vld [vmem:[#allocation3 + $0xcb0] sm:$0xff]
  %v4049 = vld [vmem:[#allocation3 + $0xcb8] sm:$0xff]
  %v4050 = vld [vmem:[#allocation3 + $0xcc0] sm:$0xff]
  %v4051 = vld [vmem:[#allocation3 + $0xcc8] sm:$0xff]
  %v4052 = vld [vmem:[#allocation3 + $0xcd0] sm:$0xff]
  %v4053 = vld [vmem:[#allocation3 + $0xcd8] sm:$0xff]
  %v4054 = vld [vmem:[#allocation3 + $0xce0] sm:$0xff]
  %v4055 = vld [vmem:[#allocation3 + $0xce8] sm:$0xff]
  %v4056 = vld [vmem:[#allocation3 + $0xcf0] sm:$0xff]
  %v4057 = vld [vmem:[#allocation3 + $0xcf8] sm:$0xff]
  %v4058 = vld [vmem:[#allocation3 + $0xd00] sm:$0xff]
  %v4059 = vld [vmem:[#allocation3 + $0xd08] sm:$0xff]
  %v4060 = vld [vmem:[#allocation3 + $0xd10] sm:$0xff]
  %v4061 = vld [vmem:[#allocation3 + $0xd18] sm:$0xff]
  %v4062 = vld [vmem:[#allocation3 + $0xd20] sm:$0xff]
  %v4063 = vld [vmem:[#allocation3 + $0xd28] sm:$0xff]
  %v4064 = vld [vmem:[#allocation3 + $0xd30] sm:$0xff]
  %v4065 = vld [vmem:[#allocation3 + $0xd38] sm:$0xff]
  %v4066 = vld [vmem:[#allocation3 + $0xd40] sm:$0xff]
  %v4067 = vld [vmem:[#allocation3 + $0xd48] sm:$0xff]
  %v4068 = vld [vmem:[#allocation3 + $0xd50] sm:$0xff]
  %v4069 = vld [vmem:[#allocation3 + $0xd58] sm:$0xff]
  %v4070 = vld [vmem:[#allocation3 + $0xd60] sm:$0xff]
  %v4071 = vld [vmem:[#allocation3 + $0xd68] sm:$0xff]
  %v4072 = vld [vmem:[#allocation3 + $0xd70] sm:$0xff]
  %v4073 = vld [vmem:[#allocation3 + $0xd78] sm:$0xff]
  %v4074 = vld [vmem:[#allocation3 + $0xd80] sm:$0xff]
  %v4075 = vld [vmem:[#allocation3 + $0xd88] sm:$0xff]
  %v4076 = vld [vmem:[#allocation3 + $0xd90] sm:$0xff]
  %v4077 = vld [vmem:[#allocation3 + $0xd98] sm:$0xff]
  %v4078 = vld [vmem:[#allocation3 + $0xda0] sm:$0xff]
  %v4079 = vld [vmem:[#allocation3 + $0xda8] sm:$0xff]
  %v4080 = vld [vmem:[#allocation3 + $0xdb0] sm:$0xff]
  %v4081 = vld [vmem:[#allocation3 + $0xdb8] sm:$0xff]
  %v4082 = vld [vmem:[#allocation3 + $0xdc0] sm:$0xff]
  %v4083 = vld [vmem:[#allocation3 + $0xdc8] sm:$0xff]
  %v4084 = vld [vmem:[#allocation3 + $0xdd0] sm:$0xff]
  %v4085 = vld [vmem:[#allocation3 + $0xdd8] sm:$0xff]
  %v4086 = vld [vmem:[#allocation3 + $0xde0] sm:$0xff]
  %v4087 = vld [vmem:[#allocation3 + $0xde8] sm:$0xff]
  %v4088 = vld [vmem:[#allocation3 + $0xdf0] sm:$0xff]
  %v4089 = vld [vmem:[#allocation3 + $0xdf8] sm:$0xff]
  %v4090 = vld [vmem:[#allocation3 + $0xe00] sm:$0xff]
  %v4091 = vld [vmem:[#allocation3 + $0xe08] sm:$0xff]
  %v4092 = vld [vmem:[#allocation3 + $0xe10] sm:$0xff]
  %v4093 = vld [vmem:[#allocation3 + $0xe18] sm:$0xff]
  %v4094 = vld [vmem:[#allocation3 + $0xe20] sm:$0xff]
  %v4095 = vld [vmem:[#allocation3 + $0xe28] sm:$0xff]
  %v4096 = vld [vmem:[#allocation3 + $0xe30] sm:$0xff]
  %v4097 = vld [vmem:[#allocation3 + $0xe38] sm:$0xff]
  %v4098 = vld [vmem:[#allocation3 + $0xe40] sm:$0xff]
  %v4099 = vld [vmem:[#allocation3 + $0xe48] sm:$0xff]
  %v4100 = vld [vmem:[#allocation3 + $0xe50] sm:$0xff]
  %v4101 = vld [vmem:[#allocation3 + $0xe58] sm:$0xff]
  %v4102 = vld [vmem:[#allocation3 + $0xe60] sm:$0xff]
  %v4103 = vld [vmem:[#allocation3 + $0xe68] sm:$0xff]
  %v4104 = vld [vmem:[#allocation3 + $0xe70] sm:$0xff]
  %v4105 = vld [vmem:[#allocation3 + $0xe78] sm:$0xff]
  %v4106 = vld [vmem:[#allocation3 + $0xe80] sm:$0xff]
  %v4107 = vld [vmem:[#allocation3 + $0xe88] sm:$0xff]
  %v4108 = vld [vmem:[#allocation3 + $0xe90] sm:$0xff]
  %v4109 = vld [vmem:[#allocation3 + $0xe98] sm:$0xff]
  %v4110 = vld [vmem:[#allocation3 + $0xea0] sm:$0xff]
  %v4111 = vld [vmem:[#allocation3 + $0xea8] sm:$0xff]
  %v4112 = vld [vmem:[#allocation3 + $0xeb0] sm:$0xff]
  %v4113 = vld [vmem:[#allocation3 + $0xeb8] sm:$0xff]
  %v4114 = vld [vmem:[#allocation3 + $0xec0] sm:$0xff]
  %v4115 = vld [vmem:[#allocation3 + $0xec8] sm:$0xff]
  %v4116 = vld [vmem:[#allocation3 + $0xed0] sm:$0xff]
  %v4117 = vld [vmem:[#allocation3 + $0xed8] sm:$0xff]
  %v4118 = vld [vmem:[#allocation3 + $0xee0] sm:$0xff]
  %v4119 = vld [vmem:[#allocation3 + $0xee8] sm:$0xff]
  %v4120 = vld [vmem:[#allocation3 + $0xef0] sm:$0xff]
  %v4121 = vld [vmem:[#allocation3 + $0xef8] sm:$0xff]
  %vm4122 = vcmask 916480
  %v4124 = vsel %vm4122, %v3639, 0
  %v4127 = vsel %vm4122, %v3641, 0
  %4129 = vmatprep.subr.mxu0 %v3643
  %4130 = vmatpush1.msra.mxu0 %v3642
  %4131 = vmatprep.subr.mxu0 %v3659
  %4132 = vmatpush1.msra.mxu0 %v3658
  %4133 = vmatprep.subr.mxu0 %v3675
  %4134 = vmatpush1.msra.mxu0 %v3674
  %4135 = vmatprep.subr.mxu0 %v3691
  %4136 = vmatpush1.msra.mxu0 %v3690
  %4137 = vmatprep.subr.mxu0 %v3707
  %4138 = vmatpush1.msra.mxu0 %v3706
  %4139 = vmatprep.subr.mxu0 %v3723
  %4140 = vmatpush1.msra.mxu0 %v3722
  %4141 = vmatprep.subr.mxu0 %v3739
  %4142 = vmatpush1.msra.mxu0 %v3738
  %4143 = vmatprep.subr.mxu0 %v3755
  %4144 = vmatpush1.msra.mxu0 %v3754
  %4145 = vmatprep.subr.mxu0 %v3771
  %4146 = vmatpush1.msra.mxu0 %v3770
  %4147 = vmatprep.subr.mxu0 %v3787
  %4148 = vmatpush1.msra.mxu0 %v3786
  %4149 = vmatprep.subr.mxu0 %v3803
  %4150 = vmatpush1.msra.mxu0 %v3802
  %4151 = vmatprep.subr.mxu0 %v3819
  %4152 = vmatpush1.msra.mxu0 %v3818
  %4153 = vmatprep.subr.mxu0 %v3835
  %4154 = vmatpush1.msra.mxu0 %v3834
  %4155 = vmatprep.subr.mxu0 %v3851
  %4156 = vmatpush1.msra.mxu0 %v3850
  %4157 = vmatprep.subr.mxu0 %v3867
  %4158 = vmatpush1.msra.mxu0 %v3866
  %4159 = vmatprep.subr.mxu0 %v3883
  %4160 = vmatpush1.msra.mxu0 %v3882
  %4161 = vmatprep.subr.mxu0 %v3899
  %4162 = vmatpush1.msra.mxu0 %v3898
  %4163 = vmatprep.subr.mxu0 %v3915
  %4164 = vmatpush1.msra.mxu0 %v3914
  %4165 = vmatprep.subr.mxu0 %v3931
  %4166 = vmatpush1.msra.mxu0 %v3930
  %4167 = vmatprep.subr.mxu0 %v3947
  %4168 = vmatpush1.msra.mxu0 %v3946
  %4169 = vmatprep.subr.mxu0 %v3963
  %4170 = vmatpush1.msra.mxu0 %v3962
  %4171 = vmatprep.subr.mxu0 %v3979
  %4172 = vmatpush1.msra.mxu0 %v3978
  %4173 = vmatprep.subr.mxu0 %v3995
  %4174 = vmatpush1.msra.mxu0 %v3994
  %4175 = vmatprep.subr.mxu0 %v4011
  %4176 = vmatpush1.msra.mxu0 %v4010
  %4177 = vmatprep.subr.mxu0 %v4027
  %4178 = vmatpush1.msra.mxu0 %v4026
  %4179 = vmatprep.subr.mxu0 %v4043
  %4180 = vmatpush1.msra.mxu0 %v4042
  %4181 = vmatprep.subr.mxu0 %v4059
  %4182 = vmatpush1.msra.mxu0 %v4058
  %4183 = vmatprep.subr.mxu0 %v4075
  %4184 = vmatpush1.msra.mxu0 %v4074
  %4185 = vmatprep.subr.mxu0 %v4091
  %4186 = vmatpush1.msra.mxu0 %v4090
  %4187 = vmatprep.subr.mxu0 %v4107
  %4188 = vmatpush1.msra.mxu0 %v4106
  %4189 = vmatprep.subr.mxu0 0.0
  %4190 = vmatpush1.msra.mxu0 0.0
  %4191 = vmatprep.subr.mxu0 0.0
  %4192 = vmatpush1.msra.mxu0 0.0
  %4193 = vmatprep.mubr.f32.mxu0 %v4124
  %4194 = vmatmul.mubr.f32.gmra.mrb[0].mxu0 %v3638
  %v4195 = vpop.f32.mrb[0].mxu0
  %v4196 = vadd.f32 0.0, %v4195
  %v4197 = vpop.f32.mrb[0].mxu0
  %v4198 = vadd.f32 0.0, %v4197
  %4199 = vmatprep.mubr.f32.mxu0 %v4127
  %4200 = vmatmul.mubr.f32.gmra.mrb[0].mxu0 %v3640
  %v4201 = vpop.f32.mrb[0].mxu0
  %v4202 = vadd.f32 0.0, %v4201
  %v4203 = vpop.f32.mrb[0].mxu0
  %v4204 = vadd.f32 0.0, %v4203
  %4205 = vdwg.mxu0
  %4206 = vmatprep.subr.mxu0 %v3645
  %4207 = vmatpush1.msra.mxu0 %v3644
  %4208 = vmatprep.subr.mxu0 %v3661
  %4209 = vmatpush1.msra.mxu0 %v3660
  %4210 = vmatprep.subr.mxu0 %v3677
  %4211 = vmatpush1.msra.mxu0 %v3676
  %4212 = vmatprep.subr.mxu0 %v3693
  %4213 = vmatpush1.msra.mxu0 %v3692
  %4214 = vmatprep.subr.mxu0 %v3709
  %4215 = vmatpush1.msra.mxu0 %v3708
  %4216 = vmatprep.subr.mxu0 %v3725
  %4217 = vmatpush1.msra.mxu0 %v3724
  %4218 = vmatprep.subr.mxu0 %v3741
  %4219 = vmatpush1.msra.mxu0 %v3740
  %4220 = vmatprep.subr.mxu0 %v3757
  %4221 = vmatpush1.msra.mxu0 %v3756
  %4222 = vmatprep.subr.mxu0 %v3773
  %4223 = vmatpush1.msra.mxu0 %v3772
  %4224 = vmatprep.subr.mxu0 %v3789
  %4225 = vmatpush1.msra.mxu0 %v3788
  %4226 = vmatprep.subr.mxu0 %v3805
  %4227 = vmatpush1.msra.mxu0 %v3804
  %4228 = vmatprep.subr.mxu0 %v3821
  %4229 = vmatpush1.msra.mxu0 %v3820
  %4230 = vmatprep.subr.mxu0 %v3837
  %4231 = vmatpush1.msra.mxu0 %v3836
  %4232 = vmatprep.subr.mxu0 %v3853
  %4233 = vmatpush1.msra.mxu0 %v3852
  %4234 = vmatprep.subr.mxu0 %v3869
  %4235 = vmatpush1.msra.mxu0 %v3868
  %4236 = vmatprep.subr.mxu0 %v3885
  %4237 = vmatpush1.msra.mxu0 %v3884
  %4238 = vmatprep.subr.mxu0 %v3901
  %4239 = vmatpush1.msra.mxu0 %v3900
  %4240 = vmatprep.subr.mxu0 %v3917
  %4241 = vmatpush1.msra.mxu0 %v3916
  %4242 = vmatprep.subr.mxu0 %v3933
  %4243 = vmatpush1.msra.mxu0 %v3932
  %4244 = vmatprep.subr.mxu0 %v3949
  %4245 = vmatpush1.msra.mxu0 %v3948
  %4246 = vmatprep.subr.mxu0 %v3965
  %4247 = vmatpush1.msra.mxu0 %v3964
  %4248 = vmatprep.subr.mxu0 %v3981
  %4249 = vmatpush1.msra.mxu0 %v3980
  %4250 = vmatprep.subr.mxu0 %v3997
  %4251 = vmatpush1.msra.mxu0 %v3996
  %4252 = vmatprep.subr.mxu0 %v4013
  %4253 = vmatpush1.msra.mxu0 %v4012
  %4254 = vmatprep.subr.mxu0 %v4029
  %4255 = vmatpush1.msra.mxu0 %v4028
  %4256 = vmatprep.subr.mxu0 %v4045
  %4257 = vmatpush1.msra.mxu0 %v4044
  %4258 = vmatprep.subr.mxu0 %v4061
  %4259 = vmatpush1.msra.mxu0 %v4060
  %4260 = vmatprep.subr.mxu0 %v4077
  %4261 = vmatpush1.msra.mxu0 %v4076
  %4262 = vmatprep.subr.mxu0 %v4093
  %4263 = vmatpush1.msra.mxu0 %v4092
  %4264 = vmatprep.subr.mxu0 %v4109
  %4265 = vmatpush1.msra.mxu0 %v4108
  %4266 = vmatprep.subr.mxu0 0.0
  %4267 = vmatpush1.msra.mxu0 0.0
  %4268 = vmatprep.subr.mxu0 0.0
  %4269 = vmatpush1.msra.mxu0 0.0
  %4270 = vmatprep.mubr.f32.mxu0 %v4124
  %4271 = vmatmul.mubr.f32.gmra.mrb[0].mxu0 %v3638
  %v4272 = vpop.f32.mrb[0].mxu0
  %v4273 = vadd.f32 0.0, %v4272
  %v4274 = vpop.f32.mrb[0].mxu0
  %v4275 = vadd.f32 0.0, %v4274
  %4276 = vmatprep.mubr.f32.mxu0 %v4127
  %4277 = vmatmul.mubr.f32.gmra.mrb[0].mxu0 %v3640
  %v4278 = vpop.f32.mrb[0].mxu0
  %v4279 = vadd.f32 0.0, %v4278
  %v4280 = vpop.f32.mrb[0].mxu0
  %v4281 = vadd.f32 0.0, %v4280
  %4282 = vdwg.mxu0
  %4283 = vmatprep.subr.mxu0 %v3647
  %4284 = vmatpush1.msra.mxu0 %v3646
  %4285 = vmatprep.subr.mxu0 %v3663
  %4286 = vmatpush1.msra.mxu0 %v3662
  %4287 = vmatprep.subr.mxu0 %v3679
  %4288 = vmatpush1.msra.mxu0 %v3678
  %4289 = vmatprep.subr.mxu0 %v3695
  %4290 = vmatpush1.msra.mxu0 %v3694
  %4291 = vmatprep.subr.mxu0 %v3711
  %4292 = vmatpush1.msra.mxu0 %v3710
  %4293 = vmatprep.subr.mxu0 %v3727
  %4294 = vmatpush1.msra.mxu0 %v3726
  %4295 = vmatprep.subr.mxu0 %v3743
  %4296 = vmatpush1.msra.mxu0 %v3742
  %4297 = vmatprep.subr.mxu0 %v3759
  %4298 = vmatpush1.msra.mxu0 %v3758
  %4299 = vmatprep.subr.mxu0 %v3775
  %4300 = vmatpush1.msra.mxu0 %v3774
  %4301 = vmatprep.subr.mxu0 %v3791
  %4302 = vmatpush1.msra.mxu0 %v3790
  %4303 = vmatprep.subr.mxu0 %v3807
  %4304 = vmatpush1.msra.mxu0 %v3806
  %4305 = vmatprep.subr.mxu0 %v3823
  %4306 = vmatpush1.msra.mxu0 %v3822
  %4307 = vmatprep.subr.mxu0 %v3839
  %4308 = vmatpush1.msra.mxu0 %v3838
  %4309 = vmatprep.subr.mxu0 %v3855
  %4310 = vmatpush1.msra.mxu0 %v3854
  %4311 = vmatprep.subr.mxu0 %v3871
  %4312 = vmatpush1.msra.mxu0 %v3870
  %4313 = vmatprep.subr.mxu0 %v3887
  %4314 = vmatpush1.msra.mxu0 %v3886
  %4315 = vmatprep.subr.mxu0 %v3903
  %4316 = vmatpush1.msra.mxu0 %v3902
  %4317 = vmatprep.subr.mxu0 %v3919
  %4318 = vmatpush1.msra.mxu0 %v3918
  %4319 = vmatprep.subr.mxu0 %v3935
  %4320 = vmatpush1.msra.mxu0 %v3934
  %4321 = vmatprep.subr.mxu0 %v3951
  %4322 = vmatpush1.msra.mxu0 %v3950
  %4323 = vmatprep.subr.mxu0 %v3967
  %4324 = vmatpush1.msra.mxu0 %v3966
  %4325 = vmatprep.subr.mxu0 %v3983
  %4326 = vmatpush1.msra.mxu0 %v3982
  %4327 = vmatprep.subr.mxu0 %v3999
  %4328 = vmatpush1.msra.mxu0 %v3998
  %4329 = vmatprep.subr.mxu0 %v4015
  %4330 = vmatpush1.msra.mxu0 %v4014
  %4331 = vmatprep.subr.mxu0 %v4031
  %4332 = vmatpush1.msra.mxu0 %v4030
  %4333 = vmatprep.subr.mxu0 %v4047
  %4334 = vmatpush1.msra.mxu0 %v4046
  %4335 = vmatprep.subr.mxu0 %v4063
  %4336 = vmatpush1.msra.mxu0 %v4062
  %4337 = vmatprep.subr.mxu0 %v4079
  %4338 = vmatpush1.msra.mxu0 %v4078
  %4339 = vmatprep.subr.mxu0 %v4095
  %4340 = vmatpush1.msra.mxu0 %v4094
  %4341 = vmatprep.subr.mxu0 %v4111
  %4342 = vmatpush1.msra.mxu0 %v4110
  %4343 = vmatprep.subr.mxu0 0.0
  %4344 = vmatpush1.msra.mxu0 0.0
  %4345 = vmatprep.subr.mxu0 0.0
  %4346 = vmatpush1.msra.mxu0 0.0
  %4347 = vmatprep.mubr.f32.mxu0 %v4124
  %4348 = vmatmul.mubr.f32.gmra.mrb[0].mxu0 %v3638
  %v4349 = vpop.f32.mrb[0].mxu0
  %v4350 = vadd.f32 0.0, %v4349
  %v4351 = vpop.f32.mrb[0].mxu0
  %v4352 = vadd.f32 0.0, %v4351
  %4353 = vmatprep.mubr.f32.mxu0 %v4127
  %4354 = vmatmul.mubr.f32.gmra.mrb[0].mxu0 %v3640
  %v4355 = vpop.f32.mrb[0].mxu0
  %v4356 = vadd.f32 0.0, %v4355
  %v4357 = vpop.f32.mrb[0].mxu0
  %v4358 = vadd.f32 0.0, %v4357
  %4359 = vdwg.mxu0
  %4360 = vmatprep.subr.mxu0 %v3649
  %4361 = vmatpush1.msra.mxu0 %v3648
  %4362 = vmatprep.subr.mxu0 %v3665
  %4363 = vmatpush1.msra.mxu0 %v3664
  %4364 = vmatprep.subr.mxu0 %v3681
  %4365 = vmatpush1.msra.mxu0 %v3680
  %4366 = vmatprep.subr.mxu0 %v3697
  %4367 = vmatpush1.msra.mxu0 %v3696
  %4368 = vmatprep.subr.mxu0 %v3713
  %4369 = vmatpush1.msra.mxu0 %v3712
  %4370 = vmatprep.subr.mxu0 %v3729
  %4371 = vmatpush1.msra.mxu0 %v3728
  %4372 = vmatprep.subr.mxu0 %v3745
  %4373 = vmatpush1.msra.mxu0 %v3744
  %4374 = vmatprep.subr.mxu0 %v3761
  %4375 = vmatpush1.msra.mxu0 %v3760
  %4376 = vmatprep.subr.mxu0 %v3777
  %4377 = vmatpush1.msra.mxu0 %v3776
  %4378 = vmatprep.subr.mxu0 %v3793
  %4379 = vmatpush1.msra.mxu0 %v3792
  %4380 = vmatprep.subr.mxu0 %v3809
  %4381 = vmatpush1.msra.mxu0 %v3808
  %4382 = vmatprep.subr.mxu0 %v3825
  %4383 = vmatpush1.msra.mxu0 %v3824
  %4384 = vmatprep.subr.mxu0 %v3841
  %4385 = vmatpush1.msra.mxu0 %v3840
  %4386 = vmatprep.subr.mxu0 %v3857
  %4387 = vmatpush1.msra.mxu0 %v3856
  %4388 = vmatprep.subr.mxu0 %v3873
  %4389 = vmatpush1.msra.mxu0 %v3872
  %4390 = vmatprep.subr.mxu0 %v3889
  %4391 = vmatpush1.msra.mxu0 %v3888
  %4392 = vmatprep.subr.mxu0 %v3905
  %4393 = vmatpush1.msra.mxu0 %v3904
  %4394 = vmatprep.subr.mxu0 %v3921
  %4395 = vmatpush1.msra.mxu0 %v3920
  %4396 = vmatprep.subr.mxu0 %v3937
  %4397 = vmatpush1.msra.mxu0 %v3936
  %4398 = vmatprep.subr.mxu0 %v3953
  %4399 = vmatpush1.msra.mxu0 %v3952
  %4400 = vmatprep.subr.mxu0 %v3969
  %4401 = vmatpush1.msra.mxu0 %v3968
  %4402 = vmatprep.subr.mxu0 %v3985
  %4403 = vmatpush1.msra.mxu0 %v3984
  %4404 = vmatprep.subr.mxu0 %v4001
  %4405 = vmatpush1.msra.mxu0 %v4000
  %4406 = vmatprep.subr.mxu0 %v4017
  %4407 = vmatpush1.msra.mxu0 %v4016
  %4408 = vmatprep.subr.mxu0 %v4033
  %4409 = vmatpush1.msra.mxu0 %v4032
  %4410 = vmatprep.subr.mxu0 %v4049
  %4411 = vmatpush1.msra.mxu0 %v4048
  %4412 = vmatprep.subr.mxu0 %v4065
  %4413 = vmatpush1.msra.mxu0 %v4064
  %4414 = vmatprep.subr.mxu0 %v4081
  %4415 = vmatpush1.msra.mxu0 %v4080
  %4416 = vmatprep.subr.mxu0 %v4097
  %4417 = vmatpush1.msra.mxu0 %v4096
  %4418 = vmatprep.subr.mxu0 %v4113
  %4419 = vmatpush1.msra.mxu0 %v4112
  %4420 = vmatprep.subr.mxu0 0.0
  %4421 = vmatpush1.msra.mxu0 0.0
  %4422 = vmatprep.subr.mxu0 0.0
  %4423 = vmatpush1.msra.mxu0 0.0
  %4424 = vmatprep.mubr.f32.mxu0 %v4124
  %4425 = vmatmul.mubr.f32.gmra.mrb[0].mxu0 %v3638
  %v4426 = vpop.f32.mrb[0].mxu0
  %v4427 = vadd.f32 0.0, %v4426
  %v4428 = vpop.f32.mrb[0].mxu0
  %v4429 = vadd.f32 0.0, %v4428
  %4430 = vmatprep.mubr.f32.mxu0 %v4127
  %4431 = vmatmul.mubr.f32.gmra.mrb[0].mxu0 %v3640
  %v4432 = vpop.f32.mrb[0].mxu0
  %v4433 = vadd.f32 0.0, %v4432
  %v4434 = vpop.f32.mrb[0].mxu0
  %v4435 = vadd.f32 0.0, %v4434
  %4436 = vdwg.mxu0
  %4437 = vmatprep.subr.mxu0 %v3651
  %4438 = vmatpush1.msra.mxu0 %v3650
  %4439 = vmatprep.subr.mxu0 %v3667
  %4440 = vmatpush1.msra.mxu0 %v3666
  %4441 = vmatprep.subr.mxu0 %v3683
  %4442 = vmatpush1.msra.mxu0 %v3682
  %4443 = vmatprep.subr.mxu0 %v3699
  %4444 = vmatpush1.msra.mxu0 %v3698
  %4445 = vmatprep.subr.mxu0 %v3715
  %4446 = vmatpush1.msra.mxu0 %v3714
  %4447 = vmatprep.subr.mxu0 %v3731
  %4448 = vmatpush1.msra.mxu0 %v3730
  %4449 = vmatprep.subr.mxu0 %v3747
  %4450 = vmatpush1.msra.mxu0 %v3746
  %4451 = vmatprep.subr.mxu0 %v3763
  %4452 = vmatpush1.msra.mxu0 %v3762
  %4453 = vmatprep.subr.mxu0 %v3779
  %4454 = vmatpush1.msra.mxu0 %v3778
  %4455 = vmatprep.subr.mxu0 %v3795
  %4456 = vmatpush1.msra.mxu0 %v3794
  %4457 = vmatprep.subr.mxu0 %v3811
  %4458 = vmatpush1.msra.mxu0 %v3810
  %4459 = vmatprep.subr.mxu0 %v3827
  %4460 = vmatpush1.msra.mxu0 %v3826
  %4461 = vmatprep.subr.mxu0 %v3843
  %4462 = vmatpush1.msra.mxu0 %v3842
  %4463 = vmatprep.subr.mxu0 %v3859
  %4464 = vmatpush1.msra.mxu0 %v3858
  %4465 = vmatprep.subr.mxu0 %v3875
  %4466 = vmatpush1.msra.mxu0 %v3874
  %4467 = vmatprep.subr.mxu0 %v3891
  %4468 = vmatpush1.msra.mxu0 %v3890
  %4469 = vmatprep.subr.mxu0 %v3907
  %4470 = vmatpush1.msra.mxu0 %v3906
  %4471 = vmatprep.subr.mxu0 %v3923
  %4472 = vmatpush1.msra.mxu0 %v3922
  %4473 = vmatprep.subr.mxu0 %v3939
  %4474 = vmatpush1.msra.mxu0 %v3938
  %4475 = vmatprep.subr.mxu0 %v3955
  %4476 = vmatpush1.msra.mxu0 %v3954
  %4477 = vmatprep.subr.mxu0 %v3971
  %4478 = vmatpush1.msra.mxu0 %v3970
  %4479 = vmatprep.subr.mxu0 %v3987
  %4480 = vmatpush1.msra.mxu0 %v3986
  %4481 = vmatprep.subr.mxu0 %v4003
  %4482 = vmatpush1.msra.mxu0 %v4002
  %4483 = vmatprep.subr.mxu0 %v4019
  %4484 = vmatpush1.msra.mxu0 %v4018
  %4485 = vmatprep.subr.mxu0 %v4035
  %4486 = vmatpush1.msra.mxu0 %v4034
  %4487 = vmatprep.subr.mxu0 %v4051
  %4488 = vmatpush1.msra.mxu0 %v4050
  %4489 = vmatprep.subr.mxu0 %v4067
  %4490 = vmatpush1.msra.mxu0 %v4066
  %4491 = vmatprep.subr.mxu0 %v4083
  %4492 = vmatpush1.msra.mxu0 %v4082
  %4493 = vmatprep.subr.mxu0 %v4099
  %4494 = vmatpush1.msra.mxu0 %v4098
  %4495 = vmatprep.subr.mxu0 %v4115
  %4496 = vmatpush1.msra.mxu0 %v4114
  %4497 = vmatprep.subr.mxu0 0.0
  %4498 = vmatpush1.msra.mxu0 0.0
  %4499 = vmatprep.subr.mxu0 0.0
  %4500 = vmatpush1.msra.mxu0 0.0
  %4501 = vmatprep.mubr.f32.mxu0 %v4124
  %4502 = vmatmul.mubr.f32.gmra.mrb[0].mxu0 %v3638
  %v4503 = vpop.f32.mrb[0].mxu0
  %v4504 = vadd.f32 0.0, %v4503
  %v4505 = vpop.f32.mrb[0].mxu0
  %v4506 = vadd.f32 0.0, %v4505
  %4507 = vmatprep.mubr.f32.mxu0 %v4127
  %4508 = vmatmul.mubr.f32.gmra.mrb[0].mxu0 %v3640
  %v4509 = vpop.f32.mrb[0].mxu0
  %v4510 = vadd.f32 0.0, %v4509
  %v4511 = vpop.f32.mrb[0].mxu0
  %v4512 = vadd.f32 0.0, %v4511
  %4513 = vdwg.mxu0
  %4514 = vmatprep.subr.mxu0 %v3653
  %4515 = vmatpush1.msra.mxu0 %v3652
  %4516 = vmatprep.subr.mxu0 %v3669
  %4517 = vmatpush1.msra.mxu0 %v3668
  %4518 = vmatprep.subr.mxu0 %v3685
  %4519 = vmatpush1.msra.mxu0 %v3684
  %4520 = vmatprep.subr.mxu0 %v3701
  %4521 = vmatpush1.msra.mxu0 %v3700
  %4522 = vmatprep.subr.mxu0 %v3717
  %4523 = vmatpush1.msra.mxu0 %v3716
  %4524 = vmatprep.subr.mxu0 %v3733
  %4525 = vmatpush1.msra.mxu0 %v3732
  %4526 = vmatprep.subr.mxu0 %v3749
  %4527 = vmatpush1.msra.mxu0 %v3748
  %4528 = vmatprep.subr.mxu0 %v3765
  %4529 = vmatpush1.msra.mxu0 %v3764
  %4530 = vmatprep.subr.mxu0 %v3781
  %4531 = vmatpush1.msra.mxu0 %v3780
  %4532 = vmatprep.subr.mxu0 %v3797
  %4533 = vmatpush1.msra.mxu0 %v3796
  %4534 = vmatprep.subr.mxu0 %v3813
  %4535 = vmatpush1.msra.mxu0 %v3812
  %4536 = vmatprep.subr.mxu0 %v3829
  %4537 = vmatpush1.msra.mxu0 %v3828
  %4538 = vmatprep.subr.mxu0 %v3845
  %4539 = vmatpush1.msra.mxu0 %v3844
  %4540 = vmatprep.subr.mxu0 %v3861
  %4541 = vmatpush1.msra.mxu0 %v3860
  %4542 = vmatprep.subr.mxu0 %v3877
  %4543 = vmatpush1.msra.mxu0 %v3876
  %4544 = vmatprep.subr.mxu0 %v3893
  %4545 = vmatpush1.msra.mxu0 %v3892
  %4546 = vmatprep.subr.mxu0 %v3909
  %4547 = vmatpush1.msra.mxu0 %v3908
  %4548 = vmatprep.subr.mxu0 %v3925
  %4549 = vmatpush1.msra.mxu0 %v3924
  %4550 = vmatprep.subr.mxu0 %v3941
  %4551 = vmatpush1.msra.mxu0 %v3940
  %4552 = vmatprep.subr.mxu0 %v3957
  %4553 = vmatpush1.msra.mxu0 %v3956
  %4554 = vmatprep.subr.mxu0 %v3973
  %4555 = vmatpush1.msra.mxu0 %v3972
  %4556 = vmatprep.subr.mxu0 %v3989
  %4557 = vmatpush1.msra.mxu0 %v3988
  %4558 = vmatprep.subr.mxu0 %v4005
  %4559 = vmatpush1.msra.mxu0 %v4004
  %4560 = vmatprep.subr.mxu0 %v4021
  %4561 = vmatpush1.msra.mxu0 %v4020
  %4562 = vmatprep.subr.mxu0 %v4037
  %4563 = vmatpush1.msra.mxu0 %v4036
  %4564 = vmatprep.subr.mxu0 %v4053
  %4565 = vmatpush1.msra.mxu0 %v4052
  %4566 = vmatprep.subr.mxu0 %v4069
  %4567 = vmatpush1.msra.mxu0 %v4068
  %4568 = vmatprep.subr.mxu0 %v4085
  %4569 = vmatpush1.msra.mxu0 %v4084
  %4570 = vmatprep.subr.mxu0 %v4101
  %4571 = vmatpush1.msra.mxu0 %v4100
  %4572 = vmatprep.subr.mxu0 %v4117
  %4573 = vmatpush1.msra.mxu0 %v4116
  %4574 = vmatprep.subr.mxu0 0.0
  %4575 = vmatpush1.msra.mxu0 0.0
  %4576 = vmatprep.subr.mxu0 0.0
  %4577 = vmatpush1.msra.mxu0 0.0
  %4578 = vmatprep.mubr.f32.mxu0 %v4124
  %4579 = vmatmul.mubr.f32.gmra.mrb[0].mxu0 %v3638
  %v4580 = vpop.f32.mrb[0].mxu0
  %v4581 = vadd.f32 0.0, %v4580
  %v4582 = vpop.f32.mrb[0].mxu0
  %v4583 = vadd.f32 0.0, %v4582
  %4584 = vmatprep.mubr.f32.mxu0 %v4127
  %4585 = vmatmul.mubr.f32.gmra.mrb[0].mxu0 %v3640
  %v4586 = vpop.f32.mrb[0].mxu0
  %v4587 = vadd.f32 0.0, %v4586
  %v4588 = vpop.f32.mrb[0].mxu0
  %v4589 = vadd.f32 0.0, %v4588
  %4590 = vdwg.mxu0
  %4591 = vmatprep.subr.mxu0 %v3655
  %4592 = vmatpush1.msra.mxu0 %v3654
  %4593 = vmatprep.subr.mxu0 %v3671
  %4594 = vmatpush1.msra.mxu0 %v3670
  %4595 = vmatprep.subr.mxu0 %v3687
  %4596 = vmatpush1.msra.mxu0 %v3686
  %4597 = vmatprep.subr.mxu0 %v3703
  %4598 = vmatpush1.msra.mxu0 %v3702
  %4599 = vmatprep.subr.mxu0 %v3719
  %4600 = vmatpush1.msra.mxu0 %v3718
  %4601 = vmatprep.subr.mxu0 %v3735
  %4602 = vmatpush1.msra.mxu0 %v3734
  %4603 = vmatprep.subr.mxu0 %v3751
  %4604 = vmatpush1.msra.mxu0 %v3750
  %4605 = vmatprep.subr.mxu0 %v3767
  %4606 = vmatpush1.msra.mxu0 %v3766
  %4607 = vmatprep.subr.mxu0 %v3783
  %4608 = vmatpush1.msra.mxu0 %v3782
  %4609 = vmatprep.subr.mxu0 %v3799
  %4610 = vmatpush1.msra.mxu0 %v3798
  %4611 = vmatprep.subr.mxu0 %v3815
  %4612 = vmatpush1.msra.mxu0 %v3814
  %4613 = vmatprep.subr.mxu0 %v3831
  %4614 = vmatpush1.msra.mxu0 %v3830
  %4615 = vmatprep.subr.mxu0 %v3847
  %4616 = vmatpush1.msra.mxu0 %v3846
  %4617 = vmatprep.subr.mxu0 %v3863
  %4618 = vmatpush1.msra.mxu0 %v3862
  %4619 = vmatprep.subr.mxu0 %v3879
  %4620 = vmatpush1.msra.mxu0 %v3878
  %4621 = vmatprep.subr.mxu0 %v3895
  %4622 = vmatpush1.msra.mxu0 %v3894
  %4623 = vmatprep.subr.mxu0 %v3911
  %4624 = vmatpush1.msra.mxu0 %v3910
  %4625 = vmatprep.subr.mxu0 %v3927
  %4626 = vmatpush1.msra.mxu0 %v3926
  %4627 = vmatprep.subr.mxu0 %v3943
  %4628 = vmatpush1.msra.mxu0 %v3942
  %4629 = vmatprep.subr.mxu0 %v3959
  %4630 = vmatpush1.msra.mxu0 %v3958
  %4631 = vmatprep.subr.mxu0 %v3975
  %4632 = vmatpush1.msra.mxu0 %v3974
  %4633 = vmatprep.subr.mxu0 %v3991
  %4634 = vmatpush1.msra.mxu0 %v3990
  %4635 = vmatprep.subr.mxu0 %v4007
  %4636 = vmatpush1.msra.mxu0 %v4006
  %4637 = vmatprep.subr.mxu0 %v4023
  %4638 = vmatpush1.msra.mxu0 %v4022
  %4639 = vmatprep.subr.mxu0 %v4039
  %4640 = vmatpush1.msra.mxu0 %v4038
  %4641 = vmatprep.subr.mxu0 %v4055
  %4642 = vmatpush1.msra.mxu0 %v4054
  %4643 = vmatprep.subr.mxu0 %v4071
  %4644 = vmatpush1.msra.mxu0 %v4070
  %4645 = vmatprep.subr.mxu0 %v4087
  %4646 = vmatpush1.msra.mxu0 %v4086
  %4647 = vmatprep.subr.mxu0 %v4103
  %4648 = vmatpush1.msra.mxu0 %v4102
  %4649 = vmatprep.subr.mxu0 %v4119
  %4650 = vmatpush1.msra.mxu0 %v4118
  %4651 = vmatprep.subr.mxu0 0.0
  %4652 = vmatpush1.msra.mxu0 0.0
  %4653 = vmatprep.subr.mxu0 0.0
  %4654 = vmatpush1.msra.mxu0 0.0
  %4655 = vmatprep.mubr.f32.mxu0 %v4124
  %4656 = vmatmul.mubr.f32.gmra.mrb[0].mxu0 %v3638
  %v4657 = vpop.f32.mrb[0].mxu0
  %v4658 = vadd.f32 0.0, %v4657
  %v4659 = vpop.f32.mrb[0].mxu0
  %v4660 = vadd.f32 0.0, %v4659
  %4661 = vmatprep.mubr.f32.mxu0 %v4127
  %4662 = vmatmul.mubr.f32.gmra.mrb[0].mxu0 %v3640
  %v4663 = vpop.f32.mrb[0].mxu0
  %v4664 = vadd.f32 0.0, %v4663
  %v4665 = vpop.f32.mrb[0].mxu0
  %v4666 = vadd.f32 0.0, %v4665
  %4667 = vdwg.mxu0
  %4668 = vmatprep.subr.mxu0 %v3657
  %4669 = vmatpush1.msra.mxu0 %v3656
  %4670 = vmatprep.subr.mxu0 %v3673
  %4671 = vmatpush1.msra.mxu0 %v3672
  %4672 = vmatprep.subr.mxu0 %v3689
  %4673 = vmatpush1.msra.mxu0 %v3688
  %4674 = vmatprep.subr.mxu0 %v3705
  %4675 = vmatpush1.msra.mxu0 %v3704
  %4676 = vmatprep.subr.mxu0 %v3721
  %4677 = vmatpush1.msra.mxu0 %v3720
  %4678 = vmatprep.subr.mxu0 %v3737
  %4679 = vmatpush1.msra.mxu0 %v3736
  %4680 = vmatprep.subr.mxu0 %v3753
  %4681 = vmatpush1.msra.mxu0 %v3752
  %4682 = vmatprep.subr.mxu0 %v3769
  %4683 = vmatpush1.msra.mxu0 %v3768
  %4684 = vmatprep.subr.mxu0 %v3785
  %4685 = vmatpush1.msra.mxu0 %v3784
  %4686 = vmatprep.subr.mxu0 %v3801
  %4687 = vmatpush1.msra.mxu0 %v3800
  %4688 = vmatprep.subr.mxu0 %v3817
  %4689 = vmatpush1.msra.mxu0 %v3816
  %4690 = vmatprep.subr.mxu0 %v3833
  %4691 = vmatpush1.msra.mxu0 %v3832
  %4692 = vmatprep.subr.mxu0 %v3849
  %4693 = vmatpush1.msra.mxu0 %v3848
  %4694 = vmatprep.subr.mxu0 %v3865
  %4695 = vmatpush1.msra.mxu0 %v3864
  %4696 = vmatprep.subr.mxu0 %v3881
  %4697 = vmatpush1.msra.mxu0 %v3880
  %4698 = vmatprep.subr.mxu0 %v3897
  %4699 = vmatpush1.msra.mxu0 %v3896
  %4700 = vmatprep.subr.mxu0 %v3913
  %4701 = vmatpush1.msra.mxu0 %v3912
  %4702 = vmatprep.subr.mxu0 %v3929
  %4703 = vmatpush1.msra.mxu0 %v3928
  %4704 = vmatprep.subr.mxu0 %v3945
  %4705 = vmatpush1.msra.mxu0 %v3944
  %4706 = vmatprep.subr.mxu0 %v3961
  %4707 = vmatpush1.msra.mxu0 %v3960
  %4708 = vmatprep.subr.mxu0 %v3977
  %4709 = vmatpush1.msra.mxu0 %v3976
  %4710 = vmatprep.subr.mxu0 %v3993
  %4711 = vmatpush1.msra.mxu0 %v3992
  %4712 = vmatprep.subr.mxu0 %v4009
  %4713 = vmatpush1.msra.mxu0 %v4008
  %4714 = vmatprep.subr.mxu0 %v4025
  %4715 = vmatpush1.msra.mxu0 %v4024
  %4716 = vmatprep.subr.mxu0 %v4041
  %4717 = vmatpush1.msra.mxu0 %v4040
  %4718 = vmatprep.subr.mxu0 %v4057
  %4719 = vmatpush1.msra.mxu0 %v4056
  %4720 = vmatprep.subr.mxu0 %v4073
  %4721 = vmatpush1.msra.mxu0 %v4072
  %4722 = vmatprep.subr.mxu0 %v4089
  %4723 = vmatpush1.msra.mxu0 %v4088
  %4724 = vmatprep.subr.mxu0 %v4105
  %4725 = vmatpush1.msra.mxu0 %v4104
  %4726 = vmatprep.subr.mxu0 %v4121
  %4727 = vmatpush1.msra.mxu0 %v4120
  %4728 = vmatprep.subr.mxu0 0.0
  %4729 = vmatpush1.msra.mxu0 0.0
  %4730 = vmatprep.subr.mxu0 0.0
  %4731 = vmatpush1.msra.mxu0 0.0
  %4732 = vmatprep.mubr.f32.mxu0 %v4124
  %4733 = vmatmul.mubr.f32.gmra.mrb[0].mxu0 %v3638
  %v4734 = vpop.f32.mrb[0].mxu0
  %v4735 = vadd.f32 0.0, %v4734
  %v4736 = vpop.f32.mrb[0].mxu0
  %v4737 = vadd.f32 0.0, %v4736
  %4738 = vmatprep.mubr.f32.mxu0 %v4127
  %4739 = vmatmul.mubr.f32.gmra.mrb[0].mxu0 %v3640
  %v4740 = vpop.f32.mrb[0].mxu0
  %v4741 = vadd.f32 0.0, %v4740
  %v4742 = vpop.f32.mrb[0].mxu0
  %v4743 = vadd.f32 0.0, %v4742
  %4744 = vdwg.mxu0
  %v4745 = vld [vmem:[%s4] sm:$0xff]
  %v4746 = vld [vmem:[%s4 + $0x8] sm:$0xff]
  %v4747 = vld [vmem:[%s4 + $0x10] sm:$0xff]
  %v4748 = vld [vmem:[%s4 + $0x18] sm:$0xff]
  %v4749 = vld [vmem:[%s4 + $0x20] sm:$0xff]
  %v4750 = vld [vmem:[%s4 + $0x28] sm:$0xff]
  %v4751 = vld [vmem:[%s4 + $0x30] sm:$0xff]
  %v4752 = vld [vmem:[%s4 + $0x38] sm:$0xff]
  %v4753 = vld [vmem:[%s4 + $0x40] sm:$0xff]
  %v4754 = vld [vmem:[%s4 + $0x48] sm:$0xff]
  %v4755 = vld [vmem:[%s4 + $0x50] sm:$0xff]
  %v4756 = vld [vmem:[%s4 + $0x58] sm:$0xff]
  %v4757 = vld [vmem:[%s4 + $0x60] sm:$0xff]
  %v4758 = vld [vmem:[%s4 + $0x68] sm:$0xff]
  %v4759 = vld [vmem:[%s4 + $0x70] sm:$0xff]
  %v4760 = vld [vmem:[%s4 + $0x78] sm:$0xff]
  %v4761 = vld [vmem:[%s4 + $0x80] sm:$0xff]
  %v4762 = vld [vmem:[%s4 + $0x88] sm:$0xff]
  %v4763 = vld [vmem:[%s4 + $0x90] sm:$0xff]
  %v4764 = vld [vmem:[%s4 + $0x98] sm:$0xff]
  %v4765 = vld [vmem:[%s4 + $0xa0] sm:$0xff]
  %v4766 = vld [vmem:[%s4 + $0xa8] sm:$0xff]
  %v4767 = vld [vmem:[%s4 + $0xb0] sm:$0xff]
  %v4768 = vld [vmem:[%s4 + $0xb8] sm:$0xff]
  %v4769 = vld [vmem:[%s4 + $0xc0] sm:$0xff]
  %v4770 = vld [vmem:[%s4 + $0xc8] sm:$0xff]
  %v4771 = vld [vmem:[%s4 + $0xd0] sm:$0xff]
  %v4772 = vld [vmem:[%s4 + $0xd8] sm:$0xff]
  %v4773 = vld [vmem:[%s4 + $0xe0] sm:$0xff]
  %v4774 = vld [vmem:[%s4 + $0xe8] sm:$0xff]
  %v4775 = vld [vmem:[%s4 + $0xf0] sm:$0xff]
  %v4776 = vld [vmem:[%s4 + $0xf8] sm:$0xff]
  %v4777 = vmul.f32 %v4196, %v4745
  %v4778 = vmul.f32 %v4198, %v4746
  %v4779 = vmul.f32 %v4273, %v4747
  %v4780 = vmul.f32 %v4275, %v4748
  %v4781 = vmul.f32 %v4350, %v4749
  %v4782 = vmul.f32 %v4352, %v4750
  %v4783 = vmul.f32 %v4427, %v4751
  %v4784 = vmul.f32 %v4429, %v4752
  %v4785 = vmul.f32 %v4504, %v4753
  %v4786 = vmul.f32 %v4506, %v4754
  %v4787 = vmul.f32 %v4581, %v4755
  %v4788 = vmul.f32 %v4583, %v4756
  %v4789 = vmul.f32 %v4658, %v4757
  %v4790 = vmul.f32 %v4660, %v4758
  %v4791 = vmul.f32 %v4735, %v4759
  %v4792 = vmul.f32 %v4737, %v4760
  %v4793 = vmul.f32 %v4202, %v4761
  %v4794 = vmul.f32 %v4204, %v4762
  %v4795 = vmul.f32 %v4279, %v4763
  %v4796 = vmul.f32 %v4281, %v4764
  %v4797 = vmul.f32 %v4356, %v4765
  %v4798 = vmul.f32 %v4358, %v4766
  %v4799 = vmul.f32 %v4433, %v4767
  %v4800 = vmul.f32 %v4435, %v4768
  %v4801 = vmul.f32 %v4510, %v4769
  %v4802 = vmul.f32 %v4512, %v4770
  %v4803 = vmul.f32 %v4587, %v4771
  %v4804 = vmul.f32 %v4589, %v4772
  %v4805 = vmul.f32 %v4664, %v4773
  %v4806 = vmul.f32 %v4666, %v4774
  %v4807 = vmul.f32 %v4741, %v4775
  %v4808 = vmul.f32 %v4743, %v4776
  %v4809 = vld [vmem:[%s5] sm:$0xff]
  %v4810 = vld [vmem:[%s5 + $0x8] sm:$0xff]
  %v4811 = vld [vmem:[%s5 + $0x10] sm:$0xff]
  %v4812 = vld [vmem:[%s5 + $0x18] sm:$0xff]
  %v4813 = vld [vmem:[%s5 + $0x20] sm:$0xff]
  %v4814 = vld [vmem:[%s5 + $0x28] sm:$0xff]
  %v4815 = vld [vmem:[%s5 + $0x30] sm:$0xff]
  %v4816 = vld [vmem:[%s5 + $0x38] sm:$0xff]
  %v4817 = vld [vmem:[%s5 + $0x40] sm:$0xff]
  %v4818 = vld [vmem:[%s5 + $0x48] sm:$0xff]
  %v4819 = vld [vmem:[%s5 + $0x50] sm:$0xff]
  %v4820 = vld [vmem:[%s5 + $0x58] sm:$0xff]
  %v4821 = vld [vmem:[%s5 + $0x60] sm:$0xff]
  %v4822 = vld [vmem:[%s5 + $0x68] sm:$0xff]
  %v4823 = vld [vmem:[%s5 + $0x70] sm:$0xff]
  %v4824 = vld [vmem:[%s5 + $0x78] sm:$0xff]
  %v4825 = vld [vmem:[%s5 + $0x80] sm:$0xff]
  %v4826 = vld [vmem:[%s5 + $0x88] sm:$0xff]
  %v4827 = vld [vmem:[%s5 + $0x90] sm:$0xff]
  %v4828 = vld [vmem:[%s5 + $0x98] sm:$0xff]
  %v4829 = vld [vmem:[%s5 + $0xa0] sm:$0xff]
  %v4830 = vld [vmem:[%s5 + $0xa8] sm:$0xff]
  %v4831 = vld [vmem:[%s5 + $0xb0] sm:$0xff]
  %v4832 = vld [vmem:[%s5 + $0xb8] sm:$0xff]
  %v4833 = vld [vmem:[%s5 + $0xc0] sm:$0xff]
  %v4834 = vld [vmem:[%s5 + $0xc8] sm:$0xff]
  %v4835 = vld [vmem:[%s5 + $0xd0] sm:$0xff]
  %v4836 = vld [vmem:[%s5 + $0xd8] sm:$0xff]
  %v4837 = vld [vmem:[%s5 + $0xe0] sm:$0xff]
  %v4838 = vld [vmem:[%s5 + $0xe8] sm:$0xff]
  %v4839 = vld [vmem:[%s5 + $0xf0] sm:$0xff]
  %v4840 = vld [vmem:[%s5 + $0xf8] sm:$0xff]
  %v4841 = vadd.f32 %v4777, %v4809
  %v4842 = vadd.f32 %v4778, %v4810
  %v4843 = vadd.f32 %v4779, %v4811
  %v4844 = vadd.f32 %v4780, %v4812
  %v4845 = vadd.f32 %v4781, %v4813
  %v4846 = vadd.f32 %v4782, %v4814
  %v4847 = vadd.f32 %v4783, %v4815
  %v4848 = vadd.f32 %v4784, %v4816
  %v4849 = vadd.f32 %v4785, %v4817
  %v4850 = vadd.f32 %v4786, %v4818
  %v4851 = vadd.f32 %v4787, %v4819
  %v4852 = vadd.f32 %v4788, %v4820
  %v4853 = vadd.f32 %v4789, %v4821
  %v4854 = vadd.f32 %v4790, %v4822
  %v4855 = vadd.f32 %v4791, %v4823
  %v4856 = vadd.f32 %v4792, %v4824
  %v4857 = vadd.f32 %v4793, %v4825
  %v4858 = vadd.f32 %v4794, %v4826
  %v4859 = vadd.f32 %v4795, %v4827
  %v4860 = vadd.f32 %v4796, %v4828
  %v4861 = vadd.f32 %v4797, %v4829
  %v4862 = vadd.f32 %v4798, %v4830
  %v4863 = vadd.f32 %v4799, %v4831
  %v4864 = vadd.f32 %v4800, %v4832
  %v4865 = vadd.f32 %v4801, %v4833
  %v4866 = vadd.f32 %v4802, %v4834
  %v4867 = vadd.f32 %v4803, %v4835
  %v4868 = vadd.f32 %v4804, %v4836
  %v4869 = vadd.f32 %v4805, %v4837
  %v4870 = vadd.f32 %v4806, %v4838
  %v4871 = vadd.f32 %v4807, %v4839
  %v4872 = vadd.f32 %v4808, %v4840
  %4873 = vst [vmem:[#allocation4] sm:$0xff] %v4841
  %4874 = vst [vmem:[#allocation4 + $0x8] sm:$0xff] %v4842
  %4875 = vst [vmem:[#allocation4 + $0x10] sm:$0xff] %v4843
  %4876 = vst [vmem:[#allocation4 + $0x18] sm:$0xff] %v4844
  %4877 = vst [vmem:[#allocation4 + $0x20] sm:$0xff] %v4845
  %4878 = vst [vmem:[#allocation4 + $0x28] sm:$0xff] %v4846
  %4879 = vst [vmem:[#allocation4 + $0x30] sm:$0xff] %v4847
  %4880 = vst [vmem:[#allocation4 + $0x38] sm:$0xff] %v4848
  %4881 = vst [vmem:[#allocation4 + $0x40] sm:$0xff] %v4849
  %4882 = vst [vmem:[#allocation4 + $0x48] sm:$0xff] %v4850
  %4883 = vst [vmem:[#allocation4 + $0x50] sm:$0xff] %v4851
  %4884 = vst [vmem:[#allocation4 + $0x58] sm:$0xff] %v4852
  %4885 = vst [vmem:[#allocation4 + $0x60] sm:$0xff] %v4853
  %4886 = vst [vmem:[#allocation4 + $0x68] sm:$0xff] %v4854
  %4887 = vst [vmem:[#allocation4 + $0x70] sm:$0xff] %v4855
  %4888 = vst [vmem:[#allocation4 + $0x78] sm:$0xff] %v4856
  %4889 = vst [vmem:[#allocation4 + $0x88] sm:$0xff] %v4857
  %4890 = vst [vmem:[#allocation4 + $0x90] sm:$0xff] %v4858
  %4891 = vst [vmem:[#allocation4 + $0x98] sm:$0xff] %v4859
  %4892 = vst [vmem:[#allocation4 + $0xa0] sm:$0xff] %v4860
  %4893 = vst [vmem:[#allocation4 + $0xa8] sm:$0xff] %v4861
  %4894 = vst [vmem:[#allocation4 + $0xb0] sm:$0xff] %v4862
  %4895 = vst [vmem:[#allocation4 + $0xb8] sm:$0xff] %v4863
  %4896 = vst [vmem:[#allocation4 + $0xc0] sm:$0xff] %v4864
  %4897 = vst [vmem:[#allocation4 + $0xc8] sm:$0xff] %v4865
  %4898 = vst [vmem:[#allocation4 + $0xd0] sm:$0xff] %v4866
  %4899 = vst [vmem:[#allocation4 + $0xd8] sm:$0xff] %v4867
  %4900 = vst [vmem:[#allocation4 + $0xe0] sm:$0xff] %v4868
  %4901 = vst [vmem:[#allocation4 + $0xe8] sm:$0xff] %v4869
  %4902 = vst [vmem:[#allocation4 + $0xf0] sm:$0xff] %v4870
  %4903 = vst [vmem:[#allocation4 + $0xf8] sm:$0xff] %v4871
  %4904 = vst [vmem:[#allocation4 + $0x100] sm:$0xff] %v4872
  %v4905 = vld [vmem:[#allocation4] sm:$0xff]
  %v4906 = vld [vmem:[#allocation4 + $0x8] sm:$0xff]
  %v4907 = vld [vmem:[#allocation4 + $0x10] sm:$0xff]
  %v4908 = vld [vmem:[#allocation4 + $0x18] sm:$0xff]
  %v4909 = vld [vmem:[#allocation4 + $0x20] sm:$0xff]
  %v4910 = vld [vmem:[#allocation4 + $0x28] sm:$0xff]
  %v4911 = vld [vmem:[#allocation4 + $0x30] sm:$0xff]
  %v4912 = vld [vmem:[#allocation4 + $0x38] sm:$0xff]
  %v4913 = vld [vmem:[#allocation4 + $0x40] sm:$0xff]
  %v4914 = vld [vmem:[#allocation4 + $0x48] sm:$0xff]
  %v4915 = vld [vmem:[#allocation4 + $0x50] sm:$0xff]
  %v4916 = vld [vmem:[#allocation4 + $0x58] sm:$0xff]
  %v4917 = vld [vmem:[#allocation4 + $0x60] sm:$0xff]
  %v4918 = vld [vmem:[#allocation4 + $0x68] sm:$0xff]
  %v4919 = vld [vmem:[#allocation4 + $0x70] sm:$0xff]
  %v4920 = vld [vmem:[#allocation4 + $0x78] sm:$0xff]
  %v4921 = vld [vmem:[#allocation4 + $0x88] sm:$0xff]
  %v4922 = vld [vmem:[#allocation4 + $0x90] sm:$0xff]
  %v4923 = vld [vmem:[#allocation4 + $0x98] sm:$0xff]
  %v4924 = vld [vmem:[#allocation4 + $0xa0] sm:$0xff]
  %v4925 = vld [vmem:[#allocation4 + $0xa8] sm:$0xff]
  %v4926 = vld [vmem:[#allocation4 + $0xb0] sm:$0xff]
  %v4927 = vld [vmem:[#allocation4 + $0xb8] sm:$0xff]
  %v4928 = vld [vmem:[#allocation4 + $0xc0] sm:$0xff]
  %v4929 = vld [vmem:[#allocation4 + $0xc8] sm:$0xff]
  %v4930 = vld [vmem:[#allocation4 + $0xd0] sm:$0xff]
  %v4931 = vld [vmem:[#allocation4 + $0xd8] sm:$0xff]
  %v4932 = vld [vmem:[#allocation4 + $0xe0] sm:$0xff]
  %v4933 = vld [vmem:[#allocation4 + $0xe8] sm:$0xff]
  %v4934 = vld [vmem:[#allocation4 + $0xf0] sm:$0xff]
  %v4935 = vld [vmem:[#allocation4 + $0xf8] sm:$0xff]
  %v4936 = vld [vmem:[#allocation4 + $0x100] sm:$0xff]
  %4937 = vst [vmem:[#allocation5] sm:$0xff] %v4905
  %4938 = vst [vmem:[#allocation5 + $0x8] sm:$0xff] %v4906
  %4939 = vst [vmem:[#allocation5 + $0x10] sm:$0xff] %v4907
  %4940 = vst [vmem:[#allocation5 + $0x18] sm:$0xff] %v4908
  %4941 = vst [vmem:[#allocation5 + $0x20] sm:$0xff] %v4909
  %4942 = vst [vmem:[#allocation5 + $0x28] sm:$0xff] %v4910
  %4943 = vst [vmem:[#allocation5 + $0x30] sm:$0xff] %v4911
  %4944 = vst [vmem:[#allocation5 + $0x38] sm:$0xff] %v4912
  %4945 = vst [vmem:[#allocation5 + $0x40] sm:$0xff] %v4913
  %4946 = vst [vmem:[#allocation5 + $0x48] sm:$0xff] %v4914
  %4947 = vst [vmem:[#allocation5 + $0x50] sm:$0xff] %v4915
  %4948 = vst [vmem:[#allocation5 + $0x58] sm:$0xff] %v4916
  %4949 = vst [vmem:[#allocation5 + $0x60] sm:$0xff] %v4917
  %4950 = vst [vmem:[#allocation5 + $0x68] sm:$0xff] %v4918
  %4951 = vst [vmem:[#allocation5 + $0x70] sm:$0xff] %v4919
  %4952 = vst [vmem:[#allocation5 + $0x78] sm:$0xff] %v4920
  %4953 = vst [vmem:[#allocation5 + $0x80] sm:$0xff] %v4921
  %4954 = vst [vmem:[#allocation5 + $0x88] sm:$0xff] %v4922
  %4955 = vst [vmem:[#allocation5 + $0x90] sm:$0xff] %v4923
  %4956 = vst [vmem:[#allocation5 + $0x98] sm:$0xff] %v4924
  %4957 = vst [vmem:[#allocation5 + $0xa0] sm:$0xff] %v4925
  %4958 = vst [vmem:[#allocation5 + $0xa8] sm:$0xff] %v4926
  %4959 = vst [vmem:[#allocation5 + $0xb0] sm:$0xff] %v4927
  %4960 = vst [vmem:[#allocation5 + $0xb8] sm:$0xff] %v4928
  %4961 = vst [vmem:[#allocation5 + $0xc0] sm:$0xff] %v4929
  %4962 = vst [vmem:[#allocation5 + $0xc8] sm:$0xff] %v4930
  %4963 = vst [vmem:[#allocation5 + $0xd0] sm:$0xff] %v4931
  %4964 = vst [vmem:[#allocation5 + $0xd8] sm:$0xff] %v4932
  %4965 = vst [vmem:[#allocation5 + $0xe0] sm:$0xff] %v4933
  %4966 = vst [vmem:[#allocation5 + $0xe8] sm:$0xff] %v4934
  %4967 = vst [vmem:[#allocation5 + $0xf0] sm:$0xff] %v4935
  %4968 = vst [vmem:[#allocation5 + $0xf8] sm:$0xff] %v4936
  %v4969 = vld [vmem:[#allocation4] sm:$0xff]
  %v4970 = vld [vmem:[#allocation4 + $0x8] sm:$0xff]
  %v4971 = vld [vmem:[#allocation4 + $0x10] sm:$0xff]
  %v4972 = vld [vmem:[#allocation4 + $0x18] sm:$0xff]
  %v4973 = vld [vmem:[#allocation4 + $0x20] sm:$0xff]
  %v4974 = vld [vmem:[#allocation4 + $0x28] sm:$0xff]
  %v4975 = vld [vmem:[#allocation4 + $0x30] sm:$0xff]
  %v4976 = vld [vmem:[#allocation4 + $0x38] sm:$0xff]
  %v4977 = vld [vmem:[#allocation4 + $0x40] sm:$0xff]
  %v4978 = vld [vmem:[#allocation4 + $0x48] sm:$0xff]
  %v4979 = vld [vmem:[#allocation4 + $0x50] sm:$0xff]
  %v4980 = vld [vmem:[#allocation4 + $0x58] sm:$0xff]
  %v4981 = vld [vmem:[#allocation4 + $0x60] sm:$0xff]
  %v4982 = vld [vmem:[#allocation4 + $0x68] sm:$0xff]
  %v4983 = vld [vmem:[#allocation4 + $0x70] sm:$0xff]
  %v4984 = vld [vmem:[#allocation4 + $0x78] sm:$0xff]
  %v4985 = vld [vmem:[#allocation4 + $0x80] sm:$0xff]
  %5003 = vrot.lane.b32.xlu0 %v4969, 127
  %v5004 = vpop.permute.xlu0 %5003
  %5005 = vrot.lane.b32.xlu0 %v4970, 127
  %v5006 = vpop.permute.xlu0 %5005
  %5007 = vrot.lane.b32.xlu0 %v4971, 127
  %v5008 = vpop.permute.xlu0 %5007
  %5009 = vrot.lane.b32.xlu0 %v4972, 127
  %v5010 = vpop.permute.xlu0 %5009
  %5011 = vrot.lane.b32.xlu0 %v4973, 127
  %v5012 = vpop.permute.xlu0 %5011
  %5013 = vrot.lane.b32.xlu0 %v4974, 127
  %v5014 = vpop.permute.xlu0 %5013
  %5015 = vrot.lane.b32.xlu0 %v4975, 127
  %v5016 = vpop.permute.xlu0 %5015
  %5017 = vrot.lane.b32.xlu0 %v4976, 127
  %v5018 = vpop.permute.xlu0 %5017
  %5019 = vrot.lane.b32.xlu0 %v4977, 127
  %v5020 = vpop.permute.xlu0 %5019
  %5021 = vrot.lane.b32.xlu0 %v4978, 127
  %v5022 = vpop.permute.xlu0 %5021
  %5023 = vrot.lane.b32.xlu0 %v4979, 127
  %v5024 = vpop.permute.xlu0 %5023
  %5025 = vrot.lane.b32.xlu0 %v4980, 127
  %v5026 = vpop.permute.xlu0 %5025
  %5027 = vrot.lane.b32.xlu0 %v4981, 127
  %v5028 = vpop.permute.xlu0 %5027
  %5029 = vrot.lane.b32.xlu0 %v4982, 127
  %v5030 = vpop.permute.xlu0 %5029
  %5031 = vrot.lane.b32.xlu0 %v4983, 127
  %v5032 = vpop.permute.xlu0 %5031
  %5033 = vrot.lane.b32.xlu0 %v4984, 127
  %v5034 = vpop.permute.xlu0 %5033
  %5035 = vrot.lane.b32.xlu0 %v4985, 127
  %v5036 = vpop.permute.xlu0 %5035
  %v5037 = vsel %vm448, %v5004, %v5006
  %v5038 = vsel %vm448, %v5006, %v5008
  %v5039 = vsel %vm448, %v5008, %v5010
  %v5040 = vsel %vm448, %v5010, %v5012
  %v5041 = vsel %vm448, %v5012, %v5014
  %v5042 = vsel %vm448, %v5014, %v5016
  %v5043 = vsel %vm448, %v5016, %v5018
  %v5044 = vsel %vm448, %v5018, %v5020
  %v5045 = vsel %vm448, %v5020, %v5022
  %v5046 = vsel %vm448, %v5022, %v5024
  %v5047 = vsel %vm448, %v5024, %v5026
  %v5048 = vsel %vm448, %v5026, %v5028
  %v5049 = vsel %vm448, %v5028, %v5030
  %v5050 = vsel %vm448, %v5030, %v5032
  %v5051 = vsel %vm448, %v5032, %v5034
  %v5052 = vsel %vm448, %v5034, %v5036
  %5069 = vst [vmem:[#allocation5 + $0x100] sm:$0xff] %v5037
  %5070 = vst [vmem:[#allocation5 + $0x108] sm:$0xff] %v5038
  %5071 = vst [vmem:[#allocation5 + $0x110] sm:$0xff] %v5039
  %5072 = vst [vmem:[#allocation5 + $0x118] sm:$0xff] %v5040
  %5073 = vst [vmem:[#allocation5 + $0x120] sm:$0xff] %v5041
  %5074 = vst [vmem:[#allocation5 + $0x128] sm:$0xff] %v5042
  %5075 = vst [vmem:[#allocation5 + $0x130] sm:$0xff] %v5043
  %5076 = vst [vmem:[#allocation5 + $0x138] sm:$0xff] %v5044
  %5077 = vst [vmem:[#allocation5 + $0x140] sm:$0xff] %v5045
  %5078 = vst [vmem:[#allocation5 + $0x148] sm:$0xff] %v5046
  %5079 = vst [vmem:[#allocation5 + $0x150] sm:$0xff] %v5047
  %5080 = vst [vmem:[#allocation5 + $0x158] sm:$0xff] %v5048
  %5081 = vst [vmem:[#allocation5 + $0x160] sm:$0xff] %v5049
  %5082 = vst [vmem:[#allocation5 + $0x168] sm:$0xff] %v5050
  %5083 = vst [vmem:[#allocation5 + $0x170] sm:$0xff] %v5051
  %5084 = vst [vmem:[#allocation5 + $0x178] sm:$0xff] %v5052
  %v5085 = vld [vmem:[#allocation4] sm:$0xff]
  %v5086 = vld [vmem:[#allocation4 + $0x8] sm:$0xff]
  %v5087 = vld [vmem:[#allocation4 + $0x10] sm:$0xff]
  %v5088 = vld [vmem:[#allocation4 + $0x18] sm:$0xff]
  %v5089 = vld [vmem:[#allocation4 + $0x20] sm:$0xff]
  %v5090 = vld [vmem:[#allocation4 + $0x28] sm:$0xff]
  %v5091 = vld [vmem:[#allocation4 + $0x30] sm:$0xff]
  %v5092 = vld [vmem:[#allocation4 + $0x38] sm:$0xff]
  %v5093 = vld [vmem:[#allocation4 + $0x40] sm:$0xff]
  %v5094 = vld [vmem:[#allocation4 + $0x48] sm:$0xff]
  %v5095 = vld [vmem:[#allocation4 + $0x50] sm:$0xff]
  %v5096 = vld [vmem:[#allocation4 + $0x58] sm:$0xff]
  %v5097 = vld [vmem:[#allocation4 + $0x60] sm:$0xff]
  %v5098 = vld [vmem:[#allocation4 + $0x68] sm:$0xff]
  %v5099 = vld [vmem:[#allocation4 + $0x70] sm:$0xff]
  %v5100 = vld [vmem:[#allocation4 + $0x78] sm:$0xff]
  %v5101 = vld [vmem:[#allocation4 + $0x80] sm:$0xff]
  %v5102 = vld [vmem:[#allocation4 + $0x88] sm:$0xff]
  %v5103 = vld [vmem:[#allocation4 + $0x90] sm:$0xff]
  %v5104 = vld [vmem:[#allocation4 + $0x98] sm:$0xff]
  %v5105 = vld [vmem:[#allocation4 + $0xa0] sm:$0xff]
  %v5106 = vld [vmem:[#allocation4 + $0xa8] sm:$0xff]
  %v5107 = vld [vmem:[#allocation4 + $0xb0] sm:$0xff]
  %v5108 = vld [vmem:[#allocation4 + $0xb8] sm:$0xff]
  %v5109 = vld [vmem:[#allocation4 + $0xc0] sm:$0xff]
  %v5110 = vld [vmem:[#allocation4 + $0xc8] sm:$0xff]
  %v5111 = vld [vmem:[#allocation4 + $0xd0] sm:$0xff]
  %v5112 = vld [vmem:[#allocation4 + $0xd8] sm:$0xff]
  %v5113 = vld [vmem:[#allocation4 + $0xe0] sm:$0xff]
  %v5114 = vld [vmem:[#allocation4 + $0xe8] sm:$0xff]
  %v5115 = vld [vmem:[#allocation4 + $0xf0] sm:$0xff]
  %v5116 = vld [vmem:[#allocation4 + $0xf8] sm:$0xff]
  %v5117 = vld [vmem:[#allocation4 + $0x100] sm:$0xff]
  %v5118 = vld [vmem:[#allocation4 + $0x108] sm:$0xff]
  %5153 = vrot.lane.b32.xlu0 %v5085, 112
  %v5154 = vpop.permute.xlu0 %5153
  %5155 = vrot.lane.b32.xlu0 %v5086, 112
  %v5156 = vpop.permute.xlu0 %5155
  %5157 = vrot.lane.b32.xlu0 %v5087, 112
  %v5158 = vpop.permute.xlu0 %5157
  %5159 = vrot.lane.b32.xlu0 %v5088, 112
  %v5160 = vpop.permute.xlu0 %5159
  %5161 = vrot.lane.b32.xlu0 %v5089, 112
  %v5162 = vpop.permute.xlu0 %5161
  %5163 = vrot.lane.b32.xlu0 %v5090, 112
  %v5164 = vpop.permute.xlu0 %5163
  %5165 = vrot.lane.b32.xlu0 %v5091, 112
  %v5166 = vpop.permute.xlu0 %5165
  %5167 = vrot.lane.b32.xlu0 %v5092, 112
  %v5168 = vpop.permute.xlu0 %5167
  %5169 = vrot.lane.b32.xlu0 %v5093, 112
  %v5170 = vpop.permute.xlu0 %5169
  %5171 = vrot.lane.b32.xlu0 %v5094, 112
  %v5172 = vpop.permute.xlu0 %5171
  %5173 = vrot.lane.b32.xlu0 %v5095, 112
  %v5174 = vpop.permute.xlu0 %5173
  %5175 = vrot.lane.b32.xlu0 %v5096, 112
  %v5176 = vpop.permute.xlu0 %5175
  %5177 = vrot.lane.b32.xlu0 %v5097, 112
  %v5178 = vpop.permute.xlu0 %5177
  %5179 = vrot.lane.b32.xlu0 %v5098, 112
  %v5180 = vpop.permute.xlu0 %5179
  %5181 = vrot.lane.b32.xlu0 %v5099, 112
  %v5182 = vpop.permute.xlu0 %5181
  %5183 = vrot.lane.b32.xlu0 %v5100, 112
  %v5184 = vpop.permute.xlu0 %5183
  %5185 = vrot.lane.b32.xlu0 %v5101, 112
  %v5186 = vpop.permute.xlu0 %5185
  %5187 = vrot.lane.b32.xlu0 %v5102, 112
  %v5188 = vpop.permute.xlu0 %5187
  %5189 = vrot.lane.b32.xlu0 %v5103, 112
  %v5190 = vpop.permute.xlu0 %5189
  %5191 = vrot.lane.b32.xlu0 %v5104, 112
  %v5192 = vpop.permute.xlu0 %5191
  %5193 = vrot.lane.b32.xlu0 %v5105, 112
  %v5194 = vpop.permute.xlu0 %5193
  %5195 = vrot.lane.b32.xlu0 %v5106, 112
  %v5196 = vpop.permute.xlu0 %5195
  %5197 = vrot.lane.b32.xlu0 %v5107, 112
  %v5198 = vpop.permute.xlu0 %5197
  %5199 = vrot.lane.b32.xlu0 %v5108, 112
  %v5200 = vpop.permute.xlu0 %5199
  %5201 = vrot.lane.b32.xlu0 %v5109, 112
  %v5202 = vpop.permute.xlu0 %5201
  %5203 = vrot.lane.b32.xlu0 %v5110, 112
  %v5204 = vpop.permute.xlu0 %5203
  %5205 = vrot.lane.b32.xlu0 %v5111, 112
  %v5206 = vpop.permute.xlu0 %5205
  %5207 = vrot.lane.b32.xlu0 %v5112, 112
  %v5208 = vpop.permute.xlu0 %5207
  %5209 = vrot.lane.b32.xlu0 %v5113, 112
  %v5210 = vpop.permute.xlu0 %5209
  %5211 = vrot.lane.b32.xlu0 %v5114, 112
  %v5212 = vpop.permute.xlu0 %5211
  %5213 = vrot.lane.b32.xlu0 %v5115, 112
  %v5214 = vpop.permute.xlu0 %5213
  %5215 = vrot.lane.b32.xlu0 %v5116, 112
  %v5216 = vpop.permute.xlu0 %5215
  %5217 = vrot.lane.b32.xlu0 %v5117, 112
  %v5218 = vpop.permute.xlu0 %5217
  %5219 = vrot.lane.b32.xlu0 %v5118, 112
  %v5220 = vpop.permute.xlu0 %5219
  %v5221 = vsel %vm4122, %v5154, %v5156
  %v5222 = vsel %vm4122, %v5156, %v5158
  %v5223 = vsel %vm4122, %v5158, %v5160
  %v5224 = vsel %vm4122, %v5160, %v5162
  %v5225 = vsel %vm4122, %v5162, %v5164
  %v5226 = vsel %vm4122, %v5164, %v5166
  %v5227 = vsel %vm4122, %v5166, %v5168
  %v5228 = vsel %vm4122, %v5168, %v5170
  %v5229 = vsel %vm4122, %v5170, %v5172
  %v5230 = vsel %vm4122, %v5172, %v5174
  %v5231 = vsel %vm4122, %v5174, %v5176
  %v5232 = vsel %vm4122, %v5176, %v5178
  %v5233 = vsel %vm4122, %v5178, %v5180
  %v5234 = vsel %vm4122, %v5180, %v5182
  %v5235 = vsel %vm4122, %v5182, %v5184
  %v5236 = vsel %vm4122, %v5184, %v5186
  %v5237 = vsel %vm4122, %v5188, %v5190
  %v5238 = vsel %vm4122, %v5190, %v5192
  %v5239 = vsel %vm4122, %v5192, %v5194
  %v5240 = vsel %vm4122, %v5194, %v5196
  %v5241 = vsel %vm4122, %v5196, %v5198
  %v5242 = vsel %vm4122, %v5198, %v5200
  %v5243 = vsel %vm4122, %v5200, %v5202
  %v5244 = vsel %vm4122, %v5202, %v5204
  %v5245 = vsel %vm4122, %v5204, %v5206
  %v5246 = vsel %vm4122, %v5206, %v5208
  %v5247 = vsel %vm4122, %v5208, %v5210
  %v5248 = vsel %vm4122, %v5210, %v5212
  %v5249 = vsel %vm4122, %v5212, %v5214
  %v5250 = vsel %vm4122, %v5214, %v5216
  %v5251 = vsel %vm4122, %v5216, %v5218
  %v5252 = vsel %vm4122, %v5218, %v5220
  %5285 = vst [vmem:[#allocation5 + $0x180] sm:$0xff] %v5221
  %5286 = vst [vmem:[#allocation5 + $0x188] sm:$0xff] %v5222
  %5287 = vst [vmem:[#allocation5 + $0x190] sm:$0xff] %v5223
  %5288 = vst [vmem:[#allocation5 + $0x198] sm:$0xff] %v5224
  %5289 = vst [vmem:[#allocation5 + $0x1a0] sm:$0xff] %v5225
  %5290 = vst [vmem:[#allocation5 + $0x1a8] sm:$0xff] %v5226
  %5291 = vst [vmem:[#allocation5 + $0x1b0] sm:$0xff] %v5227
  %5292 = vst [vmem:[#allocation5 + $0x1b8] sm:$0xff] %v5228
  %5293 = vst [vmem:[#allocation5 + $0x1c0] sm:$0xff] %v5229
  %5294 = vst [vmem:[#allocation5 + $0x1c8] sm:$0xff] %v5230
  %5295 = vst [vmem:[#allocation5 + $0x1d0] sm:$0xff] %v5231
  %5296 = vst [vmem:[#allocation5 + $0x1d8] sm:$0xff] %v5232
  %5297 = vst [vmem:[#allocation5 + $0x1e0] sm:$0xff] %v5233
  %5298 = vst [vmem:[#allocation5 + $0x1e8] sm:$0xff] %v5234
  %5299 = vst [vmem:[#allocation5 + $0x1f0] sm:$0xff] %v5235
  %5300 = vst [vmem:[#allocation5 + $0x1f8] sm:$0xff] %v5236
  %5301 = vst [vmem:[#allocation5 + $0x200] sm:$0xff] %v5237
  %5302 = vst [vmem:[#allocation5 + $0x208] sm:$0xff] %v5238
  %5303 = vst [vmem:[#allocation5 + $0x210] sm:$0xff] %v5239
  %5304 = vst [vmem:[#allocation5 + $0x218] sm:$0xff] %v5240
  %5305 = vst [vmem:[#allocation5 + $0x220] sm:$0xff] %v5241
  %5306 = vst [vmem:[#allocation5 + $0x228] sm:$0xff] %v5242
  %5307 = vst [vmem:[#allocation5 + $0x230] sm:$0xff] %v5243
  %5308 = vst [vmem:[#allocation5 + $0x238] sm:$0xff] %v5244
  %5309 = vst [vmem:[#allocation5 + $0x240] sm:$0xff] %v5245
  %5310 = vst [vmem:[#allocation5 + $0x248] sm:$0xff] %v5246
  %5311 = vst [vmem:[#allocation5 + $0x250] sm:$0xff] %v5247
  %5312 = vst [vmem:[#allocation5 + $0x258] sm:$0xff] %v5248
  %5313 = vst [vmem:[#allocation5 + $0x260] sm:$0xff] %v5249
  %5314 = vst [vmem:[#allocation5 + $0x268] sm:$0xff] %v5250
  %5315 = vst [vmem:[#allocation5 + $0x270] sm:$0xff] %v5251
  %5316 = vst [vmem:[#allocation5 + $0x278] sm:$0xff] %v5252
  %v5317 = vld [vmem:[#allocation4] sm:$0xff]
  %v5318 = vld [vmem:[#allocation4 + $0x8] sm:$0xff]
  %v5319 = vld [vmem:[#allocation4 + $0x10] sm:$0xff]
  %v5320 = vld [vmem:[#allocation4 + $0x18] sm:$0xff]
  %v5321 = vld [vmem:[#allocation4 + $0x20] sm:$0xff]
  %v5322 = vld [vmem:[#allocation4 + $0x28] sm:$0xff]
  %v5323 = vld [vmem:[#allocation4 + $0x30] sm:$0xff]
  %v5324 = vld [vmem:[#allocation4 + $0x38] sm:$0xff]
  %v5325 = vld [vmem:[#allocation4 + $0x40] sm:$0xff]
  %v5326 = vld [vmem:[#allocation4 + $0x48] sm:$0xff]
  %v5327 = vld [vmem:[#allocation4 + $0x50] sm:$0xff]
  %v5328 = vld [vmem:[#allocation4 + $0x58] sm:$0xff]
  %v5329 = vld [vmem:[#allocation4 + $0x60] sm:$0xff]
  %v5330 = vld [vmem:[#allocation4 + $0x68] sm:$0xff]
  %v5331 = vld [vmem:[#allocation4 + $0x70] sm:$0xff]
  %v5332 = vld [vmem:[#allocation4 + $0x78] sm:$0xff]
  %v5333 = vld [vmem:[#allocation4 + $0x80] sm:$0xff]
  %5351 = vrot.lane.b32.xlu0 %v5317, 111
  %v5352 = vpop.permute.xlu0 %5351
  %5353 = vrot.lane.b32.xlu0 %v5318, 111
  %v5354 = vpop.permute.xlu0 %5353
  %5355 = vrot.lane.b32.xlu0 %v5319, 111
  %v5356 = vpop.permute.xlu0 %5355
  %5357 = vrot.lane.b32.xlu0 %v5320, 111
  %v5358 = vpop.permute.xlu0 %5357
  %5359 = vrot.lane.b32.xlu0 %v5321, 111
  %v5360 = vpop.permute.xlu0 %5359
  %5361 = vrot.lane.b32.xlu0 %v5322, 111
  %v5362 = vpop.permute.xlu0 %5361
  %5363 = vrot.lane.b32.xlu0 %v5323, 111
  %v5364 = vpop.permute.xlu0 %5363
  %5365 = vrot.lane.b32.xlu0 %v5324, 111
  %v5366 = vpop.permute.xlu0 %5365
  %5367 = vrot.lane.b32.xlu0 %v5325, 111
  %v5368 = vpop.permute.xlu0 %5367
  %5369 = vrot.lane.b32.xlu0 %v5326, 111
  %v5370 = vpop.permute.xlu0 %5369
  %5371 = vrot.lane.b32.xlu0 %v5327, 111
  %v5372 = vpop.permute.xlu0 %5371
  %5373 = vrot.lane.b32.xlu0 %v5328, 111
  %v5374 = vpop.permute.xlu0 %5373
  %5375 = vrot.lane.b32.xlu0 %v5329, 111
  %v5376 = vpop.permute.xlu0 %5375
  %5377 = vrot.lane.b32.xlu0 %v5330, 111
  %v5378 = vpop.permute.xlu0 %5377
  %5379 = vrot.lane.b32.xlu0 %v5331, 111
  %v5380 = vpop.permute.xlu0 %5379
  %5381 = vrot.lane.b32.xlu0 %v5332, 111
  %v5382 = vpop.permute.xlu0 %5381
  %5383 = vrot.lane.b32.xlu0 %v5333, 111
  %v5384 = vpop.permute.xlu0 %5383
  %vm5385 = vcmask 908288
  %v5386 = vsel %vm5385, %v5352, %v5354
  %v5387 = vsel %vm5385, %v5354, %v5356
  %v5388 = vsel %vm5385, %v5356, %v5358
  %v5389 = vsel %vm5385, %v5358, %v5360
  %v5390 = vsel %vm5385, %v5360, %v5362
  %v5391 = vsel %vm5385, %v5362, %v5364
  %v5392 = vsel %vm5385, %v5364, %v5366
  %v5393 = vsel %vm5385, %v5366, %v5368
  %v5394 = vsel %vm5385, %v5368, %v5370
  %v5395 = vsel %vm5385, %v5370, %v5372
  %v5396 = vsel %vm5385, %v5372, %v5374
  %v5397 = vsel %vm5385, %v5374, %v5376
  %v5398 = vsel %vm5385, %v5376, %v5378
  %v5399 = vsel %vm5385, %v5378, %v5380
  %v5400 = vsel %vm5385, %v5380, %v5382
  %v5401 = vsel %vm5385, %v5382, %v5384
  %5418 = vst [vmem:[#allocation5 + $0x280] sm:$0xff] %v5386
  %5419 = vst [vmem:[#allocation5 + $0x288] sm:$0xff] %v5387
  %5420 = vst [vmem:[#allocation5 + $0x290] sm:$0xff] %v5388
  %5421 = vst [vmem:[#allocation5 + $0x298] sm:$0xff] %v5389
  %5422 = vst [vmem:[#allocation5 + $0x2a0] sm:$0xff] %v5390
  %5423 = vst [vmem:[#allocation5 + $0x2a8] sm:$0xff] %v5391
  %5424 = vst [vmem:[#allocation5 + $0x2b0] sm:$0xff] %v5392
  %5425 = vst [vmem:[#allocation5 + $0x2b8] sm:$0xff] %v5393
  %5426 = vst [vmem:[#allocation5 + $0x2c0] sm:$0xff] %v5394
  %5427 = vst [vmem:[#allocation5 + $0x2c8] sm:$0xff] %v5395
  %5428 = vst [vmem:[#allocation5 + $0x2d0] sm:$0xff] %v5396
  %5429 = vst [vmem:[#allocation5 + $0x2d8] sm:$0xff] %v5397
  %5430 = vst [vmem:[#allocation5 + $0x2e0] sm:$0xff] %v5398
  %5431 = vst [vmem:[#allocation5 + $0x2e8] sm:$0xff] %v5399
  %5432 = vst [vmem:[#allocation5 + $0x2f0] sm:$0xff] %v5400
  %5433 = vst [vmem:[#allocation5 + $0x2f8] sm:$0xff] %v5401
  %v5434 = vld [vmem:[#allocation4] sm:$0xff]
  %v5435 = vld [vmem:[#allocation4 + $0x8] sm:$0xff]
  %v5436 = vld [vmem:[#allocation4 + $0x10] sm:$0xff]
  %v5437 = vld [vmem:[#allocation4 + $0x18] sm:$0xff]
  %v5438 = vld [vmem:[#allocation4 + $0x20] sm:$0xff]
  %v5439 = vld [vmem:[#allocation4 + $0x28] sm:$0xff]
  %v5440 = vld [vmem:[#allocation4 + $0x30] sm:$0xff]
  %v5441 = vld [vmem:[#allocation4 + $0x38] sm:$0xff]
  %v5442 = vld [vmem:[#allocation4 + $0x40] sm:$0xff]
  %v5443 = vld [vmem:[#allocation4 + $0x48] sm:$0xff]
  %v5444 = vld [vmem:[#allocation4 + $0x50] sm:$0xff]
  %v5445 = vld [vmem:[#allocation4 + $0x58] sm:$0xff]
  %v5446 = vld [vmem:[#allocation4 + $0x60] sm:$0xff]
  %v5447 = vld [vmem:[#allocation4 + $0x68] sm:$0xff]
  %v5448 = vld [vmem:[#allocation4 + $0x70] sm:$0xff]
  %v5449 = vld [vmem:[#allocation4 + $0x78] sm:$0xff]
  %v5450 = vld [vmem:[#allocation4 + $0x80] sm:$0xff]
  %v5451 = vld [vmem:[#allocation4 + $0x88] sm:$0xff]
  %v5452 = vld [vmem:[#allocation4 + $0x90] sm:$0xff]
  %v5453 = vld [vmem:[#allocation4 + $0x98] sm:$0xff]
  %v5454 = vld [vmem:[#allocation4 + $0xa0] sm:$0xff]
  %v5455 = vld [vmem:[#allocation4 + $0xa8] sm:$0xff]
  %v5456 = vld [vmem:[#allocation4 + $0xb0] sm:$0xff]
  %v5457 = vld [vmem:[#allocation4 + $0xb8] sm:$0xff]
  %v5458 = vld [vmem:[#allocation4 + $0xc0] sm:$0xff]
  %v5459 = vld [vmem:[#allocation4 + $0xc8] sm:$0xff]
  %v5460 = vld [vmem:[#allocation4 + $0xd0] sm:$0xff]
  %v5461 = vld [vmem:[#allocation4 + $0xd8] sm:$0xff]
  %v5462 = vld [vmem:[#allocation4 + $0xe0] sm:$0xff]
  %v5463 = vld [vmem:[#allocation4 + $0xe8] sm:$0xff]
  %v5464 = vld [vmem:[#allocation4 + $0xf0] sm:$0xff]
  %v5465 = vld [vmem:[#allocation4 + $0xf8] sm:$0xff]
  %v5466 = vld [vmem:[#allocation4 + $0x100] sm:$0xff]
  %v5467 = vld [vmem:[#allocation4 + $0x108] sm:$0xff]
  %5502 = vrot.lane.b32.xlu0 %v5434, 96
  %v5503 = vpop.permute.xlu0 %5502
  %5504 = vrot.lane.b32.xlu0 %v5435, 96
  %v5505 = vpop.permute.xlu0 %5504
  %5506 = vrot.lane.b32.xlu0 %v5436, 96
  %v5507 = vpop.permute.xlu0 %5506
  %5508 = vrot.lane.b32.xlu0 %v5437, 96
  %v5509 = vpop.permute.xlu0 %5508
  %5510 = vrot.lane.b32.xlu0 %v5438, 96
  %v5511 = vpop.permute.xlu0 %5510
  %5512 = vrot.lane.b32.xlu0 %v5439, 96
  %v5513 = vpop.permute.xlu0 %5512
  %5514 = vrot.lane.b32.xlu0 %v5440, 96
  %v5515 = vpop.permute.xlu0 %5514
  %5516 = vrot.lane.b32.xlu0 %v5441, 96
  %v5517 = vpop.permute.xlu0 %5516
  %5518 = vrot.lane.b32.xlu0 %v5442, 96
  %v5519 = vpop.permute.xlu0 %5518
  %5520 = vrot.lane.b32.xlu0 %v5443, 96
  %v5521 = vpop.permute.xlu0 %5520
  %5522 = vrot.lane.b32.xlu0 %v5444, 96
  %v5523 = vpop.permute.xlu0 %5522
  %5524 = vrot.lane.b32.xlu0 %v5445, 96
  %v5525 = vpop.permute.xlu0 %5524
  %5526 = vrot.lane.b32.xlu0 %v5446, 96
  %v5527 = vpop.permute.xlu0 %5526
  %5528 = vrot.lane.b32.xlu0 %v5447, 96
  %v5529 = vpop.permute.xlu0 %5528
  %5530 = vrot.lane.b32.xlu0 %v5448, 96
  %v5531 = vpop.permute.xlu0 %5530
  %5532 = vrot.lane.b32.xlu0 %v5449, 96
  %v5533 = vpop.permute.xlu0 %5532
  %5534 = vrot.lane.b32.xlu0 %v5450, 96
  %v5535 = vpop.permute.xlu0 %5534
  %5536 = vrot.lane.b32.xlu0 %v5451, 96
  %v5537 = vpop.permute.xlu0 %5536
  %5538 = vrot.lane.b32.xlu0 %v5452, 96
  %v5539 = vpop.permute.xlu0 %5538
  %5540 = vrot.lane.b32.xlu0 %v5453, 96
  %v5541 = vpop.permute.xlu0 %5540
  %5542 = vrot.lane.b32.xlu0 %v5454, 96
  %v5543 = vpop.permute.xlu0 %5542
  %5544 = vrot.lane.b32.xlu0 %v5455, 96
  %v5545 = vpop.permute.xlu0 %5544
  %5546 = vrot.lane.b32.xlu0 %v5456, 96
  %v5547 = vpop.permute.xlu0 %5546
  %5548 = vrot.lane.b32.xlu0 %v5457, 96
  %v5549 = vpop.permute.xlu0 %5548
  %5550 = vrot.lane.b32.xlu0 %v5458, 96
  %v5551 = vpop.permute.xlu0 %5550
  %5552 = vrot.lane.b32.xlu0 %v5459, 96
  %v5553 = vpop.permute.xlu0 %5552
  %5554 = vrot.lane.b32.xlu0 %v5460, 96
  %v5555 = vpop.permute.xlu0 %5554
  %5556 = vrot.lane.b32.xlu0 %v5461, 96
  %v5557 = vpop.permute.xlu0 %5556
  %5558 = vrot.lane.b32.xlu0 %v5462, 96
  %v5559 = vpop.permute.xlu0 %5558
  %5560 = vrot.lane.b32.xlu0 %v5463, 96
  %v5561 = vpop.permute.xlu0 %5560
  %5562 = vrot.lane.b32.xlu0 %v5464, 96
  %v5563 = vpop.permute.xlu0 %5562
  %5564 = vrot.lane.b32.xlu0 %v5465, 96
  %v5565 = vpop.permute.xlu0 %5564
  %5566 = vrot.lane.b32.xlu0 %v5466, 96
  %v5567 = vpop.permute.xlu0 %5566
  %5568 = vrot.lane.b32.xlu0 %v5467, 96
  %v5569 = vpop.permute.xlu0 %5568
  %vm5570 = vcmask 785408
  %v5571 = vsel %vm5570, %v5503, %v5505
  %v5572 = vsel %vm5570, %v5505, %v5507
  %v5573 = vsel %vm5570, %v5507, %v5509
  %v5574 = vsel %vm5570, %v5509, %v5511
  %v5575 = vsel %vm5570, %v5511, %v5513
  %v5576 = vsel %vm5570, %v5513, %v5515
  %v5577 = vsel %vm5570, %v5515, %v5517
  %v5578 = vsel %vm5570, %v5517, %v5519
  %v5579 = vsel %vm5570, %v5519, %v5521
  %v5580 = vsel %vm5570, %v5521, %v5523
  %v5581 = vsel %vm5570, %v5523, %v5525
  %v5582 = vsel %vm5570, %v5525, %v5527
  %v5583 = vsel %vm5570, %v5527, %v5529
  %v5584 = vsel %vm5570, %v5529, %v5531
  %v5585 = vsel %vm5570, %v5531, %v5533
  %v5586 = vsel %vm5570, %v5533, %v5535
  %v5587 = vsel %vm5570, %v5537, %v5539
  %v5588 = vsel %vm5570, %v5539, %v5541
  %v5589 = vsel %vm5570, %v5541, %v5543
  %v5590 = vsel %vm5570, %v5543, %v5545
  %v5591 = vsel %vm5570, %v5545, %v5547
  %v5592 = vsel %vm5570, %v5547, %v5549
  %v5593 = vsel %vm5570, %v5549, %v5551
  %v5594 = vsel %vm5570, %v5551, %v5553
  %v5595 = vsel %vm5570, %v5553, %v5555
  %v5596 = vsel %vm5570, %v5555, %v5557
  %v5597 = vsel %vm5570, %v5557, %v5559
  %v5598 = vsel %vm5570, %v5559, %v5561
  %v5599 = vsel %vm5570, %v5561, %v5563
  %v5600 = vsel %vm5570, %v5563, %v5565
  %v5601 = vsel %vm5570, %v5565, %v5567
  %v5602 = vsel %vm5570, %v5567, %v5569
  %5635 = vst [vmem:[#allocation5 + $0x300] sm:$0xff] %v5571
  %5636 = vst [vmem:[#allocation5 + $0x308] sm:$0xff] %v5572
  %5637 = vst [vmem:[#allocation5 + $0x310] sm:$0xff] %v5573
  %5638 = vst [vmem:[#allocation5 + $0x318] sm:$0xff] %v5574
  %5639 = vst [vmem:[#allocation5 + $0x320] sm:$0xff] %v5575
  %5640 = vst [vmem:[#allocation5 + $0x328] sm:$0xff] %v5576
  %5641 = vst [vmem:[#allocation5 + $0x330] sm:$0xff] %v5577
  %5642 = vst [vmem:[#allocation5 + $0x338] sm:$0xff] %v5578
  %5643 = vst [vmem:[#allocation5 + $0x340] sm:$0xff] %v5579
  %5644 = vst [vmem:[#allocation5 + $0x348] sm:$0xff] %v5580
  %5645 = vst [vmem:[#allocation5 + $0x350] sm:$0xff] %v5581
  %5646 = vst [vmem:[#allocation5 + $0x358] sm:$0xff] %v5582
  %5647 = vst [vmem:[#allocation5 + $0x360] sm:$0xff] %v5583
  %5648 = vst [vmem:[#allocation5 + $0x368] sm:$0xff] %v5584
  %5649 = vst [vmem:[#allocation5 + $0x370] sm:$0xff] %v5585
  %5650 = vst [vmem:[#allocation5 + $0x378] sm:$0xff] %v5586
  %5651 = vst [vmem:[#allocation5 + $0x380] sm:$0xff] %v5587
  %5652 = vst [vmem:[#allocation5 + $0x388] sm:$0xff] %v5588
  %5653 = vst [vmem:[#allocation5 + $0x390] sm:$0xff] %v5589
  %5654 = vst [vmem:[#allocation5 + $0x398] sm:$0xff] %v5590
  %5655 = vst [vmem:[#allocation5 + $0x3a0] sm:$0xff] %v5591
  %5656 = vst [vmem:[#allocation5 + $0x3a8] sm:$0xff] %v5592
  %5657 = vst [vmem:[#allocation5 + $0x3b0] sm:$0xff] %v5593
  %5658 = vst [vmem:[#allocation5 + $0x3b8] sm:$0xff] %v5594
  %5659 = vst [vmem:[#allocation5 + $0x3c0] sm:$0xff] %v5595
  %5660 = vst [vmem:[#allocation5 + $0x3c8] sm:$0xff] %v5596
  %5661 = vst [vmem:[#allocation5 + $0x3d0] sm:$0xff] %v5597
  %5662 = vst [vmem:[#allocation5 + $0x3d8] sm:$0xff] %v5598
  %5663 = vst [vmem:[#allocation5 + $0x3e0] sm:$0xff] %v5599
  %5664 = vst [vmem:[#allocation5 + $0x3e8] sm:$0xff] %v5600
  %5665 = vst [vmem:[#allocation5 + $0x3f0] sm:$0xff] %v5601
  %5666 = vst [vmem:[#allocation5 + $0x3f8] sm:$0xff] %v5602
  %v5667 = vld [vmem:[#allocation4] sm:$0xff]
  %v5668 = vld [vmem:[#allocation4 + $0x8] sm:$0xff]
  %v5669 = vld [vmem:[#allocation4 + $0x10] sm:$0xff]
  %v5670 = vld [vmem:[#allocation4 + $0x18] sm:$0xff]
  %v5671 = vld [vmem:[#allocation4 + $0x20] sm:$0xff]
  %v5672 = vld [vmem:[#allocation4 + $0x28] sm:$0xff]
  %v5673 = vld [vmem:[#allocation4 + $0x30] sm:$0xff]
  %v5674 = vld [vmem:[#allocation4 + $0x38] sm:$0xff]
  %v5675 = vld [vmem:[#allocation4 + $0x40] sm:$0xff]
  %v5676 = vld [vmem:[#allocation4 + $0x48] sm:$0xff]
  %v5677 = vld [vmem:[#allocation4 + $0x50] sm:$0xff]
  %v5678 = vld [vmem:[#allocation4 + $0x58] sm:$0xff]
  %v5679 = vld [vmem:[#allocation4 + $0x60] sm:$0xff]
  %v5680 = vld [vmem:[#allocation4 + $0x68] sm:$0xff]
  %v5681 = vld [vmem:[#allocation4 + $0x70] sm:$0xff]
  %v5682 = vld [vmem:[#allocation4 + $0x78] sm:$0xff]
  %v5683 = vld [vmem:[#allocation4 + $0x80] sm:$0xff]
  %5701 = vrot.lane.b32.xlu0 %v5667, 95
  %v5702 = vpop.permute.xlu0 %5701
  %5703 = vrot.lane.b32.xlu0 %v5668, 95
  %v5704 = vpop.permute.xlu0 %5703
  %5705 = vrot.lane.b32.xlu0 %v5669, 95
  %v5706 = vpop.permute.xlu0 %5705
  %5707 = vrot.lane.b32.xlu0 %v5670, 95
  %v5708 = vpop.permute.xlu0 %5707
  %5709 = vrot.lane.b32.xlu0 %v5671, 95
  %v5710 = vpop.permute.xlu0 %5709
  %5711 = vrot.lane.b32.xlu0 %v5672, 95
  %v5712 = vpop.permute.xlu0 %5711
  %5713 = vrot.lane.b32.xlu0 %v5673, 95
  %v5714 = vpop.permute.xlu0 %5713
  %5715 = vrot.lane.b32.xlu0 %v5674, 95
  %v5716 = vpop.permute.xlu0 %5715
  %5717 = vrot.lane.b32.xlu0 %v5675, 95
  %v5718 = vpop.permute.xlu0 %5717
  %5719 = vrot.lane.b32.xlu0 %v5676, 95
  %v5720 = vpop.permute.xlu0 %5719
  %5721 = vrot.lane.b32.xlu0 %v5677, 95
  %v5722 = vpop.permute.xlu0 %5721
  %5723 = vrot.lane.b32.xlu0 %v5678, 95
  %v5724 = vpop.permute.xlu0 %5723
  %5725 = vrot.lane.b32.xlu0 %v5679, 95
  %v5726 = vpop.permute.xlu0 %5725
  %5727 = vrot.lane.b32.xlu0 %v5680, 95
  %v5728 = vpop.permute.xlu0 %5727
  %5729 = vrot.lane.b32.xlu0 %v5681, 95
  %v5730 = vpop.permute.xlu0 %5729
  %5731 = vrot.lane.b32.xlu0 %v5682, 95
  %v5732 = vpop.permute.xlu0 %5731
  %5733 = vrot.lane.b32.xlu0 %v5683, 95
  %v5734 = vpop.permute.xlu0 %5733
  %vm5735 = vcmask 777216
  %v5736 = vsel %vm5735, %v5702, %v5704
  %v5737 = vsel %vm5735, %v5704, %v5706
  %v5738 = vsel %vm5735, %v5706, %v5708
  %v5739 = vsel %vm5735, %v5708, %v5710
  %v5740 = vsel %vm5735, %v5710, %v5712
  %v5741 = vsel %vm5735, %v5712, %v5714
  %v5742 = vsel %vm5735, %v5714, %v5716
  %v5743 = vsel %vm5735, %v5716, %v5718
  %v5744 = vsel %vm5735, %v5718, %v5720
  %v5745 = vsel %vm5735, %v5720, %v5722
  %v5746 = vsel %vm5735, %v5722, %v5724
  %v5747 = vsel %vm5735, %v5724, %v5726
  %v5748 = vsel %vm5735, %v5726, %v5728
  %v5749 = vsel %vm5735, %v5728, %v5730
  %v5750 = vsel %vm5735, %v5730, %v5732
  %v5751 = vsel %vm5735, %v5732, %v5734
  %5768 = vst [vmem:[#allocation5 + $0x400] sm:$0xff] %v5736
  %5769 = vst [vmem:[#allocation5 + $0x408] sm:$0xff] %v5737
  %5770 = vst [vmem:[#allocation5 + $0x410] sm:$0xff] %v5738
  %5771 = vst [vmem:[#allocation5 + $0x418] sm:$0xff] %v5739
  %5772 = vst [vmem:[#allocation5 + $0x420] sm:$0xff] %v5740
  %5773 = vst [vmem:[#allocation5 + $0x428] sm:$0xff] %v5741
  %5774 = vst [vmem:[#allocation5 + $0x430] sm:$0xff] %v5742
  %5775 = vst [vmem:[#allocation5 + $0x438] sm:$0xff] %v5743
  %5776 = vst [vmem:[#allocation5 + $0x440] sm:$0xff] %v5744
  %5777 = vst [vmem:[#allocation5 + $0x448] sm:$0xff] %v5745
  %5778 = vst [vmem:[#allocation5 + $0x450] sm:$0xff] %v5746
  %5779 = vst [vmem:[#allocation5 + $0x458] sm:$0xff] %v5747
  %5780 = vst [vmem:[#allocation5 + $0x460] sm:$0xff] %v5748
  %5781 = vst [vmem:[#allocation5 + $0x468] sm:$0xff] %v5749
  %5782 = vst [vmem:[#allocation5 + $0x470] sm:$0xff] %v5750
  %5783 = vst [vmem:[#allocation5 + $0x478] sm:$0xff] %v5751
  %v5784 = vld [vmem:[%s6] sm:$0x7]
  %v5785 = vld [vmem:[#allocation5] sm:$0xff]
  %v5786 = vld [vmem:[#allocation5 + $0x8] sm:$0xff]
  %v5787 = vld [vmem:[#allocation5 + $0x10] sm:$0xff]
  %v5788 = vld [vmem:[#allocation5 + $0x18] sm:$0xff]
  %v5789 = vld [vmem:[#allocation5 + $0x20] sm:$0xff]
  %v5790 = vld [vmem:[#allocation5 + $0x28] sm:$0xff]
  %v5791 = vld [vmem:[#allocation5 + $0x30] sm:$0xff]
  %v5792 = vld [vmem:[#allocation5 + $0x38] sm:$0xff]
  %v5793 = vld [vmem:[#allocation5 + $0x40] sm:$0xff]
  %v5794 = vld [vmem:[#allocation5 + $0x48] sm:$0xff]
  %v5795 = vld [vmem:[#allocation5 + $0x50] sm:$0xff]
  %v5796 = vld [vmem:[#allocation5 + $0x58] sm:$0xff]
  %v5797 = vld [vmem:[#allocation5 + $0x60] sm:$0xff]
  %v5798 = vld [vmem:[#allocation5 + $0x68] sm:$0xff]
  %v5799 = vld [vmem:[#allocation5 + $0x70] sm:$0xff]
  %v5800 = vld [vmem:[#allocation5 + $0x78] sm:$0xff]
  %v5801 = vld [vmem:[#allocation5 + $0x80] sm:$0xff]
  %v5802 = vld [vmem:[#allocation5 + $0x88] sm:$0xff]
  %v5803 = vld [vmem:[#allocation5 + $0x90] sm:$0xff]
  %v5804 = vld [vmem:[#allocation5 + $0x98] sm:$0xff]
  %v5805 = vld [vmem:[#allocation5 + $0xa0] sm:$0xff]
  %v5806 = vld [vmem:[#allocation5 + $0xa8] sm:$0xff]
  %v5807 = vld [vmem:[#allocation5 + $0xb0] sm:$0xff]
  %v5808 = vld [vmem:[#allocation5 + $0xb8] sm:$0xff]
  %v5809 = vld [vmem:[#allocation5 + $0xc0] sm:$0xff]
  %v5810 = vld [vmem:[#allocation5 + $0xc8] sm:$0xff]
  %v5811 = vld [vmem:[#allocation5 + $0xd0] sm:$0xff]
  %v5812 = vld [vmem:[#allocation5 + $0xd8] sm:$0xff]
  %v5813 = vld [vmem:[#allocation5 + $0xe0] sm:$0xff]
  %v5814 = vld [vmem:[#allocation5 + $0xe8] sm:$0xff]
  %v5815 = vld [vmem:[#allocation5 + $0xf0] sm:$0xff]
  %v5816 = vld [vmem:[#allocation5 + $0xf8] sm:$0xff]
  %v5817 = vld [vmem:[#allocation5 + $0x100] sm:$0xff]
  %v5818 = vld [vmem:[#allocation5 + $0x108] sm:$0xff]
  %v5819 = vld [vmem:[#allocation5 + $0x110] sm:$0xff]
  %v5820 = vld [vmem:[#allocation5 + $0x118] sm:$0xff]
  %v5821 = vld [vmem:[#allocation5 + $0x120] sm:$0xff]
  %v5822 = vld [vmem:[#allocation5 + $0x128] sm:$0xff]
  %v5823 = vld [vmem:[#allocation5 + $0x130] sm:$0xff]
  %v5824 = vld [vmem:[#allocation5 + $0x138] sm:$0xff]
  %v5825 = vld [vmem:[#allocation5 + $0x140] sm:$0xff]
  %v5826 = vld [vmem:[#allocation5 + $0x148] sm:$0xff]
  %v5827 = vld [vmem:[#allocation5 + $0x150] sm:$0xff]
  %v5828 = vld [vmem:[#allocation5 + $0x158] sm:$0xff]
  %v5829 = vld [vmem:[#allocation5 + $0x160] sm:$0xff]
  %v5830 = vld [vmem:[#allocation5 + $0x168] sm:$0xff]
  %v5831 = vld [vmem:[#allocation5 + $0x170] sm:$0xff]
  %v5832 = vld [vmem:[#allocation5 + $0x178] sm:$0xff]
  %v5833 = vld [vmem:[#allocation5 + $0x180] sm:$0xff]
  %v5834 = vld [vmem:[#allocation5 + $0x188] sm:$0xff]
  %v5835 = vld [vmem:[#allocation5 + $0x190] sm:$0xff]
  %v5836 = vld [vmem:[#allocation5 + $0x198] sm:$0xff]
  %v5837 = vld [vmem:[#allocation5 + $0x1a0] sm:$0xff]
  %v5838 = vld [vmem:[#allocation5 + $0x1a8] sm:$0xff]
  %v5839 = vld [vmem:[#allocation5 + $0x1b0] sm:$0xff]
  %v5840 = vld [vmem:[#allocation5 + $0x1b8] sm:$0xff]
  %v5841 = vld [vmem:[#allocation5 + $0x1c0] sm:$0xff]
  %v5842 = vld [vmem:[#allocation5 + $0x1c8] sm:$0xff]
  %v5843 = vld [vmem:[#allocation5 + $0x1d0] sm:$0xff]
  %v5844 = vld [vmem:[#allocation5 + $0x1d8] sm:$0xff]
  %v5845 = vld [vmem:[#allocation5 + $0x1e0] sm:$0xff]
  %v5846 = vld [vmem:[#allocation5 + $0x1e8] sm:$0xff]
  %v5847 = vld [vmem:[#allocation5 + $0x1f0] sm:$0xff]
  %v5848 = vld [vmem:[#allocation5 + $0x1f8] sm:$0xff]
  %v5849 = vld [vmem:[#allocation5 + $0x200] sm:$0xff]
  %v5850 = vld [vmem:[#allocation5 + $0x208] sm:$0xff]
  %v5851 = vld [vmem:[#allocation5 + $0x210] sm:$0xff]
  %v5852 = vld [vmem:[#allocation5 + $0x218] sm:$0xff]
  %v5853 = vld [vmem:[#allocation5 + $0x220] sm:$0xff]
  %v5854 = vld [vmem:[#allocation5 + $0x228] sm:$0xff]
  %v5855 = vld [vmem:[#allocation5 + $0x230] sm:$0xff]
  %v5856 = vld [vmem:[#allocation5 + $0x238] sm:$0xff]
  %v5857 = vld [vmem:[#allocation5 + $0x240] sm:$0xff]
  %v5858 = vld [vmem:[#allocation5 + $0x248] sm:$0xff]
  %v5859 = vld [vmem:[#allocation5 + $0x250] sm:$0xff]
  %v5860 = vld [vmem:[#allocation5 + $0x258] sm:$0xff]
  %v5861 = vld [vmem:[#allocation5 + $0x260] sm:$0xff]
  %v5862 = vld [vmem:[#allocation5 + $0x268] sm:$0xff]
  %v5863 = vld [vmem:[#allocation5 + $0x270] sm:$0xff]
  %v5864 = vld [vmem:[#allocation5 + $0x278] sm:$0xff]
  %v5865 = vld [vmem:[#allocation5 + $0x280] sm:$0xff]
  %v5866 = vld [vmem:[#allocation5 + $0x288] sm:$0xff]
  %v5867 = vld [vmem:[#allocation5 + $0x290] sm:$0xff]
  %v5868 = vld [vmem:[#allocation5 + $0x298] sm:$0xff]
  %v5869 = vld [vmem:[#allocation5 + $0x2a0] sm:$0xff]
  %v5870 = vld [vmem:[#allocation5 + $0x2a8] sm:$0xff]
  %v5871 = vld [vmem:[#allocation5 + $0x2b0] sm:$0xff]
  %v5872 = vld [vmem:[#allocation5 + $0x2b8] sm:$0xff]
  %v5873 = vld [vmem:[#allocation5 + $0x2c0] sm:$0xff]
  %v5874 = vld [vmem:[#allocation5 + $0x2c8] sm:$0xff]
  %v5875 = vld [vmem:[#allocation5 + $0x2d0] sm:$0xff]
  %v5876 = vld [vmem:[#allocation5 + $0x2d8] sm:$0xff]
  %v5877 = vld [vmem:[#allocation5 + $0x2e0] sm:$0xff]
  %v5878 = vld [vmem:[#allocation5 + $0x2e8] sm:$0xff]
  %v5879 = vld [vmem:[#allocation5 + $0x2f0] sm:$0xff]
  %v5880 = vld [vmem:[#allocation5 + $0x2f8] sm:$0xff]
  %v5881 = vld [vmem:[#allocation5 + $0x300] sm:$0xff]
  %v5882 = vld [vmem:[#allocation5 + $0x308] sm:$0xff]
  %v5883 = vld [vmem:[#allocation5 + $0x310] sm:$0xff]
  %v5884 = vld [vmem:[#allocation5 + $0x318] sm:$0xff]
  %v5885 = vld [vmem:[#allocation5 + $0x320] sm:$0xff]
  %v5886 = vld [vmem:[#allocation5 + $0x328] sm:$0xff]
  %v5887 = vld [vmem:[#allocation5 + $0x330] sm:$0xff]
  %v5888 = vld [vmem:[#allocation5 + $0x338] sm:$0xff]
  %v5889 = vld [vmem:[#allocation5 + $0x340] sm:$0xff]
  %v5890 = vld [vmem:[#allocation5 + $0x348] sm:$0xff]
  %v5891 = vld [vmem:[#allocation5 + $0x350] sm:$0xff]
  %v5892 = vld [vmem:[#allocation5 + $0x358] sm:$0xff]
  %v5893 = vld [vmem:[#allocation5 + $0x360] sm:$0xff]
  %v5894 = vld [vmem:[#allocation5 + $0x368] sm:$0xff]
  %v5895 = vld [vmem:[#allocation5 + $0x370] sm:$0xff]
  %v5896 = vld [vmem:[#allocation5 + $0x378] sm:$0xff]
  %v5897 = vld [vmem:[#allocation5 + $0x380] sm:$0xff]
  %v5898 = vld [vmem:[#allocation5 + $0x388] sm:$0xff]
  %v5899 = vld [vmem:[#allocation5 + $0x390] sm:$0xff]
  %v5900 = vld [vmem:[#allocation5 + $0x398] sm:$0xff]
  %v5901 = vld [vmem:[#allocation5 + $0x3a0] sm:$0xff]
  %v5902 = vld [vmem:[#allocation5 + $0x3a8] sm:$0xff]
  %v5903 = vld [vmem:[#allocation5 + $0x3b0] sm:$0xff]
  %v5904 = vld [vmem:[#allocation5 + $0x3b8] sm:$0xff]
  %v5905 = vld [vmem:[#allocation5 + $0x3c0] sm:$0xff]
  %v5906 = vld [vmem:[#allocation5 + $0x3c8] sm:$0xff]
  %v5907 = vld [vmem:[#allocation5 + $0x3d0] sm:$0xff]
  %v5908 = vld [vmem:[#allocation5 + $0x3d8] sm:$0xff]
  %v5909 = vld [vmem:[#allocation5 + $0x3e0] sm:$0xff]
  %v5910 = vld [vmem:[#allocation5 + $0x3e8] sm:$0xff]
  %v5911 = vld [vmem:[#allocation5 + $0x3f0] sm:$0xff]
  %v5912 = vld [vmem:[#allocation5 + $0x3f8] sm:$0xff]
  %v5913 = vld [vmem:[#allocation5 + $0x400] sm:$0xff]
  %v5914 = vld [vmem:[#allocation5 + $0x408] sm:$0xff]
  %v5915 = vld [vmem:[#allocation5 + $0x410] sm:$0xff]
  %v5916 = vld [vmem:[#allocation5 + $0x418] sm:$0xff]
  %v5917 = vld [vmem:[#allocation5 + $0x420] sm:$0xff]
  %v5918 = vld [vmem:[#allocation5 + $0x428] sm:$0xff]
  %v5919 = vld [vmem:[#allocation5 + $0x430] sm:$0xff]
  %v5920 = vld [vmem:[#allocation5 + $0x438] sm:$0xff]
  %v5921 = vld [vmem:[#allocation5 + $0x440] sm:$0xff]
  %v5922 = vld [vmem:[#allocation5 + $0x448] sm:$0xff]
  %v5923 = vld [vmem:[#allocation5 + $0x450] sm:$0xff]
  %v5924 = vld [vmem:[#allocation5 + $0x458] sm:$0xff]
  %v5925 = vld [vmem:[#allocation5 + $0x460] sm:$0xff]
  %v5926 = vld [vmem:[#allocation5 + $0x468] sm:$0xff]
  %v5927 = vld [vmem:[#allocation5 + $0x470] sm:$0xff]
  %v5928 = vld [vmem:[#allocation5 + $0x478] sm:$0xff]
  %v5929 = vld [vmem:[%s7] sm:$0x77]
  %v5930 = vld [vmem:[%s7 + $0x8] sm:$0x77]
  %v5931 = vld [vmem:[%s7 + $0x10] sm:$0x77]
  %v5932 = vld [vmem:[%s7 + $0x18] sm:$0x77]
  %v5933 = vld [vmem:[%s7 + $0x20] sm:$0x77]
  %v5934 = vld [vmem:[%s7 + $0x28] sm:$0x77]
  %v5935 = vld [vmem:[%s7 + $0x30] sm:$0x77]
  %v5936 = vld [vmem:[%s7 + $0x38] sm:$0x77]
  %v5945 = vcombine.high %v5929, %v5929
  %v5946 = vcombine.high %v5930, %v5930
  %v5947 = vcombine.high %v5931, %v5931
  %v5948 = vcombine.high %v5932, %v5932
  %v5949 = vcombine.high %v5933, %v5933
  %v5950 = vcombine.high %v5934, %v5934
  %v5951 = vcombine.high %v5935, %v5935
  %v5952 = vcombine.high %v5936, %v5936
  %vm5961 = vcmask 588800
  %v5963 = vsel %vm5961, %v5784, 0
  %5965 = vmatprep.subr.mxu0 %v5786
  %5966 = vmatpush1.msra.mxu0 %v5785
  %5967 = vmatprep.subr.mxu0 %v5802
  %5968 = vmatpush1.msra.mxu0 %v5801
  %5969 = vmatprep.subr.mxu0 %v5818
  %5970 = vmatpush1.msra.mxu0 %v5817
  %5971 = vmatprep.subr.mxu0 %v5834
  %5972 = vmatpush1.msra.mxu0 %v5833
  %5973 = vmatprep.subr.mxu0 %v5850
  %5974 = vmatpush1.msra.mxu0 %v5849
  %5975 = vmatprep.subr.mxu0 %v5866
  %5976 = vmatpush1.msra.mxu0 %v5865
  %5977 = vmatprep.subr.mxu0 %v5882
  %5978 = vmatpush1.msra.mxu0 %v5881
  %5979 = vmatprep.subr.mxu0 %v5898
  %5980 = vmatpush1.msra.mxu0 %v5897
  %5981 = vmatprep.subr.mxu0 %v5914
  %5982 = vmatpush1.msra.mxu0 %v5913
  %5983 = vmatprep.subr.mxu0 0.0
  %5984 = vmatpush1.msra.mxu0 0.0
  %5985 = vmatprep.subr.mxu0 0.0
  %5986 = vmatpush1.msra.mxu0 0.0
  %5987 = vmatprep.subr.mxu0 0.0
  %5988 = vmatpush1.msra.mxu0 0.0
  %5989 = vmatprep.subr.mxu0 0.0
  %5990 = vmatpush1.msra.mxu0 0.0
  %5991 = vmatprep.subr.mxu0 0.0
  %5992 = vmatpush1.msra.mxu0 0.0
  %5993 = vmatprep.subr.mxu0 0.0
  %5994 = vmatpush1.msra.mxu0 0.0
  %5995 = vmatprep.subr.mxu0 0.0
  %5996 = vmatpush1.msra.mxu0 0.0
  %5997 = vmatprep.subr.mxu0 0.0
  %5998 = vmatpush1.msra.mxu0 0.0
  %5999 = vmatprep.subr.mxu0 0.0
  %6000 = vmatpush1.msra.mxu0 0.0
  %6001 = vmatprep.subr.mxu0 0.0
  %6002 = vmatpush1.msra.mxu0 0.0
  %6003 = vmatprep.subr.mxu0 0.0
  %6004 = vmatpush1.msra.mxu0 0.0
  %6005 = vmatprep.subr.mxu0 0.0
  %6006 = vmatpush1.msra.mxu0 0.0
  %6007 = vmatprep.subr.mxu0 0.0
  %6008 = vmatpush1.msra.mxu0 0.0
  %6009 = vmatprep.subr.mxu0 0.0
  %6010 = vmatpush1.msra.mxu0 0.0
  %6011 = vmatprep.subr.mxu0 0.0
  %6012 = vmatpush1.msra.mxu0 0.0
  %6013 = vmatprep.subr.mxu0 0.0
  %6014 = vmatpush1.msra.mxu0 0.0
  %6015 = vmatprep.subr.mxu0 0.0
  %6016 = vmatpush1.msra.mxu0 0.0
  %6017 = vmatprep.subr.mxu0 0.0
  %6018 = vmatpush1.msra.mxu0 0.0
  %6019 = vmatprep.subr.mxu0 0.0
  %6020 = vmatpush1.msra.mxu0 0.0
  %6021 = vmatprep.subr.mxu0 0.0
  %6022 = vmatpush1.msra.mxu0 0.0
  %6023 = vmatprep.subr.mxu0 0.0
  %6024 = vmatpush1.msra.mxu0 0.0
  %6025 = vmatprep.subr.mxu0 0.0
  %6026 = vmatpush1.msra.mxu0 0.0
  %6027 = vmatprep.subr.mxu0 0.0
  %6028 = vmatpush1.msra.mxu0 0.0
  %6029 = vmatprep.mubr.f32.mxu0 0.0
  %6030 = vmatmul.mubr.f32.gmra.mrb[0].mxu0 %v5963
  %v6031 = vpop.f32.mrb[0].mxu0
  %v6032 = vadd.f32 %v5929, %v6031
  %v6033 = vpop.f32.mrb[0].mxu0
  %v6034 = vadd.f32 %v5945, %v6033
  %6035 = vdwg.mxu0
  %6036 = vmatprep.subr.mxu0 %v5788
  %6037 = vmatpush1.msra.mxu0 %v5787
  %6038 = vmatprep.subr.mxu0 %v5804
  %6039 = vmatpush1.msra.mxu0 %v5803
  %6040 = vmatprep.subr.mxu0 %v5820
  %6041 = vmatpush1.msra.mxu0 %v5819
  %6042 = vmatprep.subr.mxu0 %v5836
  %6043 = vmatpush1.msra.mxu0 %v5835
  %6044 = vmatprep.subr.mxu0 %v5852
  %6045 = vmatpush1.msra.mxu0 %v5851
  %6046 = vmatprep.subr.mxu0 %v5868
  %6047 = vmatpush1.msra.mxu0 %v5867
  %6048 = vmatprep.subr.mxu0 %v5884
  %6049 = vmatpush1.msra.mxu0 %v5883
  %6050 = vmatprep.subr.mxu0 %v5900
  %6051 = vmatpush1.msra.mxu0 %v5899
  %6052 = vmatprep.subr.mxu0 %v5916
  %6053 = vmatpush1.msra.mxu0 %v5915
  %6054 = vmatprep.subr.mxu0 0.0
  %6055 = vmatpush1.msra.mxu0 0.0
  %6056 = vmatprep.subr.mxu0 0.0
  %6057 = vmatpush1.msra.mxu0 0.0
  %6058 = vmatprep.subr.mxu0 0.0
  %6059 = vmatpush1.msra.mxu0 0.0
  %6060 = vmatprep.subr.mxu0 0.0
  %6061 = vmatpush1.msra.mxu0 0.0
  %6062 = vmatprep.subr.mxu0 0.0
  %6063 = vmatpush1.msra.mxu0 0.0
  %6064 = vmatprep.subr.mxu0 0.0
  %6065 = vmatpush1.msra.mxu0 0.0
  %6066 = vmatprep.subr.mxu0 0.0
  %6067 = vmatpush1.msra.mxu0 0.0
  %6068 = vmatprep.subr.mxu0 0.0
  %6069 = vmatpush1.msra.mxu0 0.0
  %6070 = vmatprep.subr.mxu0 0.0
  %6071 = vmatpush1.msra.mxu0 0.0
  %6072 = vmatprep.subr.mxu0 0.0
  %6073 = vmatpush1.msra.mxu0 0.0
  %6074 = vmatprep.subr.mxu0 0.0
  %6075 = vmatpush1.msra.mxu0 0.0
  %6076 = vmatprep.subr.mxu0 0.0
  %6077 = vmatpush1.msra.mxu0 0.0
  %6078 = vmatprep.subr.mxu0 0.0
  %6079 = vmatpush1.msra.mxu0 0.0
  %6080 = vmatprep.subr.mxu0 0.0
  %6081 = vmatpush1.msra.mxu0 0.0
  %6082 = vmatprep.subr.mxu0 0.0
  %6083 = vmatpush1.msra.mxu0 0.0
  %6084 = vmatprep.subr.mxu0 0.0
  %6085 = vmatpush1.msra.mxu0 0.0
  %6086 = vmatprep.subr.mxu0 0.0
  %6087 = vmatpush1.msra.mxu0 0.0
  %6088 = vmatprep.subr.mxu0 0.0
  %6089 = vmatpush1.msra.mxu0 0.0
  %6090 = vmatprep.subr.mxu0 0.0
  %6091 = vmatpush1.msra.mxu0 0.0
  %6092 = vmatprep.subr.mxu0 0.0
  %6093 = vmatpush1.msra.mxu0 0.0
  %6094 = vmatprep.subr.mxu0 0.0
  %6095 = vmatpush1.msra.mxu0 0.0
  %6096 = vmatprep.subr.mxu0 0.0
  %6097 = vmatpush1.msra.mxu0 0.0
  %6098 = vmatprep.subr.mxu0 0.0
  %6099 = vmatpush1.msra.mxu0 0.0
  %6100 = vmatprep.mubr.f32.mxu0 0.0
  %6101 = vmatmul.mubr.f32.gmra.mrb[0].mxu0 %v5963
  %v6102 = vpop.f32.mrb[0].mxu0
  %v6103 = vadd.f32 %v5930, %v6102
  %v6104 = vpop.f32.mrb[0].mxu0
  %v6105 = vadd.f32 %v5946, %v6104
  %6106 = vdwg.mxu0
  %6107 = vmatprep.subr.mxu0 %v5790
  %6108 = vmatpush1.msra.mxu0 %v5789
  %6109 = vmatprep.subr.mxu0 %v5806
  %6110 = vmatpush1.msra.mxu0 %v5805
  %6111 = vmatprep.subr.mxu0 %v5822
  %6112 = vmatpush1.msra.mxu0 %v5821
  %6113 = vmatprep.subr.mxu0 %v5838
  %6114 = vmatpush1.msra.mxu0 %v5837
  %6115 = vmatprep.subr.mxu0 %v5854
  %6116 = vmatpush1.msra.mxu0 %v5853
  %6117 = vmatprep.subr.mxu0 %v5870
  %6118 = vmatpush1.msra.mxu0 %v5869
  %6119 = vmatprep.subr.mxu0 %v5886
  %6120 = vmatpush1.msra.mxu0 %v5885
  %6121 = vmatprep.subr.mxu0 %v5902
  %6122 = vmatpush1.msra.mxu0 %v5901
  %6123 = vmatprep.subr.mxu0 %v5918
  %6124 = vmatpush1.msra.mxu0 %v5917
  %6125 = vmatprep.subr.mxu0 0.0
  %6126 = vmatpush1.msra.mxu0 0.0
  %6127 = vmatprep.subr.mxu0 0.0
  %6128 = vmatpush1.msra.mxu0 0.0
  %6129 = vmatprep.subr.mxu0 0.0
  %6130 = vmatpush1.msra.mxu0 0.0
  %6131 = vmatprep.subr.mxu0 0.0
  %6132 = vmatpush1.msra.mxu0 0.0
  %6133 = vmatprep.subr.mxu0 0.0
  %6134 = vmatpush1.msra.mxu0 0.0
  %6135 = vmatprep.subr.mxu0 0.0
  %6136 = vmatpush1.msra.mxu0 0.0
  %6137 = vmatprep.subr.mxu0 0.0
  %6138 = vmatpush1.msra.mxu0 0.0
  %6139 = vmatprep.subr.mxu0 0.0
  %6140 = vmatpush1.msra.mxu0 0.0
  %6141 = vmatprep.subr.mxu0 0.0
  %6142 = vmatpush1.msra.mxu0 0.0
  %6143 = vmatprep.subr.mxu0 0.0
  %6144 = vmatpush1.msra.mxu0 0.0
  %6145 = vmatprep.subr.mxu0 0.0
  %6146 = vmatpush1.msra.mxu0 0.0
  %6147 = vmatprep.subr.mxu0 0.0
  %6148 = vmatpush1.msra.mxu0 0.0
  %6149 = vmatprep.subr.mxu0 0.0
  %6150 = vmatpush1.msra.mxu0 0.0
  %6151 = vmatprep.subr.mxu0 0.0
  %6152 = vmatpush1.msra.mxu0 0.0
  %6153 = vmatprep.subr.mxu0 0.0
  %6154 = vmatpush1.msra.mxu0 0.0
  %6155 = vmatprep.subr.mxu0 0.0
  %6156 = vmatpush1.msra.mxu0 0.0
  %6157 = vmatprep.subr.mxu0 0.0
  %6158 = vmatpush1.msra.mxu0 0.0
  %6159 = vmatprep.subr.mxu0 0.0
  %6160 = vmatpush1.msra.mxu0 0.0
  %6161 = vmatprep.subr.mxu0 0.0
  %6162 = vmatpush1.msra.mxu0 0.0
  %6163 = vmatprep.subr.mxu0 0.0
  %6164 = vmatpush1.msra.mxu0 0.0
  %6165 = vmatprep.subr.mxu0 0.0
  %6166 = vmatpush1.msra.mxu0 0.0
  %6167 = vmatprep.subr.mxu0 0.0
  %6168 = vmatpush1.msra.mxu0 0.0
  %6169 = vmatprep.subr.mxu0 0.0
  %6170 = vmatpush1.msra.mxu0 0.0
  %6171 = vmatprep.mubr.f32.mxu0 0.0
  %6172 = vmatmul.mubr.f32.gmra.mrb[0].mxu0 %v5963
  %v6173 = vpop.f32.mrb[0].mxu0
  %v6174 = vadd.f32 %v5931, %v6173
  %v6175 = vpop.f32.mrb[0].mxu0
  %v6176 = vadd.f32 %v5947, %v6175
  %6177 = vdwg.mxu0
  %6178 = vmatprep.subr.mxu0 %v5792
  %6179 = vmatpush1.msra.mxu0 %v5791
  %6180 = vmatprep.subr.mxu0 %v5808
  %6181 = vmatpush1.msra.mxu0 %v5807
  %6182 = vmatprep.subr.mxu0 %v5824
  %6183 = vmatpush1.msra.mxu0 %v5823
  %6184 = vmatprep.subr.mxu0 %v5840
  %6185 = vmatpush1.msra.mxu0 %v5839
  %6186 = vmatprep.subr.mxu0 %v5856
  %6187 = vmatpush1.msra.mxu0 %v5855
  %6188 = vmatprep.subr.mxu0 %v5872
  %6189 = vmatpush1.msra.mxu0 %v5871
  %6190 = vmatprep.subr.mxu0 %v5888
  %6191 = vmatpush1.msra.mxu0 %v5887
  %6192 = vmatprep.subr.mxu0 %v5904
  %6193 = vmatpush1.msra.mxu0 %v5903
  %6194 = vmatprep.subr.mxu0 %v5920
  %6195 = vmatpush1.msra.mxu0 %v5919
  %6196 = vmatprep.subr.mxu0 0.0
  %6197 = vmatpush1.msra.mxu0 0.0
  %6198 = vmatprep.subr.mxu0 0.0
  %6199 = vmatpush1.msra.mxu0 0.0
  %6200 = vmatprep.subr.mxu0 0.0
  %6201 = vmatpush1.msra.mxu0 0.0
  %6202 = vmatprep.subr.mxu0 0.0
  %6203 = vmatpush1.msra.mxu0 0.0
  %6204 = vmatprep.subr.mxu0 0.0
  %6205 = vmatpush1.msra.mxu0 0.0
  %6206 = vmatprep.subr.mxu0 0.0
  %6207 = vmatpush1.msra.mxu0 0.0
  %6208 = vmatprep.subr.mxu0 0.0
  %6209 = vmatpush1.msra.mxu0 0.0
  %6210 = vmatprep.subr.mxu0 0.0
  %6211 = vmatpush1.msra.mxu0 0.0
  %6212 = vmatprep.subr.mxu0 0.0
  %6213 = vmatpush1.msra.mxu0 0.0
  %6214 = vmatprep.subr.mxu0 0.0
  %6215 = vmatpush1.msra.mxu0 0.0
  %6216 = vmatprep.subr.mxu0 0.0
  %6217 = vmatpush1.msra.mxu0 0.0
  %6218 = vmatprep.subr.mxu0 0.0
  %6219 = vmatpush1.msra.mxu0 0.0
  %6220 = vmatprep.subr.mxu0 0.0
  %6221 = vmatpush1.msra.mxu0 0.0
  %6222 = vmatprep.subr.mxu0 0.0
  %6223 = vmatpush1.msra.mxu0 0.0
  %6224 = vmatprep.subr.mxu0 0.0
  %6225 = vmatpush1.msra.mxu0 0.0
  %6226 = vmatprep.subr.mxu0 0.0
  %6227 = vmatpush1.msra.mxu0 0.0
  %6228 = vmatprep.subr.mxu0 0.0
  %6229 = vmatpush1.msra.mxu0 0.0
  %6230 = vmatprep.subr.mxu0 0.0
  %6231 = vmatpush1.msra.mxu0 0.0
  %6232 = vmatprep.subr.mxu0 0.0
  %6233 = vmatpush1.msra.mxu0 0.0
  %6234 = vmatprep.subr.mxu0 0.0
  %6235 = vmatpush1.msra.mxu0 0.0
  %6236 = vmatprep.subr.mxu0 0.0
  %6237 = vmatpush1.msra.mxu0 0.0
  %6238 = vmatprep.subr.mxu0 0.0
  %6239 = vmatpush1.msra.mxu0 0.0
  %6240 = vmatprep.subr.mxu0 0.0
  %6241 = vmatpush1.msra.mxu0 0.0
  %6242 = vmatprep.mubr.f32.mxu0 0.0
  %6243 = vmatmul.mubr.f32.gmra.mrb[0].mxu0 %v5963
  %v6244 = vpop.f32.mrb[0].mxu0
  %v6245 = vadd.f32 %v5932, %v6244
  %v6246 = vpop.f32.mrb[0].mxu0
  %v6247 = vadd.f32 %v5948, %v6246
  %6248 = vdwg.mxu0
  %6249 = vmatprep.subr.mxu0 %v5794
  %6250 = vmatpush1.msra.mxu0 %v5793
  %6251 = vmatprep.subr.mxu0 %v5810
  %6252 = vmatpush1.msra.mxu0 %v5809
  %6253 = vmatprep.subr.mxu0 %v5826
  %6254 = vmatpush1.msra.mxu0 %v5825
  %6255 = vmatprep.subr.mxu0 %v5842
  %6256 = vmatpush1.msra.mxu0 %v5841
  %6257 = vmatprep.subr.mxu0 %v5858
  %6258 = vmatpush1.msra.mxu0 %v5857
  %6259 = vmatprep.subr.mxu0 %v5874
  %6260 = vmatpush1.msra.mxu0 %v5873
  %6261 = vmatprep.subr.mxu0 %v5890
  %6262 = vmatpush1.msra.mxu0 %v5889
  %6263 = vmatprep.subr.mxu0 %v5906
  %6264 = vmatpush1.msra.mxu0 %v5905
  %6265 = vmatprep.subr.mxu0 %v5922
  %6266 = vmatpush1.msra.mxu0 %v5921
  %6267 = vmatprep.subr.mxu0 0.0
  %6268 = vmatpush1.msra.mxu0 0.0
  %6269 = vmatprep.subr.mxu0 0.0
  %6270 = vmatpush1.msra.mxu0 0.0
  %6271 = vmatprep.subr.mxu0 0.0
  %6272 = vmatpush1.msra.mxu0 0.0
  %6273 = vmatprep.subr.mxu0 0.0
  %6274 = vmatpush1.msra.mxu0 0.0
  %6275 = vmatprep.subr.mxu0 0.0
  %6276 = vmatpush1.msra.mxu0 0.0
  %6277 = vmatprep.subr.mxu0 0.0
  %6278 = vmatpush1.msra.mxu0 0.0
  %6279 = vmatprep.subr.mxu0 0.0
  %6280 = vmatpush1.msra.mxu0 0.0
  %6281 = vmatprep.subr.mxu0 0.0
  %6282 = vmatpush1.msra.mxu0 0.0
  %6283 = vmatprep.subr.mxu0 0.0
  %6284 = vmatpush1.msra.mxu0 0.0
  %6285 = vmatprep.subr.mxu0 0.0
  %6286 = vmatpush1.msra.mxu0 0.0
  %6287 = vmatprep.subr.mxu0 0.0
  %6288 = vmatpush1.msra.mxu0 0.0
  %6289 = vmatprep.subr.mxu0 0.0
  %6290 = vmatpush1.msra.mxu0 0.0
  %6291 = vmatprep.subr.mxu0 0.0
  %6292 = vmatpush1.msra.mxu0 0.0
  %6293 = vmatprep.subr.mxu0 0.0
  %6294 = vmatpush1.msra.mxu0 0.0
  %6295 = vmatprep.subr.mxu0 0.0
  %6296 = vmatpush1.msra.mxu0 0.0
  %6297 = vmatprep.subr.mxu0 0.0
  %6298 = vmatpush1.msra.mxu0 0.0
  %6299 = vmatprep.subr.mxu0 0.0
  %6300 = vmatpush1.msra.mxu0 0.0
  %6301 = vmatprep.subr.mxu0 0.0
  %6302 = vmatpush1.msra.mxu0 0.0
  %6303 = vmatprep.subr.mxu0 0.0
  %6304 = vmatpush1.msra.mxu0 0.0
  %6305 = vmatprep.subr.mxu0 0.0
  %6306 = vmatpush1.msra.mxu0 0.0
  %6307 = vmatprep.subr.mxu0 0.0
  %6308 = vmatpush1.msra.mxu0 0.0
  %6309 = vmatprep.subr.mxu0 0.0
  %6310 = vmatpush1.msra.mxu0 0.0
  %6311 = vmatprep.subr.mxu0 0.0
  %6312 = vmatpush1.msra.mxu0 0.0
  %6313 = vmatprep.mubr.f32.mxu0 0.0
  %6314 = vmatmul.mubr.f32.gmra.mrb[0].mxu0 %v5963
  %v6315 = vpop.f32.mrb[0].mxu0
  %v6316 = vadd.f32 %v5933, %v6315
  %v6317 = vpop.f32.mrb[0].mxu0
  %v6318 = vadd.f32 %v5949, %v6317
  %6319 = vdwg.mxu0
  %6320 = vmatprep.subr.mxu0 %v5796
  %6321 = vmatpush1.msra.mxu0 %v5795
  %6322 = vmatprep.subr.mxu0 %v5812
  %6323 = vmatpush1.msra.mxu0 %v5811
  %6324 = vmatprep.subr.mxu0 %v5828
  %6325 = vmatpush1.msra.mxu0 %v5827
  %6326 = vmatprep.subr.mxu0 %v5844
  %6327 = vmatpush1.msra.mxu0 %v5843
  %6328 = vmatprep.subr.mxu0 %v5860
  %6329 = vmatpush1.msra.mxu0 %v5859
  %6330 = vmatprep.subr.mxu0 %v5876
  %6331 = vmatpush1.msra.mxu0 %v5875
  %6332 = vmatprep.subr.mxu0 %v5892
  %6333 = vmatpush1.msra.mxu0 %v5891
  %6334 = vmatprep.subr.mxu0 %v5908
  %6335 = vmatpush1.msra.mxu0 %v5907
  %6336 = vmatprep.subr.mxu0 %v5924
  %6337 = vmatpush1.msra.mxu0 %v5923
  %6338 = vmatprep.subr.mxu0 0.0
  %6339 = vmatpush1.msra.mxu0 0.0
  %6340 = vmatprep.subr.mxu0 0.0
  %6341 = vmatpush1.msra.mxu0 0.0
  %6342 = vmatprep.subr.mxu0 0.0
  %6343 = vmatpush1.msra.mxu0 0.0
  %6344 = vmatprep.subr.mxu0 0.0
  %6345 = vmatpush1.msra.mxu0 0.0
  %6346 = vmatprep.subr.mxu0 0.0
  %6347 = vmatpush1.msra.mxu0 0.0
  %6348 = vmatprep.subr.mxu0 0.0
  %6349 = vmatpush1.msra.mxu0 0.0
  %6350 = vmatprep.subr.mxu0 0.0
  %6351 = vmatpush1.msra.mxu0 0.0
  %6352 = vmatprep.subr.mxu0 0.0
  %6353 = vmatpush1.msra.mxu0 0.0
  %6354 = vmatprep.subr.mxu0 0.0
  %6355 = vmatpush1.msra.mxu0 0.0
  %6356 = vmatprep.subr.mxu0 0.0
  %6357 = vmatpush1.msra.mxu0 0.0
  %6358 = vmatprep.subr.mxu0 0.0
  %6359 = vmatpush1.msra.mxu0 0.0
  %6360 = vmatprep.subr.mxu0 0.0
  %6361 = vmatpush1.msra.mxu0 0.0
  %6362 = vmatprep.subr.mxu0 0.0
  %6363 = vmatpush1.msra.mxu0 0.0
  %6364 = vmatprep.subr.mxu0 0.0
  %6365 = vmatpush1.msra.mxu0 0.0
  %6366 = vmatprep.subr.mxu0 0.0
  %6367 = vmatpush1.msra.mxu0 0.0
  %6368 = vmatprep.subr.mxu0 0.0
  %6369 = vmatpush1.msra.mxu0 0.0
  %6370 = vmatprep.subr.mxu0 0.0
  %6371 = vmatpush1.msra.mxu0 0.0
  %6372 = vmatprep.subr.mxu0 0.0
  %6373 = vmatpush1.msra.mxu0 0.0
  %6374 = vmatprep.subr.mxu0 0.0
  %6375 = vmatpush1.msra.mxu0 0.0
  %6376 = vmatprep.subr.mxu0 0.0
  %6377 = vmatpush1.msra.mxu0 0.0
  %6378 = vmatprep.subr.mxu0 0.0
  %6379 = vmatpush1.msra.mxu0 0.0
  %6380 = vmatprep.subr.mxu0 0.0
  %6381 = vmatpush1.msra.mxu0 0.0
  %6382 = vmatprep.subr.mxu0 0.0
  %6383 = vmatpush1.msra.mxu0 0.0
  %6384 = vmatprep.mubr.f32.mxu0 0.0
  %6385 = vmatmul.mubr.f32.gmra.mrb[0].mxu0 %v5963
  %v6386 = vpop.f32.mrb[0].mxu0
  %v6387 = vadd.f32 %v5934, %v6386
  %v6388 = vpop.f32.mrb[0].mxu0
  %v6389 = vadd.f32 %v5950, %v6388
  %6390 = vdwg.mxu0
  %6391 = vmatprep.subr.mxu0 %v5798
  %6392 = vmatpush1.msra.mxu0 %v5797
  %6393 = vmatprep.subr.mxu0 %v5814
  %6394 = vmatpush1.msra.mxu0 %v5813
  %6395 = vmatprep.subr.mxu0 %v5830
  %6396 = vmatpush1.msra.mxu0 %v5829
  %6397 = vmatprep.subr.mxu0 %v5846
  %6398 = vmatpush1.msra.mxu0 %v5845
  %6399 = vmatprep.subr.mxu0 %v5862
  %6400 = vmatpush1.msra.mxu0 %v5861
  %6401 = vmatprep.subr.mxu0 %v5878
  %6402 = vmatpush1.msra.mxu0 %v5877
  %6403 = vmatprep.subr.mxu0 %v5894
  %6404 = vmatpush1.msra.mxu0 %v5893
  %6405 = vmatprep.subr.mxu0 %v5910
  %6406 = vmatpush1.msra.mxu0 %v5909
  %6407 = vmatprep.subr.mxu0 %v5926
  %6408 = vmatpush1.msra.mxu0 %v5925
  %6409 = vmatprep.subr.mxu0 0.0
  %6410 = vmatpush1.msra.mxu0 0.0
  %6411 = vmatprep.subr.mxu0 0.0
  %6412 = vmatpush1.msra.mxu0 0.0
  %6413 = vmatprep.subr.mxu0 0.0
  %6414 = vmatpush1.msra.mxu0 0.0
  %6415 = vmatprep.subr.mxu0 0.0
  %6416 = vmatpush1.msra.mxu0 0.0
  %6417 = vmatprep.subr.mxu0 0.0
  %6418 = vmatpush1.msra.mxu0 0.0
  %6419 = vmatprep.subr.mxu0 0.0
  %6420 = vmatpush1.msra.mxu0 0.0
  %6421 = vmatprep.subr.mxu0 0.0
  %6422 = vmatpush1.msra.mxu0 0.0
  %6423 = vmatprep.subr.mxu0 0.0
  %6424 = vmatpush1.msra.mxu0 0.0
  %6425 = vmatprep.subr.mxu0 0.0
  %6426 = vmatpush1.msra.mxu0 0.0
  %6427 = vmatprep.subr.mxu0 0.0
  %6428 = vmatpush1.msra.mxu0 0.0
  %6429 = vmatprep.subr.mxu0 0.0
  %6430 = vmatpush1.msra.mxu0 0.0
  %6431 = vmatprep.subr.mxu0 0.0
  %6432 = vmatpush1.msra.mxu0 0.0
  %6433 = vmatprep.subr.mxu0 0.0
  %6434 = vmatpush1.msra.mxu0 0.0
  %6435 = vmatprep.subr.mxu0 0.0
  %6436 = vmatpush1.msra.mxu0 0.0
  %6437 = vmatprep.subr.mxu0 0.0
  %6438 = vmatpush1.msra.mxu0 0.0
  %6439 = vmatprep.subr.mxu0 0.0
  %6440 = vmatpush1.msra.mxu0 0.0
  %6441 = vmatprep.subr.mxu0 0.0
  %6442 = vmatpush1.msra.mxu0 0.0
  %6443 = vmatprep.subr.mxu0 0.0
  %6444 = vmatpush1.msra.mxu0 0.0
  %6445 = vmatprep.subr.mxu0 0.0
  %6446 = vmatpush1.msra.mxu0 0.0
  %6447 = vmatprep.subr.mxu0 0.0
  %6448 = vmatpush1.msra.mxu0 0.0
  %6449 = vmatprep.subr.mxu0 0.0
  %6450 = vmatpush1.msra.mxu0 0.0
  %6451 = vmatprep.subr.mxu0 0.0
  %6452 = vmatpush1.msra.mxu0 0.0
  %6453 = vmatprep.subr.mxu0 0.0
  %6454 = vmatpush1.msra.mxu0 0.0
  %6455 = vmatprep.mubr.f32.mxu0 0.0
  %6456 = vmatmul.mubr.f32.gmra.mrb[0].mxu0 %v5963
  %v6457 = vpop.f32.mrb[0].mxu0
  %v6458 = vadd.f32 %v5935, %v6457
  %v6459 = vpop.f32.mrb[0].mxu0
  %v6460 = vadd.f32 %v5951, %v6459
  %6461 = vdwg.mxu0
  %6462 = vmatprep.subr.mxu0 %v5800
  %6463 = vmatpush1.msra.mxu0 %v5799
  %6464 = vmatprep.subr.mxu0 %v5816
  %6465 = vmatpush1.msra.mxu0 %v5815
  %6466 = vmatprep.subr.mxu0 %v5832
  %6467 = vmatpush1.msra.mxu0 %v5831
  %6468 = vmatprep.subr.mxu0 %v5848
  %6469 = vmatpush1.msra.mxu0 %v5847
  %6470 = vmatprep.subr.mxu0 %v5864
  %6471 = vmatpush1.msra.mxu0 %v5863
  %6472 = vmatprep.subr.mxu0 %v5880
  %6473 = vmatpush1.msra.mxu0 %v5879
  %6474 = vmatprep.subr.mxu0 %v5896
  %6475 = vmatpush1.msra.mxu0 %v5895
  %6476 = vmatprep.subr.mxu0 %v5912
  %6477 = vmatpush1.msra.mxu0 %v5911
  %6478 = vmatprep.subr.mxu0 %v5928
  %6479 = vmatpush1.msra.mxu0 %v5927
  %6480 = vmatprep.subr.mxu0 0.0
  %6481 = vmatpush1.msra.mxu0 0.0
  %6482 = vmatprep.subr.mxu0 0.0
  %6483 = vmatpush1.msra.mxu0 0.0
  %6484 = vmatprep.subr.mxu0 0.0
  %6485 = vmatpush1.msra.mxu0 0.0
  %6486 = vmatprep.subr.mxu0 0.0
  %6487 = vmatpush1.msra.mxu0 0.0
  %6488 = vmatprep.subr.mxu0 0.0
  %6489 = vmatpush1.msra.mxu0 0.0
  %6490 = vmatprep.subr.mxu0 0.0
  %6491 = vmatpush1.msra.mxu0 0.0
  %6492 = vmatprep.subr.mxu0 0.0
  %6493 = vmatpush1.msra.mxu0 0.0
  %6494 = vmatprep.subr.mxu0 0.0
  %6495 = vmatpush1.msra.mxu0 0.0
  %6496 = vmatprep.subr.mxu0 0.0
  %6497 = vmatpush1.msra.mxu0 0.0
  %6498 = vmatprep.subr.mxu0 0.0
  %6499 = vmatpush1.msra.mxu0 0.0
  %6500 = vmatprep.subr.mxu0 0.0
  %6501 = vmatpush1.msra.mxu0 0.0
  %6502 = vmatprep.subr.mxu0 0.0
  %6503 = vmatpush1.msra.mxu0 0.0
  %6504 = vmatprep.subr.mxu0 0.0
  %6505 = vmatpush1.msra.mxu0 0.0
  %6506 = vmatprep.subr.mxu0 0.0
  %6507 = vmatpush1.msra.mxu0 0.0
  %6508 = vmatprep.subr.mxu0 0.0
  %6509 = vmatpush1.msra.mxu0 0.0
  %6510 = vmatprep.subr.mxu0 0.0
  %6511 = vmatpush1.msra.mxu0 0.0
  %6512 = vmatprep.subr.mxu0 0.0
  %6513 = vmatpush1.msra.mxu0 0.0
  %6514 = vmatprep.subr.mxu0 0.0
  %6515 = vmatpush1.msra.mxu0 0.0
  %6516 = vmatprep.subr.mxu0 0.0
  %6517 = vmatpush1.msra.mxu0 0.0
  %6518 = vmatprep.subr.mxu0 0.0
  %6519 = vmatpush1.msra.mxu0 0.0
  %6520 = vmatprep.subr.mxu0 0.0
  %6521 = vmatpush1.msra.mxu0 0.0
  %6522 = vmatprep.subr.mxu0 0.0
  %6523 = vmatpush1.msra.mxu0 0.0
  %6524 = vmatprep.subr.mxu0 0.0
  %6525 = vmatpush1.msra.mxu0 0.0
  %6526 = vmatprep.mubr.f32.mxu0 0.0
  %6527 = vmatmul.mubr.f32.gmra.mrb[0].mxu0 %v5963
  %v6528 = vpop.f32.mrb[0].mxu0
  %v6529 = vadd.f32 %v5936, %v6528
  %v6530 = vpop.f32.mrb[0].mxu0
  %v6531 = vadd.f32 %v5952, %v6530
  %6532 = vdwg.mxu0
  %v6549 = vcombine.low %v6032, %v6034
  %v6550 = vcombine.low %v6103, %v6105
  %v6551 = vcombine.low %v6174, %v6176
  %v6552 = vcombine.low %v6245, %v6247
  %v6553 = vcombine.low %v6316, %v6318
  %v6554 = vcombine.low %v6387, %v6389
  %v6555 = vcombine.low %v6458, %v6460
  %v6556 = vcombine.low %v6529, %v6531
  %6565 = vst [vmem:[%s8] sm:$0x77] %v6549
  %6566 = vst [vmem:[%s8 + $0x8] sm:$0x77] %v6550
  %6567 = vst [vmem:[%s8 + $0x10] sm:$0x77] %v6551
  %6568 = vst [vmem:[%s8 + $0x18] sm:$0x77] %v6552
  %6569 = vst [vmem:[%s8 + $0x20] sm:$0x77] %v6553
  %6570 = vst [vmem:[%s8 + $0x28] sm:$0x77] %v6554
  %6571 = vst [vmem:[%s8 + $0x30] sm:$0x77] %v6555
  %6572 = vst [vmem:[%s8 + $0x38] sm:$0x77] %v6556
  // Predicated region
  $region34: #{_lambda_.1} parent=0 // pred_check
    _
  $region35: #{_lambda_.1} parent=0 // pred_check_branch
    %6574 = sbr.rel (0) target = $region37
  $region36: #{_lambda_.1} parent=0 // pred_region
    _
  $region37: #{_lambda_.1} parent=0 // pred_fallthru
    _
  // Predicated region
  $region38: #{_lambda_.1} parent=0 // pred_check
    _
  $region39: #{_lambda_.1} parent=0 // pred_check_branch
    %6576 = sbr.rel (0) target = $region41
  $region40: #{_lambda_.1} parent=0 // pred_region
    _
  $region41: #{_lambda_.1} parent=0 // pred_fallthru
    _

</llo_original>
